<compile_context>
chip_gen: v7x
topology: tpu7x:2x2x1
jax: 0.10.0
libtpu: 0.0.40
codegen_flags: <defaults>
</compile_context>

<pallas_src>
import jax
import jax.numpy as jnp
from jax import lax
from jax.experimental import pallas as pl
from jax.experimental.pallas import tpu as pltpu

KSIZE = 3
PAD = KSIZE // 2          # 1 -> "same" padding for a 3x3 conv


def _pick_tile_h(H):
  """Largest row tile in {32, 16, 8} that strictly divides H (keeps per-step
  VMEM small, including on v7x's 64 MiB); falls back to a single tile."""
  for th in (32, 16, 8):
    if th < H and H % th == 0:
      return th
  return H


# ---------------------------------------------------------------------------
# Kernel 1: RCAB conv pair    h = conv2(relu(conv1(x) + b1)) + b2
# plus the per-image channel pool sums needed by the channel-attention layer.
# Grid: (N, H // TH).  Row halos (2 rows each side for the two stacked 3x3
# convs) arrive as their own small blocks of the unpadded input.
# ---------------------------------------------------------------------------
def _make_rcab_conv_kernel(H, W, C, TH, n_tiles):
  TH2 = TH + 2 * PAD          # rows of intermediate h1 that conv2 needs
  THX = TH + 4 * PAD          # rows of x that conv1 needs
  WP = W + 2 * PAD

  def kernel(x_mid_ref, x_top_ref, x_bot_ref,
             w1_ref, b1_ref, w2_ref, b2_ref,
             h_ref, pool_ref,
             xpad_ref, hpad_ref):
    i = pl.program_id(1)

    # -- assemble zero-padded input tile (only halo strips get zeroed) ------
    zx = jnp.zeros((THX, PAD, C), jnp.float32)
    xpad_ref[:, 0:PAD, :] = zx
    xpad_ref[:, W + PAD:WP, :] = zx
    top = x_top_ref[0] * (i > 0).astype(jnp.float32)
    bot = x_bot_ref[0] * (i < n_tiles - 1).astype(jnp.float32)
    xpad_ref[0:2 * PAD, PAD:PAD + W, :] = top
    xpad_ref[2 * PAD:2 * PAD + TH, PAD:PAD + W, :] = x_mid_ref[0]
    xpad_ref[2 * PAD + TH:THX, PAD:PAD + W, :] = bot
    xpad = xpad_ref[...]

    # -- conv1 + bias + ReLU on the extended (TH+2) x W region --------------
    acc = None
    for ky in range(KSIZE):
      for kx in range(KSIZE):
        patch = xpad[ky:ky + TH2, kx:kx + W, :].reshape(TH2 * W, C)
        t = jnp.dot(patch, w1_ref[ky, kx], preferred_element_type=jnp.float32)
        acc = t if acc is None else acc + t
    h1 = jnp.maximum(acc + b1_ref[...], 0.0).reshape(TH2, W, C)

    # rows outside the image act as conv2's zero padding -> mask them
    grow = (i * TH - PAD) + lax.broadcasted_iota(jnp.int32, (TH2, 1, 1), 0)
    h1 = h1 * ((grow >= 0) & (grow < H)).astype(jnp.float32)

    # -- stage h1 in a width-padded scratch (halo columns zeroed only) ------
    zh = jnp.zeros((TH2, PAD, C), jnp.float32)
    hpad_ref[:, 0:PAD, :] = zh
    hpad_ref[:, W + PAD:WP, :] = zh
    hpad_ref[:, PAD:PAD + W, :] = h1
    hpad = hpad_ref[...]

    # -- conv2 + bias --------------------------------------------------------
    acc2 = None
    for ky in range(KSIZE):
      for kx in range(KSIZE):
        patch = hpad[ky:ky + TH, kx:kx + W, :].reshape(TH * W, C)
        t = jnp.dot(patch, w2_ref[ky, kx], preferred_element_type=jnp.float32)
        acc2 = t if acc2 is None else acc2 + t
    h2 = acc2 + b2_ref[...]                      # (TH*W, C)

    h_ref[...] = h2.reshape(1, TH, W, C)

    # -- accumulate the channel pool across row tiles ------------------------
    psum = jnp.sum(h2, axis=0, keepdims=True).reshape(1, 1, C)

    @pl.when(i == 0)
    def _():
      pool_ref[...] = psum

    @pl.when(i > 0)
    def _():
      pool_ref[...] += psum

  return kernel


def _rcab_conv_pair(x, w1, b1, w2, b2, TH):
  N, H, W, C = x.shape
  n_tiles = H // TH
  kernel = _make_rcab_conv_kernel(H, W, C, TH, n_tiles)

  halo_rows = 2 * PAD
  blocks_per_tile = TH // halo_rows
  n_halo_blocks = pl.cdiv(H, halo_rows)

  tile_map = lambda n, i: (n, i, 0, 0)
  top_map = lambda n, i: (n, jnp.maximum(i * blocks_per_tile - 1, 0), 0, 0)
  bot_map = lambda n, i: (
      n, jnp.minimum((i + 1) * blocks_per_tile, n_halo_blocks - 1), 0, 0)
  const4 = lambda n, i: (0, 0, 0, 0)
  const2 = lambda n, i: (0, 0)

  h, pool = pl.pallas_call(
      kernel,
      out_shape=(jax.ShapeDtypeStruct((N, H, W, C), jnp.float32),
                 jax.ShapeDtypeStruct((N, 1, C), jnp.float32)),
      grid=(N, n_tiles),
      in_specs=[
          pl.BlockSpec((1, TH, W, C), tile_map),
          pl.BlockSpec((1, halo_rows, W, C), top_map),
          pl.BlockSpec((1, halo_rows, W, C), bot_map),
          pl.BlockSpec((KSIZE, KSIZE, C, C), const4),   # weights stay resident
          pl.BlockSpec((1, C), const2),
          pl.BlockSpec((KSIZE, KSIZE, C, C), const4),
          pl.BlockSpec((1, C), const2),
      ],
      out_specs=(pl.BlockSpec((1, TH, W, C), tile_map),
                 pl.BlockSpec((1, 1, C), lambda n, i: (n, 0, 0))),
      scratch_shapes=[
          pltpu.VMEM((TH + 4 * PAD, W + 2 * PAD, C), jnp.float32),
          pltpu.VMEM((TH + 2 * PAD, W + 2 * PAD, C), jnp.float32),
      ],
      compiler_params=pltpu.CompilerParams(
          dimension_semantics=("parallel", "arbitrary")),
  )(x, x, x, w1, b1, w2, b2)
  return h, pool


# ---------------------------------------------------------------------------
# Kernel 2: CALayer scale + RCAB residual:  out = h * sigmoid(MLP(mean(h))) + x
# The tiny (1, C) MLP is recomputed per tile from the pooled sums (negligible).
# ---------------------------------------------------------------------------
def _make_ca_scale_kernel(H, W, C):
  inv_hw = 1.0 / float(H * W)

  def kernel(pool_ref, wd_ref, cd_ref, wu_ref, cu_ref,
             h_ref, x_ref, out_ref):
    y = pool_ref[0] * inv_hw                                         # (1, C)
    z = jnp.dot(y, wd_ref[...], preferred_element_type=jnp.float32) + cd_ref[...]
    z = jnp.maximum(z, 0.0)                                          # (1, C//r)
    s = jnp.dot(z, wu_ref[...], preferred_element_type=jnp.float32) + cu_ref[...]
    s = 1.0 / (1.0 + jnp.exp(-s))                                    # sigmoid
    out_ref[...] = h_ref[...] * s.reshape(1, 1, 1, C) + x_ref[...]

  return kernel


def _ca_scale_add(h, x, pool, wd, cd, wu, cu, TH):
  N, H, W, C = h.shape
  Cr = wd.shape[1]
  n_tiles = H // TH
  kernel = _make_ca_scale_kernel(H, W, C)
  tile_map = lambda n, i: (n, i, 0, 0)

  return pl.pallas_call(
      kernel,
      out_shape=jax.ShapeDtypeStruct((N, H, W, C), jnp.float32),
      grid=(N, n_tiles),
      in_specs=[
          pl.BlockSpec((1, 1, C), lambda n, i: (n, 0, 0)),
          pl.BlockSpec((C, Cr), lambda n, i: (0, 0)),
          pl.BlockSpec((1, Cr), lambda n, i: (0, 0)),
          pl.BlockSpec((Cr, C), lambda n, i: (0, 0)),
          pl.BlockSpec((1, C), lambda n, i: (0, 0)),
          pl.BlockSpec((1, TH, W, C), tile_map),
          pl.BlockSpec((1, TH, W, C), tile_map),
      ],
      out_specs=pl.BlockSpec((1, TH, W, C), tile_map),
      compiler_params=pltpu.CompilerParams(
          dimension_semantics=("parallel", "parallel")),
  )(pool, wd, cd, wu, cu, h, x)


# ---------------------------------------------------------------------------
# Kernel 3: final 3x3 conv of the group + group residual (1-row halos).
# ---------------------------------------------------------------------------
def _make_final_conv_kernel(H, W, C, TH, n_tiles):
  THX = TH + 2 * PAD
  WP = W + 2 * PAD

  def kernel(x_mid_ref, x_top_ref, x_bot_ref, x0_ref, w_ref, b_ref,
             out_ref, xpad_ref):
    i = pl.program_id(1)

    zx = jnp.zeros((THX, PAD, C), jnp.float32)
    xpad_ref[:, 0:PAD, :] = zx
    xpad_ref[:, W + PAD:WP, :] = zx
    top = x_top_ref[0] * (i > 0).astype(jnp.float32)
    bot = x_bot_ref[0] * (i < n_tiles - 1).astype(jnp.float32)
    xpad_ref[0:PAD, PAD:PAD + W, :] = top
    xpad_ref[PAD:PAD + TH, PAD:PAD + W, :] = x_mid_ref[0]
    xpad_ref[PAD + TH:THX, PAD:PAD + W, :] = bot
    xpad = xpad_ref[...]

    acc = None
    for ky in range(KSIZE):
      for kx in range(KSIZE):
        patch = xpad[ky:ky + TH, kx:kx + W, :].reshape(TH * W, C)
        t = jnp.dot(patch, w_ref[ky, kx], preferred_element_type=jnp.float32)
        acc = t if acc is None else acc + t
    res = (acc + b_ref[...]).reshape(1, TH, W, C)
    out_ref[...] = res + x0_ref[...]

  return kernel


def _final_conv_residual(x, x0, w, b, TH):
  N, H, W, C = x.shape
  n_tiles = H // TH
  kernel = _make_final_conv_kernel(H, W, C, TH, n_tiles)
  tile_map = lambda n, i: (n, i, 0, 0)
  top_map = lambda n, i: (n, jnp.maximum(i * TH - 1, 0), 0, 0)
  bot_map = lambda n, i: (n, jnp.minimum((i + 1) * TH, H - 1), 0, 0)

  return pl.pallas_call(
      kernel,
      out_shape=jax.ShapeDtypeStruct((N, H, W, C), jnp.float32),
      grid=(N, n_tiles),
      in_specs=[
          pl.BlockSpec((1, TH, W, C), tile_map),
          pl.BlockSpec((1, 1, W, C), top_map),
          pl.BlockSpec((1, 1, W, C), bot_map),
          pl.BlockSpec((1, TH, W, C), tile_map),
          pl.BlockSpec((KSIZE, KSIZE, C, C), lambda n, i: (0, 0, 0, 0)),
          pl.BlockSpec((1, C), lambda n, i: (0, 0)),
      ],
      out_specs=pl.BlockSpec((1, TH, W, C), tile_map),
      scratch_shapes=[pltpu.VMEM((TH + 2 * PAD, W + 2 * PAD, C), jnp.float32)],
      compiler_params=pltpu.CompilerParams(
          dimension_semantics=("parallel", "parallel")),
  )(x, x, x, x0, w, b)


# ---------------------------------------------------------------------------
# Wrapper: full ResidualGroup forward (NCHW in / NCHW out).
# ---------------------------------------------------------------------------
@jax.jit
def residual_group_forward(x_nchw, rcab_params, w_last, b_last):
  """x_nchw: (N, C, H, W) f32.
  rcab_params: tuple of per-RCAB tuples (w1, b1, w2, b2, wd, cd, wu, cu),
  conv weights in HWIO layout, CA 1x1-conv weights as (C, C//r) / (C//r, C)."""
  N, C, H, W = x_nchw.shape
  TH = _pick_tile_h(H)

  x0 = jnp.transpose(x_nchw, (0, 2, 3, 1)).astype(jnp.float32)   # NHWC
  x = x0
  for (w1, b1, w2, b2, wd, cd, wu, cu) in rcab_params:
    h, pool = _rcab_conv_pair(x, w1, b1.reshape(1, C), w2, b2.reshape(1, C), TH)
    x = _ca_scale_add(h, x, pool, wd, cd.reshape(1, -1), wu, cu.reshape(1, C), TH)
  out = _final_conv_residual(x, x0, w_last, b_last.reshape(1, C), TH)
  return jnp.transpose(out, (0, 3, 1, 2))


# ---------------------------------------------------------------------------
# Pure-JAX reference (lax conv), used only for the self-check below.
# ---------------------------------------------------------------------------
def _reference_forward(x_nchw, rcab_params, w_last, b_last):
  x0 = jnp.transpose(x_nchw, (0, 2, 3, 1))
  dn = ("NHWC", "HWIO", "NHWC")
  x = x0
  for (w1, b1, w2, b2, wd, cd, wu, cu) in rcab_params:
    h = lax.conv_general_dilated(x, w1, (1, 1), "SAME", dimension_numbers=dn)
    h = jnp.maximum(h + b1.reshape(1, 1, 1, -1), 0.0)
    h = lax.conv_general_dilated(h, w2, (1, 1), "SAME", dimension_numbers=dn)
    h = h + b2.reshape(1, 1, 1, -1)
    y = jnp.mean(h, axis=(1, 2))                      # (N, C)
    z = jnp.maximum(y @ wd + cd, 0.0)
    s = jax.nn.sigmoid(z @ wu + cu)                   # (N, C)
    x = h * s[:, None, None, :] + x
  r = lax.conv_general_dilated(x, w_last, (1, 1), "SAME", dimension_numbers=dn)
  r = r + b_last.reshape(1, 1, 1, -1) + x0
  return jnp.transpose(r, (0, 3, 1, 2))


if __name__ == "__main__":
  # Small shapes consistent with the module: batch=2, n_feat=4, 16x16 spatial,
  # reduction=2 (so n_feat // reduction >= 1), n_resblocks=2.
  N, C, H, W = 2, 4, 16, 16
  REDUCTION = 2
  N_RESBLOCKS = 2
  CR = C // REDUCTION

  key = jax.random.PRNGKey(0)

  def uinit(k, shape, fan_in):
    bound = 1.0 / (float(fan_in) ** 0.5)
    return jax.random.uniform(k, shape, jnp.float32, -bound, bound)

  key, kx = jax.random.split(key)
  x = jax.random.normal(kx, (N, C, H, W), dtype=jnp.float32)

  fan_conv = C * KSIZE * KSIZE
  rcab_params = []
  for _ in range(N_RESBLOCKS):
    key, *ks = jax.random.split(key, 9)
    rcab_params.append((
        uinit(ks[0], (KSIZE, KSIZE, C, C), fan_conv),   # conv1 weight (HWIO)
        uinit(ks[1], (C,), fan_conv),                   # conv1 bias
        uinit(ks[2], (KSIZE, KSIZE, C, C), fan_conv),   # conv2 weight
        uinit(ks[3], (C,), fan_conv),                   # conv2 bias
        uinit(ks[4], (C, CR), C),                       # CA 1x1 down-proj
        uinit(ks[5], (CR,), C),
        uinit(ks[6], (CR, C), CR),                      # CA 1x1 up-proj
        uinit(ks[7], (C,), CR),
    ))
  rcab_params = tuple(rcab_params)

  key, kw, kb = jax.random.split(key, 3)
  w_last = uinit(kw, (KSIZE, KSIZE, C, C), fan_conv)
  b_last = uinit(kb, (C,), fan_conv)

  out = jax.block_until_ready(
      residual_group_forward(x, rcab_params, w_last, b_last))
  ref = jax.block_until_ready(
      _reference_forward(x, rcab_params, w_last, b_last))

  assert out.shape == (N, C, H, W)
  assert jnp.allclose(out, ref, atol=1e-4, rtol=1e-4), (
      "mismatch vs reference, max abs err = %g"
      % float(jnp.max(jnp.abs(out - ref))))
  print("KERNEL_OK")
</pallas_src>

<mosaic_0001>
module attributes {stable_mosaic.version = 11 : i64} {
  func.func @kernel(%arg0: i32, %arg1: i32, %arg2: memref<1x1x4xf32, #tpu.memory_space<vmem>>, %arg3: memref<4x2xf32, #tpu.memory_space<vmem>>, %arg4: memref<1x2xf32, #tpu.memory_space<vmem>>, %arg5: memref<2x4xf32, #tpu.memory_space<vmem>>, %arg6: memref<1x4xf32, #tpu.memory_space<vmem>>, %arg7: memref<1x8x16x4xf32, #tpu.memory_space<vmem>>, %arg8: memref<1x8x16x4xf32, #tpu.memory_space<vmem>>, %arg9: memref<1x8x16x4xf32, #tpu.memory_space<vmem>>) attributes {dimension_semantics = [#tpu.dimension_semantics<parallel>, #tpu.dimension_semantics<parallel>], iteration_bounds = array<i64: 2, 2>, scalar_prefetch = 0 : i64, scratch_operands = 0 : i64, tpu.core_type = #tpu.core_type<tc>, window_params = [{transform_indices = @transform_0, window_bounds = array<i64: 1, 1, 4>}, {pipeline_mode = #tpu.pipeline_mode<synchronous>, transform_indices = @transform_1, window_bounds = array<i64: 4, 2>}, {pipeline_mode = #tpu.pipeline_mode<synchronous>, transform_indices = @transform_2, window_bounds = array<i64: 1, 2>}, {pipeline_mode = #tpu.pipeline_mode<synchronous>, transform_indices = @transform_3, window_bounds = array<i64: 2, 4>}, {pipeline_mode = #tpu.pipeline_mode<synchronous>, transform_indices = @transform_4, window_bounds = array<i64: 1, 4>}, {transform_indices = @transform_5, window_bounds = array<i64: 1, 8, 16, 4>}, {transform_indices = @transform_6, window_bounds = array<i64: 1, 8, 16, 4>}, {transform_indices = @transform_7, window_bounds = array<i64: 1, 8, 16, 4>}]} {
    %c0 = arith.constant 0 : index
    %c0_0 = arith.constant 0 : index
    %c0_1 = arith.constant 0 : index
    %0 = vector.load %arg2[%c0, %c0_0, %c0_1] : memref<1x1x4xf32, #tpu.memory_space<vmem>>, vector<1x1x4xf32>
    %1 = vector.shape_cast %0 : vector<1x1x4xf32> to vector<1x4xf32>
    %cst = arith.constant 3.906250e-03 : f32
    %2 = vector.broadcast %cst : f32 to vector<1x4xf32>
    %3 = arith.mulf %1, %2 : vector<1x4xf32>
    %c0_2 = arith.constant 0 : index
    %c0_3 = arith.constant 0 : index
    %4 = vector.load %arg3[%c0_2, %c0_3] : memref<4x2xf32, #tpu.memory_space<vmem>>, vector<4x2xf32>
    %cst_4 = arith.constant dense<0.000000e+00> : vector<1x2xf32>
    %5 = tpu.matmul %3, %4, %cst_4 {dimension_numbers = #tpu.dot_dimension_numbers<[1], [0], [0], [1], [0, 0, 1, 1], [], []>} : vector<1x4xf32>, vector<4x2xf32>, vector<1x2xf32> -> vector<1x2xf32>
    %c0_5 = arith.constant 0 : index
    %c0_6 = arith.constant 0 : index
    %6 = vector.load %arg4[%c0_5, %c0_6] : memref<1x2xf32, #tpu.memory_space<vmem>>, vector<1x2xf32>
    %7 = arith.addf %5, %6 : vector<1x2xf32>
    %cst_7 = arith.constant 0.000000e+00 : f32
    %8 = vector.broadcast %cst_7 : f32 to vector<1x2xf32>
    %9 = arith.maximumf %7, %8 : vector<1x2xf32>
    %c0_8 = arith.constant 0 : index
    %c0_9 = arith.constant 0 : index
    %10 = vector.load %arg5[%c0_8, %c0_9] : memref<2x4xf32, #tpu.memory_space<vmem>>, vector<2x4xf32>
    %cst_10 = arith.constant dense<0.000000e+00> : vector<1x4xf32>
    %11 = tpu.matmul %9, %10, %cst_10 {dimension_numbers = #tpu.dot_dimension_numbers<[1], [0], [0], [1], [0, 0, 1, 1], [], []>} : vector<1x2xf32>, vector<2x4xf32>, vector<1x4xf32> -> vector<1x4xf32>
    %c0_11 = arith.constant 0 : index
    %c0_12 = arith.constant 0 : index
    %12 = vector.load %arg6[%c0_11, %c0_12] : memref<1x4xf32, #tpu.memory_space<vmem>>, vector<1x4xf32>
    %13 = arith.addf %11, %12 : vector<1x4xf32>
    %cst_13 = arith.constant 0.000000e+00 : f32
    %14 = vector.broadcast %cst_13 : f32 to vector<1x4xf32>
    %15 = arith.subf %14, %13 : vector<1x4xf32>
    %16 = math.exp %15 : vector<1x4xf32>
    %cst_14 = arith.constant 1.000000e+00 : f32
    %17 = vector.broadcast %cst_14 : f32 to vector<1x4xf32>
    %18 = arith.addf %17, %16 : vector<1x4xf32>
    %cst_15 = arith.constant 1.000000e+00 : f32
    %19 = vector.broadcast %cst_15 : f32 to vector<1x4xf32>
    %20 = arith.divf %19, %18 : vector<1x4xf32>
    %c0_16 = arith.constant 0 : index
    %c0_17 = arith.constant 0 : index
    %c0_18 = arith.constant 0 : index
    %c0_19 = arith.constant 0 : index
    %21 = vector.load %arg7[%c0_16, %c0_17, %c0_18, %c0_19] : memref<1x8x16x4xf32, #tpu.memory_space<vmem>>, vector<1x8x16x4xf32>
    %22 = vector.shape_cast %20 : vector<1x4xf32> to vector<1x1x1x4xf32>
    %23 = vector.broadcast %22 : vector<1x1x1x4xf32> to vector<1x8x16x4xf32>
    %24 = arith.mulf %21, %23 : vector<1x8x16x4xf32>
    %c0_20 = arith.constant 0 : index
    %c0_21 = arith.constant 0 : index
    %c0_22 = arith.constant 0 : index
    %c0_23 = arith.constant 0 : index
    %25 = vector.load %arg8[%c0_20, %c0_21, %c0_22, %c0_23] : memref<1x8x16x4xf32, #tpu.memory_space<vmem>>, vector<1x8x16x4xf32>
    %26 = arith.addf %24, %25 : vector<1x8x16x4xf32>
    %c0_24 = arith.constant 0 : index
    %c0_25 = arith.constant 0 : index
    %c0_26 = arith.constant 0 : index
    %c0_27 = arith.constant 0 : index
    %27 = vector.load %arg9[%c0_24, %c0_25, %c0_26, %c0_27] : memref<1x8x16x4xf32, #tpu.memory_space<vmem>>, vector<1x8x16x4xf32>
    tpu.vector_store %arg9[%c0_24, %c0_25, %c0_26, %c0_27], %26 {strides = array<i32>} : memref<1x8x16x4xf32, #tpu.memory_space<vmem>>, vector<1x8x16x4xf32>,
    return
  }
  func.func @transform_0(%arg0: i32, %arg1: i32) -> (i32, i32, i32) {
    %c0_i32 = arith.constant 0 : i32
    %c0_i32_0 = arith.constant 0 : i32
    %c0_i32_1 = arith.constant 0 : i32
    return %arg0, %c0_i32, %c0_i32_0 : i32, i32, i32
  }
  func.func @transform_1(%arg0: i32, %arg1: i32) -> (i32, i32) {
    %c0_i32 = arith.constant 0 : i32
    %c0_i32_0 = arith.constant 0 : i32
    %c0_i32_1 = arith.constant 0 : i32
    return %c0_i32, %c0_i32_0 : i32, i32
  }
  func.func @transform_2(%arg0: i32, %arg1: i32) -> (i32, i32) {
    %c0_i32 = arith.constant 0 : i32
    %c0_i32_0 = arith.constant 0 : i32
    %c0_i32_1 = arith.constant 0 : i32
    return %c0_i32, %c0_i32_0 : i32, i32
  }
  func.func @transform_3(%arg0: i32, %arg1: i32) -> (i32, i32) {
    %c0_i32 = arith.constant 0 : i32
    %c0_i32_0 = arith.constant 0 : i32
    %c0_i32_1 = arith.constant 0 : i32
    return %c0_i32, %c0_i32_0 : i32, i32
  }
  func.func @transform_4(%arg0: i32, %arg1: i32) -> (i32, i32) {
    %c0_i32 = arith.constant 0 : i32
    %c0_i32_0 = arith.constant 0 : i32
    %c0_i32_1 = arith.constant 0 : i32
    return %c0_i32, %c0_i32_0 : i32, i32
  }
  func.func @transform_5(%arg0: i32, %arg1: i32) -> (i32, i32, i32, i32) {
    %c0_i32 = arith.constant 0 : i32
    %c0_i32_0 = arith.constant 0 : i32
    %c0_i32_1 = arith.constant 0 : i32
    return %arg0, %arg1, %c0_i32, %c0_i32_0 : i32, i32, i32, i32
  }
  func.func @transform_6(%arg0: i32, %arg1: i32) -> (i32, i32, i32, i32) {
    %c0_i32 = arith.constant 0 : i32
    %c0_i32_0 = arith.constant 0 : i32
    %c0_i32_1 = arith.constant 0 : i32
    return %arg0, %arg1, %c0_i32, %c0_i32_0 : i32, i32, i32, i32
  }
  func.func @transform_7(%arg0: i32, %arg1: i32) -> (i32, i32, i32, i32) {
    %c0_i32 = arith.constant 0 : i32
    %c0_i32_0 = arith.constant 0 : i32
    %c0_i32_1 = arith.constant 0 : i32
    return %arg0, %arg1, %c0_i32, %c0_i32_0 : i32, i32, i32, i32
  }
}

module attributes {stable_mosaic.version = 11 : i64} {
  func.func @kernel(%arg0: i32, %arg1: i32, %arg2: memref<1x8x16x4xf32, #tpu.memory_space<vmem>>, %arg3: memref<1x2x16x4xf32, #tpu.memory_space<vmem>>, %arg4: memref<1x2x16x4xf32, #tpu.memory_space<vmem>>, %arg5: memref<3x3x4x4xf32, #tpu.memory_space<vmem>>, %arg6: memref<1x4xf32, #tpu.memory_space<vmem>>, %arg7: memref<3x3x4x4xf32, #tpu.memory_space<vmem>>, %arg8: memref<1x4xf32, #tpu.memory_space<vmem>>, %arg9: memref<1x8x16x4xf32, #tpu.memory_space<vmem>>, %arg10: memref<1x1x4xf32, #tpu.memory_space<vmem>>, %arg11: memref<12x18x4xf32, #tpu.memory_space<vmem>>, %arg12: memref<10x18x4xf32, #tpu.memory_space<vmem>>) attributes {dimension_semantics = [#tpu.dimension_semantics<parallel>, #tpu.dimension_semantics<arbitrary>], iteration_bounds = array<i64: 2, 2>, scalar_prefetch = 0 : i64, scratch_operands = 2 : i64, tpu.core_type = #tpu.core_type<tc>, window_params = [{transform_indices = @transform_0, window_bounds = array<i64: 1, 8, 16, 4>}, {transform_indices = @transform_1, window_bounds = array<i64: 1, 2, 16, 4>}, {transform_indices = @transform_2, window_bounds = array<i64: 1, 2, 16, 4>}, {pipeline_mode = #tpu.pipeline_mode<synchronous>, transform_indices = @transform_3, window_bounds = array<i64: 3, 3, 4, 4>}, {pipeline_mode = #tpu.pipeline_mode<synchronous>, transform_indices = @transform_4, window_bounds = array<i64: 1, 4>}, {pipeline_mode = #tpu.pipeline_mode<synchronous>, transform_indices = @transform_5, window_bounds = array<i64: 3, 3, 4, 4>}, {pipeline_mode = #tpu.pipeline_mode<synchronous>, transform_indices = @transform_6, window_bounds = array<i64: 1, 4>}, {transform_indices = @transform_7, window_bounds = array<i64: 1, 8, 16, 4>}, {transform_indices = @transform_8, window_bounds = array<i64: 1, 1, 4>}]} {
    %cst = arith.constant 0.000000e+00 : f32
    %0 = vector.broadcast %cst : f32 to vector<12x1x4xf32>
    %c0 = arith.constant 0 : index
    %c0_0 = arith.constant 0 : index
    %c0_1 = arith.constant 0 : index
    %1 = vector.load %arg11[%c0, %c0_0, %c0_1] : memref<12x18x4xf32, #tpu.memory_space<vmem>>, vector<12x1x4xf32>
    tpu.vector_store %arg11[%c0, %c0_0, %c0_1], %0 {strides = array<i32>} : memref<12x18x4xf32, #tpu.memory_space<vmem>>, vector<12x1x4xf32>,
    %c0_2 = arith.constant 0 : index
    %c17 = arith.constant 17 : index
    %c0_3 = arith.constant 0 : index
    %2 = vector.load %arg11[%c0_2, %c17, %c0_3] : memref<12x18x4xf32, #tpu.memory_space<vmem>>, vector<12x1x4xf32>
    tpu.vector_store %arg11[%c0_2, %c17, %c0_3], %0 {strides = array<i32>} : memref<12x18x4xf32, #tpu.memory_space<vmem>>, vector<12x1x4xf32>,
    %c0_4 = arith.constant 0 : index
    %c0_5 = arith.constant 0 : index
    %c0_6 = arith.constant 0 : index
    %c0_7 = arith.constant 0 : index
    %3 = vector.load %arg3[%c0_4, %c0_5, %c0_6, %c0_7] : memref<1x2x16x4xf32, #tpu.memory_space<vmem>>, vector<1x2x16x4xf32>
    %4 = vector.shape_cast %3 : vector<1x2x16x4xf32> to vector<2x16x4xf32>
    %c0_i32 = arith.constant 0 : i32
    %5 = arith.cmpi sgt, %arg1, %c0_i32 : i32
    %6 = arith.extui %5 : i1 to i32
    %7 = arith.sitofp %6 : i32 to f32
    %8 = vector.broadcast %7 : f32 to vector<2x16x4xf32>
    %9 = arith.mulf %4, %8 : vector<2x16x4xf32>
    %c0_8 = arith.constant 0 : index
    %c0_9 = arith.constant 0 : index
    %c0_10 = arith.constant 0 : index
    %c0_11 = arith.constant 0 : index
    %10 = vector.load %arg4[%c0_8, %c0_9, %c0_10, %c0_11] : memref<1x2x16x4xf32, #tpu.memory_space<vmem>>, vector<1x2x16x4xf32>
    %11 = vector.shape_cast %10 : vector<1x2x16x4xf32> to vector<2x16x4xf32>
    %c1_i32 = arith.constant 1 : i32
    %12 = arith.cmpi slt, %arg1, %c1_i32 : i32
    %13 = arith.extui %12 : i1 to i32
    %14 = arith.sitofp %13 : i32 to f32
    %15 = vector.broadcast %14 : f32 to vector<2x16x4xf32>
    %16 = arith.mulf %11, %15 : vector<2x16x4xf32>
    %c0_12 = arith.constant 0 : index
    %c1 = arith.constant 1 : index
    %c0_13 = arith.constant 0 : index
    %17 = vector.load %arg11[%c0_12, %c1, %c0_13] : memref<12x18x4xf32, #tpu.memory_space<vmem>>, vector<2x16x4xf32>
    tpu.vector_store %arg11[%c0_12, %c1, %c0_13], %9 {strides = array<i32>} : memref<12x18x4xf32, #tpu.memory_space<vmem>>, vector<2x16x4xf32>,
    %c0_14 = arith.constant 0 : index
    %c0_15 = arith.constant 0 : index
    %c0_16 = arith.constant 0 : index
    %c0_17 = arith.constant 0 : index
    %18 = vector.load %arg2[%c0_14, %c0_15, %c0_16, %c0_17] : memref<1x8x16x4xf32, #tpu.memory_space<vmem>>, vector<1x8x16x4xf32>
    %19 = vector.shape_cast %18 : vector<1x8x16x4xf32> to vector<8x16x4xf32>
    %c2 = arith.constant 2 : index
    %c1_18 = arith.constant 1 : index
    %c0_19 = arith.constant 0 : index
    %20 = vector.load %arg11[%c2, %c1_18, %c0_19] : memref<12x18x4xf32, #tpu.memory_space<vmem>>, vector<8x16x4xf32>
    tpu.vector_store %arg11[%c2, %c1_18, %c0_19], %19 {strides = array<i32>} : memref<12x18x4xf32, #tpu.memory_space<vmem>>, vector<8x16x4xf32>,
    %c10 = arith.constant 10 : index
    %c1_20 = arith.constant 1 : index
    %c0_21 = arith.constant 0 : index
    %21 = vector.load %arg11[%c10, %c1_20, %c0_21] : memref<12x18x4xf32, #tpu.memory_space<vmem>>, vector<2x16x4xf32>
    tpu.vector_store %arg11[%c10, %c1_20, %c0_21], %16 {strides = array<i32>} : memref<12x18x4xf32, #tpu.memory_space<vmem>>, vector<2x16x4xf32>,
    %c0_22 = arith.constant 0 : index
    %c0_23 = arith.constant 0 : index
    %c0_24 = arith.constant 0 : index
    %22 = vector.load %arg11[%c0_22, %c0_23, %c0_24] : memref<12x18x4xf32, #tpu.memory_space<vmem>>, vector<12x18x4xf32>
    %23 = vector.extract_strided_slice %22 {offsets = [0, 0, 0], sizes = [10, 16, 4], strides = [1, 1, 1]} : vector<12x18x4xf32> to vector<10x16x4xf32>
    %24 = vector.shape_cast %23 : vector<10x16x4xf32> to vector<160x4xf32>
    %c0_25 = arith.constant 0 : index
    %c0_26 = arith.constant 0 : index
    %c0_27 = arith.constant 0 : index
    %c0_28 = arith.constant 0 : index
    %25 = vector.load %arg5[%c0_25, %c0_26, %c0_27, %c0_28] : memref<3x3x4x4xf32, #tpu.memory_space<vmem>>, vector<1x1x4x4xf32>
    %26 = vector.shape_cast %25 : vector<1x1x4x4xf32> to vector<4x4xf32>
    %cst_29 = arith.constant dense<0.000000e+00> : vector<160x4xf32>
    %27 = tpu.matmul %24, %26, %cst_29 {dimension_numbers = #tpu.dot_dimension_numbers<[1], [0], [0], [1], [0, 0, 1, 1], [], []>} : vector<160x4xf32>, vector<4x4xf32>, vector<160x4xf32> -> vector<160x4xf32>
    %28 = vector.extract_strided_slice %22 {offsets = [0, 1, 0], sizes = [10, 16, 4], strides = [1, 1, 1]} : vector<12x18x4xf32> to vector<10x16x4xf32>
    %29 = vector.shape_cast %28 : vector<10x16x4xf32> to vector<160x4xf32>
    %c0_30 = arith.constant 0 : index
    %c1_31 = arith.constant 1 : index
    %c0_32 = arith.constant 0 : index
    %c0_33 = arith.constant 0 : index
    %30 = vector.load %arg5[%c0_30, %c1_31, %c0_32, %c0_33] : memref<3x3x4x4xf32, #tpu.memory_space<vmem>>, vector<1x1x4x4xf32>
    %31 = vector.shape_cast %30 : vector<1x1x4x4xf32> to vector<4x4xf32>
    %cst_34 = arith.constant dense<0.000000e+00> : vector<160x4xf32>
    %32 = tpu.matmul %29, %31, %cst_34 {dimension_numbers = #tpu.dot_dimension_numbers<[1], [0], [0], [1], [0, 0, 1, 1], [], []>} : vector<160x4xf32>, vector<4x4xf32>, vector<160x4xf32> -> vector<160x4xf32>
    %33 = arith.addf %27, %32 : vector<160x4xf32>
    %34 = vector.extract_strided_slice %22 {offsets = [0, 2, 0], sizes = [10, 16, 4], strides = [1, 1, 1]} : vector<12x18x4xf32> to vector<10x16x4xf32>
    %35 = vector.shape_cast %34 : vector<10x16x4xf32> to vector<160x4xf32>
    %c0_35 = arith.constant 0 : index
    %c2_36 = arith.constant 2 : index
    %c0_37 = arith.constant 0 : index
    %c0_38 = arith.constant 0 : index
    %36 = vector.load %arg5[%c0_35, %c2_36, %c0_37, %c0_38] : memref<3x3x4x4xf32, #tpu.memory_space<vmem>>, vector<1x1x4x4xf32>
    %37 = vector.shape_cast %36 : vector<1x1x4x4xf32> to vector<4x4xf32>
    %cst_39 = arith.constant dense<0.000000e+00> : vector<160x4xf32>
    %38 = tpu.matmul %35, %37, %cst_39 {dimension_numbers = #tpu.dot_dimension_numbers<[1], [0], [0], [1], [0, 0, 1, 1], [], []>} : vector<160x4xf32>, vector<4x4xf32>, vector<160x4xf32> -> vector<160x4xf32>
    %39 = arith.addf %33, %38 : vector<160x4xf32>
    %40 = vector.extract_strided_slice %22 {offsets = [1, 0, 0], sizes = [10, 16, 4], strides = [1, 1, 1]} : vector<12x18x4xf32> to vector<10x16x4xf32>
    %41 = vector.shape_cast %40 : vector<10x16x4xf32> to vector<160x4xf32>
    %c1_40 = arith.constant 1 : index
    %c0_41 = arith.constant 0 : index
    %c0_42 = arith.constant 0 : index
    %c0_43 = arith.constant 0 : index
    %42 = vector.load %arg5[%c1_40, %c0_41, %c0_42, %c0_43] : memref<3x3x4x4xf32, #tpu.memory_space<vmem>>, vector<1x1x4x4xf32>
    %43 = vector.shape_cast %42 : vector<1x1x4x4xf32> to vector<4x4xf32>
    %cst_44 = arith.constant dense<0.000000e+00> : vector<160x4xf32>
    %44 = tpu.matmul %41, %43, %cst_44 {dimension_numbers = #tpu.dot_dimension_numbers<[1], [0], [0], [1], [0, 0, 1, 1], [], []>} : vector<160x4xf32>, vector<4x4xf32>, vector<160x4xf32> -> vector<160x4xf32>
    %45 = arith.addf %39, %44 : vector<160x4xf32>
    %46 = vector.extract_strided_slice %22 {offsets = [1, 1, 0], sizes = [10, 16, 4], strides = [1, 1, 1]} : vector<12x18x4xf32> to vector<10x16x4xf32>
    %47 = vector.shape_cast %46 : vector<10x16x4xf32> to vector<160x4xf32>
    %c1_45 = arith.constant 1 : index
    %c1_46 = arith.constant 1 : index
    %c0_47 = arith.constant 0 : index
    %c0_48 = arith.constant 0 : index
    %48 = vector.load %arg5[%c1_45, %c1_46, %c0_47, %c0_48] : memref<3x3x4x4xf32, #tpu.memory_space<vmem>>, vector<1x1x4x4xf32>
    %49 = vector.shape_cast %48 : vector<1x1x4x4xf32> to vector<4x4xf32>
    %cst_49 = arith.constant dense<0.000000e+00> : vector<160x4xf32>
    %50 = tpu.matmul %47, %49, %cst_49 {dimension_numbers = #tpu.dot_dimension_numbers<[1], [0], [0], [1], [0, 0, 1, 1], [], []>} : vector<160x4xf32>, vector<4x4xf32>, vector<160x4xf32> -> vector<160x4xf32>
    %51 = arith.addf %45, %50 : vector<160x4xf32>
    %52 = vector.extract_strided_slice %22 {offsets = [1, 2, 0], sizes = [10, 16, 4], strides = [1, 1, 1]} : vector<12x18x4xf32> to vector<10x16x4xf32>
    %53 = vector.shape_cast %52 : vector<10x16x4xf32> to vector<160x4xf32>
    %c1_50 = arith.constant 1 : index
    %c2_51 = arith.constant 2 : index
    %c0_52 = arith.constant 0 : index
    %c0_53 = arith.constant 0 : index
    %54 = vector.load %arg5[%c1_50, %c2_51, %c0_52, %c0_53] : memref<3x3x4x4xf32, #tpu.memory_space<vmem>>, vector<1x1x4x4xf32>
    %55 = vector.shape_cast %54 : vector<1x1x4x4xf32> to vector<4x4xf32>
    %cst_54 = arith.constant dense<0.000000e+00> : vector<160x4xf32>
    %56 = tpu.matmul %53, %55, %cst_54 {dimension_numbers = #tpu.dot_dimension_numbers<[1], [0], [0], [1], [0, 0, 1, 1], [], []>} : vector<160x4xf32>, vector<4x4xf32>, vector<160x4xf32> -> vector<160x4xf32>
    %57 = arith.addf %51, %56 : vector<160x4xf32>
    %58 = vector.extract_strided_slice %22 {offsets = [2, 0, 0], sizes = [10, 16, 4], strides = [1, 1, 1]} : vector<12x18x4xf32> to vector<10x16x4xf32>
    %59 = vector.shape_cast %58 : vector<10x16x4xf32> to vector<160x4xf32>
    %c2_55 = arith.constant 2 : index
    %c0_56 = arith.constant 0 : index
    %c0_57 = arith.constant 0 : index
    %c0_58 = arith.constant 0 : index
    %60 = vector.load %arg5[%c2_55, %c0_56, %c0_57, %c0_58] : memref<3x3x4x4xf32, #tpu.memory_space<vmem>>, vector<1x1x4x4xf32>
    %61 = vector.shape_cast %60 : vector<1x1x4x4xf32> to vector<4x4xf32>
    %cst_59 = arith.constant dense<0.000000e+00> : vector<160x4xf32>
    %62 = tpu.matmul %59, %61, %cst_59 {dimension_numbers = #tpu.dot_dimension_numbers<[1], [0], [0], [1], [0, 0, 1, 1], [], []>} : vector<160x4xf32>, vector<4x4xf32>, vector<160x4xf32> -> vector<160x4xf32>
    %63 = arith.addf %57, %62 : vector<160x4xf32>
    %64 = vector.extract_strided_slice %22 {offsets = [2, 1, 0], sizes = [10, 16, 4], strides = [1, 1, 1]} : vector<12x18x4xf32> to vector<10x16x4xf32>
    %65 = vector.shape_cast %64 : vector<10x16x4xf32> to vector<160x4xf32>
    %c2_60 = arith.constant 2 : index
    %c1_61 = arith.constant 1 : index
    %c0_62 = arith.constant 0 : index
    %c0_63 = arith.constant 0 : index
    %66 = vector.load %arg5[%c2_60, %c1_61, %c0_62, %c0_63] : memref<3x3x4x4xf32, #tpu.memory_space<vmem>>, vector<1x1x4x4xf32>
    %67 = vector.shape_cast %66 : vector<1x1x4x4xf32> to vector<4x4xf32>
    %cst_64 = arith.constant dense<0.000000e+00> : vector<160x4xf32>
    %68 = tpu.matmul %65, %67, %cst_64 {dimension_numbers = #tpu.dot_dimension_numbers<[1], [0], [0], [1], [0, 0, 1, 1], [], []>} : vector<160x4xf32>, vector<4x4xf32>, vector<160x4xf32> -> vector<160x4xf32>
    %69 = arith.addf %63, %68 : vector<160x4xf32>
    %70 = vector.extract_strided_slice %22 {offsets = [2, 2, 0], sizes = [10, 16, 4], strides = [1, 1, 1]} : vector<12x18x4xf32> to vector<10x16x4xf32>
    %71 = vector.shape_cast %70 : vector<10x16x4xf32> to vector<160x4xf32>
    %c2_65 = arith.constant 2 : index
    %c2_66 = arith.constant 2 : index
    %c0_67 = arith.constant 0 : index
    %c0_68 = arith.constant 0 : index
    %72 = vector.load %arg5[%c2_65, %c2_66, %c0_67, %c0_68] : memref<3x3x4x4xf32, #tpu.memory_space<vmem>>, vector<1x1x4x4xf32>
    %73 = vector.shape_cast %72 : vector<1x1x4x4xf32> to vector<4x4xf32>
    %cst_69 = arith.constant dense<0.000000e+00> : vector<160x4xf32>
    %74 = tpu.matmul %71, %73, %cst_69 {dimension_numbers = #tpu.dot_dimension_numbers<[1], [0], [0], [1], [0, 0, 1, 1], [], []>} : vector<160x4xf32>, vector<4x4xf32>, vector<160x4xf32> -> vector<160x4xf32>
    %75 = arith.addf %69, %74 : vector<160x4xf32>
    %c0_70 = arith.constant 0 : index
    %c0_71 = arith.constant 0 : index
    %76 = vector.load %arg6[%c0_70, %c0_71] : memref<1x4xf32, #tpu.memory_space<vmem>>, vector<1x4xf32>
    %77 = vector.broadcast %76 : vector<1x4xf32> to vector<160x4xf32>
    %78 = arith.addf %75, %77 : vector<160x4xf32>
    %cst_72 = arith.constant 0.000000e+00 : f32
    %79 = vector.broadcast %cst_72 : f32 to vector<160x4xf32>
    %80 = arith.maximumf %78, %79 : vector<160x4xf32>
    %81 = vector.shape_cast %80 : vector<160x4xf32> to vector<10x16x4xf32>
    %c8_i32 = arith.constant 8 : i32
    %82 = arith.muli %arg1, %c8_i32 : i32
    %c1_i32_73 = arith.constant 1 : i32
    %83 = arith.subi %82, %c1_i32_73 : i32
    %84 = tpu.iota {dimensions = array<i32: 0>} : vector<10x1x1xi32>
    %85 = vector.broadcast %83 : i32 to vector<10x1x1xi32>
    %86 = arith.addi %85, %84 : vector<10x1x1xi32>
    %c0_i32_74 = arith.constant 0 : i32
    %87 = vector.broadcast %c0_i32_74 : i32 to vector<10x1x1xi32>
    %88 = arith.cmpi sge, %86, %87 : vector<10x1x1xi32>
    %c16_i32 = arith.constant 16 : i32
    %89 = vector.broadcast %c16_i32 : i32 to vector<10x1x1xi32>
    %90 = arith.cmpi slt, %86, %89 : vector<10x1x1xi32>
    %91 = arith.andi %88, %90 : vector<10x1x1xi1>
    %92 = arith.extui %91 : vector<10x1x1xi1> to vector<10x1x1xi32>
    %93 = arith.sitofp %92 : vector<10x1x1xi32> to vector<10x1x1xf32>
    %94 = vector.broadcast %93 : vector<10x1x1xf32> to vector<10x16x4xf32>
    %95 = arith.mulf %81, %94 : vector<10x16x4xf32>
    %cst_75 = arith.constant 0.000000e+00 : f32
    %96 = vector.broadcast %cst_75 : f32 to vector<10x1x4xf32>
    %c0_76 = arith.constant 0 : index
    %c0_77 = arith.constant 0 : index
    %c0_78 = arith.constant 0 : index
    %97 = vector.load %arg12[%c0_76, %c0_77, %c0_78] : memref<10x18x4xf32, #tpu.memory_space<vmem>>, vector<10x1x4xf32>
    tpu.vector_store %arg12[%c0_76, %c0_77, %c0_78], %96 {strides = array<i32>} : memref<10x18x4xf32, #tpu.memory_space<vmem>>, vector<10x1x4xf32>,
    %c0_79 = arith.constant 0 : index
    %c17_80 = arith.constant 17 : index
    %c0_81 = arith.constant 0 : index
    %98 = vector.load %arg12[%c0_79, %c17_80, %c0_81] : memref<10x18x4xf32, #tpu.memory_space<vmem>>, vector<10x1x4xf32>
    tpu.vector_store %arg12[%c0_79, %c17_80, %c0_81], %96 {strides = array<i32>} : memref<10x18x4xf32, #tpu.memory_space<vmem>>, vector<10x1x4xf32>,
    %c0_82 = arith.constant 0 : index
    %c1_83 = arith.constant 1 : index
    %c0_84 = arith.constant 0 : index
    %99 = vector.load %arg12[%c0_82, %c1_83, %c0_84] : memref<10x18x4xf32, #tpu.memory_space<vmem>>, vector<10x16x4xf32>
    tpu.vector_store %arg12[%c0_82, %c1_83, %c0_84], %95 {strides = array<i32>} : memref<10x18x4xf32, #tpu.memory_space<vmem>>, vector<10x16x4xf32>,
    %c0_85 = arith.constant 0 : index
    %c0_86 = arith.constant 0 : index
    %c0_87 = arith.constant 0 : index
    %100 = vector.load %arg12[%c0_85, %c0_86, %c0_87] : memref<10x18x4xf32, #tpu.memory_space<vmem>>, vector<10x18x4xf32>
    %101 = vector.extract_strided_slice %100 {offsets = [0, 0, 0], sizes = [8, 16, 4], strides = [1, 1, 1]} : vector<10x18x4xf32> to vector<8x16x4xf32>
    %102 = vector.shape_cast %101 : vector<8x16x4xf32> to vector<128x4xf32>
    %c0_88 = arith.constant 0 : index
    %c0_89 = arith.constant 0 : index
    %c0_90 = arith.constant 0 : index
    %c0_91 = arith.constant 0 : index
    %103 = vector.load %arg7[%c0_88, %c0_89, %c0_90, %c0_91] : memref<3x3x4x4xf32, #tpu.memory_space<vmem>>, vector<1x1x4x4xf32>
    %104 = vector.shape_cast %103 : vector<1x1x4x4xf32> to vector<4x4xf32>
    %cst_92 = arith.constant dense<0.000000e+00> : vector<128x4xf32>
    %105 = tpu.matmul %102, %104, %cst_92 {dimension_numbers = #tpu.dot_dimension_numbers<[1], [0], [0], [1], [0, 0, 1, 1], [], []>} : vector<128x4xf32>, vector<4x4xf32>, vector<128x4xf32> -> vector<128x4xf32>
    %106 = vector.extract_strided_slice %100 {offsets = [0, 1, 0], sizes = [8, 16, 4], strides = [1, 1, 1]} : vector<10x18x4xf32> to vector<8x16x4xf32>
    %107 = vector.shape_cast %106 : vector<8x16x4xf32> to vector<128x4xf32>
    %c0_93 = arith.constant 0 : index
    %c1_94 = arith.constant 1 : index
    %c0_95 = arith.constant 0 : index
    %c0_96 = arith.constant 0 : index
    %108 = vector.load %arg7[%c0_93, %c1_94, %c0_95, %c0_96] : memref<3x3x4x4xf32, #tpu.memory_space<vmem>>, vector<1x1x4x4xf32>
    %109 = vector.shape_cast %108 : vector<1x1x4x4xf32> to vector<4x4xf32>
    %cst_97 = arith.constant dense<0.000000e+00> : vector<128x4xf32>
    %110 = tpu.matmul %107, %109, %cst_97 {dimension_numbers = #tpu.dot_dimension_numbers<[1], [0], [0], [1], [0, 0, 1, 1], [], []>} : vector<128x4xf32>, vector<4x4xf32>, vector<128x4xf32> -> vector<128x4xf32>
    %111 = arith.addf %105, %110 : vector<128x4xf32>
    %112 = vector.extract_strided_slice %100 {offsets = [0, 2, 0], sizes = [8, 16, 4], strides = [1, 1, 1]} : vector<10x18x4xf32> to vector<8x16x4xf32>
    %113 = vector.shape_cast %112 : vector<8x16x4xf32> to vector<128x4xf32>
    %c0_98 = arith.constant 0 : index
    %c2_99 = arith.constant 2 : index
    %c0_100 = arith.constant 0 : index
    %c0_101 = arith.constant 0 : index
    %114 = vector.load %arg7[%c0_98, %c2_99, %c0_100, %c0_101] : memref<3x3x4x4xf32, #tpu.memory_space<vmem>>, vector<1x1x4x4xf32>
    %115 = vector.shape_cast %114 : vector<1x1x4x4xf32> to vector<4x4xf32>
    %cst_102 = arith.constant dense<0.000000e+00> : vector<128x4xf32>
    %116 = tpu.matmul %113, %115, %cst_102 {dimension_numbers = #tpu.dot_dimension_numbers<[1], [0], [0], [1], [0, 0, 1, 1], [], []>} : vector<128x4xf32>, vector<4x4xf32>, vector<128x4xf32> -> vector<128x4xf32>
    %117 = arith.addf %111, %116 : vector<128x4xf32>
    %118 = vector.extract_strided_slice %100 {offsets = [1, 0, 0], sizes = [8, 16, 4], strides = [1, 1, 1]} : vector<10x18x4xf32> to vector<8x16x4xf32>
    %119 = vector.shape_cast %118 : vector<8x16x4xf32> to vector<128x4xf32>
    %c1_103 = arith.constant 1 : index
    %c0_104 = arith.constant 0 : index
    %c0_105 = arith.constant 0 : index
    %c0_106 = arith.constant 0 : index
    %120 = vector.load %arg7[%c1_103, %c0_104, %c0_105, %c0_106] : memref<3x3x4x4xf32, #tpu.memory_space<vmem>>, vector<1x1x4x4xf32>
    %121 = vector.shape_cast %120 : vector<1x1x4x4xf32> to vector<4x4xf32>
    %cst_107 = arith.constant dense<0.000000e+00> : vector<128x4xf32>
    %122 = tpu.matmul %119, %121, %cst_107 {dimension_numbers = #tpu.dot_dimension_numbers<[1], [0], [0], [1], [0, 0, 1, 1], [], []>} : vector<128x4xf32>, vector<4x4xf32>, vector<128x4xf32> -> vector<128x4xf32>
    %123 = arith.addf %117, %122 : vector<128x4xf32>
    %124 = vector.extract_strided_slice %100 {offsets = [1, 1, 0], sizes = [8, 16, 4], strides = [1, 1, 1]} : vector<10x18x4xf32> to vector<8x16x4xf32>
    %125 = vector.shape_cast %124 : vector<8x16x4xf32> to vector<128x4xf32>
    %c1_108 = arith.constant 1 : index
    %c1_109 = arith.constant 1 : index
    %c0_110 = arith.constant 0 : index
    %c0_111 = arith.constant 0 : index
    %126 = vector.load %arg7[%c1_108, %c1_109, %c0_110, %c0_111] : memref<3x3x4x4xf32, #tpu.memory_space<vmem>>, vector<1x1x4x4xf32>
    %127 = vector.shape_cast %126 : vector<1x1x4x4xf32> to vector<4x4xf32>
    %cst_112 = arith.constant dense<0.000000e+00> : vector<128x4xf32>
    %128 = tpu.matmul %125, %127, %cst_112 {dimension_numbers = #tpu.dot_dimension_numbers<[1], [0], [0], [1], [0, 0, 1, 1], [], []>} : vector<128x4xf32>, vector<4x4xf32>, vector<128x4xf32> -> vector<128x4xf32>
    %129 = arith.addf %123, %128 : vector<128x4xf32>
    %130 = vector.extract_strided_slice %100 {offsets = [1, 2, 0], sizes = [8, 16, 4], strides = [1, 1, 1]} : vector<10x18x4xf32> to vector<8x16x4xf32>
    %131 = vector.shape_cast %130 : vector<8x16x4xf32> to vector<128x4xf32>
    %c1_113 = arith.constant 1 : index
    %c2_114 = arith.constant 2 : index
    %c0_115 = arith.constant 0 : index
    %c0_116 = arith.constant 0 : index
    %132 = vector.load %arg7[%c1_113, %c2_114, %c0_115, %c0_116] : memref<3x3x4x4xf32, #tpu.memory_space<vmem>>, vector<1x1x4x4xf32>
    %133 = vector.shape_cast %132 : vector<1x1x4x4xf32> to vector<4x4xf32>
    %cst_117 = arith.constant dense<0.000000e+00> : vector<128x4xf32>
    %134 = tpu.matmul %131, %133, %cst_117 {dimension_numbers = #tpu.dot_dimension_numbers<[1], [0], [0], [1], [0, 0, 1, 1], [], []>} : vector<128x4xf32>, vector<4x4xf32>, vector<128x4xf32> -> vector<128x4xf32>
    %135 = arith.addf %129, %134 : vector<128x4xf32>
    %136 = vector.extract_strided_slice %100 {offsets = [2, 0, 0], sizes = [8, 16, 4], strides = [1, 1, 1]} : vector<10x18x4xf32> to vector<8x16x4xf32>
    %137 = vector.shape_cast %136 : vector<8x16x4xf32> to vector<128x4xf32>
    %c2_118 = arith.constant 2 : index
    %c0_119 = arith.constant 0 : index
    %c0_120 = arith.constant 0 : index
    %c0_121 = arith.constant 0 : index
    %138 = vector.load %arg7[%c2_118, %c0_119, %c0_120, %c0_121] : memref<3x3x4x4xf32, #tpu.memory_space<vmem>>, vector<1x1x4x4xf32>
    %139 = vector.shape_cast %138 : vector<1x1x4x4xf32> to vector<4x4xf32>
    %cst_122 = arith.constant dense<0.000000e+00> : vector<128x4xf32>
    %140 = tpu.matmul %137, %139, %cst_122 {dimension_numbers = #tpu.dot_dimension_numbers<[1], [0], [0], [1], [0, 0, 1, 1], [], []>} : vector<128x4xf32>, vector<4x4xf32>, vector<128x4xf32> -> vector<128x4xf32>
    %141 = arith.addf %135, %140 : vector<128x4xf32>
    %142 = vector.extract_strided_slice %100 {offsets = [2, 1, 0], sizes = [8, 16, 4], strides = [1, 1, 1]} : vector<10x18x4xf32> to vector<8x16x4xf32>
    %143 = vector.shape_cast %142 : vector<8x16x4xf32> to vector<128x4xf32>
    %c2_123 = arith.constant 2 : index
    %c1_124 = arith.constant 1 : index
    %c0_125 = arith.constant 0 : index
    %c0_126 = arith.constant 0 : index
    %144 = vector.load %arg7[%c2_123, %c1_124, %c0_125, %c0_126] : memref<3x3x4x4xf32, #tpu.memory_space<vmem>>, vector<1x1x4x4xf32>
    %145 = vector.shape_cast %144 : vector<1x1x4x4xf32> to vector<4x4xf32>
    %cst_127 = arith.constant dense<0.000000e+00> : vector<128x4xf32>
    %146 = tpu.matmul %143, %145, %cst_127 {dimension_numbers = #tpu.dot_dimension_numbers<[1], [0], [0], [1], [0, 0, 1, 1], [], []>} : vector<128x4xf32>, vector<4x4xf32>, vector<128x4xf32> -> vector<128x4xf32>
    %147 = arith.addf %141, %146 : vector<128x4xf32>
    %148 = vector.extract_strided_slice %100 {offsets = [2, 2, 0], sizes = [8, 16, 4], strides = [1, 1, 1]} : vector<10x18x4xf32> to vector<8x16x4xf32>
    %149 = vector.shape_cast %148 : vector<8x16x4xf32> to vector<128x4xf32>
    %c2_128 = arith.constant 2 : index
    %c2_129 = arith.constant 2 : index
    %c0_130 = arith.constant 0 : index
    %c0_131 = arith.constant 0 : index
    %150 = vector.load %arg7[%c2_128, %c2_129, %c0_130, %c0_131] : memref<3x3x4x4xf32, #tpu.memory_space<vmem>>, vector<1x1x4x4xf32>
    %151 = vector.shape_cast %150 : vector<1x1x4x4xf32> to vector<4x4xf32>
    %cst_132 = arith.constant dense<0.000000e+00> : vector<128x4xf32>
    %152 = tpu.matmul %149, %151, %cst_132 {dimension_numbers = #tpu.dot_dimension_numbers<[1], [0], [0], [1], [0, 0, 1, 1], [], []>} : vector<128x4xf32>, vector<4x4xf32>, vector<128x4xf32> -> vector<128x4xf32>
    %153 = arith.addf %147, %152 : vector<128x4xf32>
    %c0_133 = arith.constant 0 : index
    %c0_134 = arith.constant 0 : index
    %154 = vector.load %arg8[%c0_133, %c0_134] : memref<1x4xf32, #tpu.memory_space<vmem>>, vector<1x4xf32>
    %155 = vector.broadcast %154 : vector<1x4xf32> to vector<128x4xf32>
    %156 = arith.addf %153, %155 : vector<128x4xf32>
    %157 = vector.shape_cast %156 : vector<128x4xf32> to vector<1x8x16x4xf32>
    %c0_135 = arith.constant 0 : index
    %c0_136 = arith.constant 0 : index
    %c0_137 = arith.constant 0 : index
    %c0_138 = arith.constant 0 : index
    %158 = vector.load %arg9[%c0_135, %c0_136, %c0_137, %c0_138] : memref<1x8x16x4xf32, #tpu.memory_space<vmem>>, vector<1x8x16x4xf32>
    tpu.vector_store %arg9[%c0_135, %c0_136, %c0_137, %c0_138], %157 {strides = array<i32>} : memref<1x8x16x4xf32, #tpu.memory_space<vmem>>, vector<1x8x16x4xf32>,
    %cst_139 = arith.constant dense<0.000000e+00> : vector<4xf32>
    %159 = vector.multi_reduction <add>, %156, %cst_139 [0] : vector<128x4xf32> to vector<4xf32>
    %160 = vector.shape_cast %159 : vector<4xf32> to vector<1x4xf32>
    %161 = vector.shape_cast %160 : vector<1x4xf32> to vector<1x1x4xf32>
    %c0_i32_140 = arith.constant 0 : i32
    %162 = arith.cmpi eq, %arg1, %c0_i32_140 : i32
    %163 = arith.extui %162 : i1 to i32
    %c0_i32_141 = arith.constant 0 : i32
    %164 = arith.cmpi ne, %163, %c0_i32_141 : i32
    scf.if %164 {
      %c0_144 = arith.constant 0 : index
      %c0_145 = arith.constant 0 : index
      %c0_146 = arith.constant 0 : index
      %168 = vector.load %arg10[%c0_144, %c0_145, %c0_146] : memref<1x1x4xf32, #tpu.memory_space<vmem>>, vector<1x1x4xf32>
      tpu.vector_store %arg10[%c0_144, %c0_145, %c0_146], %161 {strides = array<i32>} : memref<1x1x4xf32, #tpu.memory_space<vmem>>, vector<1x1x4xf32>,
    } else {
    }
    %c0_i32_142 = arith.constant 0 : i32
    %165 = arith.cmpi sgt, %arg1, %c0_i32_142 : i32
    %166 = arith.extui %165 : i1 to i32
    %c0_i32_143 = arith.constant 0 : i32
    %167 = arith.cmpi ne, %166, %c0_i32_143 : i32
    scf.if %167 {
      %c0_144 = arith.constant 0 : index
      %c0_145 = arith.constant 0 : index
      %c0_146 = arith.constant 0 : index
      %168 = vector.load %arg10[%c0_144, %c0_145, %c0_146] : memref<1x1x4xf32, #tpu.memory_space<vmem>>, vector<1x1x4xf32>
      %169 = arith.addf %168, %161 : vector<1x1x4xf32>
      %c0_147 = arith.constant 0 : index
      %c0_148 = arith.constant 0 : index
      %c0_149 = arith.constant 0 : index
      %170 = vector.load %arg10[%c0_147, %c0_148, %c0_149] : memref<1x1x4xf32, #tpu.memory_space<vmem>>, vector<1x1x4xf32>
      tpu.vector_store %arg10[%c0_147, %c0_148, %c0_149], %169 {strides = array<i32>} : memref<1x1x4xf32, #tpu.memory_space<vmem>>, vector<1x1x4xf32>,
    } else {
    }
    return
  }
  func.func @transform_0(%arg0: i32, %arg1: i32) -> (i32, i32, i32, i32) {
    %c0_i32 = arith.constant 0 : i32
    %c0_i32_0 = arith.constant 0 : i32
    %c0_i32_1 = arith.constant 0 : i32
    return %arg0, %arg1, %c0_i32, %c0_i32_0 : i32, i32, i32, i32
  }
  func.func @transform_1(%arg0: i32, %arg1: i32) -> (i32, i32, i32, i32) {
    %c4_i32 = arith.constant 4 : i32
    %0 = arith.muli %arg1, %c4_i32 : i32
    %c1_i32 = arith.constant 1 : i32
    %1 = arith.subi %0, %c1_i32 : i32
    %c0_i32 = arith.constant 0 : i32
    %2 = arith.maxsi %1, %c0_i32 : i32
    %c0_i32_0 = arith.constant 0 : i32
    %c0_i32_1 = arith.constant 0 : i32
    %c0_i32_2 = arith.constant 0 : i32
    return %arg0, %2, %c0_i32_0, %c0_i32_1 : i32, i32, i32, i32
  }
  func.func @transform_2(%arg0: i32, %arg1: i32) -> (i32, i32, i32, i32) {
    %c1_i32 = arith.constant 1 : i32
    %0 = arith.addi %arg1, %c1_i32 : i32
    %c4_i32 = arith.constant 4 : i32
    %1 = arith.muli %0, %c4_i32 : i32
    %c7_i32 = arith.constant 7 : i32
    %2 = arith.minsi %1, %c7_i32 : i32
    %c0_i32 = arith.constant 0 : i32
    %c0_i32_0 = arith.constant 0 : i32
    %c0_i32_1 = arith.constant 0 : i32
    return %arg0, %2, %c0_i32, %c0_i32_0 : i32, i32, i32, i32
  }
  func.func @transform_3(%arg0: i32, %arg1: i32) -> (i32, i32, i32, i32) {
    %c0_i32 = arith.constant 0 : i32
    %c0_i32_0 = arith.constant 0 : i32
    %c0_i32_1 = arith.constant 0 : i32
    %c0_i32_2 = arith.constant 0 : i32
    %c0_i32_3 = arith.constant 0 : i32
    return %c0_i32, %c0_i32_0, %c0_i32_1, %c0_i32_2 : i32, i32, i32, i32
  }
  func.func @transform_4(%arg0: i32, %arg1: i32) -> (i32, i32) {
    %c0_i32 = arith.constant 0 : i32
    %c0_i32_0 = arith.constant 0 : i32
    %c0_i32_1 = arith.constant 0 : i32
    return %c0_i32, %c0_i32_0 : i32, i32
  }
  func.func @transform_5(%arg0: i32, %arg1: i32) -> (i32, i32, i32, i32) {
    %c0_i32 = arith.constant 0 : i32
    %c0_i32_0 = arith.constant 0 : i32
    %c0_i32_1 = arith.constant 0 : i32
    %c0_i32_2 = arith.constant 0 : i32
    %c0_i32_3 = arith.constant 0 : i32
    return %c0_i32, %c0_i32_0, %c0_i32_1, %c0_i32_2 : i32, i32, i32, i32
  }
  func.func @transform_6(%arg0: i32, %arg1: i32) -> (i32, i32) {
    %c0_i32 = arith.constant 0 : i32
    %c0_i32_0 = arith.constant 0 : i32
    %c0_i32_1 = arith.constant 0 : i32
    return %c0_i32, %c0_i32_0 : i32, i32
  }
  func.func @transform_7(%arg0: i32, %arg1: i32) -> (i32, i32, i32, i32) {
    %c0_i32 = arith.constant 0 : i32
    %c0_i32_0 = arith.constant 0 : i32
    %c0_i32_1 = arith.constant 0 : i32
    return %arg0, %arg1, %c0_i32, %c0_i32_0 : i32, i32, i32, i32
  }
  func.func @transform_8(%arg0: i32, %arg1: i32) -> (i32, i32, i32) {
    %c0_i32 = arith.constant 0 : i32
    %c0_i32_0 = arith.constant 0 : i32
    %c0_i32_1 = arith.constant 0 : i32
    return %arg0, %c0_i32, %c0_i32_0 : i32, i32, i32
  }
}

module attributes {stable_mosaic.version = 11 : i64} {
  func.func @kernel(%arg0: i32, %arg1: i32, %arg2: memref<1x8x16x4xf32, #tpu.memory_space<vmem>>, %arg3: memref<1x1x16x4xf32, #tpu.memory_space<vmem>>, %arg4: memref<1x1x16x4xf32, #tpu.memory_space<vmem>>, %arg5: memref<1x8x16x4xf32, #tpu.memory_space<vmem>>, %arg6: memref<3x3x4x4xf32, #tpu.memory_space<vmem>>, %arg7: memref<1x4xf32, #tpu.memory_space<vmem>>, %arg8: memref<1x8x16x4xf32, #tpu.memory_space<vmem>>, %arg9: memref<10x18x4xf32, #tpu.memory_space<vmem>>) attributes {dimension_semantics = [#tpu.dimension_semantics<parallel>, #tpu.dimension_semantics<parallel>], iteration_bounds = array<i64: 2, 2>, scalar_prefetch = 0 : i64, scratch_operands = 1 : i64, tpu.core_type = #tpu.core_type<tc>, window_params = [{transform_indices = @transform_0, window_bounds = array<i64: 1, 8, 16, 4>}, {transform_indices = @transform_1, window_bounds = array<i64: 1, 1, 16, 4>}, {transform_indices = @transform_2, window_bounds = array<i64: 1, 1, 16, 4>}, {transform_indices = @transform_3, window_bounds = array<i64: 1, 8, 16, 4>}, {pipeline_mode = #tpu.pipeline_mode<synchronous>, transform_indices = @transform_4, window_bounds = array<i64: 3, 3, 4, 4>}, {pipeline_mode = #tpu.pipeline_mode<synchronous>, transform_indices = @transform_5, window_bounds = array<i64: 1, 4>}, {transform_indices = @transform_6, window_bounds = array<i64: 1, 8, 16, 4>}]} {
    %cst = arith.constant 0.000000e+00 : f32
    %0 = vector.broadcast %cst : f32 to vector<10x1x4xf32>
    %c0 = arith.constant 0 : index
    %c0_0 = arith.constant 0 : index
    %c0_1 = arith.constant 0 : index
    %1 = vector.load %arg9[%c0, %c0_0, %c0_1] : memref<10x18x4xf32, #tpu.memory_space<vmem>>, vector<10x1x4xf32>
    tpu.vector_store %arg9[%c0, %c0_0, %c0_1], %0 {strides = array<i32>} : memref<10x18x4xf32, #tpu.memory_space<vmem>>, vector<10x1x4xf32>,
    %c0_2 = arith.constant 0 : index
    %c17 = arith.constant 17 : index
    %c0_3 = arith.constant 0 : index
    %2 = vector.load %arg9[%c0_2, %c17, %c0_3] : memref<10x18x4xf32, #tpu.memory_space<vmem>>, vector<10x1x4xf32>
    tpu.vector_store %arg9[%c0_2, %c17, %c0_3], %0 {strides = array<i32>} : memref<10x18x4xf32, #tpu.memory_space<vmem>>, vector<10x1x4xf32>,
    %c0_4 = arith.constant 0 : index
    %c0_5 = arith.constant 0 : index
    %c0_6 = arith.constant 0 : index
    %c0_7 = arith.constant 0 : index
    %3 = vector.load %arg3[%c0_4, %c0_5, %c0_6, %c0_7] : memref<1x1x16x4xf32, #tpu.memory_space<vmem>>, vector<1x1x16x4xf32>
    %4 = vector.shape_cast %3 : vector<1x1x16x4xf32> to vector<1x16x4xf32>
    %c0_i32 = arith.constant 0 : i32
    %5 = arith.cmpi sgt, %arg1, %c0_i32 : i32
    %6 = arith.extui %5 : i1 to i32
    %7 = arith.sitofp %6 : i32 to f32
    %8 = vector.broadcast %7 : f32 to vector<1x16x4xf32>
    %9 = arith.mulf %4, %8 : vector<1x16x4xf32>
    %c0_8 = arith.constant 0 : index
    %c0_9 = arith.constant 0 : index
    %c0_10 = arith.constant 0 : index
    %c0_11 = arith.constant 0 : index
    %10 = vector.load %arg4[%c0_8, %c0_9, %c0_10, %c0_11] : memref<1x1x16x4xf32, #tpu.memory_space<vmem>>, vector<1x1x16x4xf32>
    %11 = vector.shape_cast %10 : vector<1x1x16x4xf32> to vector<1x16x4xf32>
    %c1_i32 = arith.constant 1 : i32
    %12 = arith.cmpi slt, %arg1, %c1_i32 : i32
    %13 = arith.extui %12 : i1 to i32
    %14 = arith.sitofp %13 : i32 to f32
    %15 = vector.broadcast %14 : f32 to vector<1x16x4xf32>
    %16 = arith.mulf %11, %15 : vector<1x16x4xf32>
    %c0_12 = arith.constant 0 : index
    %c1 = arith.constant 1 : index
    %c0_13 = arith.constant 0 : index
    %17 = vector.load %arg9[%c0_12, %c1, %c0_13] : memref<10x18x4xf32, #tpu.memory_space<vmem>>, vector<1x16x4xf32>
    tpu.vector_store %arg9[%c0_12, %c1, %c0_13], %9 {strides = array<i32>} : memref<10x18x4xf32, #tpu.memory_space<vmem>>, vector<1x16x4xf32>,
    %c0_14 = arith.constant 0 : index
    %c0_15 = arith.constant 0 : index
    %c0_16 = arith.constant 0 : index
    %c0_17 = arith.constant 0 : index
    %18 = vector.load %arg2[%c0_14, %c0_15, %c0_16, %c0_17] : memref<1x8x16x4xf32, #tpu.memory_space<vmem>>, vector<1x8x16x4xf32>
    %19 = vector.shape_cast %18 : vector<1x8x16x4xf32> to vector<8x16x4xf32>
    %c1_18 = arith.constant 1 : index
    %c1_19 = arith.constant 1 : index
    %c0_20 = arith.constant 0 : index
    %20 = vector.load %arg9[%c1_18, %c1_19, %c0_20] : memref<10x18x4xf32, #tpu.memory_space<vmem>>, vector<8x16x4xf32>
    tpu.vector_store %arg9[%c1_18, %c1_19, %c0_20], %19 {strides = array<i32>} : memref<10x18x4xf32, #tpu.memory_space<vmem>>, vector<8x16x4xf32>,
    %c9 = arith.constant 9 : index
    %c1_21 = arith.constant 1 : index
    %c0_22 = arith.constant 0 : index
    %21 = vector.load %arg9[%c9, %c1_21, %c0_22] : memref<10x18x4xf32, #tpu.memory_space<vmem>>, vector<1x16x4xf32>
    tpu.vector_store %arg9[%c9, %c1_21, %c0_22], %16 {strides = array<i32>} : memref<10x18x4xf32, #tpu.memory_space<vmem>>, vector<1x16x4xf32>,
    %c0_23 = arith.constant 0 : index
    %c0_24 = arith.constant 0 : index
    %c0_25 = arith.constant 0 : index
    %22 = vector.load %arg9[%c0_23, %c0_24, %c0_25] : memref<10x18x4xf32, #tpu.memory_space<vmem>>, vector<10x18x4xf32>
    %23 = vector.extract_strided_slice %22 {offsets = [0, 0, 0], sizes = [8, 16, 4], strides = [1, 1, 1]} : vector<10x18x4xf32> to vector<8x16x4xf32>
    %24 = vector.shape_cast %23 : vector<8x16x4xf32> to vector<128x4xf32>
    %c0_26 = arith.constant 0 : index
    %c0_27 = arith.constant 0 : index
    %c0_28 = arith.constant 0 : index
    %c0_29 = arith.constant 0 : index
    %25 = vector.load %arg6[%c0_26, %c0_27, %c0_28, %c0_29] : memref<3x3x4x4xf32, #tpu.memory_space<vmem>>, vector<1x1x4x4xf32>
    %26 = vector.shape_cast %25 : vector<1x1x4x4xf32> to vector<4x4xf32>
    %cst_30 = arith.constant dense<0.000000e+00> : vector<128x4xf32>
    %27 = tpu.matmul %24, %26, %cst_30 {dimension_numbers = #tpu.dot_dimension_numbers<[1], [0], [0], [1], [0, 0, 1, 1], [], []>} : vector<128x4xf32>, vector<4x4xf32>, vector<128x4xf32> -> vector<128x4xf32>
    %28 = vector.extract_strided_slice %22 {offsets = [0, 1, 0], sizes = [8, 16, 4], strides = [1, 1, 1]} : vector<10x18x4xf32> to vector<8x16x4xf32>
    %29 = vector.shape_cast %28 : vector<8x16x4xf32> to vector<128x4xf32>
    %c0_31 = arith.constant 0 : index
    %c1_32 = arith.constant 1 : index
    %c0_33 = arith.constant 0 : index
    %c0_34 = arith.constant 0 : index
    %30 = vector.load %arg6[%c0_31, %c1_32, %c0_33, %c0_34] : memref<3x3x4x4xf32, #tpu.memory_space<vmem>>, vector<1x1x4x4xf32>
    %31 = vector.shape_cast %30 : vector<1x1x4x4xf32> to vector<4x4xf32>
    %cst_35 = arith.constant dense<0.000000e+00> : vector<128x4xf32>
    %32 = tpu.matmul %29, %31, %cst_35 {dimension_numbers = #tpu.dot_dimension_numbers<[1], [0], [0], [1], [0, 0, 1, 1], [], []>} : vector<128x4xf32>, vector<4x4xf32>, vector<128x4xf32> -> vector<128x4xf32>
    %33 = arith.addf %27, %32 : vector<128x4xf32>
    %34 = vector.extract_strided_slice %22 {offsets = [0, 2, 0], sizes = [8, 16, 4], strides = [1, 1, 1]} : vector<10x18x4xf32> to vector<8x16x4xf32>
    %35 = vector.shape_cast %34 : vector<8x16x4xf32> to vector<128x4xf32>
    %c0_36 = arith.constant 0 : index
    %c2 = arith.constant 2 : index
    %c0_37 = arith.constant 0 : index
    %c0_38 = arith.constant 0 : index
    %36 = vector.load %arg6[%c0_36, %c2, %c0_37, %c0_38] : memref<3x3x4x4xf32, #tpu.memory_space<vmem>>, vector<1x1x4x4xf32>
    %37 = vector.shape_cast %36 : vector<1x1x4x4xf32> to vector<4x4xf32>
    %cst_39 = arith.constant dense<0.000000e+00> : vector<128x4xf32>
    %38 = tpu.matmul %35, %37, %cst_39 {dimension_numbers = #tpu.dot_dimension_numbers<[1], [0], [0], [1], [0, 0, 1, 1], [], []>} : vector<128x4xf32>, vector<4x4xf32>, vector<128x4xf32> -> vector<128x4xf32>
    %39 = arith.addf %33, %38 : vector<128x4xf32>
    %40 = vector.extract_strided_slice %22 {offsets = [1, 0, 0], sizes = [8, 16, 4], strides = [1, 1, 1]} : vector<10x18x4xf32> to vector<8x16x4xf32>
    %41 = vector.shape_cast %40 : vector<8x16x4xf32> to vector<128x4xf32>
    %c1_40 = arith.constant 1 : index
    %c0_41 = arith.constant 0 : index
    %c0_42 = arith.constant 0 : index
    %c0_43 = arith.constant 0 : index
    %42 = vector.load %arg6[%c1_40, %c0_41, %c0_42, %c0_43] : memref<3x3x4x4xf32, #tpu.memory_space<vmem>>, vector<1x1x4x4xf32>
    %43 = vector.shape_cast %42 : vector<1x1x4x4xf32> to vector<4x4xf32>
    %cst_44 = arith.constant dense<0.000000e+00> : vector<128x4xf32>
    %44 = tpu.matmul %41, %43, %cst_44 {dimension_numbers = #tpu.dot_dimension_numbers<[1], [0], [0], [1], [0, 0, 1, 1], [], []>} : vector<128x4xf32>, vector<4x4xf32>, vector<128x4xf32> -> vector<128x4xf32>
    %45 = arith.addf %39, %44 : vector<128x4xf32>
    %46 = vector.extract_strided_slice %22 {offsets = [1, 1, 0], sizes = [8, 16, 4], strides = [1, 1, 1]} : vector<10x18x4xf32> to vector<8x16x4xf32>
    %47 = vector.shape_cast %46 : vector<8x16x4xf32> to vector<128x4xf32>
    %c1_45 = arith.constant 1 : index
    %c1_46 = arith.constant 1 : index
    %c0_47 = arith.constant 0 : index
    %c0_48 = arith.constant 0 : index
    %48 = vector.load %arg6[%c1_45, %c1_46, %c0_47, %c0_48] : memref<3x3x4x4xf32, #tpu.memory_space<vmem>>, vector<1x1x4x4xf32>
    %49 = vector.shape_cast %48 : vector<1x1x4x4xf32> to vector<4x4xf32>
    %cst_49 = arith.constant dense<0.000000e+00> : vector<128x4xf32>
    %50 = tpu.matmul %47, %49, %cst_49 {dimension_numbers = #tpu.dot_dimension_numbers<[1], [0], [0], [1], [0, 0, 1, 1], [], []>} : vector<128x4xf32>, vector<4x4xf32>, vector<128x4xf32> -> vector<128x4xf32>
    %51 = arith.addf %45, %50 : vector<128x4xf32>
    %52 = vector.extract_strided_slice %22 {offsets = [1, 2, 0], sizes = [8, 16, 4], strides = [1, 1, 1]} : vector<10x18x4xf32> to vector<8x16x4xf32>
    %53 = vector.shape_cast %52 : vector<8x16x4xf32> to vector<128x4xf32>
    %c1_50 = arith.constant 1 : index
    %c2_51 = arith.constant 2 : index
    %c0_52 = arith.constant 0 : index
    %c0_53 = arith.constant 0 : index
    %54 = vector.load %arg6[%c1_50, %c2_51, %c0_52, %c0_53] : memref<3x3x4x4xf32, #tpu.memory_space<vmem>>, vector<1x1x4x4xf32>
    %55 = vector.shape_cast %54 : vector<1x1x4x4xf32> to vector<4x4xf32>
    %cst_54 = arith.constant dense<0.000000e+00> : vector<128x4xf32>
    %56 = tpu.matmul %53, %55, %cst_54 {dimension_numbers = #tpu.dot_dimension_numbers<[1], [0], [0], [1], [0, 0, 1, 1], [], []>} : vector<128x4xf32>, vector<4x4xf32>, vector<128x4xf32> -> vector<128x4xf32>
    %57 = arith.addf %51, %56 : vector<128x4xf32>
    %58 = vector.extract_strided_slice %22 {offsets = [2, 0, 0], sizes = [8, 16, 4], strides = [1, 1, 1]} : vector<10x18x4xf32> to vector<8x16x4xf32>
    %59 = vector.shape_cast %58 : vector<8x16x4xf32> to vector<128x4xf32>
    %c2_55 = arith.constant 2 : index
    %c0_56 = arith.constant 0 : index
    %c0_57 = arith.constant 0 : index
    %c0_58 = arith.constant 0 : index
    %60 = vector.load %arg6[%c2_55, %c0_56, %c0_57, %c0_58] : memref<3x3x4x4xf32, #tpu.memory_space<vmem>>, vector<1x1x4x4xf32>
    %61 = vector.shape_cast %60 : vector<1x1x4x4xf32> to vector<4x4xf32>
    %cst_59 = arith.constant dense<0.000000e+00> : vector<128x4xf32>
    %62 = tpu.matmul %59, %61, %cst_59 {dimension_numbers = #tpu.dot_dimension_numbers<[1], [0], [0], [1], [0, 0, 1, 1], [], []>} : vector<128x4xf32>, vector<4x4xf32>, vector<128x4xf32> -> vector<128x4xf32>
    %63 = arith.addf %57, %62 : vector<128x4xf32>
    %64 = vector.extract_strided_slice %22 {offsets = [2, 1, 0], sizes = [8, 16, 4], strides = [1, 1, 1]} : vector<10x18x4xf32> to vector<8x16x4xf32>
    %65 = vector.shape_cast %64 : vector<8x16x4xf32> to vector<128x4xf32>
    %c2_60 = arith.constant 2 : index
    %c1_61 = arith.constant 1 : index
    %c0_62 = arith.constant 0 : index
    %c0_63 = arith.constant 0 : index
    %66 = vector.load %arg6[%c2_60, %c1_61, %c0_62, %c0_63] : memref<3x3x4x4xf32, #tpu.memory_space<vmem>>, vector<1x1x4x4xf32>
    %67 = vector.shape_cast %66 : vector<1x1x4x4xf32> to vector<4x4xf32>
    %cst_64 = arith.constant dense<0.000000e+00> : vector<128x4xf32>
    %68 = tpu.matmul %65, %67, %cst_64 {dimension_numbers = #tpu.dot_dimension_numbers<[1], [0], [0], [1], [0, 0, 1, 1], [], []>} : vector<128x4xf32>, vector<4x4xf32>, vector<128x4xf32> -> vector<128x4xf32>
    %69 = arith.addf %63, %68 : vector<128x4xf32>
    %70 = vector.extract_strided_slice %22 {offsets = [2, 2, 0], sizes = [8, 16, 4], strides = [1, 1, 1]} : vector<10x18x4xf32> to vector<8x16x4xf32>
    %71 = vector.shape_cast %70 : vector<8x16x4xf32> to vector<128x4xf32>
    %c2_65 = arith.constant 2 : index
    %c2_66 = arith.constant 2 : index
    %c0_67 = arith.constant 0 : index
    %c0_68 = arith.constant 0 : index
    %72 = vector.load %arg6[%c2_65, %c2_66, %c0_67, %c0_68] : memref<3x3x4x4xf32, #tpu.memory_space<vmem>>, vector<1x1x4x4xf32>
    %73 = vector.shape_cast %72 : vector<1x1x4x4xf32> to vector<4x4xf32>
    %cst_69 = arith.constant dense<0.000000e+00> : vector<128x4xf32>
    %74 = tpu.matmul %71, %73, %cst_69 {dimension_numbers = #tpu.dot_dimension_numbers<[1], [0], [0], [1], [0, 0, 1, 1], [], []>} : vector<128x4xf32>, vector<4x4xf32>, vector<128x4xf32> -> vector<128x4xf32>
    %75 = arith.addf %69, %74 : vector<128x4xf32>
    %c0_70 = arith.constant 0 : index
    %c0_71 = arith.constant 0 : index
    %76 = vector.load %arg7[%c0_70, %c0_71] : memref<1x4xf32, #tpu.memory_space<vmem>>, vector<1x4xf32>
    %77 = vector.broadcast %76 : vector<1x4xf32> to vector<128x4xf32>
    %78 = arith.addf %75, %77 : vector<128x4xf32>
    %79 = vector.shape_cast %78 : vector<128x4xf32> to vector<1x8x16x4xf32>
    %c0_72 = arith.constant 0 : index
    %c0_73 = arith.constant 0 : index
    %c0_74 = arith.constant 0 : index
    %c0_75 = arith.constant 0 : index
    %80 = vector.load %arg5[%c0_72, %c0_73, %c0_74, %c0_75] : memref<1x8x16x4xf32, #tpu.memory_space<vmem>>, vector<1x8x16x4xf32>
    %81 = arith.addf %79, %80 : vector<1x8x16x4xf32>
    %c0_76 = arith.constant 0 : index
    %c0_77 = arith.constant 0 : index
    %c0_78 = arith.constant 0 : index
    %c0_79 = arith.constant 0 : index
    %82 = vector.load %arg8[%c0_76, %c0_77, %c0_78, %c0_79] : memref<1x8x16x4xf32, #tpu.memory_space<vmem>>, vector<1x8x16x4xf32>
    tpu.vector_store %arg8[%c0_76, %c0_77, %c0_78, %c0_79], %81 {strides = array<i32>} : memref<1x8x16x4xf32, #tpu.memory_space<vmem>>, vector<1x8x16x4xf32>,
    return
  }
  func.func @transform_0(%arg0: i32, %arg1: i32) -> (i32, i32, i32, i32) {
    %c0_i32 = arith.constant 0 : i32
    %c0_i32_0 = arith.constant 0 : i32
    %c0_i32_1 = arith.constant 0 : i32
    return %arg0, %arg1, %c0_i32, %c0_i32_0 : i32, i32, i32, i32
  }
  func.func @transform_1(%arg0: i32, %arg1: i32) -> (i32, i32, i32, i32) {
    %c8_i32 = arith.constant 8 : i32
    %0 = arith.muli %arg1, %c8_i32 : i32
    %c1_i32 = arith.constant 1 : i32
    %1 = arith.subi %0, %c1_i32 : i32
    %c0_i32 = arith.constant 0 : i32
    %2 = arith.maxsi %1, %c0_i32 : i32
    %c0_i32_0 = arith.constant 0 : i32
    %c0_i32_1 = arith.constant 0 : i32
    %c0_i32_2 = arith.constant 0 : i32
    return %arg0, %2, %c0_i32_0, %c0_i32_1 : i32, i32, i32, i32
  }
  func.func @transform_2(%arg0: i32, %arg1: i32) -> (i32, i32, i32, i32) {
    %c1_i32 = arith.constant 1 : i32
    %0 = arith.addi %arg1, %c1_i32 : i32
    %c8_i32 = arith.constant 8 : i32
    %1 = arith.muli %0, %c8_i32 : i32
    %c15_i32 = arith.constant 15 : i32
    %2 = arith.minsi %1, %c15_i32 : i32
    %c0_i32 = arith.constant 0 : i32
    %c0_i32_0 = arith.constant 0 : i32
    %c0_i32_1 = arith.constant 0 : i32
    return %arg0, %2, %c0_i32, %c0_i32_0 : i32, i32, i32, i32
  }
  func.func @transform_3(%arg0: i32, %arg1: i32) -> (i32, i32, i32, i32) {
    %c0_i32 = arith.constant 0 : i32
    %c0_i32_0 = arith.constant 0 : i32
    %c0_i32_1 = arith.constant 0 : i32
    return %arg0, %arg1, %c0_i32, %c0_i32_0 : i32, i32, i32, i32
  }
  func.func @transform_4(%arg0: i32, %arg1: i32) -> (i32, i32, i32, i32) {
    %c0_i32 = arith.constant 0 : i32
    %c0_i32_0 = arith.constant 0 : i32
    %c0_i32_1 = arith.constant 0 : i32
    %c0_i32_2 = arith.constant 0 : i32
    %c0_i32_3 = arith.constant 0 : i32
    return %c0_i32, %c0_i32_0, %c0_i32_1, %c0_i32_2 : i32, i32, i32, i32
  }
  func.func @transform_5(%arg0: i32, %arg1: i32) -> (i32, i32) {
    %c0_i32 = arith.constant 0 : i32
    %c0_i32_0 = arith.constant 0 : i32
    %c0_i32_1 = arith.constant 0 : i32
    return %c0_i32, %c0_i32_0 : i32, i32
  }
  func.func @transform_6(%arg0: i32, %arg1: i32) -> (i32, i32, i32, i32) {
    %c0_i32 = arith.constant 0 : i32
    %c0_i32_0 = arith.constant 0 : i32
    %c0_i32_1 = arith.constant 0 : i32
    return %arg0, %arg1, %c0_i32, %c0_i32_0 : i32, i32, i32, i32
  }
}

</mosaic_0001>

<llo_original>
// kernel: residual_group_forward.6
$region0: #{residual_group_forward.6}
  #allocation0 [shape = 'u32[]', space=smem, size = 0x4, offset = 0x4, fixed_abs, tag = 'smem constant byte address 0x4 - core index']
  #allocation1 [shape = 'u32[144,128]{1,0:T(1,128)}', space=vmem, size = 0x12000, scoped, tag = 'internal scratch']
  %s0 = inlined_call_operand.vmem [shape: f32[2,1,4], index: 0, kind: input, shape index: {}]
  %s1 = inlined_call_operand.vmem [shape: f32[4,2], index: 1, kind: input, shape index: {}]
  %s2 = inlined_call_operand.vmem [shape: f32[1,2], index: 2, kind: input, shape index: {}]
  %s3 = inlined_call_operand.vmem [shape: f32[2,4], index: 3, kind: input, shape index: {}]
  %s4 = inlined_call_operand.vmem [shape: f32[1,4], index: 4, kind: input, shape index: {}]
  %s5 = inlined_call_operand.vmem [shape: f32[2,16,16,4], index: 5, kind: input, shape index: {}]
  %s6 = inlined_call_operand.vmem [shape: f32[2,16,16,4], index: 6, kind: input, shape index: {}]
  %s7 = inlined_call_operand.vmem [shape: f32[2,16,16,4], index: 7, kind: output, shape index: {}]
  %s8 = sld [smem:[#allocation0]]
  $region61: #{residual_group_forward.6} parent=0
    _
  %s10 = ssub.s32 1, %s8
  %s11 = scalar_select 0, %s10, %s8
  loop: start=0, step=1, limit=6
  $region2: #{residual_group_forward.6} parent=0 // loop_pre_header
    _
  $region3: #{residual_group_forward.6} parent=0 // loop_header
    %s13 = sphi 0, %s17
    %p14 = scmp.ge.s32.totalorder %s13, 6
    %s20 = sphi 0, %s32
    %s21 = sphi 0, %s28
    %s22 = sphi 0, %s20
    %s23 = sphi 0, %s21
    %s24 = sphi 0, %s22
    %s25 = sphi 0, %s23
    %s35 = sphi 0, %s37
    %s38 = sphi 0, %s35
    %s39 = sphi 0, %s38
    %s55 = sphi 0, %s39
    %s59 = sphi 0, %s59
    %s61 = sphi 0, %s59
    %s62 = sphi 0, %s61
    %s76 = sphi 0, %s62
    %s80 = sphi 0, %s80
    %s82 = sphi 0, %s80
    %s83 = sphi 0, %s82
    %s97 = sphi 0, %s83
    %s101 = sphi 0, %s101
    %s103 = sphi 0, %s101
    %s104 = sphi 0, %s103
    %s118 = sphi 0, %s104
    %s122 = sphi 0, %s122
    %s124 = sphi 0, %s122
    %s125 = sphi 0, %s124
    %s139 = sphi 0, %s125
    %s147 = sphi 0, %s149
    %s150 = sphi 0, %s147
    %s151 = sphi 0, %s150
    %s167 = sphi 0, %s151
    %s175 = sphi 0, %s177
    %s178 = sphi 0, %s175
    %s179 = sphi 0, %s178
    %s195 = sphi 0, %s179
    %s203 = sphi 0, %s205
    %s206 = sphi 0, %s203
    %s207 = sphi 0, %s206
    %s223 = sphi 0, %s207
  $region4: #{residual_group_forward.6} parent=0 // loop_header_branch
    %16 = sbr.rel (%p14) target = $region8
  $region5: #{residual_group_forward.6} parent=0 // loop_body
    %s18 = ssub.s32 %s13, 1
    %s19 = ssub.s32 %s13, 2
    %s26 = sadd.s32 1, %s21
    %p27 = scmp.ge.s32.totalorder %s26, 2
    %s28 = scalar_select %p27, 0, %s26
    %s29 = sadd.s32 1, %s20
    %s30 = scalar_select %p27, %s29, %s20
    %p31 = scmp.ge.s32.totalorder %s30, 2
    %s32 = scalar_select %p31, 0, %s30
    %s33 = ssub.s32 %s20, %s32
    %p34 = scmp.eq.s32.totalorder %s33, 0
    %s36 = sadd.s32 %s35, 1
    %s37 = scalar_select %p34, %s35, %s36
    %p40 = pneg %p34
    %p41 = scmp.eq.s32.totalorder %s13, 3
    %p42 = por %p40, %p41
    %p43 = scmp.ne.s32.totalorder %s35, %s38
    %p44 = scmp.eq.s32.totalorder %s13, 0
    %p45 = por %p43, %p44
    %p46 = scmp.ne.s32.totalorder %s35, %s38
    %p47 = scmp.eq.s32.totalorder %s18, 3
    %p48 = por %p46, %p47
    %p49 = scmp.ne.s32.totalorder %s38, %s39
    %p50 = scmp.eq.s32.totalorder %s18, 0
    %p51 = por %p49, %p50
    %p52 = scmp.ne.s32.totalorder %s38, %s39
    %p53 = scmp.eq.s32.totalorder %s19, 3
    %p54 = por %p52, %p53
    %p56 = scmp.ne.s32.totalorder %s39, %s55
    %p57 = scmp.eq.s32.totalorder %s19, 0
    %p58 = por %p56, %p57
    %s60 = sadd.s32 %s59, 1
    %p63 = scmp.eq.s32.totalorder %s13, 3
    %p64 = scmp.ne.s32.totalorder %s59, %s61
    %p65 = scmp.eq.s32.totalorder %s13, 0
    %p66 = por %p64, %p65
    %p67 = scmp.ne.s32.totalorder %s59, %s61
    %p68 = scmp.eq.s32.totalorder %s18, 3
    %p69 = por %p67, %p68
    %p70 = scmp.ne.s32.totalorder %s61, %s62
    %p71 = scmp.eq.s32.totalorder %s18, 0
    %p72 = por %p70, %p71
    %p73 = scmp.ne.s32.totalorder %s61, %s62
    %p74 = scmp.eq.s32.totalorder %s19, 3
    %p75 = por %p73, %p74
    %p77 = scmp.ne.s32.totalorder %s62, %s76
    %p78 = scmp.eq.s32.totalorder %s19, 0
    %p79 = por %p77, %p78
    %s81 = sadd.s32 %s80, 1
    %p84 = scmp.eq.s32.totalorder %s13, 3
    %p85 = scmp.ne.s32.totalorder %s80, %s82
    %p86 = scmp.eq.s32.totalorder %s13, 0
    %p87 = por %p85, %p86
    %p88 = scmp.ne.s32.totalorder %s80, %s82
    %p89 = scmp.eq.s32.totalorder %s18, 3
    %p90 = por %p88, %p89
    %p91 = scmp.ne.s32.totalorder %s82, %s83
    %p92 = scmp.eq.s32.totalorder %s18, 0
    %p93 = por %p91, %p92
    %p94 = scmp.ne.s32.totalorder %s82, %s83
    %p95 = scmp.eq.s32.totalorder %s19, 3
    %p96 = por %p94, %p95
    %p98 = scmp.ne.s32.totalorder %s83, %s97
    %p99 = scmp.eq.s32.totalorder %s19, 0
    %p100 = por %p98, %p99
    %s102 = sadd.s32 %s101, 1
    %p105 = scmp.eq.s32.totalorder %s13, 3
    %p106 = scmp.ne.s32.totalorder %s101, %s103
    %p107 = scmp.eq.s32.totalorder %s13, 0
    %p108 = por %p106, %p107
    %p109 = scmp.ne.s32.totalorder %s101, %s103
    %p110 = scmp.eq.s32.totalorder %s18, 3
    %p111 = por %p109, %p110
    %p112 = scmp.ne.s32.totalorder %s103, %s104
    %p113 = scmp.eq.s32.totalorder %s18, 0
    %p114 = por %p112, %p113
    %p115 = scmp.ne.s32.totalorder %s103, %s104
    %p116 = scmp.eq.s32.totalorder %s19, 3
    %p117 = por %p115, %p116
    %p119 = scmp.ne.s32.totalorder %s104, %s118
    %p120 = scmp.eq.s32.totalorder %s19, 0
    %p121 = por %p119, %p120
    %s123 = sadd.s32 %s122, 1
    %p126 = scmp.eq.s32.totalorder %s13, 3
    %p127 = scmp.ne.s32.totalorder %s122, %s124
    %p128 = scmp.eq.s32.totalorder %s13, 0
    %p129 = por %p127, %p128
    %p130 = scmp.ne.s32.totalorder %s122, %s124
    %p131 = scmp.eq.s32.totalorder %s18, 3
    %p132 = por %p130, %p131
    %p133 = scmp.ne.s32.totalorder %s124, %s125
    %p134 = scmp.eq.s32.totalorder %s18, 0
    %p135 = por %p133, %p134
    %p136 = scmp.ne.s32.totalorder %s124, %s125
    %p137 = scmp.eq.s32.totalorder %s19, 3
    %p138 = por %p136, %p137
    %p140 = scmp.ne.s32.totalorder %s125, %s139
    %p141 = scmp.eq.s32.totalorder %s19, 0
    %p142 = por %p140, %p141
    %s143 = ssub.s32 %s20, %s32
    %s144 = ssub.s32 %s21, %s28
    %s145 = sor.u32 %s143, %s144
    %p146 = scmp.eq.s32.totalorder %s145, 0
    %s148 = sadd.s32 %s147, 1
    %s149 = scalar_select %p146, %s147, %s148
    %p152 = pneg %p146
    %p153 = scmp.eq.s32.totalorder %s13, 3
    %p154 = por %p152, %p153
    %p155 = scmp.ne.s32.totalorder %s147, %s150
    %p156 = scmp.eq.s32.totalorder %s13, 0
    %p157 = por %p155, %p156
    %p158 = scmp.ne.s32.totalorder %s147, %s150
    %p159 = scmp.eq.s32.totalorder %s18, 3
    %p160 = por %p158, %p159
    %p161 = scmp.ne.s32.totalorder %s150, %s151
    %p162 = scmp.eq.s32.totalorder %s18, 0
    %p163 = por %p161, %p162
    %p164 = scmp.ne.s32.totalorder %s150, %s151
    %p165 = scmp.eq.s32.totalorder %s19, 3
    %p166 = por %p164, %p165
    %p168 = scmp.ne.s32.totalorder %s151, %s167
    %p169 = scmp.eq.s32.totalorder %s19, 0
    %p170 = por %p168, %p169
    %s171 = ssub.s32 %s20, %s32
    %s172 = ssub.s32 %s21, %s28
    %s173 = sor.u32 %s171, %s172
    %p174 = scmp.eq.s32.totalorder %s173, 0
    %s176 = sadd.s32 %s175, 1
    %s177 = scalar_select %p174, %s175, %s176
    %p180 = pneg %p174
    %p181 = scmp.eq.s32.totalorder %s13, 3
    %p182 = por %p180, %p181
    %p183 = scmp.ne.s32.totalorder %s175, %s178
    %p184 = scmp.eq.s32.totalorder %s13, 0
    %p185 = por %p183, %p184
    %p186 = scmp.ne.s32.totalorder %s175, %s178
    %p187 = scmp.eq.s32.totalorder %s18, 3
    %p188 = por %p186, %p187
    %p189 = scmp.ne.s32.totalorder %s178, %s179
    %p190 = scmp.eq.s32.totalorder %s18, 0
    %p191 = por %p189, %p190
    %p192 = scmp.ne.s32.totalorder %s178, %s179
    %p193 = scmp.eq.s32.totalorder %s19, 3
    %p194 = por %p192, %p193
    %p196 = scmp.ne.s32.totalorder %s179, %s195
    %p197 = scmp.eq.s32.totalorder %s19, 0
    %p198 = por %p196, %p197
    %s199 = ssub.s32 %s20, %s32
    %s200 = ssub.s32 %s21, %s28
    %s201 = sor.u32 %s199, %s200
    %p202 = scmp.eq.s32.totalorder %s201, 0
    %s204 = sadd.s32 %s203, 1
    %s205 = scalar_select %p202, %s203, %s204
    %p208 = pneg %p202
    %p209 = scmp.eq.s32.totalorder %s13, 3
    %p210 = por %p208, %p209
    %p211 = scmp.ne.s32.totalorder %s203, %s206
    %p212 = scmp.eq.s32.totalorder %s13, 0
    %p213 = por %p211, %p212
    %p214 = scmp.ne.s32.totalorder %s203, %s206
    %p215 = scmp.eq.s32.totalorder %s18, 3
    %p216 = por %p214, %p215
    %p217 = scmp.ne.s32.totalorder %s206, %s207
    %p218 = scmp.eq.s32.totalorder %s18, 0
    %p219 = por %p217, %p218
    %p220 = scmp.ne.s32.totalorder %s206, %s207
    %p221 = scmp.eq.s32.totalorder %s19, 3
    %p222 = por %p220, %p221
    %p224 = scmp.ne.s32.totalorder %s207, %s223
    %p225 = scmp.eq.s32.totalorder %s19, 0
    %p226 = por %p224, %p225
    %p227 = scmp.le.s32.totalorder 1, %s13
    %p228 = scmp.lt.s32.totalorder %s13, 5
    %p229 = pnand %p227, %p228
    %p230 = pneg %p229
    // Predicated region
    $region9: #{residual_group_forward.6} parent=5 // pred_check
      _
    $region10: #{residual_group_forward.6} parent=5 // pred_check_branch
      %232 = sbr.rel (%p229) target = $region12
    $region11: #{residual_group_forward.6} parent=5 // pred_region
      %s233 = ssub.s32 %s13, 1
      // Predicated region
      $region13: #{residual_group_forward.6} parent=11 // pred_check
        %p234 = pneg %p72
      $region14: #{residual_group_forward.6} parent=11 // pred_check_branch
        %236 = sbr.rel (%p234) target = $region16
      $region15: #{residual_group_forward.6} parent=11 // pred_region
        _
      $region16: #{residual_group_forward.6} parent=11 // pred_fallthru
        _
      // Predicated region
      $region17: #{residual_group_forward.6} parent=11 // pred_check
        %p237 = pneg %p93
      $region18: #{residual_group_forward.6} parent=11 // pred_check_branch
        %239 = sbr.rel (%p237) target = $region20
      $region19: #{residual_group_forward.6} parent=11 // pred_region
        _
      $region20: #{residual_group_forward.6} parent=11 // pred_fallthru
        _
      // Predicated region
      $region21: #{residual_group_forward.6} parent=11 // pred_check
        %p240 = pneg %p114
      $region22: #{residual_group_forward.6} parent=11 // pred_check_branch
        %242 = sbr.rel (%p240) target = $region24
      $region23: #{residual_group_forward.6} parent=11 // pred_region
        _
      $region24: #{residual_group_forward.6} parent=11 // pred_fallthru
        _
      // Predicated region
      $region25: #{residual_group_forward.6} parent=11 // pred_check
        %p243 = pneg %p135
      $region26: #{residual_group_forward.6} parent=11 // pred_check_branch
        %245 = sbr.rel (%p243) target = $region28
      $region27: #{residual_group_forward.6} parent=11 // pred_region
        _
      $region28: #{residual_group_forward.6} parent=11 // pred_fallthru
        _
    $region12: #{residual_group_forward.6} parent=5 // pred_fallthru
      _
    %p246 = scmp.lt.s32.totalorder %s13, 4
    // Predicated region
    $region29: #{residual_group_forward.6} parent=5 // pred_check
      %p247 = pneg %p246
    $region30: #{residual_group_forward.6} parent=5 // pred_check_branch
      %249 = sbr.rel (%p247) target = $region32
    $region31: #{residual_group_forward.6} parent=5 // pred_region
      // Predicated region
      $region33: #{residual_group_forward.6} parent=31 // pred_check
        %p250 = pneg %p45
      $region34: #{residual_group_forward.6} parent=31 // pred_check_branch
        %252 = sbr.rel (%p250) target = $region36
      $region35: #{residual_group_forward.6} parent=31 // pred_region
        %p253 = scmp.lt.s32.totalorder %s20, 1
        %s254 = scalar_select %p253, %s20, 1
        %s255 = scalar_lea.vmem %s0, %s254
      $region36: #{residual_group_forward.6} parent=31 // pred_fallthru
        _
      // Predicated region
      $region37: #{residual_group_forward.6} parent=31 // pred_check
        %p256 = pneg %p157
      $region38: #{residual_group_forward.6} parent=31 // pred_check_branch
        %258 = sbr.rel (%p256) target = $region40
      $region39: #{residual_group_forward.6} parent=31 // pred_region
        %s259 = smul.u32 8, %s21
        %p260 = scmp.lt.s32.totalorder %s20, 1
        %s261 = scalar_select %p260, %s20, 1
        %p262 = scmp.lt.s32.totalorder %s259, 15
        %s263 = scalar_select %p262, %s259, 15
        %s264 = smul.addr %s263, 2
        %s265 = smul.addr %s261, 32
        %s266 = sadd.s32 %s264, %s265
        %s267 = smul.addr %s266, 8
        %s268 = scalar_lea.vmem %s5, %s267
        %s269 = smul.u32 8, %s21
      $region40: #{residual_group_forward.6} parent=31 // pred_fallthru
        _
      // Predicated region
      $region41: #{residual_group_forward.6} parent=31 // pred_check
        %p270 = pneg %p185
      $region42: #{residual_group_forward.6} parent=31 // pred_check_branch
        %272 = sbr.rel (%p270) target = $region44
      $region43: #{residual_group_forward.6} parent=31 // pred_region
        %s273 = smul.u32 8, %s21
        %p274 = scmp.lt.s32.totalorder %s20, 1
        %s275 = scalar_select %p274, %s20, 1
        %p276 = scmp.lt.s32.totalorder %s273, 15
        %s277 = scalar_select %p276, %s273, 15
        %s278 = smul.addr %s277, 2
        %s279 = smul.addr %s275, 32
        %s280 = sadd.s32 %s278, %s279
        %s281 = smul.addr %s280, 8
        %s282 = scalar_lea.vmem %s6, %s281
        %s283 = smul.u32 8, %s21
      $region44: #{residual_group_forward.6} parent=31 // pred_fallthru
        _
    $region32: #{residual_group_forward.6} parent=5 // pred_fallthru
      _
    %p284 = scmp.le.s32.totalorder 1, %s13
    %p285 = scmp.lt.s32.totalorder %s13, 5
    %p286 = pnand %p284, %p285
    %p287 = pneg %p286
    // Predicated region
    $region45: #{residual_group_forward.6} parent=5 // pred_check
      _
    $region46: #{residual_group_forward.6} parent=5 // pred_check_branch
      %289 = sbr.rel (%p286) target = $region48
    $region47: #{residual_group_forward.6} parent=5 // pred_region
      %s290 = ssub.s32 %s13, 1
      %p291 = scmp.lt.s32.totalorder %s22, 1
      %s292 = scalar_select %p291, %s22, 1
      %s293 = scalar_lea.vmem %s0, %s292
      %p294 = pneg %p51
      %p295 = pneg %p48
      %p296 = pneg %p72
      %p297 = pneg %p69
      %p298 = pneg %p93
      %p299 = pneg %p90
      %p300 = pneg %p114
      %p301 = pneg %p111
      %p302 = pneg %p135
      %p303 = pneg %p132
      %s304 = smul.u32 8, %s23
      %p305 = scmp.lt.s32.totalorder %s22, 1
      %s306 = scalar_select %p305, %s22, 1
      %p307 = scmp.lt.s32.totalorder %s304, 15
      %s308 = scalar_select %p307, %s304, 15
      %s309 = smul.addr %s308, 2
      %s310 = smul.addr %s306, 32
      %s311 = sadd.s32 %s309, %s310
      %s312 = smul.addr %s311, 8
      %s313 = scalar_lea.vmem %s5, %s312
      %p314 = pneg %p163
      %p315 = pneg %p160
      %s316 = smul.u32 8, %s23
      %p317 = scmp.lt.s32.totalorder %s22, 1
      %s318 = scalar_select %p317, %s22, 1
      %p319 = scmp.lt.s32.totalorder %s316, 15
      %s320 = scalar_select %p319, %s316, 15
      %s321 = smul.addr %s320, 2
      %s322 = smul.addr %s318, 32
      %s323 = sadd.s32 %s321, %s322
      %s324 = smul.addr %s323, 8
      %s325 = scalar_lea.vmem %s6, %s324
      %p326 = pneg %p191
      %p327 = pneg %p188
      %p328 = pneg %p219
      %p329 = pneg %p216
      %s330 = smul.u32 8, %s23
      %p331 = scmp.lt.s32.totalorder %s22, 1
      %s332 = scalar_select %p331, %s22, 1
      %p333 = scmp.lt.s32.totalorder %s330, 15
      %s334 = scalar_select %p333, %s330, 15
      %s335 = smul.addr %s334, 2
      %s336 = smul.addr %s332, 32
      %s337 = sadd.s32 %s335, %s336
      %s338 = smul.addr %s337, 8
      %s339 = scalar_lea.vmem %s7, %s338
      %p340 = scmp.lt.s32.totalorder %s22, 1
      %s341 = scalar_select %p340, %s22, 1
      %s342 = scalar_lea.vmem %s0, %s341
      %s343 = smul.u32 8, %s23
      %p344 = scmp.lt.s32.totalorder %s22, 1
      %s345 = scalar_select %p344, %s22, 1
      %p346 = scmp.lt.s32.totalorder %s343, 15
      %s347 = scalar_select %p346, %s343, 15
      %s348 = smul.addr %s347, 2
      %s349 = smul.addr %s345, 32
      %s350 = sadd.s32 %s348, %s349
      %s351 = smul.addr %s350, 8
      %s352 = scalar_lea.vmem %s5, %s351
      %s353 = smul.u32 8, %s23
      %s354 = smul.u32 8, %s23
      %p355 = scmp.lt.s32.totalorder %s22, 1
      %s356 = scalar_select %p355, %s22, 1
      %p357 = scmp.lt.s32.totalorder %s354, 15
      %s358 = scalar_select %p357, %s354, 15
      %s359 = smul.addr %s358, 2
      %s360 = smul.addr %s356, 32
      %s361 = sadd.s32 %s359, %s360
      %s362 = smul.addr %s361, 8
      %s363 = scalar_lea.vmem %s6, %s362
      %s364 = smul.u32 8, %s23
      %s365 = smul.u32 8, %s23
      %p366 = scmp.lt.s32.totalorder %s22, 1
      %s367 = scalar_select %p366, %s22, 1
      %p368 = scmp.lt.s32.totalorder %s365, 15
      %s369 = scalar_select %p368, %s365, 15
      %s370 = smul.addr %s369, 2
      %s371 = smul.addr %s367, 32
      %s372 = sadd.s32 %s370, %s371
      %s373 = smul.addr %s372, 8
      %s374 = scalar_lea.vmem %s7, %s373
      %s375 = smul.u32 8, %s23
      %v376 = vld [vmem:[%s342] sm:$0x1]
      %v377 = vmul.f32 %v376, 0.00390625
      %v378 = vld [vmem:[%s1] sm:$0xf]
      %v379 = vld [vmem:[%s2] sm:$0x1]
      %vm380 = vcmask 31744
      %v382 = vsel %vm380, %v377, 0
      %vm384 = vcmask 1043456
      %v386 = vsel %vm384, %v378, 0
      %388 = vmatprep.subr.mxu0 0.0
      %389 = vmatpush1.msra.mxu0 %v386
      %390 = vmatprep.subr.mxu0 0.0
      %391 = vmatpush1.msra.mxu0 0.0
      %392 = vmatprep.subr.mxu0 0.0
      %393 = vmatpush1.msra.mxu0 0.0
      %394 = vmatprep.subr.mxu0 0.0
      %395 = vmatpush1.msra.mxu0 0.0
      %396 = vmatprep.subr.mxu0 0.0
      %397 = vmatpush1.msra.mxu0 0.0
      %398 = vmatprep.subr.mxu0 0.0
      %399 = vmatpush1.msra.mxu0 0.0
      %400 = vmatprep.subr.mxu0 0.0
      %401 = vmatpush1.msra.mxu0 0.0
      %402 = vmatprep.subr.mxu0 0.0
      %403 = vmatpush1.msra.mxu0 0.0
      %404 = vmatprep.subr.mxu0 0.0
      %405 = vmatpush1.msra.mxu0 0.0
      %406 = vmatprep.subr.mxu0 0.0
      %407 = vmatpush1.msra.mxu0 0.0
      %408 = vmatprep.subr.mxu0 0.0
      %409 = vmatpush1.msra.mxu0 0.0
      %410 = vmatprep.subr.mxu0 0.0
      %411 = vmatpush1.msra.mxu0 0.0
      %412 = vmatprep.subr.mxu0 0.0
      %413 = vmatpush1.msra.mxu0 0.0
      %414 = vmatprep.subr.mxu0 0.0
      %415 = vmatpush1.msra.mxu0 0.0
      %416 = vmatprep.subr.mxu0 0.0
      %417 = vmatpush1.msra.mxu0 0.0
      %418 = vmatprep.subr.mxu0 0.0
      %419 = vmatpush1.msra.mxu0 0.0
      %420 = vmatprep.subr.mxu0 0.0
      %421 = vmatpush1.msra.mxu0 0.0
      %422 = vmatprep.subr.mxu0 0.0
      %423 = vmatpush1.msra.mxu0 0.0
      %424 = vmatprep.subr.mxu0 0.0
      %425 = vmatpush1.msra.mxu0 0.0
      %426 = vmatprep.subr.mxu0 0.0
      %427 = vmatpush1.msra.mxu0 0.0
      %428 = vmatprep.subr.mxu0 0.0
      %429 = vmatpush1.msra.mxu0 0.0
      %430 = vmatprep.subr.mxu0 0.0
      %431 = vmatpush1.msra.mxu0 0.0
      %432 = vmatprep.subr.mxu0 0.0
      %433 = vmatpush1.msra.mxu0 0.0
      %434 = vmatprep.subr.mxu0 0.0
      %435 = vmatpush1.msra.mxu0 0.0
      %436 = vmatprep.subr.mxu0 0.0
      %437 = vmatpush1.msra.mxu0 0.0
      %438 = vmatprep.subr.mxu0 0.0
      %439 = vmatpush1.msra.mxu0 0.0
      %440 = vmatprep.subr.mxu0 0.0
      %441 = vmatpush1.msra.mxu0 0.0
      %442 = vmatprep.subr.mxu0 0.0
      %443 = vmatpush1.msra.mxu0 0.0
      %444 = vmatprep.subr.mxu0 0.0
      %445 = vmatpush1.msra.mxu0 0.0
      %446 = vmatprep.subr.mxu0 0.0
      %447 = vmatpush1.msra.mxu0 0.0
      %448 = vmatprep.subr.mxu0 0.0
      %449 = vmatpush1.msra.mxu0 0.0
      %450 = vmatprep.subr.mxu0 0.0
      %451 = vmatpush1.msra.mxu0 0.0
      %452 = vmatprep.mubr.f32.mxu0 0.0
      %453 = vmatmul.mubr.f32.gmra.mrb[0].mxu0 %v382
      %v454 = vpop.f32.mrb[0].mxu0
      %v455 = vadd.f32 %v379, %v454
      %v456 = vpop.f32.mrb[0].mxu0
      %457 = vdwg.mxu0
      %v458 = vmax.f32 %v455, 0.0
      %v459 = vld [vmem:[%s3] sm:$0x3]
      %v460 = vld [vmem:[%s4] sm:$0x1]
      %vm461 = vcmask 15360
      %v463 = vsel %vm461, %v458, 0
      %vm465 = vcmask 1041408
      %v467 = vsel %vm465, %v459, 0
      %469 = vmatprep.subr.mxu0 0.0
      %470 = vmatpush1.msra.mxu0 %v467
      %471 = vmatprep.subr.mxu0 0.0
      %472 = vmatpush1.msra.mxu0 0.0
      %473 = vmatprep.subr.mxu0 0.0
      %474 = vmatpush1.msra.mxu0 0.0
      %475 = vmatprep.subr.mxu0 0.0
      %476 = vmatpush1.msra.mxu0 0.0
      %477 = vmatprep.subr.mxu0 0.0
      %478 = vmatpush1.msra.mxu0 0.0
      %479 = vmatprep.subr.mxu0 0.0
      %480 = vmatpush1.msra.mxu0 0.0
      %481 = vmatprep.subr.mxu0 0.0
      %482 = vmatpush1.msra.mxu0 0.0
      %483 = vmatprep.subr.mxu0 0.0
      %484 = vmatpush1.msra.mxu0 0.0
      %485 = vmatprep.subr.mxu0 0.0
      %486 = vmatpush1.msra.mxu0 0.0
      %487 = vmatprep.subr.mxu0 0.0
      %488 = vmatpush1.msra.mxu0 0.0
      %489 = vmatprep.subr.mxu0 0.0
      %490 = vmatpush1.msra.mxu0 0.0
      %491 = vmatprep.subr.mxu0 0.0
      %492 = vmatpush1.msra.mxu0 0.0
      %493 = vmatprep.subr.mxu0 0.0
      %494 = vmatpush1.msra.mxu0 0.0
      %495 = vmatprep.subr.mxu0 0.0
      %496 = vmatpush1.msra.mxu0 0.0
      %497 = vmatprep.subr.mxu0 0.0
      %498 = vmatpush1.msra.mxu0 0.0
      %499 = vmatprep.subr.mxu0 0.0
      %500 = vmatpush1.msra.mxu0 0.0
      %501 = vmatprep.subr.mxu0 0.0
      %502 = vmatpush1.msra.mxu0 0.0
      %503 = vmatprep.subr.mxu0 0.0
      %504 = vmatpush1.msra.mxu0 0.0
      %505 = vmatprep.subr.mxu0 0.0
      %506 = vmatpush1.msra.mxu0 0.0
      %507 = vmatprep.subr.mxu0 0.0
      %508 = vmatpush1.msra.mxu0 0.0
      %509 = vmatprep.subr.mxu0 0.0
      %510 = vmatpush1.msra.mxu0 0.0
      %511 = vmatprep.subr.mxu0 0.0
      %512 = vmatpush1.msra.mxu0 0.0
      %513 = vmatprep.subr.mxu0 0.0
      %514 = vmatpush1.msra.mxu0 0.0
      %515 = vmatprep.subr.mxu0 0.0
      %516 = vmatpush1.msra.mxu0 0.0
      %517 = vmatprep.subr.mxu0 0.0
      %518 = vmatpush1.msra.mxu0 0.0
      %519 = vmatprep.subr.mxu0 0.0
      %520 = vmatpush1.msra.mxu0 0.0
      %521 = vmatprep.subr.mxu0 0.0
      %522 = vmatpush1.msra.mxu0 0.0
      %523 = vmatprep.subr.mxu0 0.0
      %524 = vmatpush1.msra.mxu0 0.0
      %525 = vmatprep.subr.mxu0 0.0
      %526 = vmatpush1.msra.mxu0 0.0
      %527 = vmatprep.subr.mxu0 0.0
      %528 = vmatpush1.msra.mxu0 0.0
      %529 = vmatprep.subr.mxu0 0.0
      %530 = vmatpush1.msra.mxu0 0.0
      %531 = vmatprep.subr.mxu0 0.0
      %532 = vmatpush1.msra.mxu0 0.0
      %533 = vmatprep.mubr.f32.mxu0 0.0
      %534 = vmatmul.mubr.f32.gmra.mrb[0].mxu0 %v463
      %v535 = vpop.f32.mrb[0].mxu0
      %v536 = vadd.f32 %v460, %v535
      %v537 = vpop.f32.mrb[0].mxu0
      %538 = vdwg.mxu0
      %v539 = vsub.f32 0.0, %v536
      %v540 = vmul.f32 %v539, 1.442695
      %v541 = vpow.pop %v540
      %v542 = vadd.f32 %v541, 1.0
      %v543 = vrcp.pop %v542
      %v544 = vmul.f32 1.0, %v543
      %v545 = vld [vmem:[%s352] sm:$0xff]
      %v546 = vld [vmem:[%s352 + $0x8] sm:$0xff]
      %v547 = vld [vmem:[%s352 + $0x10] sm:$0xff]
      %v548 = vld [vmem:[%s352 + $0x18] sm:$0xff]
      %v549 = vld [vmem:[%s352 + $0x20] sm:$0xff]
      %v550 = vld [vmem:[%s352 + $0x28] sm:$0xff]
      %v551 = vld [vmem:[%s352 + $0x30] sm:$0xff]
      %v552 = vld [vmem:[%s352 + $0x38] sm:$0xff]
      %v553 = vld [vmem:[%s352 + $0x40] sm:$0xff]
      %v554 = vld [vmem:[%s352 + $0x48] sm:$0xff]
      %v555 = vld [vmem:[%s352 + $0x50] sm:$0xff]
      %v556 = vld [vmem:[%s352 + $0x58] sm:$0xff]
      %v557 = vld [vmem:[%s352 + $0x60] sm:$0xff]
      %v558 = vld [vmem:[%s352 + $0x68] sm:$0xff]
      %v559 = vld [vmem:[%s352 + $0x70] sm:$0xff]
      %v560 = vld [vmem:[%s352 + $0x78] sm:$0xff]
      %v561 = vlaneseq
      %v562 = vshrl.u32 %v561, 7
      %v563 = vsub.s32 0, %v562
      %v564 = vrot.slane %v544, %v563
      %v565 = vmul.f32 %v545, %v564
      %v566 = vmul.f32 %v546, %v564
      %v567 = vmul.f32 %v547, %v564
      %v568 = vmul.f32 %v548, %v564
      %v569 = vmul.f32 %v549, %v564
      %v570 = vmul.f32 %v550, %v564
      %v571 = vmul.f32 %v551, %v564
      %v572 = vmul.f32 %v552, %v564
      %v573 = vmul.f32 %v553, %v564
      %v574 = vmul.f32 %v554, %v564
      %v575 = vmul.f32 %v555, %v564
      %v576 = vmul.f32 %v556, %v564
      %v577 = vmul.f32 %v557, %v564
      %v578 = vmul.f32 %v558, %v564
      %v579 = vmul.f32 %v559, %v564
      %v580 = vmul.f32 %v560, %v564
      %v581 = vld [vmem:[%s363] sm:$0xff]
      %v582 = vld [vmem:[%s363 + $0x8] sm:$0xff]
      %v583 = vld [vmem:[%s363 + $0x10] sm:$0xff]
      %v584 = vld [vmem:[%s363 + $0x18] sm:$0xff]
      %v585 = vld [vmem:[%s363 + $0x20] sm:$0xff]
      %v586 = vld [vmem:[%s363 + $0x28] sm:$0xff]
      %v587 = vld [vmem:[%s363 + $0x30] sm:$0xff]
      %v588 = vld [vmem:[%s363 + $0x38] sm:$0xff]
      %v589 = vld [vmem:[%s363 + $0x40] sm:$0xff]
      %v590 = vld [vmem:[%s363 + $0x48] sm:$0xff]
      %v591 = vld [vmem:[%s363 + $0x50] sm:$0xff]
      %v592 = vld [vmem:[%s363 + $0x58] sm:$0xff]
      %v593 = vld [vmem:[%s363 + $0x60] sm:$0xff]
      %v594 = vld [vmem:[%s363 + $0x68] sm:$0xff]
      %v595 = vld [vmem:[%s363 + $0x70] sm:$0xff]
      %v596 = vld [vmem:[%s363 + $0x78] sm:$0xff]
      %v597 = vadd.f32 %v565, %v581
      %v598 = vadd.f32 %v566, %v582
      %v599 = vadd.f32 %v567, %v583
      %v600 = vadd.f32 %v568, %v584
      %v601 = vadd.f32 %v569, %v585
      %v602 = vadd.f32 %v570, %v586
      %v603 = vadd.f32 %v571, %v587
      %v604 = vadd.f32 %v572, %v588
      %v605 = vadd.f32 %v573, %v589
      %v606 = vadd.f32 %v574, %v590
      %v607 = vadd.f32 %v575, %v591
      %v608 = vadd.f32 %v576, %v592
      %v609 = vadd.f32 %v577, %v593
      %v610 = vadd.f32 %v578, %v594
      %v611 = vadd.f32 %v579, %v595
      %v612 = vadd.f32 %v580, %v596
      %613 = vst.msk [vmem:[%s374] sm:$0xff] %vm380, %v597
      %614 = vst.msk [vmem:[%s374 + $0x8] sm:$0xff] %vm380, %v598
      %615 = vst.msk [vmem:[%s374 + $0x10] sm:$0xff] %vm380, %v599
      %616 = vst.msk [vmem:[%s374 + $0x18] sm:$0xff] %vm380, %v600
      %617 = vst.msk [vmem:[%s374 + $0x20] sm:$0xff] %vm380, %v601
      %618 = vst.msk [vmem:[%s374 + $0x28] sm:$0xff] %vm380, %v602
      %619 = vst.msk [vmem:[%s374 + $0x30] sm:$0xff] %vm380, %v603
      %620 = vst.msk [vmem:[%s374 + $0x38] sm:$0xff] %vm380, %v604
      %621 = vst.msk [vmem:[%s374 + $0x40] sm:$0xff] %vm380, %v605
      %622 = vst.msk [vmem:[%s374 + $0x48] sm:$0xff] %vm380, %v606
      %623 = vst.msk [vmem:[%s374 + $0x50] sm:$0xff] %vm380, %v607
      %624 = vst.msk [vmem:[%s374 + $0x58] sm:$0xff] %vm380, %v608
      %625 = vst.msk [vmem:[%s374 + $0x60] sm:$0xff] %vm380, %v609
      %626 = vst.msk [vmem:[%s374 + $0x68] sm:$0xff] %vm380, %v610
      %627 = vst.msk [vmem:[%s374 + $0x70] sm:$0xff] %vm380, %v611
      %628 = vst.msk [vmem:[%s374 + $0x78] sm:$0xff] %vm380, %v612
      %s629 = smul.u32 8, %s23
      %p630 = scmp.lt.s32.totalorder %s22, 1
      %s631 = scalar_select %p630, %s22, 1
      %p632 = scmp.lt.s32.totalorder %s629, 15
      %s633 = scalar_select %p632, %s629, 15
      %s634 = smul.addr %s633, 2
      %s635 = smul.addr %s631, 32
      %s636 = sadd.s32 %s634, %s635
      %s637 = smul.addr %s636, 8
      %s638 = scalar_lea.vmem %s7, %s637
      // Predicated region
      $region49: #{residual_group_forward.6} parent=47 // pred_check
        %p639 = pneg %p216
      $region50: #{residual_group_forward.6} parent=47 // pred_check_branch
        %641 = sbr.rel (%p639) target = $region52
      $region51: #{residual_group_forward.6} parent=47 // pred_region
        %s642 = smul.u32 8, %s23
      $region52: #{residual_group_forward.6} parent=47 // pred_fallthru
        _
    $region48: #{residual_group_forward.6} parent=5 // pred_fallthru
      _
    %p643 = scmp.le.s32.totalorder 2, %s13
    // Predicated region
    $region53: #{residual_group_forward.6} parent=5 // pred_check
      %p644 = pneg %p643
    $region54: #{residual_group_forward.6} parent=5 // pred_check_branch
      %646 = sbr.rel (%p644) target = $region56
    $region55: #{residual_group_forward.6} parent=5 // pred_region
      %s647 = ssub.s32 %s13, 2
      // Predicated region
      $region57: #{residual_group_forward.6} parent=55 // pred_check
        %p648 = pneg %p222
      $region58: #{residual_group_forward.6} parent=55 // pred_check_branch
        %650 = sbr.rel (%p648) target = $region60
      $region59: #{residual_group_forward.6} parent=55 // pred_region
        %s651 = smul.u32 8, %s25
        %p652 = scmp.lt.s32.totalorder %s24, 1
        %s653 = scalar_select %p652, %s24, 1
        %p654 = scmp.lt.s32.totalorder %s651, 15
        %s655 = scalar_select %p654, %s651, 15
        %s656 = smul.addr %s655, 2
        %s657 = smul.addr %s653, 32
        %s658 = sadd.s32 %s656, %s657
        %s659 = smul.addr %s658, 8
        %s660 = scalar_lea.vmem %s7, %s659
      $region60: #{residual_group_forward.6} parent=55 // pred_fallthru
        _
    $region56: #{residual_group_forward.6} parent=5 // pred_fallthru
      _
  $region6: #{residual_group_forward.6} parent=0 // loop_footer
    %s17 = sadd.s32 1, %s13
  $region7: #{residual_group_forward.6} parent=0 // loop_footer_branch
    %12 = sbr.rel target = $region3
  $region8: #{residual_group_forward.6} parent=0 // loop_exit
    _

// kernel: residual_group_forward.9
$region0: #{residual_group_forward.9}
  #allocation0 [shape = 'u32[]', space=smem, size = 0x4, offset = 0x4, fixed_abs, tag = 'smem constant byte address 0x4 - core index']
  #allocation1 [shape = 'u32[144,128]{1,0:T(1,128)}', space=vmem, size = 0x12000, scoped, tag = 'internal scratch']
  #allocation2 [shape = 'f32[10,18,4]{2,1,0:T(8,128)}', space=vmem, size = 0x1e000, scoped, tag = 'scratch operand']
  %s0 = inlined_call_operand.vmem [shape: f32[2,16,16,4], index: 0, kind: input, shape index: {}, may-alias: {0,1,2}]
  %s1 = inlined_call_operand.vmem [shape: f32[2,16,16,4], index: 1, kind: input, shape index: {}, may-alias: {0,1,2}]
  %s2 = inlined_call_operand.vmem [shape: f32[2,16,16,4], index: 2, kind: input, shape index: {}, may-alias: {0,1,2}]
  %s3 = inlined_call_operand.vmem [shape: f32[2,16,16,4], index: 3, kind: input, shape index: {}]
  %s4 = inlined_call_operand.vmem [shape: f32[3,3,4,4], index: 4, kind: input, shape index: {}]
  %s5 = inlined_call_operand.vmem [shape: f32[1,4], index: 5, kind: input, shape index: {}]
  %s6 = inlined_call_operand.vmem [shape: f32[2,16,16,4], index: 6, kind: output, shape index: {}]
  %s7 = sld [smem:[#allocation0]]
  $region57: #{residual_group_forward.9} parent=0
    _
  %s9 = ssub.s32 1, %s7
  %s10 = scalar_select 0, %s9, %s7
  loop: start=0, step=1, limit=6
  $region2: #{residual_group_forward.9} parent=0 // loop_pre_header
    _
  $region3: #{residual_group_forward.9} parent=0 // loop_header
    %s12 = sphi 0, %s16
    %p13 = scmp.ge.s32.totalorder %s12, 6
    %s19 = sphi 0, %s31
    %s20 = sphi 0, %s27
    %s21 = sphi 0, %s19
    %s22 = sphi 0, %s20
    %s23 = sphi 0, %s21
    %s24 = sphi 0, %s22
    %s36 = sphi 0, %s38
    %s39 = sphi 0, %s36
    %s40 = sphi 0, %s39
    %s56 = sphi 0, %s40
    %s72 = sphi 0, %s74
    %s75 = sphi 0, %s72
    %s76 = sphi 0, %s75
    %s92 = sphi 0, %s76
    %s108 = sphi 0, %s110
    %s111 = sphi 0, %s108
    %s112 = sphi 0, %s111
    %s128 = sphi 0, %s112
    %s136 = sphi 0, %s138
    %s139 = sphi 0, %s136
    %s140 = sphi 0, %s139
    %s156 = sphi 0, %s140
    %s160 = sphi 0, %s160
    %s162 = sphi 0, %s160
    %s163 = sphi 0, %s162
    %s177 = sphi 0, %s163
    %s181 = sphi 0, %s181
    %s183 = sphi 0, %s181
    %s184 = sphi 0, %s183
    %s198 = sphi 0, %s184
    %s206 = sphi 0, %s208
    %s209 = sphi 0, %s206
    %s210 = sphi 0, %s209
    %s226 = sphi 0, %s210
  $region4: #{residual_group_forward.9} parent=0 // loop_header_branch
    %15 = sbr.rel (%p13) target = $region8
  $region5: #{residual_group_forward.9} parent=0 // loop_body
    %s17 = ssub.s32 %s12, 1
    %s18 = ssub.s32 %s12, 2
    %s25 = sadd.s32 1, %s20
    %p26 = scmp.ge.s32.totalorder %s25, 2
    %s27 = scalar_select %p26, 0, %s25
    %s28 = sadd.s32 1, %s19
    %s29 = scalar_select %p26, %s28, %s19
    %p30 = scmp.ge.s32.totalorder %s29, 2
    %s31 = scalar_select %p30, 0, %s29
    %s32 = ssub.s32 %s19, %s31
    %s33 = ssub.s32 %s20, %s27
    %s34 = sor.u32 %s32, %s33
    %p35 = scmp.eq.s32.totalorder %s34, 0
    %s37 = sadd.s32 %s36, 1
    %s38 = scalar_select %p35, %s36, %s37
    %p41 = pneg %p35
    %p42 = scmp.eq.s32.totalorder %s12, 3
    %p43 = por %p41, %p42
    %p44 = scmp.ne.s32.totalorder %s36, %s39
    %p45 = scmp.eq.s32.totalorder %s12, 0
    %p46 = por %p44, %p45
    %p47 = scmp.ne.s32.totalorder %s36, %s39
    %p48 = scmp.eq.s32.totalorder %s17, 3
    %p49 = por %p47, %p48
    %p50 = scmp.ne.s32.totalorder %s39, %s40
    %p51 = scmp.eq.s32.totalorder %s17, 0
    %p52 = por %p50, %p51
    %p53 = scmp.ne.s32.totalorder %s39, %s40
    %p54 = scmp.eq.s32.totalorder %s18, 3
    %p55 = por %p53, %p54
    %p57 = scmp.ne.s32.totalorder %s40, %s56
    %p58 = scmp.eq.s32.totalorder %s18, 0
    %p59 = por %p57, %p58
    %s60 = smul.u32 %s20, 8
    %s61 = ssub.s32 %s60, 1
    %p62 = scmp.gt.s32.totalorder %s61, 0
    %s63 = scalar_select %p62, %s61, 0
    %s64 = smul.u32 %s27, 8
    %s65 = ssub.s32 %s64, 1
    %p66 = scmp.gt.s32.totalorder %s65, 0
    %s67 = scalar_select %p66, %s65, 0
    %s68 = ssub.s32 %s19, %s31
    %s69 = ssub.s32 %s63, %s67
    %s70 = sor.u32 %s68, %s69
    %p71 = scmp.eq.s32.totalorder %s70, 0
    %s73 = sadd.s32 %s72, 1
    %s74 = scalar_select %p71, %s72, %s73
    %p77 = pneg %p71
    %p78 = scmp.eq.s32.totalorder %s12, 3
    %p79 = por %p77, %p78
    %p80 = scmp.ne.s32.totalorder %s72, %s75
    %p81 = scmp.eq.s32.totalorder %s12, 0
    %p82 = por %p80, %p81
    %p83 = scmp.ne.s32.totalorder %s72, %s75
    %p84 = scmp.eq.s32.totalorder %s17, 3
    %p85 = por %p83, %p84
    %p86 = scmp.ne.s32.totalorder %s75, %s76
    %p87 = scmp.eq.s32.totalorder %s17, 0
    %p88 = por %p86, %p87
    %p89 = scmp.ne.s32.totalorder %s75, %s76
    %p90 = scmp.eq.s32.totalorder %s18, 3
    %p91 = por %p89, %p90
    %p93 = scmp.ne.s32.totalorder %s76, %s92
    %p94 = scmp.eq.s32.totalorder %s18, 0
    %p95 = por %p93, %p94
    %s96 = sadd.s32 %s20, 1
    %s97 = smul.u32 %s96, 8
    %p98 = scmp.lt.s32.totalorder %s97, 15
    %s99 = scalar_select %p98, %s97, 15
    %s100 = sadd.s32 %s27, 1
    %s101 = smul.u32 %s100, 8
    %p102 = scmp.lt.s32.totalorder %s101, 15
    %s103 = scalar_select %p102, %s101, 15
    %s104 = ssub.s32 %s19, %s31
    %s105 = ssub.s32 %s99, %s103
    %s106 = sor.u32 %s104, %s105
    %p107 = scmp.eq.s32.totalorder %s106, 0
    %s109 = sadd.s32 %s108, 1
    %s110 = scalar_select %p107, %s108, %s109
    %p113 = pneg %p107
    %p114 = scmp.eq.s32.totalorder %s12, 3
    %p115 = por %p113, %p114
    %p116 = scmp.ne.s32.totalorder %s108, %s111
    %p117 = scmp.eq.s32.totalorder %s12, 0
    %p118 = por %p116, %p117
    %p119 = scmp.ne.s32.totalorder %s108, %s111
    %p120 = scmp.eq.s32.totalorder %s17, 3
    %p121 = por %p119, %p120
    %p122 = scmp.ne.s32.totalorder %s111, %s112
    %p123 = scmp.eq.s32.totalorder %s17, 0
    %p124 = por %p122, %p123
    %p125 = scmp.ne.s32.totalorder %s111, %s112
    %p126 = scmp.eq.s32.totalorder %s18, 3
    %p127 = por %p125, %p126
    %p129 = scmp.ne.s32.totalorder %s112, %s128
    %p130 = scmp.eq.s32.totalorder %s18, 0
    %p131 = por %p129, %p130
    %s132 = ssub.s32 %s19, %s31
    %s133 = ssub.s32 %s20, %s27
    %s134 = sor.u32 %s132, %s133
    %p135 = scmp.eq.s32.totalorder %s134, 0
    %s137 = sadd.s32 %s136, 1
    %s138 = scalar_select %p135, %s136, %s137
    %p141 = pneg %p135
    %p142 = scmp.eq.s32.totalorder %s12, 3
    %p143 = por %p141, %p142
    %p144 = scmp.ne.s32.totalorder %s136, %s139
    %p145 = scmp.eq.s32.totalorder %s12, 0
    %p146 = por %p144, %p145
    %p147 = scmp.ne.s32.totalorder %s136, %s139
    %p148 = scmp.eq.s32.totalorder %s17, 3
    %p149 = por %p147, %p148
    %p150 = scmp.ne.s32.totalorder %s139, %s140
    %p151 = scmp.eq.s32.totalorder %s17, 0
    %p152 = por %p150, %p151
    %p153 = scmp.ne.s32.totalorder %s139, %s140
    %p154 = scmp.eq.s32.totalorder %s18, 3
    %p155 = por %p153, %p154
    %p157 = scmp.ne.s32.totalorder %s140, %s156
    %p158 = scmp.eq.s32.totalorder %s18, 0
    %p159 = por %p157, %p158
    %s161 = sadd.s32 %s160, 1
    %p164 = scmp.eq.s32.totalorder %s12, 3
    %p165 = scmp.ne.s32.totalorder %s160, %s162
    %p166 = scmp.eq.s32.totalorder %s12, 0
    %p167 = por %p165, %p166
    %p168 = scmp.ne.s32.totalorder %s160, %s162
    %p169 = scmp.eq.s32.totalorder %s17, 3
    %p170 = por %p168, %p169
    %p171 = scmp.ne.s32.totalorder %s162, %s163
    %p172 = scmp.eq.s32.totalorder %s17, 0
    %p173 = por %p171, %p172
    %p174 = scmp.ne.s32.totalorder %s162, %s163
    %p175 = scmp.eq.s32.totalorder %s18, 3
    %p176 = por %p174, %p175
    %p178 = scmp.ne.s32.totalorder %s163, %s177
    %p179 = scmp.eq.s32.totalorder %s18, 0
    %p180 = por %p178, %p179
    %s182 = sadd.s32 %s181, 1
    %p185 = scmp.eq.s32.totalorder %s12, 3
    %p186 = scmp.ne.s32.totalorder %s181, %s183
    %p187 = scmp.eq.s32.totalorder %s12, 0
    %p188 = por %p186, %p187
    %p189 = scmp.ne.s32.totalorder %s181, %s183
    %p190 = scmp.eq.s32.totalorder %s17, 3
    %p191 = por %p189, %p190
    %p192 = scmp.ne.s32.totalorder %s183, %s184
    %p193 = scmp.eq.s32.totalorder %s17, 0
    %p194 = por %p192, %p193
    %p195 = scmp.ne.s32.totalorder %s183, %s184
    %p196 = scmp.eq.s32.totalorder %s18, 3
    %p197 = por %p195, %p196
    %p199 = scmp.ne.s32.totalorder %s184, %s198
    %p200 = scmp.eq.s32.totalorder %s18, 0
    %p201 = por %p199, %p200
    %s202 = ssub.s32 %s19, %s31
    %s203 = ssub.s32 %s20, %s27
    %s204 = sor.u32 %s202, %s203
    %p205 = scmp.eq.s32.totalorder %s204, 0
    %s207 = sadd.s32 %s206, 1
    %s208 = scalar_select %p205, %s206, %s207
    %p211 = pneg %p205
    %p212 = scmp.eq.s32.totalorder %s12, 3
    %p213 = por %p211, %p212
    %p214 = scmp.ne.s32.totalorder %s206, %s209
    %p215 = scmp.eq.s32.totalorder %s12, 0
    %p216 = por %p214, %p215
    %p217 = scmp.ne.s32.totalorder %s206, %s209
    %p218 = scmp.eq.s32.totalorder %s17, 3
    %p219 = por %p217, %p218
    %p220 = scmp.ne.s32.totalorder %s209, %s210
    %p221 = scmp.eq.s32.totalorder %s17, 0
    %p222 = por %p220, %p221
    %p223 = scmp.ne.s32.totalorder %s209, %s210
    %p224 = scmp.eq.s32.totalorder %s18, 3
    %p225 = por %p223, %p224
    %p227 = scmp.ne.s32.totalorder %s210, %s226
    %p228 = scmp.eq.s32.totalorder %s18, 0
    %p229 = por %p227, %p228
    %p230 = scmp.le.s32.totalorder 1, %s12
    %p231 = scmp.lt.s32.totalorder %s12, 5
    %p232 = pnand %p230, %p231
    %p233 = pneg %p232
    // Predicated region
    $region9: #{residual_group_forward.9} parent=5 // pred_check
      _
    $region10: #{residual_group_forward.9} parent=5 // pred_check_branch
      %235 = sbr.rel (%p232) target = $region12
    $region11: #{residual_group_forward.9} parent=5 // pred_region
      %s236 = ssub.s32 %s12, 1
      // Predicated region
      $region13: #{residual_group_forward.9} parent=11 // pred_check
        %p237 = pneg %p173
      $region14: #{residual_group_forward.9} parent=11 // pred_check_branch
        %239 = sbr.rel (%p237) target = $region16
      $region15: #{residual_group_forward.9} parent=11 // pred_region
        _
      $region16: #{residual_group_forward.9} parent=11 // pred_fallthru
        _
      // Predicated region
      $region17: #{residual_group_forward.9} parent=11 // pred_check
        %p240 = pneg %p194
      $region18: #{residual_group_forward.9} parent=11 // pred_check_branch
        %242 = sbr.rel (%p240) target = $region20
      $region19: #{residual_group_forward.9} parent=11 // pred_region
        _
      $region20: #{residual_group_forward.9} parent=11 // pred_fallthru
        _
    $region12: #{residual_group_forward.9} parent=5 // pred_fallthru
      _
    %p243 = scmp.lt.s32.totalorder %s12, 4
    // Predicated region
    $region21: #{residual_group_forward.9} parent=5 // pred_check
      %p244 = pneg %p243
    $region22: #{residual_group_forward.9} parent=5 // pred_check_branch
      %246 = sbr.rel (%p244) target = $region24
    $region23: #{residual_group_forward.9} parent=5 // pred_region
      // Predicated region
      $region25: #{residual_group_forward.9} parent=23 // pred_check
        %p247 = pneg %p46
      $region26: #{residual_group_forward.9} parent=23 // pred_check_branch
        %249 = sbr.rel (%p247) target = $region28
      $region27: #{residual_group_forward.9} parent=23 // pred_region
        %s250 = smul.u32 8, %s20
        %p251 = scmp.lt.s32.totalorder %s19, 1
        %s252 = scalar_select %p251, %s19, 1
        %p253 = scmp.lt.s32.totalorder %s250, 15
        %s254 = scalar_select %p253, %s250, 15
        %s255 = smul.addr %s254, 2
        %s256 = smul.addr %s252, 32
        %s257 = sadd.s32 %s255, %s256
        %s258 = smul.addr %s257, 8
        %s259 = scalar_lea.vmem %s0, %s258
        %s260 = smul.u32 8, %s20
      $region28: #{residual_group_forward.9} parent=23 // pred_fallthru
        _
      // Predicated region
      $region29: #{residual_group_forward.9} parent=23 // pred_check
        %p261 = pneg %p82
      $region30: #{residual_group_forward.9} parent=23 // pred_check_branch
        %263 = sbr.rel (%p261) target = $region32
      $region31: #{residual_group_forward.9} parent=23 // pred_region
        %s264 = smul.u32 %s20, 8
        %s265 = ssub.s32 %s264, 1
        %p266 = scmp.gt.s32.totalorder %s265, 0
        %s267 = scalar_select %p266, %s265, 0
        %p268 = scmp.lt.s32.totalorder %s19, 1
        %s269 = scalar_select %p268, %s19, 1
        %p270 = scmp.lt.s32.totalorder %s267, 15
        %s271 = scalar_select %p270, %s267, 15
        %s272 = smul.addr %s271, 2
        %s273 = smul.addr %s269, 32
        %s274 = sadd.s32 %s272, %s273
        %s275 = smul.addr %s274, 8
        %s276 = scalar_lea.vmem %s1, %s275
        %s277 = smul.u32 %s20, 8
        %s278 = ssub.s32 %s277, 1
        %p279 = scmp.gt.s32.totalorder %s278, 0
        %s280 = scalar_select %p279, %s278, 0
      $region32: #{residual_group_forward.9} parent=23 // pred_fallthru
        _
      // Predicated region
      $region33: #{residual_group_forward.9} parent=23 // pred_check
        %p281 = pneg %p118
      $region34: #{residual_group_forward.9} parent=23 // pred_check_branch
        %283 = sbr.rel (%p281) target = $region36
      $region35: #{residual_group_forward.9} parent=23 // pred_region
        %s284 = sadd.s32 %s20, 1
        %s285 = smul.u32 %s284, 8
        %p286 = scmp.lt.s32.totalorder %s285, 15
        %s287 = scalar_select %p286, %s285, 15
        %p288 = scmp.lt.s32.totalorder %s19, 1
        %s289 = scalar_select %p288, %s19, 1
        %p290 = scmp.lt.s32.totalorder %s287, 15
        %s291 = scalar_select %p290, %s287, 15
        %s292 = smul.addr %s291, 2
        %s293 = smul.addr %s289, 32
        %s294 = sadd.s32 %s292, %s293
        %s295 = smul.addr %s294, 8
        %s296 = scalar_lea.vmem %s2, %s295
        %s297 = sadd.s32 %s20, 1
        %s298 = smul.u32 %s297, 8
        %p299 = scmp.lt.s32.totalorder %s298, 15
        %s300 = scalar_select %p299, %s298, 15
      $region36: #{residual_group_forward.9} parent=23 // pred_fallthru
        _
      // Predicated region
      $region37: #{residual_group_forward.9} parent=23 // pred_check
        %p301 = pneg %p146
      $region38: #{residual_group_forward.9} parent=23 // pred_check_branch
        %303 = sbr.rel (%p301) target = $region40
      $region39: #{residual_group_forward.9} parent=23 // pred_region
        %s304 = smul.u32 8, %s20
        %p305 = scmp.lt.s32.totalorder %s19, 1
        %s306 = scalar_select %p305, %s19, 1
        %p307 = scmp.lt.s32.totalorder %s304, 15
        %s308 = scalar_select %p307, %s304, 15
        %s309 = smul.addr %s308, 2
        %s310 = smul.addr %s306, 32
        %s311 = sadd.s32 %s309, %s310
        %s312 = smul.addr %s311, 8
        %s313 = scalar_lea.vmem %s3, %s312
        %s314 = smul.u32 8, %s20
      $region40: #{residual_group_forward.9} parent=23 // pred_fallthru
        _
    $region24: #{residual_group_forward.9} parent=5 // pred_fallthru
      _
    %p315 = scmp.le.s32.totalorder 1, %s12
    %p316 = scmp.lt.s32.totalorder %s12, 5
    %p317 = pnand %p315, %p316
    %p318 = pneg %p317
    // Predicated region
    $region41: #{residual_group_forward.9} parent=5 // pred_check
      _
    $region42: #{residual_group_forward.9} parent=5 // pred_check_branch
      %320 = sbr.rel (%p317) target = $region44
    $region43: #{residual_group_forward.9} parent=5 // pred_region
      %s321 = ssub.s32 %s12, 1
      %s322 = smul.u32 8, %s22
      %p323 = scmp.lt.s32.totalorder %s21, 1
      %s324 = scalar_select %p323, %s21, 1
      %p325 = scmp.lt.s32.totalorder %s322, 15
      %s326 = scalar_select %p325, %s322, 15
      %s327 = smul.addr %s326, 2
      %s328 = smul.addr %s324, 32
      %s329 = sadd.s32 %s327, %s328
      %s330 = smul.addr %s329, 8
      %s331 = scalar_lea.vmem %s0, %s330
      %p332 = pneg %p52
      %p333 = pneg %p49
      %s334 = smul.u32 %s22, 8
      %s335 = ssub.s32 %s334, 1
      %p336 = scmp.gt.s32.totalorder %s335, 0
      %s337 = scalar_select %p336, %s335, 0
      %p338 = scmp.lt.s32.totalorder %s21, 1
      %s339 = scalar_select %p338, %s21, 1
      %p340 = scmp.lt.s32.totalorder %s337, 15
      %s341 = scalar_select %p340, %s337, 15
      %s342 = smul.addr %s341, 2
      %s343 = smul.addr %s339, 32
      %s344 = sadd.s32 %s342, %s343
      %s345 = smul.addr %s344, 8
      %s346 = scalar_lea.vmem %s1, %s345
      %p347 = pneg %p88
      %p348 = pneg %p85
      %s349 = sadd.s32 %s22, 1
      %s350 = smul.u32 %s349, 8
      %p351 = scmp.lt.s32.totalorder %s350, 15
      %s352 = scalar_select %p351, %s350, 15
      %p353 = scmp.lt.s32.totalorder %s21, 1
      %s354 = scalar_select %p353, %s21, 1
      %p355 = scmp.lt.s32.totalorder %s352, 15
      %s356 = scalar_select %p355, %s352, 15
      %s357 = smul.addr %s356, 2
      %s358 = smul.addr %s354, 32
      %s359 = sadd.s32 %s357, %s358
      %s360 = smul.addr %s359, 8
      %s361 = scalar_lea.vmem %s2, %s360
      %p362 = pneg %p124
      %p363 = pneg %p121
      %s364 = smul.u32 8, %s22
      %p365 = scmp.lt.s32.totalorder %s21, 1
      %s366 = scalar_select %p365, %s21, 1
      %p367 = scmp.lt.s32.totalorder %s364, 15
      %s368 = scalar_select %p367, %s364, 15
      %s369 = smul.addr %s368, 2
      %s370 = smul.addr %s366, 32
      %s371 = sadd.s32 %s369, %s370
      %s372 = smul.addr %s371, 8
      %s373 = scalar_lea.vmem %s3, %s372
      %p374 = pneg %p152
      %p375 = pneg %p149
      %p376 = pneg %p173
      %p377 = pneg %p170
      %p378 = pneg %p194
      %p379 = pneg %p191
      %p380 = pneg %p222
      %p381 = pneg %p219
      %s382 = smul.u32 8, %s22
      %p383 = scmp.lt.s32.totalorder %s21, 1
      %s384 = scalar_select %p383, %s21, 1
      %p385 = scmp.lt.s32.totalorder %s382, 15
      %s386 = scalar_select %p385, %s382, 15
      %s387 = smul.addr %s386, 2
      %s388 = smul.addr %s384, 32
      %s389 = sadd.s32 %s387, %s388
      %s390 = smul.addr %s389, 8
      %s391 = scalar_lea.vmem %s6, %s390
      %s392 = smul.u32 8, %s22
      %p393 = scmp.lt.s32.totalorder %s21, 1
      %s394 = scalar_select %p393, %s21, 1
      %p395 = scmp.lt.s32.totalorder %s392, 15
      %s396 = scalar_select %p395, %s392, 15
      %s397 = smul.addr %s396, 2
      %s398 = smul.addr %s394, 32
      %s399 = sadd.s32 %s397, %s398
      %s400 = smul.addr %s399, 8
      %s401 = scalar_lea.vmem %s0, %s400
      %s402 = smul.u32 8, %s22
      %s403 = smul.u32 %s22, 8
      %s404 = ssub.s32 %s403, 1
      %p405 = scmp.gt.s32.totalorder %s404, 0
      %s406 = scalar_select %p405, %s404, 0
      %p407 = scmp.lt.s32.totalorder %s21, 1
      %s408 = scalar_select %p407, %s21, 1
      %p409 = scmp.lt.s32.totalorder %s406, 15
      %s410 = scalar_select %p409, %s406, 15
      %s411 = smul.addr %s410, 2
      %s412 = smul.addr %s408, 32
      %s413 = sadd.s32 %s411, %s412
      %s414 = smul.addr %s413, 8
      %s415 = scalar_lea.vmem %s1, %s414
      %s416 = smul.u32 %s22, 8
      %s417 = ssub.s32 %s416, 1
      %p418 = scmp.gt.s32.totalorder %s417, 0
      %s419 = scalar_select %p418, %s417, 0
      %s420 = sadd.s32 %s22, 1
      %s421 = smul.u32 %s420, 8
      %p422 = scmp.lt.s32.totalorder %s421, 15
      %s423 = scalar_select %p422, %s421, 15
      %p424 = scmp.lt.s32.totalorder %s21, 1
      %s425 = scalar_select %p424, %s21, 1
      %p426 = scmp.lt.s32.totalorder %s423, 15
      %s427 = scalar_select %p426, %s423, 15
      %s428 = smul.addr %s427, 2
      %s429 = smul.addr %s425, 32
      %s430 = sadd.s32 %s428, %s429
      %s431 = smul.addr %s430, 8
      %s432 = scalar_lea.vmem %s2, %s431
      %s433 = sadd.s32 %s22, 1
      %s434 = smul.u32 %s433, 8
      %p435 = scmp.lt.s32.totalorder %s434, 15
      %s436 = scalar_select %p435, %s434, 15
      %s437 = smul.u32 8, %s22
      %p438 = scmp.lt.s32.totalorder %s21, 1
      %s439 = scalar_select %p438, %s21, 1
      %p440 = scmp.lt.s32.totalorder %s437, 15
      %s441 = scalar_select %p440, %s437, 15
      %s442 = smul.addr %s441, 2
      %s443 = smul.addr %s439, 32
      %s444 = sadd.s32 %s442, %s443
      %s445 = smul.addr %s444, 8
      %s446 = scalar_lea.vmem %s3, %s445
      %s447 = smul.u32 8, %s22
      %s448 = smul.u32 8, %s22
      %p449 = scmp.lt.s32.totalorder %s21, 1
      %s450 = scalar_select %p449, %s21, 1
      %p451 = scmp.lt.s32.totalorder %s448, 15
      %s452 = scalar_select %p451, %s448, 15
      %s453 = smul.addr %s452, 2
      %s454 = smul.addr %s450, 32
      %s455 = sadd.s32 %s453, %s454
      %s456 = smul.addr %s455, 8
      %s457 = scalar_lea.vmem %s6, %s456
      %s458 = smul.u32 8, %s22
      %vm459 = vcmask 24576
      %460 = vst.msk [vmem:[#allocation2] sm:$0x1] %vm459, 0.0
      %461 = vst.msk [vmem:[#allocation2 + $0x18] sm:$0x1] %vm459, 0.0
      %462 = vst.msk [vmem:[#allocation2 + $0x30] sm:$0x1] %vm459, 0.0
      %463 = vst.msk [vmem:[#allocation2 + $0x48] sm:$0x1] %vm459, 0.0
      %464 = vst.msk [vmem:[#allocation2 + $0x60] sm:$0x1] %vm459, 0.0
      %465 = vst.msk [vmem:[#allocation2 + $0x78] sm:$0x1] %vm459, 0.0
      %466 = vst.msk [vmem:[#allocation2 + $0x90] sm:$0x1] %vm459, 0.0
      %467 = vst.msk [vmem:[#allocation2 + $0xa8] sm:$0x1] %vm459, 0.0
      %468 = vst.msk [vmem:[#allocation2 + $0xc0] sm:$0x1] %vm459, 0.0
      %469 = vst.msk [vmem:[#allocation2 + $0xd8] sm:$0x1] %vm459, 0.0
      %470 = vst.msk [vmem:[#allocation2 + $0x11] sm:$0x1] %vm459, 0.0
      %471 = vst.msk [vmem:[#allocation2 + $0x29] sm:$0x1] %vm459, 0.0
      %472 = vst.msk [vmem:[#allocation2 + $0x41] sm:$0x1] %vm459, 0.0
      %473 = vst.msk [vmem:[#allocation2 + $0x59] sm:$0x1] %vm459, 0.0
      %474 = vst.msk [vmem:[#allocation2 + $0x71] sm:$0x1] %vm459, 0.0
      %475 = vst.msk [vmem:[#allocation2 + $0x89] sm:$0x1] %vm459, 0.0
      %476 = vst.msk [vmem:[#allocation2 + $0xa1] sm:$0x1] %vm459, 0.0
      %477 = vst.msk [vmem:[#allocation2 + $0xb9] sm:$0x1] %vm459, 0.0
      %478 = vst.msk [vmem:[#allocation2 + $0xd1] sm:$0x1] %vm459, 0.0
      %479 = vst.msk [vmem:[#allocation2 + $0xe9] sm:$0x1] %vm459, 0.0
      %v480 = vld [vmem:[%s415] sm:$0xff]
      %v481 = vld [vmem:[%s415 + $0x8] sm:$0xff]
      %p482 = scmp.gt.s32.totalorder %s22, 0
      %s483 = scalar_select %p482, 1, 0
      %s484 = scvt.s32.f32 %s483
      %v485 = vstv %s484
      %v486 = vmul.f32 %v480, %v485
      %v487 = vmul.f32 %v481, %v485
      %v488 = vld [vmem:[%s432] sm:$0xff]
      %v489 = vld [vmem:[%s432 + $0x8] sm:$0xff]
      %p490 = scmp.lt.s32.totalorder %s22, 1
      %s491 = scalar_select %p490, 1, 0
      %s492 = scvt.s32.f32 %s491
      %v493 = vstv %s492
      %v494 = vmul.f32 %v488, %v493
      %v495 = vmul.f32 %v489, %v493
      %vm496 = vcmask 31744
      %497 = vst.msk [vmem:[#allocation2 + $0x1] sm:$0xff] %vm496, %v486
      %498 = vst.msk [vmem:[#allocation2 + $0x9] sm:$0xff] %vm496, %v487
      %v499 = vld [vmem:[%s401] sm:$0xff]
      %v500 = vld [vmem:[%s401 + $0x8] sm:$0xff]
      %v501 = vld [vmem:[%s401 + $0x10] sm:$0xff]
      %v502 = vld [vmem:[%s401 + $0x18] sm:$0xff]
      %v503 = vld [vmem:[%s401 + $0x20] sm:$0xff]
      %v504 = vld [vmem:[%s401 + $0x28] sm:$0xff]
      %v505 = vld [vmem:[%s401 + $0x30] sm:$0xff]
      %v506 = vld [vmem:[%s401 + $0x38] sm:$0xff]
      %v507 = vld [vmem:[%s401 + $0x40] sm:$0xff]
      %v508 = vld [vmem:[%s401 + $0x48] sm:$0xff]
      %v509 = vld [vmem:[%s401 + $0x50] sm:$0xff]
      %v510 = vld [vmem:[%s401 + $0x58] sm:$0xff]
      %v511 = vld [vmem:[%s401 + $0x60] sm:$0xff]
      %v512 = vld [vmem:[%s401 + $0x68] sm:$0xff]
      %v513 = vld [vmem:[%s401 + $0x70] sm:$0xff]
      %v514 = vld [vmem:[%s401 + $0x78] sm:$0xff]
      %s515 = scalar_lea.vmem [#allocation2], 24
      %516 = vst.msk [vmem:[%s515 + $0x1] sm:$0xff] %vm496, %v499
      %517 = vst.msk [vmem:[%s515 + $0x9] sm:$0xff] %vm496, %v500
      %518 = vst.msk [vmem:[%s515 + $0x19] sm:$0xff] %vm496, %v501
      %519 = vst.msk [vmem:[%s515 + $0x21] sm:$0xff] %vm496, %v502
      %520 = vst.msk [vmem:[%s515 + $0x31] sm:$0xff] %vm496, %v503
      %521 = vst.msk [vmem:[%s515 + $0x39] sm:$0xff] %vm496, %v504
      %522 = vst.msk [vmem:[%s515 + $0x49] sm:$0xff] %vm496, %v505
      %523 = vst.msk [vmem:[%s515 + $0x51] sm:$0xff] %vm496, %v506
      %524 = vst.msk [vmem:[%s515 + $0x61] sm:$0xff] %vm496, %v507
      %525 = vst.msk [vmem:[%s515 + $0x69] sm:$0xff] %vm496, %v508
      %526 = vst.msk [vmem:[%s515 + $0x79] sm:$0xff] %vm496, %v509
      %527 = vst.msk [vmem:[%s515 + $0x81] sm:$0xff] %vm496, %v510
      %528 = vst.msk [vmem:[%s515 + $0x91] sm:$0xff] %vm496, %v511
      %529 = vst.msk [vmem:[%s515 + $0x99] sm:$0xff] %vm496, %v512
      %530 = vst.msk [vmem:[%s515 + $0xa9] sm:$0xff] %vm496, %v513
      %531 = vst.msk [vmem:[%s515 + $0xb1] sm:$0xff] %vm496, %v514
      %s532 = scalar_lea.vmem [#allocation2], 216
      %533 = vst.msk [vmem:[%s532 + $0x1] sm:$0xff] %vm496, %v494
      %534 = vst.msk [vmem:[%s532 + $0x9] sm:$0xff] %vm496, %v495
      %v535 = vld [vmem:[#allocation2] sm:$0xff]
      %v536 = vld [vmem:[#allocation2 + $0x8] sm:$0xff]
      %v537 = vld [vmem:[#allocation2 + $0x10] sm:$0x3]
      %v538 = vld [vmem:[#allocation2 + $0x18] sm:$0xff]
      %v539 = vld [vmem:[#allocation2 + $0x20] sm:$0xff]
      %v540 = vld [vmem:[#allocation2 + $0x28] sm:$0x3]
      %v541 = vld [vmem:[#allocation2 + $0x30] sm:$0xff]
      %v542 = vld [vmem:[#allocation2 + $0x38] sm:$0xff]
      %v543 = vld [vmem:[#allocation2 + $0x40] sm:$0x3]
      %v544 = vld [vmem:[#allocation2 + $0x48] sm:$0xff]
      %v545 = vld [vmem:[#allocation2 + $0x50] sm:$0xff]
      %v546 = vld [vmem:[#allocation2 + $0x58] sm:$0x3]
      %v547 = vld [vmem:[#allocation2 + $0x60] sm:$0xff]
      %v548 = vld [vmem:[#allocation2 + $0x68] sm:$0xff]
      %v549 = vld [vmem:[#allocation2 + $0x70] sm:$0x3]
      %v550 = vld [vmem:[#allocation2 + $0x78] sm:$0xff]
      %v551 = vld [vmem:[#allocation2 + $0x80] sm:$0xff]
      %v552 = vld [vmem:[#allocation2 + $0x88] sm:$0x3]
      %v553 = vld [vmem:[#allocation2 + $0x90] sm:$0xff]
      %v554 = vld [vmem:[#allocation2 + $0x98] sm:$0xff]
      %v555 = vld [vmem:[#allocation2 + $0xa0] sm:$0x3]
      %v556 = vld [vmem:[#allocation2 + $0xa8] sm:$0xff]
      %v557 = vld [vmem:[#allocation2 + $0xb0] sm:$0xff]
      %v558 = vld [vmem:[#allocation2 + $0xb8] sm:$0x3]
      %v559 = vld [vmem:[#allocation2 + $0xc0] sm:$0xff]
      %v560 = vld [vmem:[#allocation2 + $0xc8] sm:$0xff]
      %v561 = vld [vmem:[#allocation2 + $0xd0] sm:$0x3]
      %v562 = vld [vmem:[#allocation2 + $0xd8] sm:$0xff]
      %v563 = vld [vmem:[#allocation2 + $0xe0] sm:$0xff]
      %v564 = vld [vmem:[#allocation2 + $0xe8] sm:$0x3]
      %v565 = vld [vmem:[%s4] sm:$0xf]
      %vm590 = vcmask 1046528
      %v591 = vrot.slane %v535, 1
      %v592 = vrot.slane %v536, 1
      %v593 = vsel %vm590, %v591, %v592
      %v594 = vrot.slane %v537, 1
      %v595 = vsel %vm590, %v592, %v594
      %v596 = vrot.slane %v538, 1
      %v597 = vrot.slane %v539, 1
      %v598 = vsel %vm590, %v596, %v597
      %v599 = vrot.slane %v540, 1
      %v600 = vsel %vm590, %v597, %v599
      %v601 = vrot.slane %v541, 1
      %v602 = vrot.slane %v542, 1
      %v603 = vsel %vm590, %v601, %v602
      %v604 = vrot.slane %v543, 1
      %v605 = vsel %vm590, %v602, %v604
      %v606 = vrot.slane %v544, 1
      %v607 = vrot.slane %v545, 1
      %v608 = vsel %vm590, %v606, %v607
      %v609 = vrot.slane %v546, 1
      %v610 = vsel %vm590, %v607, %v609
      %v611 = vrot.slane %v547, 1
      %v612 = vrot.slane %v548, 1
      %v613 = vsel %vm590, %v611, %v612
      %v614 = vrot.slane %v549, 1
      %v615 = vsel %vm590, %v612, %v614
      %v616 = vrot.slane %v550, 1
      %v617 = vrot.slane %v551, 1
      %v618 = vsel %vm590, %v616, %v617
      %v619 = vrot.slane %v552, 1
      %v620 = vsel %vm590, %v617, %v619
      %v621 = vrot.slane %v553, 1
      %v622 = vrot.slane %v554, 1
      %v623 = vsel %vm590, %v621, %v622
      %v624 = vrot.slane %v555, 1
      %v625 = vsel %vm590, %v622, %v624
      %v626 = vrot.slane %v556, 1
      %v627 = vrot.slane %v557, 1
      %v628 = vsel %vm590, %v626, %v627
      %v629 = vrot.slane %v558, 1
      %v630 = vsel %vm590, %v627, %v629
      %s631 = scalar_lea.vmem %s4, 4
      %v632 = vld [vmem:[%s631] sm:$0xf]
      %v633 = vsel %vm496, %v593, 0
      %v635 = vsel %vm496, %v595, 0
      %v637 = vsel %vm496, %v598, 0
      %v639 = vsel %vm496, %v600, 0
      %v641 = vsel %vm496, %v603, 0
      %v643 = vsel %vm496, %v605, 0
      %v645 = vsel %vm496, %v608, 0
      %v647 = vsel %vm496, %v610, 0
      %v649 = vsel %vm496, %v613, 0
      %v651 = vsel %vm496, %v615, 0
      %v653 = vsel %vm496, %v618, 0
      %v655 = vsel %vm496, %v620, 0
      %v657 = vsel %vm496, %v623, 0
      %v659 = vsel %vm496, %v625, 0
      %v661 = vsel %vm496, %v628, 0
      %v663 = vsel %vm496, %v630, 0
      %vm665 = vcmask 1043456
      %v667 = vsel %vm665, %v632, 0
      %669 = vmatprep.subr.mxu0 0.0
      %670 = vmatpush1.msra.mxu0 %v667
      %671 = vmatprep.subr.mxu0 0.0
      %672 = vmatpush1.msra.mxu0 0.0
      %673 = vmatprep.subr.mxu0 0.0
      %674 = vmatpush1.msra.mxu0 0.0
      %675 = vmatprep.subr.mxu0 0.0
      %676 = vmatpush1.msra.mxu0 0.0
      %677 = vmatprep.subr.mxu0 0.0
      %678 = vmatpush1.msra.mxu0 0.0
      %679 = vmatprep.subr.mxu0 0.0
      %680 = vmatpush1.msra.mxu0 0.0
      %681 = vmatprep.subr.mxu0 0.0
      %682 = vmatpush1.msra.mxu0 0.0
      %683 = vmatprep.subr.mxu0 0.0
      %684 = vmatpush1.msra.mxu0 0.0
      %685 = vmatprep.subr.mxu0 0.0
      %686 = vmatpush1.msra.mxu0 0.0
      %687 = vmatprep.subr.mxu0 0.0
      %688 = vmatpush1.msra.mxu0 0.0
      %689 = vmatprep.subr.mxu0 0.0
      %690 = vmatpush1.msra.mxu0 0.0
      %691 = vmatprep.subr.mxu0 0.0
      %692 = vmatpush1.msra.mxu0 0.0
      %693 = vmatprep.subr.mxu0 0.0
      %694 = vmatpush1.msra.mxu0 0.0
      %695 = vmatprep.subr.mxu0 0.0
      %696 = vmatpush1.msra.mxu0 0.0
      %697 = vmatprep.subr.mxu0 0.0
      %698 = vmatpush1.msra.mxu0 0.0
      %699 = vmatprep.subr.mxu0 0.0
      %700 = vmatpush1.msra.mxu0 0.0
      %701 = vmatprep.subr.mxu0 0.0
      %702 = vmatpush1.msra.mxu0 0.0
      %703 = vmatprep.subr.mxu0 0.0
      %704 = vmatpush1.msra.mxu0 0.0
      %705 = vmatprep.subr.mxu0 0.0
      %706 = vmatpush1.msra.mxu0 0.0
      %707 = vmatprep.subr.mxu0 0.0
      %708 = vmatpush1.msra.mxu0 0.0
      %709 = vmatprep.subr.mxu0 0.0
      %710 = vmatpush1.msra.mxu0 0.0
      %711 = vmatprep.subr.mxu0 0.0
      %712 = vmatpush1.msra.mxu0 0.0
      %713 = vmatprep.subr.mxu0 0.0
      %714 = vmatpush1.msra.mxu0 0.0
      %715 = vmatprep.subr.mxu0 0.0
      %716 = vmatpush1.msra.mxu0 0.0
      %717 = vmatprep.subr.mxu0 0.0
      %718 = vmatpush1.msra.mxu0 0.0
      %719 = vmatprep.subr.mxu0 0.0
      %720 = vmatpush1.msra.mxu0 0.0
      %721 = vmatprep.subr.mxu0 0.0
      %722 = vmatpush1.msra.mxu0 0.0
      %723 = vmatprep.subr.mxu0 0.0
      %724 = vmatpush1.msra.mxu0 0.0
      %725 = vmatprep.subr.mxu0 0.0
      %726 = vmatpush1.msra.mxu0 0.0
      %727 = vmatprep.subr.mxu0 0.0
      %728 = vmatpush1.msra.mxu0 0.0
      %729 = vmatprep.subr.mxu0 0.0
      %730 = vmatpush1.msra.mxu0 0.0
      %731 = vmatprep.subr.mxu0 0.0
      %732 = vmatpush1.msra.mxu0 0.0
      %733 = vmatprep.mubr.f32.mxu0 0.0
      %734 = vmatmul.mubr.f32.gmra.mrb[0].mxu0 %v633
      %v735 = vpop.f32.mrb[0].mxu0
      %v736 = vadd.f32 0.0, %v735
      %v737 = vpop.f32.mrb[0].mxu0
      %738 = vmatprep.mubr.f32.mxu0 0.0
      %739 = vmatmul.mubr.f32.gmra.mrb[0].mxu0 %v635
      %v740 = vpop.f32.mrb[0].mxu0
      %v741 = vadd.f32 0.0, %v740
      %v742 = vpop.f32.mrb[0].mxu0
      %743 = vmatprep.mubr.f32.mxu0 0.0
      %744 = vmatmul.mubr.f32.gmra.mrb[0].mxu0 %v637
      %v745 = vpop.f32.mrb[0].mxu0
      %v746 = vadd.f32 0.0, %v745
      %v747 = vpop.f32.mrb[0].mxu0
      %748 = vmatprep.mubr.f32.mxu0 0.0
      %749 = vmatmul.mubr.f32.gmra.mrb[0].mxu0 %v639
      %v750 = vpop.f32.mrb[0].mxu0
      %v751 = vadd.f32 0.0, %v750
      %v752 = vpop.f32.mrb[0].mxu0
      %753 = vmatprep.mubr.f32.mxu0 0.0
      %754 = vmatmul.mubr.f32.gmra.mrb[0].mxu0 %v641
      %v755 = vpop.f32.mrb[0].mxu0
      %v756 = vadd.f32 0.0, %v755
      %v757 = vpop.f32.mrb[0].mxu0
      %758 = vmatprep.mubr.f32.mxu0 0.0
      %759 = vmatmul.mubr.f32.gmra.mrb[0].mxu0 %v643
      %v760 = vpop.f32.mrb[0].mxu0
      %v761 = vadd.f32 0.0, %v760
      %v762 = vpop.f32.mrb[0].mxu0
      %763 = vmatprep.mubr.f32.mxu0 0.0
      %764 = vmatmul.mubr.f32.gmra.mrb[0].mxu0 %v645
      %v765 = vpop.f32.mrb[0].mxu0
      %v766 = vadd.f32 0.0, %v765
      %v767 = vpop.f32.mrb[0].mxu0
      %768 = vmatprep.mubr.f32.mxu0 0.0
      %769 = vmatmul.mubr.f32.gmra.mrb[0].mxu0 %v647
      %v770 = vpop.f32.mrb[0].mxu0
      %v771 = vadd.f32 0.0, %v770
      %v772 = vpop.f32.mrb[0].mxu0
      %773 = vmatprep.mubr.f32.mxu0 0.0
      %774 = vmatmul.mubr.f32.gmra.mrb[0].mxu0 %v649
      %v775 = vpop.f32.mrb[0].mxu0
      %v776 = vadd.f32 0.0, %v775
      %v777 = vpop.f32.mrb[0].mxu0
      %778 = vmatprep.mubr.f32.mxu0 0.0
      %779 = vmatmul.mubr.f32.gmra.mrb[0].mxu0 %v651
      %v780 = vpop.f32.mrb[0].mxu0
      %v781 = vadd.f32 0.0, %v780
      %v782 = vpop.f32.mrb[0].mxu0
      %783 = vmatprep.mubr.f32.mxu0 0.0
      %784 = vmatmul.mubr.f32.gmra.mrb[0].mxu0 %v653
      %v785 = vpop.f32.mrb[0].mxu0
      %v786 = vadd.f32 0.0, %v785
      %v787 = vpop.f32.mrb[0].mxu0
      %788 = vmatprep.mubr.f32.mxu0 0.0
      %789 = vmatmul.mubr.f32.gmra.mrb[0].mxu0 %v655
      %v790 = vpop.f32.mrb[0].mxu0
      %v791 = vadd.f32 0.0, %v790
      %v792 = vpop.f32.mrb[0].mxu0
      %793 = vmatprep.mubr.f32.mxu0 0.0
      %794 = vmatmul.mubr.f32.gmra.mrb[0].mxu0 %v657
      %v795 = vpop.f32.mrb[0].mxu0
      %v796 = vadd.f32 0.0, %v795
      %v797 = vpop.f32.mrb[0].mxu0
      %798 = vmatprep.mubr.f32.mxu0 0.0
      %799 = vmatmul.mubr.f32.gmra.mrb[0].mxu0 %v659
      %v800 = vpop.f32.mrb[0].mxu0
      %v801 = vadd.f32 0.0, %v800
      %v802 = vpop.f32.mrb[0].mxu0
      %803 = vmatprep.mubr.f32.mxu0 0.0
      %804 = vmatmul.mubr.f32.gmra.mrb[0].mxu0 %v661
      %v805 = vpop.f32.mrb[0].mxu0
      %v806 = vadd.f32 0.0, %v805
      %v807 = vpop.f32.mrb[0].mxu0
      %808 = vmatprep.mubr.f32.mxu0 0.0
      %809 = vmatmul.mubr.f32.gmra.mrb[0].mxu0 %v663
      %v810 = vpop.f32.mrb[0].mxu0
      %v811 = vadd.f32 0.0, %v810
      %v812 = vpop.f32.mrb[0].mxu0
      %813 = vdwg.mxu0
      %v814 = vsel %vm496, %v535, 0
      %v816 = vsel %vm496, %v536, 0
      %v818 = vsel %vm496, %v538, 0
      %v820 = vsel %vm496, %v539, 0
      %v822 = vsel %vm496, %v541, 0
      %v824 = vsel %vm496, %v542, 0
      %v826 = vsel %vm496, %v544, 0
      %v828 = vsel %vm496, %v545, 0
      %v830 = vsel %vm496, %v547, 0
      %v832 = vsel %vm496, %v548, 0
      %v834 = vsel %vm496, %v550, 0
      %v836 = vsel %vm496, %v551, 0
      %v838 = vsel %vm496, %v553, 0
      %v840 = vsel %vm496, %v554, 0
      %v842 = vsel %vm496, %v556, 0
      %v844 = vsel %vm496, %v557, 0
      %v847 = vsel %vm665, %v565, 0
      %849 = vmatprep.subr.mxu0 0.0
      %850 = vmatpush1.msra.mxu0 %v847
      %851 = vmatprep.subr.mxu0 0.0
      %852 = vmatpush1.msra.mxu0 0.0
      %853 = vmatprep.subr.mxu0 0.0
      %854 = vmatpush1.msra.mxu0 0.0
      %855 = vmatprep.subr.mxu0 0.0
      %856 = vmatpush1.msra.mxu0 0.0
      %857 = vmatprep.subr.mxu0 0.0
      %858 = vmatpush1.msra.mxu0 0.0
      %859 = vmatprep.subr.mxu0 0.0
      %860 = vmatpush1.msra.mxu0 0.0
      %861 = vmatprep.subr.mxu0 0.0
      %862 = vmatpush1.msra.mxu0 0.0
      %863 = vmatprep.subr.mxu0 0.0
      %864 = vmatpush1.msra.mxu0 0.0
      %865 = vmatprep.subr.mxu0 0.0
      %866 = vmatpush1.msra.mxu0 0.0
      %867 = vmatprep.subr.mxu0 0.0
      %868 = vmatpush1.msra.mxu0 0.0
      %869 = vmatprep.subr.mxu0 0.0
      %870 = vmatpush1.msra.mxu0 0.0
      %871 = vmatprep.subr.mxu0 0.0
      %872 = vmatpush1.msra.mxu0 0.0
      %873 = vmatprep.subr.mxu0 0.0
      %874 = vmatpush1.msra.mxu0 0.0
      %875 = vmatprep.subr.mxu0 0.0
      %876 = vmatpush1.msra.mxu0 0.0
      %877 = vmatprep.subr.mxu0 0.0
      %878 = vmatpush1.msra.mxu0 0.0
      %879 = vmatprep.subr.mxu0 0.0
      %880 = vmatpush1.msra.mxu0 0.0
      %881 = vmatprep.subr.mxu0 0.0
      %882 = vmatpush1.msra.mxu0 0.0
      %883 = vmatprep.subr.mxu0 0.0
      %884 = vmatpush1.msra.mxu0 0.0
      %885 = vmatprep.subr.mxu0 0.0
      %886 = vmatpush1.msra.mxu0 0.0
      %887 = vmatprep.subr.mxu0 0.0
      %888 = vmatpush1.msra.mxu0 0.0
      %889 = vmatprep.subr.mxu0 0.0
      %890 = vmatpush1.msra.mxu0 0.0
      %891 = vmatprep.subr.mxu0 0.0
      %892 = vmatpush1.msra.mxu0 0.0
      %893 = vmatprep.subr.mxu0 0.0
      %894 = vmatpush1.msra.mxu0 0.0
      %895 = vmatprep.subr.mxu0 0.0
      %896 = vmatpush1.msra.mxu0 0.0
      %897 = vmatprep.subr.mxu0 0.0
      %898 = vmatpush1.msra.mxu0 0.0
      %899 = vmatprep.subr.mxu0 0.0
      %900 = vmatpush1.msra.mxu0 0.0
      %901 = vmatprep.subr.mxu0 0.0
      %902 = vmatpush1.msra.mxu0 0.0
      %903 = vmatprep.subr.mxu0 0.0
      %904 = vmatpush1.msra.mxu0 0.0
      %905 = vmatprep.subr.mxu0 0.0
      %906 = vmatpush1.msra.mxu0 0.0
      %907 = vmatprep.subr.mxu0 0.0
      %908 = vmatpush1.msra.mxu0 0.0
      %909 = vmatprep.subr.mxu0 0.0
      %910 = vmatpush1.msra.mxu0 0.0
      %911 = vmatprep.subr.mxu0 0.0
      %912 = vmatpush1.msra.mxu0 0.0
      %913 = vmatprep.mubr.f32.mxu0 0.0
      %914 = vmatmul.mubr.f32.gmra.mrb[0].mxu0 %v814
      %v915 = vpop.f32.mrb[0].mxu0
      %v916 = vadd.f32 %v736, %v915
      %v917 = vpop.f32.mrb[0].mxu0
      %918 = vmatprep.mubr.f32.mxu0 0.0
      %919 = vmatmul.mubr.f32.gmra.mrb[0].mxu0 %v816
      %v920 = vpop.f32.mrb[0].mxu0
      %v921 = vadd.f32 %v741, %v920
      %v922 = vpop.f32.mrb[0].mxu0
      %923 = vmatprep.mubr.f32.mxu0 0.0
      %924 = vmatmul.mubr.f32.gmra.mrb[0].mxu0 %v818
      %v925 = vpop.f32.mrb[0].mxu0
      %v926 = vadd.f32 %v746, %v925
      %v927 = vpop.f32.mrb[0].mxu0
      %928 = vmatprep.mubr.f32.mxu0 0.0
      %929 = vmatmul.mubr.f32.gmra.mrb[0].mxu0 %v820
      %v930 = vpop.f32.mrb[0].mxu0
      %v931 = vadd.f32 %v751, %v930
      %v932 = vpop.f32.mrb[0].mxu0
      %933 = vmatprep.mubr.f32.mxu0 0.0
      %934 = vmatmul.mubr.f32.gmra.mrb[0].mxu0 %v822
      %v935 = vpop.f32.mrb[0].mxu0
      %v936 = vadd.f32 %v756, %v935
      %v937 = vpop.f32.mrb[0].mxu0
      %938 = vmatprep.mubr.f32.mxu0 0.0
      %939 = vmatmul.mubr.f32.gmra.mrb[0].mxu0 %v824
      %v940 = vpop.f32.mrb[0].mxu0
      %v941 = vadd.f32 %v761, %v940
      %v942 = vpop.f32.mrb[0].mxu0
      %943 = vmatprep.mubr.f32.mxu0 0.0
      %944 = vmatmul.mubr.f32.gmra.mrb[0].mxu0 %v826
      %v945 = vpop.f32.mrb[0].mxu0
      %v946 = vadd.f32 %v766, %v945
      %v947 = vpop.f32.mrb[0].mxu0
      %948 = vmatprep.mubr.f32.mxu0 0.0
      %949 = vmatmul.mubr.f32.gmra.mrb[0].mxu0 %v828
      %v950 = vpop.f32.mrb[0].mxu0
      %v951 = vadd.f32 %v771, %v950
      %v952 = vpop.f32.mrb[0].mxu0
      %953 = vmatprep.mubr.f32.mxu0 0.0
      %954 = vmatmul.mubr.f32.gmra.mrb[0].mxu0 %v830
      %v955 = vpop.f32.mrb[0].mxu0
      %v956 = vadd.f32 %v776, %v955
      %v957 = vpop.f32.mrb[0].mxu0
      %958 = vmatprep.mubr.f32.mxu0 0.0
      %959 = vmatmul.mubr.f32.gmra.mrb[0].mxu0 %v832
      %v960 = vpop.f32.mrb[0].mxu0
      %v961 = vadd.f32 %v781, %v960
      %v962 = vpop.f32.mrb[0].mxu0
      %963 = vmatprep.mubr.f32.mxu0 0.0
      %964 = vmatmul.mubr.f32.gmra.mrb[0].mxu0 %v834
      %v965 = vpop.f32.mrb[0].mxu0
      %v966 = vadd.f32 %v786, %v965
      %v967 = vpop.f32.mrb[0].mxu0
      %968 = vmatprep.mubr.f32.mxu0 0.0
      %969 = vmatmul.mubr.f32.gmra.mrb[0].mxu0 %v836
      %v970 = vpop.f32.mrb[0].mxu0
      %v971 = vadd.f32 %v791, %v970
      %v972 = vpop.f32.mrb[0].mxu0
      %973 = vmatprep.mubr.f32.mxu0 0.0
      %974 = vmatmul.mubr.f32.gmra.mrb[0].mxu0 %v838
      %v975 = vpop.f32.mrb[0].mxu0
      %v976 = vadd.f32 %v796, %v975
      %v977 = vpop.f32.mrb[0].mxu0
      %978 = vmatprep.mubr.f32.mxu0 0.0
      %979 = vmatmul.mubr.f32.gmra.mrb[0].mxu0 %v840
      %v980 = vpop.f32.mrb[0].mxu0
      %v981 = vadd.f32 %v801, %v980
      %v982 = vpop.f32.mrb[0].mxu0
      %983 = vmatprep.mubr.f32.mxu0 0.0
      %984 = vmatmul.mubr.f32.gmra.mrb[0].mxu0 %v842
      %v985 = vpop.f32.mrb[0].mxu0
      %v986 = vadd.f32 %v806, %v985
      %v987 = vpop.f32.mrb[0].mxu0
      %988 = vmatprep.mubr.f32.mxu0 0.0
      %989 = vmatmul.mubr.f32.gmra.mrb[0].mxu0 %v844
      %v990 = vpop.f32.mrb[0].mxu0
      %v991 = vadd.f32 %v811, %v990
      %v992 = vpop.f32.mrb[0].mxu0
      %993 = vdwg.mxu0
      %vm994 = vcmask 1045504
      %v995 = vrot.slane %v535, 2
      %v996 = vrot.slane %v536, 2
      %v997 = vsel %vm994, %v995, %v996
      %v998 = vrot.slane %v537, 2
      %v999 = vsel %vm994, %v996, %v998
      %v1000 = vrot.slane %v538, 2
      %v1001 = vrot.slane %v539, 2
      %v1002 = vsel %vm994, %v1000, %v1001
      %v1003 = vrot.slane %v540, 2
      %v1004 = vsel %vm994, %v1001, %v1003
      %v1005 = vrot.slane %v541, 2
      %v1006 = vrot.slane %v542, 2
      %v1007 = vsel %vm994, %v1005, %v1006
      %v1008 = vrot.slane %v543, 2
      %v1009 = vsel %vm994, %v1006, %v1008
      %v1010 = vrot.slane %v544, 2
      %v1011 = vrot.slane %v545, 2
      %v1012 = vsel %vm994, %v1010, %v1011
      %v1013 = vrot.slane %v546, 2
      %v1014 = vsel %vm994, %v1011, %v1013
      %v1015 = vrot.slane %v547, 2
      %v1016 = vrot.slane %v548, 2
      %v1017 = vsel %vm994, %v1015, %v1016
      %v1018 = vrot.slane %v549, 2
      %v1019 = vsel %vm994, %v1016, %v1018
      %v1020 = vrot.slane %v550, 2
      %v1021 = vrot.slane %v551, 2
      %v1022 = vsel %vm994, %v1020, %v1021
      %v1023 = vrot.slane %v552, 2
      %v1024 = vsel %vm994, %v1021, %v1023
      %v1025 = vrot.slane %v553, 2
      %v1026 = vrot.slane %v554, 2
      %v1027 = vsel %vm994, %v1025, %v1026
      %v1028 = vrot.slane %v555, 2
      %v1029 = vsel %vm994, %v1026, %v1028
      %v1030 = vrot.slane %v556, 2
      %v1031 = vrot.slane %v557, 2
      %v1032 = vsel %vm994, %v1030, %v1031
      %v1033 = vrot.slane %v558, 2
      %v1034 = vsel %vm994, %v1031, %v1033
      %s1035 = scalar_lea.vmem %s4, 8
      %v1036 = vld [vmem:[%s1035] sm:$0xf]
      %v1037 = vsel %vm496, %v997, 0
      %v1039 = vsel %vm496, %v999, 0
      %v1041 = vsel %vm496, %v1002, 0
      %v1043 = vsel %vm496, %v1004, 0
      %v1045 = vsel %vm496, %v1007, 0
      %v1047 = vsel %vm496, %v1009, 0
      %v1049 = vsel %vm496, %v1012, 0
      %v1051 = vsel %vm496, %v1014, 0
      %v1053 = vsel %vm496, %v1017, 0
      %v1055 = vsel %vm496, %v1019, 0
      %v1057 = vsel %vm496, %v1022, 0
      %v1059 = vsel %vm496, %v1024, 0
      %v1061 = vsel %vm496, %v1027, 0
      %v1063 = vsel %vm496, %v1029, 0
      %v1065 = vsel %vm496, %v1032, 0
      %v1067 = vsel %vm496, %v1034, 0
      %v1070 = vsel %vm665, %v1036, 0
      %1072 = vmatprep.subr.mxu0 0.0
      %1073 = vmatpush1.msra.mxu0 %v1070
      %1074 = vmatprep.subr.mxu0 0.0
      %1075 = vmatpush1.msra.mxu0 0.0
      %1076 = vmatprep.subr.mxu0 0.0
      %1077 = vmatpush1.msra.mxu0 0.0
      %1078 = vmatprep.subr.mxu0 0.0
      %1079 = vmatpush1.msra.mxu0 0.0
      %1080 = vmatprep.subr.mxu0 0.0
      %1081 = vmatpush1.msra.mxu0 0.0
      %1082 = vmatprep.subr.mxu0 0.0
      %1083 = vmatpush1.msra.mxu0 0.0
      %1084 = vmatprep.subr.mxu0 0.0
      %1085 = vmatpush1.msra.mxu0 0.0
      %1086 = vmatprep.subr.mxu0 0.0
      %1087 = vmatpush1.msra.mxu0 0.0
      %1088 = vmatprep.subr.mxu0 0.0
      %1089 = vmatpush1.msra.mxu0 0.0
      %1090 = vmatprep.subr.mxu0 0.0
      %1091 = vmatpush1.msra.mxu0 0.0
      %1092 = vmatprep.subr.mxu0 0.0
      %1093 = vmatpush1.msra.mxu0 0.0
      %1094 = vmatprep.subr.mxu0 0.0
      %1095 = vmatpush1.msra.mxu0 0.0
      %1096 = vmatprep.subr.mxu0 0.0
      %1097 = vmatpush1.msra.mxu0 0.0
      %1098 = vmatprep.subr.mxu0 0.0
      %1099 = vmatpush1.msra.mxu0 0.0
      %1100 = vmatprep.subr.mxu0 0.0
      %1101 = vmatpush1.msra.mxu0 0.0
      %1102 = vmatprep.subr.mxu0 0.0
      %1103 = vmatpush1.msra.mxu0 0.0
      %1104 = vmatprep.subr.mxu0 0.0
      %1105 = vmatpush1.msra.mxu0 0.0
      %1106 = vmatprep.subr.mxu0 0.0
      %1107 = vmatpush1.msra.mxu0 0.0
      %1108 = vmatprep.subr.mxu0 0.0
      %1109 = vmatpush1.msra.mxu0 0.0
      %1110 = vmatprep.subr.mxu0 0.0
      %1111 = vmatpush1.msra.mxu0 0.0
      %1112 = vmatprep.subr.mxu0 0.0
      %1113 = vmatpush1.msra.mxu0 0.0
      %1114 = vmatprep.subr.mxu0 0.0
      %1115 = vmatpush1.msra.mxu0 0.0
      %1116 = vmatprep.subr.mxu0 0.0
      %1117 = vmatpush1.msra.mxu0 0.0
      %1118 = vmatprep.subr.mxu0 0.0
      %1119 = vmatpush1.msra.mxu0 0.0
      %1120 = vmatprep.subr.mxu0 0.0
      %1121 = vmatpush1.msra.mxu0 0.0
      %1122 = vmatprep.subr.mxu0 0.0
      %1123 = vmatpush1.msra.mxu0 0.0
      %1124 = vmatprep.subr.mxu0 0.0
      %1125 = vmatpush1.msra.mxu0 0.0
      %1126 = vmatprep.subr.mxu0 0.0
      %1127 = vmatpush1.msra.mxu0 0.0
      %1128 = vmatprep.subr.mxu0 0.0
      %1129 = vmatpush1.msra.mxu0 0.0
      %1130 = vmatprep.subr.mxu0 0.0
      %1131 = vmatpush1.msra.mxu0 0.0
      %1132 = vmatprep.subr.mxu0 0.0
      %1133 = vmatpush1.msra.mxu0 0.0
      %1134 = vmatprep.subr.mxu0 0.0
      %1135 = vmatpush1.msra.mxu0 0.0
      %1136 = vmatprep.mubr.f32.mxu0 0.0
      %1137 = vmatmul.mubr.f32.gmra.mrb[0].mxu0 %v1037
      %v1138 = vpop.f32.mrb[0].mxu0
      %v1139 = vadd.f32 0.0, %v1138
      %v1140 = vpop.f32.mrb[0].mxu0
      %1141 = vmatprep.mubr.f32.mxu0 0.0
      %1142 = vmatmul.mubr.f32.gmra.mrb[0].mxu0 %v1039
      %v1143 = vpop.f32.mrb[0].mxu0
      %v1144 = vadd.f32 0.0, %v1143
      %v1145 = vpop.f32.mrb[0].mxu0
      %1146 = vmatprep.mubr.f32.mxu0 0.0
      %1147 = vmatmul.mubr.f32.gmra.mrb[0].mxu0 %v1041
      %v1148 = vpop.f32.mrb[0].mxu0
      %v1149 = vadd.f32 0.0, %v1148
      %v1150 = vpop.f32.mrb[0].mxu0
      %1151 = vmatprep.mubr.f32.mxu0 0.0
      %1152 = vmatmul.mubr.f32.gmra.mrb[0].mxu0 %v1043
      %v1153 = vpop.f32.mrb[0].mxu0
      %v1154 = vadd.f32 0.0, %v1153
      %v1155 = vpop.f32.mrb[0].mxu0
      %1156 = vmatprep.mubr.f32.mxu0 0.0
      %1157 = vmatmul.mubr.f32.gmra.mrb[0].mxu0 %v1045
      %v1158 = vpop.f32.mrb[0].mxu0
      %v1159 = vadd.f32 0.0, %v1158
      %v1160 = vpop.f32.mrb[0].mxu0
      %1161 = vmatprep.mubr.f32.mxu0 0.0
      %1162 = vmatmul.mubr.f32.gmra.mrb[0].mxu0 %v1047
      %v1163 = vpop.f32.mrb[0].mxu0
      %v1164 = vadd.f32 0.0, %v1163
      %v1165 = vpop.f32.mrb[0].mxu0
      %1166 = vmatprep.mubr.f32.mxu0 0.0
      %1167 = vmatmul.mubr.f32.gmra.mrb[0].mxu0 %v1049
      %v1168 = vpop.f32.mrb[0].mxu0
      %v1169 = vadd.f32 0.0, %v1168
      %v1170 = vpop.f32.mrb[0].mxu0
      %1171 = vmatprep.mubr.f32.mxu0 0.0
      %1172 = vmatmul.mubr.f32.gmra.mrb[0].mxu0 %v1051
      %v1173 = vpop.f32.mrb[0].mxu0
      %v1174 = vadd.f32 0.0, %v1173
      %v1175 = vpop.f32.mrb[0].mxu0
      %1176 = vmatprep.mubr.f32.mxu0 0.0
      %1177 = vmatmul.mubr.f32.gmra.mrb[0].mxu0 %v1053
      %v1178 = vpop.f32.mrb[0].mxu0
      %v1179 = vadd.f32 0.0, %v1178
      %v1180 = vpop.f32.mrb[0].mxu0
      %1181 = vmatprep.mubr.f32.mxu0 0.0
      %1182 = vmatmul.mubr.f32.gmra.mrb[0].mxu0 %v1055
      %v1183 = vpop.f32.mrb[0].mxu0
      %v1184 = vadd.f32 0.0, %v1183
      %v1185 = vpop.f32.mrb[0].mxu0
      %1186 = vmatprep.mubr.f32.mxu0 0.0
      %1187 = vmatmul.mubr.f32.gmra.mrb[0].mxu0 %v1057
      %v1188 = vpop.f32.mrb[0].mxu0
      %v1189 = vadd.f32 0.0, %v1188
      %v1190 = vpop.f32.mrb[0].mxu0
      %1191 = vmatprep.mubr.f32.mxu0 0.0
      %1192 = vmatmul.mubr.f32.gmra.mrb[0].mxu0 %v1059
      %v1193 = vpop.f32.mrb[0].mxu0
      %v1194 = vadd.f32 0.0, %v1193
      %v1195 = vpop.f32.mrb[0].mxu0
      %1196 = vmatprep.mubr.f32.mxu0 0.0
      %1197 = vmatmul.mubr.f32.gmra.mrb[0].mxu0 %v1061
      %v1198 = vpop.f32.mrb[0].mxu0
      %v1199 = vadd.f32 0.0, %v1198
      %v1200 = vpop.f32.mrb[0].mxu0
      %1201 = vmatprep.mubr.f32.mxu0 0.0
      %1202 = vmatmul.mubr.f32.gmra.mrb[0].mxu0 %v1063
      %v1203 = vpop.f32.mrb[0].mxu0
      %v1204 = vadd.f32 0.0, %v1203
      %v1205 = vpop.f32.mrb[0].mxu0
      %1206 = vmatprep.mubr.f32.mxu0 0.0
      %1207 = vmatmul.mubr.f32.gmra.mrb[0].mxu0 %v1065
      %v1208 = vpop.f32.mrb[0].mxu0
      %v1209 = vadd.f32 0.0, %v1208
      %v1210 = vpop.f32.mrb[0].mxu0
      %1211 = vmatprep.mubr.f32.mxu0 0.0
      %1212 = vmatmul.mubr.f32.gmra.mrb[0].mxu0 %v1067
      %v1213 = vpop.f32.mrb[0].mxu0
      %v1214 = vadd.f32 0.0, %v1213
      %v1215 = vpop.f32.mrb[0].mxu0
      %1216 = vdwg.mxu0
      %v1217 = vadd.f32 %v916, %v1139
      %v1218 = vadd.f32 %v921, %v1144
      %v1219 = vadd.f32 %v926, %v1149
      %v1220 = vadd.f32 %v931, %v1154
      %v1221 = vadd.f32 %v936, %v1159
      %v1222 = vadd.f32 %v941, %v1164
      %v1223 = vadd.f32 %v946, %v1169
      %v1224 = vadd.f32 %v951, %v1174
      %v1225 = vadd.f32 %v956, %v1179
      %v1226 = vadd.f32 %v961, %v1184
      %v1227 = vadd.f32 %v966, %v1189
      %v1228 = vadd.f32 %v971, %v1194
      %v1229 = vadd.f32 %v976, %v1199
      %v1230 = vadd.f32 %v981, %v1204
      %v1231 = vadd.f32 %v986, %v1209
      %v1232 = vadd.f32 %v991, %v1214
      %s1233 = scalar_lea.vmem %s4, 12
      %v1234 = vld [vmem:[%s1233] sm:$0xf]
      %v1236 = vsel %vm496, %v559, 0
      %v1239 = vsel %vm496, %v560, 0
      %v1242 = vsel %vm665, %v1234, 0
      %1244 = vmatprep.subr.mxu0 0.0
      %1245 = vmatpush1.msra.mxu0 %v1242
      %1246 = vmatprep.subr.mxu0 0.0
      %1247 = vmatpush1.msra.mxu0 0.0
      %1248 = vmatprep.subr.mxu0 0.0
      %1249 = vmatpush1.msra.mxu0 0.0
      %1250 = vmatprep.subr.mxu0 0.0
      %1251 = vmatpush1.msra.mxu0 0.0
      %1252 = vmatprep.subr.mxu0 0.0
      %1253 = vmatpush1.msra.mxu0 0.0
      %1254 = vmatprep.subr.mxu0 0.0
      %1255 = vmatpush1.msra.mxu0 0.0
      %1256 = vmatprep.subr.mxu0 0.0
      %1257 = vmatpush1.msra.mxu0 0.0
      %1258 = vmatprep.subr.mxu0 0.0
      %1259 = vmatpush1.msra.mxu0 0.0
      %1260 = vmatprep.subr.mxu0 0.0
      %1261 = vmatpush1.msra.mxu0 0.0
      %1262 = vmatprep.subr.mxu0 0.0
      %1263 = vmatpush1.msra.mxu0 0.0
      %1264 = vmatprep.subr.mxu0 0.0
      %1265 = vmatpush1.msra.mxu0 0.0
      %1266 = vmatprep.subr.mxu0 0.0
      %1267 = vmatpush1.msra.mxu0 0.0
      %1268 = vmatprep.subr.mxu0 0.0
      %1269 = vmatpush1.msra.mxu0 0.0
      %1270 = vmatprep.subr.mxu0 0.0
      %1271 = vmatpush1.msra.mxu0 0.0
      %1272 = vmatprep.subr.mxu0 0.0
      %1273 = vmatpush1.msra.mxu0 0.0
      %1274 = vmatprep.subr.mxu0 0.0
      %1275 = vmatpush1.msra.mxu0 0.0
      %1276 = vmatprep.subr.mxu0 0.0
      %1277 = vmatpush1.msra.mxu0 0.0
      %1278 = vmatprep.subr.mxu0 0.0
      %1279 = vmatpush1.msra.mxu0 0.0
      %1280 = vmatprep.subr.mxu0 0.0
      %1281 = vmatpush1.msra.mxu0 0.0
      %1282 = vmatprep.subr.mxu0 0.0
      %1283 = vmatpush1.msra.mxu0 0.0
      %1284 = vmatprep.subr.mxu0 0.0
      %1285 = vmatpush1.msra.mxu0 0.0
      %1286 = vmatprep.subr.mxu0 0.0
      %1287 = vmatpush1.msra.mxu0 0.0
      %1288 = vmatprep.subr.mxu0 0.0
      %1289 = vmatpush1.msra.mxu0 0.0
      %1290 = vmatprep.subr.mxu0 0.0
      %1291 = vmatpush1.msra.mxu0 0.0
      %1292 = vmatprep.subr.mxu0 0.0
      %1293 = vmatpush1.msra.mxu0 0.0
      %1294 = vmatprep.subr.mxu0 0.0
      %1295 = vmatpush1.msra.mxu0 0.0
      %1296 = vmatprep.subr.mxu0 0.0
      %1297 = vmatpush1.msra.mxu0 0.0
      %1298 = vmatprep.subr.mxu0 0.0
      %1299 = vmatpush1.msra.mxu0 0.0
      %1300 = vmatprep.subr.mxu0 0.0
      %1301 = vmatpush1.msra.mxu0 0.0
      %1302 = vmatprep.subr.mxu0 0.0
      %1303 = vmatpush1.msra.mxu0 0.0
      %1304 = vmatprep.subr.mxu0 0.0
      %1305 = vmatpush1.msra.mxu0 0.0
      %1306 = vmatprep.subr.mxu0 0.0
      %1307 = vmatpush1.msra.mxu0 0.0
      %1308 = vmatprep.mubr.f32.mxu0 0.0
      %1309 = vmatmul.mubr.f32.gmra.mrb[0].mxu0 %v818
      %v1310 = vpop.f32.mrb[0].mxu0
      %v1311 = vadd.f32 0.0, %v1310
      %v1312 = vpop.f32.mrb[0].mxu0
      %1313 = vmatprep.mubr.f32.mxu0 0.0
      %1314 = vmatmul.mubr.f32.gmra.mrb[0].mxu0 %v820
      %v1315 = vpop.f32.mrb[0].mxu0
      %v1316 = vadd.f32 0.0, %v1315
      %v1317 = vpop.f32.mrb[0].mxu0
      %1318 = vmatprep.mubr.f32.mxu0 0.0
      %1319 = vmatmul.mubr.f32.gmra.mrb[0].mxu0 %v822
      %v1320 = vpop.f32.mrb[0].mxu0
      %v1321 = vadd.f32 0.0, %v1320
      %v1322 = vpop.f32.mrb[0].mxu0
      %1323 = vmatprep.mubr.f32.mxu0 0.0
      %1324 = vmatmul.mubr.f32.gmra.mrb[0].mxu0 %v824
      %v1325 = vpop.f32.mrb[0].mxu0
      %v1326 = vadd.f32 0.0, %v1325
      %v1327 = vpop.f32.mrb[0].mxu0
      %1328 = vmatprep.mubr.f32.mxu0 0.0
      %1329 = vmatmul.mubr.f32.gmra.mrb[0].mxu0 %v826
      %v1330 = vpop.f32.mrb[0].mxu0
      %v1331 = vadd.f32 0.0, %v1330
      %v1332 = vpop.f32.mrb[0].mxu0
      %1333 = vmatprep.mubr.f32.mxu0 0.0
      %1334 = vmatmul.mubr.f32.gmra.mrb[0].mxu0 %v828
      %v1335 = vpop.f32.mrb[0].mxu0
      %v1336 = vadd.f32 0.0, %v1335
      %v1337 = vpop.f32.mrb[0].mxu0
      %1338 = vmatprep.mubr.f32.mxu0 0.0
      %1339 = vmatmul.mubr.f32.gmra.mrb[0].mxu0 %v830
      %v1340 = vpop.f32.mrb[0].mxu0
      %v1341 = vadd.f32 0.0, %v1340
      %v1342 = vpop.f32.mrb[0].mxu0
      %1343 = vmatprep.mubr.f32.mxu0 0.0
      %1344 = vmatmul.mubr.f32.gmra.mrb[0].mxu0 %v832
      %v1345 = vpop.f32.mrb[0].mxu0
      %v1346 = vadd.f32 0.0, %v1345
      %v1347 = vpop.f32.mrb[0].mxu0
      %1348 = vmatprep.mubr.f32.mxu0 0.0
      %1349 = vmatmul.mubr.f32.gmra.mrb[0].mxu0 %v834
      %v1350 = vpop.f32.mrb[0].mxu0
      %v1351 = vadd.f32 0.0, %v1350
      %v1352 = vpop.f32.mrb[0].mxu0
      %1353 = vmatprep.mubr.f32.mxu0 0.0
      %1354 = vmatmul.mubr.f32.gmra.mrb[0].mxu0 %v836
      %v1355 = vpop.f32.mrb[0].mxu0
      %v1356 = vadd.f32 0.0, %v1355
      %v1357 = vpop.f32.mrb[0].mxu0
      %1358 = vmatprep.mubr.f32.mxu0 0.0
      %1359 = vmatmul.mubr.f32.gmra.mrb[0].mxu0 %v838
      %v1360 = vpop.f32.mrb[0].mxu0
      %v1361 = vadd.f32 0.0, %v1360
      %v1362 = vpop.f32.mrb[0].mxu0
      %1363 = vmatprep.mubr.f32.mxu0 0.0
      %1364 = vmatmul.mubr.f32.gmra.mrb[0].mxu0 %v840
      %v1365 = vpop.f32.mrb[0].mxu0
      %v1366 = vadd.f32 0.0, %v1365
      %v1367 = vpop.f32.mrb[0].mxu0
      %1368 = vmatprep.mubr.f32.mxu0 0.0
      %1369 = vmatmul.mubr.f32.gmra.mrb[0].mxu0 %v842
      %v1370 = vpop.f32.mrb[0].mxu0
      %v1371 = vadd.f32 0.0, %v1370
      %v1372 = vpop.f32.mrb[0].mxu0
      %1373 = vmatprep.mubr.f32.mxu0 0.0
      %1374 = vmatmul.mubr.f32.gmra.mrb[0].mxu0 %v844
      %v1375 = vpop.f32.mrb[0].mxu0
      %v1376 = vadd.f32 0.0, %v1375
      %v1377 = vpop.f32.mrb[0].mxu0
      %1378 = vmatprep.mubr.f32.mxu0 0.0
      %1379 = vmatmul.mubr.f32.gmra.mrb[0].mxu0 %v1236
      %v1380 = vpop.f32.mrb[0].mxu0
      %v1381 = vadd.f32 0.0, %v1380
      %v1382 = vpop.f32.mrb[0].mxu0
      %1383 = vmatprep.mubr.f32.mxu0 0.0
      %1384 = vmatmul.mubr.f32.gmra.mrb[0].mxu0 %v1239
      %v1385 = vpop.f32.mrb[0].mxu0
      %v1386 = vadd.f32 0.0, %v1385
      %v1387 = vpop.f32.mrb[0].mxu0
      %1388 = vdwg.mxu0
      %v1389 = vadd.f32 %v1217, %v1311
      %v1390 = vadd.f32 %v1218, %v1316
      %v1391 = vadd.f32 %v1219, %v1321
      %v1392 = vadd.f32 %v1220, %v1326
      %v1393 = vadd.f32 %v1221, %v1331
      %v1394 = vadd.f32 %v1222, %v1336
      %v1395 = vadd.f32 %v1223, %v1341
      %v1396 = vadd.f32 %v1224, %v1346
      %v1397 = vadd.f32 %v1225, %v1351
      %v1398 = vadd.f32 %v1226, %v1356
      %v1399 = vadd.f32 %v1227, %v1361
      %v1400 = vadd.f32 %v1228, %v1366
      %v1401 = vadd.f32 %v1229, %v1371
      %v1402 = vadd.f32 %v1230, %v1376
      %v1403 = vadd.f32 %v1231, %v1381
      %v1404 = vadd.f32 %v1232, %v1386
      %v1406 = vrot.slane %v559, 1
      %v1407 = vrot.slane %v560, 1
      %v1408 = vsel %vm590, %v1406, %v1407
      %v1409 = vrot.slane %v561, 1
      %v1410 = vsel %vm590, %v1407, %v1409
      %s1411 = scalar_lea.vmem %s4, 16
      %v1412 = vld [vmem:[%s1411] sm:$0xf]
      %v1413 = vsel %vm496, %v1408, 0
      %v1415 = vsel %vm496, %v1410, 0
      %v1418 = vsel %vm665, %v1412, 0
      %1420 = vmatprep.subr.mxu0 0.0
      %1421 = vmatpush1.msra.mxu0 %v1418
      %1422 = vmatprep.subr.mxu0 0.0
      %1423 = vmatpush1.msra.mxu0 0.0
      %1424 = vmatprep.subr.mxu0 0.0
      %1425 = vmatpush1.msra.mxu0 0.0
      %1426 = vmatprep.subr.mxu0 0.0
      %1427 = vmatpush1.msra.mxu0 0.0
      %1428 = vmatprep.subr.mxu0 0.0
      %1429 = vmatpush1.msra.mxu0 0.0
      %1430 = vmatprep.subr.mxu0 0.0
      %1431 = vmatpush1.msra.mxu0 0.0
      %1432 = vmatprep.subr.mxu0 0.0
      %1433 = vmatpush1.msra.mxu0 0.0
      %1434 = vmatprep.subr.mxu0 0.0
      %1435 = vmatpush1.msra.mxu0 0.0
      %1436 = vmatprep.subr.mxu0 0.0
      %1437 = vmatpush1.msra.mxu0 0.0
      %1438 = vmatprep.subr.mxu0 0.0
      %1439 = vmatpush1.msra.mxu0 0.0
      %1440 = vmatprep.subr.mxu0 0.0
      %1441 = vmatpush1.msra.mxu0 0.0
      %1442 = vmatprep.subr.mxu0 0.0
      %1443 = vmatpush1.msra.mxu0 0.0
      %1444 = vmatprep.subr.mxu0 0.0
      %1445 = vmatpush1.msra.mxu0 0.0
      %1446 = vmatprep.subr.mxu0 0.0
      %1447 = vmatpush1.msra.mxu0 0.0
      %1448 = vmatprep.subr.mxu0 0.0
      %1449 = vmatpush1.msra.mxu0 0.0
      %1450 = vmatprep.subr.mxu0 0.0
      %1451 = vmatpush1.msra.mxu0 0.0
      %1452 = vmatprep.subr.mxu0 0.0
      %1453 = vmatpush1.msra.mxu0 0.0
      %1454 = vmatprep.subr.mxu0 0.0
      %1455 = vmatpush1.msra.mxu0 0.0
      %1456 = vmatprep.subr.mxu0 0.0
      %1457 = vmatpush1.msra.mxu0 0.0
      %1458 = vmatprep.subr.mxu0 0.0
      %1459 = vmatpush1.msra.mxu0 0.0
      %1460 = vmatprep.subr.mxu0 0.0
      %1461 = vmatpush1.msra.mxu0 0.0
      %1462 = vmatprep.subr.mxu0 0.0
      %1463 = vmatpush1.msra.mxu0 0.0
      %1464 = vmatprep.subr.mxu0 0.0
      %1465 = vmatpush1.msra.mxu0 0.0
      %1466 = vmatprep.subr.mxu0 0.0
      %1467 = vmatpush1.msra.mxu0 0.0
      %1468 = vmatprep.subr.mxu0 0.0
      %1469 = vmatpush1.msra.mxu0 0.0
      %1470 = vmatprep.subr.mxu0 0.0
      %1471 = vmatpush1.msra.mxu0 0.0
      %1472 = vmatprep.subr.mxu0 0.0
      %1473 = vmatpush1.msra.mxu0 0.0
      %1474 = vmatprep.subr.mxu0 0.0
      %1475 = vmatpush1.msra.mxu0 0.0
      %1476 = vmatprep.subr.mxu0 0.0
      %1477 = vmatpush1.msra.mxu0 0.0
      %1478 = vmatprep.subr.mxu0 0.0
      %1479 = vmatpush1.msra.mxu0 0.0
      %1480 = vmatprep.subr.mxu0 0.0
      %1481 = vmatpush1.msra.mxu0 0.0
      %1482 = vmatprep.subr.mxu0 0.0
      %1483 = vmatpush1.msra.mxu0 0.0
      %1484 = vmatprep.mubr.f32.mxu0 0.0
      %1485 = vmatmul.mubr.f32.gmra.mrb[0].mxu0 %v637
      %v1486 = vpop.f32.mrb[0].mxu0
      %v1487 = vadd.f32 0.0, %v1486
      %v1488 = vpop.f32.mrb[0].mxu0
      %1489 = vmatprep.mubr.f32.mxu0 0.0
      %1490 = vmatmul.mubr.f32.gmra.mrb[0].mxu0 %v639
      %v1491 = vpop.f32.mrb[0].mxu0
      %v1492 = vadd.f32 0.0, %v1491
      %v1493 = vpop.f32.mrb[0].mxu0
      %1494 = vmatprep.mubr.f32.mxu0 0.0
      %1495 = vmatmul.mubr.f32.gmra.mrb[0].mxu0 %v641
      %v1496 = vpop.f32.mrb[0].mxu0
      %v1497 = vadd.f32 0.0, %v1496
      %v1498 = vpop.f32.mrb[0].mxu0
      %1499 = vmatprep.mubr.f32.mxu0 0.0
      %1500 = vmatmul.mubr.f32.gmra.mrb[0].mxu0 %v643
      %v1501 = vpop.f32.mrb[0].mxu0
      %v1502 = vadd.f32 0.0, %v1501
      %v1503 = vpop.f32.mrb[0].mxu0
      %1504 = vmatprep.mubr.f32.mxu0 0.0
      %1505 = vmatmul.mubr.f32.gmra.mrb[0].mxu0 %v645
      %v1506 = vpop.f32.mrb[0].mxu0
      %v1507 = vadd.f32 0.0, %v1506
      %v1508 = vpop.f32.mrb[0].mxu0
      %1509 = vmatprep.mubr.f32.mxu0 0.0
      %1510 = vmatmul.mubr.f32.gmra.mrb[0].mxu0 %v647
      %v1511 = vpop.f32.mrb[0].mxu0
      %v1512 = vadd.f32 0.0, %v1511
      %v1513 = vpop.f32.mrb[0].mxu0
      %1514 = vmatprep.mubr.f32.mxu0 0.0
      %1515 = vmatmul.mubr.f32.gmra.mrb[0].mxu0 %v649
      %v1516 = vpop.f32.mrb[0].mxu0
      %v1517 = vadd.f32 0.0, %v1516
      %v1518 = vpop.f32.mrb[0].mxu0
      %1519 = vmatprep.mubr.f32.mxu0 0.0
      %1520 = vmatmul.mubr.f32.gmra.mrb[0].mxu0 %v651
      %v1521 = vpop.f32.mrb[0].mxu0
      %v1522 = vadd.f32 0.0, %v1521
      %v1523 = vpop.f32.mrb[0].mxu0
      %1524 = vmatprep.mubr.f32.mxu0 0.0
      %1525 = vmatmul.mubr.f32.gmra.mrb[0].mxu0 %v653
      %v1526 = vpop.f32.mrb[0].mxu0
      %v1527 = vadd.f32 0.0, %v1526
      %v1528 = vpop.f32.mrb[0].mxu0
      %1529 = vmatprep.mubr.f32.mxu0 0.0
      %1530 = vmatmul.mubr.f32.gmra.mrb[0].mxu0 %v655
      %v1531 = vpop.f32.mrb[0].mxu0
      %v1532 = vadd.f32 0.0, %v1531
      %v1533 = vpop.f32.mrb[0].mxu0
      %1534 = vmatprep.mubr.f32.mxu0 0.0
      %1535 = vmatmul.mubr.f32.gmra.mrb[0].mxu0 %v657
      %v1536 = vpop.f32.mrb[0].mxu0
      %v1537 = vadd.f32 0.0, %v1536
      %v1538 = vpop.f32.mrb[0].mxu0
      %1539 = vmatprep.mubr.f32.mxu0 0.0
      %1540 = vmatmul.mubr.f32.gmra.mrb[0].mxu0 %v659
      %v1541 = vpop.f32.mrb[0].mxu0
      %v1542 = vadd.f32 0.0, %v1541
      %v1543 = vpop.f32.mrb[0].mxu0
      %1544 = vmatprep.mubr.f32.mxu0 0.0
      %1545 = vmatmul.mubr.f32.gmra.mrb[0].mxu0 %v661
      %v1546 = vpop.f32.mrb[0].mxu0
      %v1547 = vadd.f32 0.0, %v1546
      %v1548 = vpop.f32.mrb[0].mxu0
      %1549 = vmatprep.mubr.f32.mxu0 0.0
      %1550 = vmatmul.mubr.f32.gmra.mrb[0].mxu0 %v663
      %v1551 = vpop.f32.mrb[0].mxu0
      %v1552 = vadd.f32 0.0, %v1551
      %v1553 = vpop.f32.mrb[0].mxu0
      %1554 = vmatprep.mubr.f32.mxu0 0.0
      %1555 = vmatmul.mubr.f32.gmra.mrb[0].mxu0 %v1413
      %v1556 = vpop.f32.mrb[0].mxu0
      %v1557 = vadd.f32 0.0, %v1556
      %v1558 = vpop.f32.mrb[0].mxu0
      %1559 = vmatprep.mubr.f32.mxu0 0.0
      %1560 = vmatmul.mubr.f32.gmra.mrb[0].mxu0 %v1415
      %v1561 = vpop.f32.mrb[0].mxu0
      %v1562 = vadd.f32 0.0, %v1561
      %v1563 = vpop.f32.mrb[0].mxu0
      %1564 = vdwg.mxu0
      %v1565 = vadd.f32 %v1389, %v1487
      %v1566 = vadd.f32 %v1390, %v1492
      %v1567 = vadd.f32 %v1391, %v1497
      %v1568 = vadd.f32 %v1392, %v1502
      %v1569 = vadd.f32 %v1393, %v1507
      %v1570 = vadd.f32 %v1394, %v1512
      %v1571 = vadd.f32 %v1395, %v1517
      %v1572 = vadd.f32 %v1396, %v1522
      %v1573 = vadd.f32 %v1397, %v1527
      %v1574 = vadd.f32 %v1398, %v1532
      %v1575 = vadd.f32 %v1399, %v1537
      %v1576 = vadd.f32 %v1400, %v1542
      %v1577 = vadd.f32 %v1401, %v1547
      %v1578 = vadd.f32 %v1402, %v1552
      %v1579 = vadd.f32 %v1403, %v1557
      %v1580 = vadd.f32 %v1404, %v1562
      %v1581 = vrot.slane %v559, 2
      %v1582 = vrot.slane %v560, 2
      %v1583 = vsel %vm994, %v1581, %v1582
      %v1584 = vrot.slane %v561, 2
      %v1585 = vsel %vm994, %v1582, %v1584
      %s1586 = scalar_lea.vmem %s4, 20
      %v1587 = vld [vmem:[%s1586] sm:$0xf]
      %v1588 = vsel %vm496, %v1583, 0
      %v1590 = vsel %vm496, %v1585, 0
      %v1593 = vsel %vm665, %v1587, 0
      %1595 = vmatprep.subr.mxu0 0.0
      %1596 = vmatpush1.msra.mxu0 %v1593
      %1597 = vmatprep.subr.mxu0 0.0
      %1598 = vmatpush1.msra.mxu0 0.0
      %1599 = vmatprep.subr.mxu0 0.0
      %1600 = vmatpush1.msra.mxu0 0.0
      %1601 = vmatprep.subr.mxu0 0.0
      %1602 = vmatpush1.msra.mxu0 0.0
      %1603 = vmatprep.subr.mxu0 0.0
      %1604 = vmatpush1.msra.mxu0 0.0
      %1605 = vmatprep.subr.mxu0 0.0
      %1606 = vmatpush1.msra.mxu0 0.0
      %1607 = vmatprep.subr.mxu0 0.0
      %1608 = vmatpush1.msra.mxu0 0.0
      %1609 = vmatprep.subr.mxu0 0.0
      %1610 = vmatpush1.msra.mxu0 0.0
      %1611 = vmatprep.subr.mxu0 0.0
      %1612 = vmatpush1.msra.mxu0 0.0
      %1613 = vmatprep.subr.mxu0 0.0
      %1614 = vmatpush1.msra.mxu0 0.0
      %1615 = vmatprep.subr.mxu0 0.0
      %1616 = vmatpush1.msra.mxu0 0.0
      %1617 = vmatprep.subr.mxu0 0.0
      %1618 = vmatpush1.msra.mxu0 0.0
      %1619 = vmatprep.subr.mxu0 0.0
      %1620 = vmatpush1.msra.mxu0 0.0
      %1621 = vmatprep.subr.mxu0 0.0
      %1622 = vmatpush1.msra.mxu0 0.0
      %1623 = vmatprep.subr.mxu0 0.0
      %1624 = vmatpush1.msra.mxu0 0.0
      %1625 = vmatprep.subr.mxu0 0.0
      %1626 = vmatpush1.msra.mxu0 0.0
      %1627 = vmatprep.subr.mxu0 0.0
      %1628 = vmatpush1.msra.mxu0 0.0
      %1629 = vmatprep.subr.mxu0 0.0
      %1630 = vmatpush1.msra.mxu0 0.0
      %1631 = vmatprep.subr.mxu0 0.0
      %1632 = vmatpush1.msra.mxu0 0.0
      %1633 = vmatprep.subr.mxu0 0.0
      %1634 = vmatpush1.msra.mxu0 0.0
      %1635 = vmatprep.subr.mxu0 0.0
      %1636 = vmatpush1.msra.mxu0 0.0
      %1637 = vmatprep.subr.mxu0 0.0
      %1638 = vmatpush1.msra.mxu0 0.0
      %1639 = vmatprep.subr.mxu0 0.0
      %1640 = vmatpush1.msra.mxu0 0.0
      %1641 = vmatprep.subr.mxu0 0.0
      %1642 = vmatpush1.msra.mxu0 0.0
      %1643 = vmatprep.subr.mxu0 0.0
      %1644 = vmatpush1.msra.mxu0 0.0
      %1645 = vmatprep.subr.mxu0 0.0
      %1646 = vmatpush1.msra.mxu0 0.0
      %1647 = vmatprep.subr.mxu0 0.0
      %1648 = vmatpush1.msra.mxu0 0.0
      %1649 = vmatprep.subr.mxu0 0.0
      %1650 = vmatpush1.msra.mxu0 0.0
      %1651 = vmatprep.subr.mxu0 0.0
      %1652 = vmatpush1.msra.mxu0 0.0
      %1653 = vmatprep.subr.mxu0 0.0
      %1654 = vmatpush1.msra.mxu0 0.0
      %1655 = vmatprep.subr.mxu0 0.0
      %1656 = vmatpush1.msra.mxu0 0.0
      %1657 = vmatprep.subr.mxu0 0.0
      %1658 = vmatpush1.msra.mxu0 0.0
      %1659 = vmatprep.mubr.f32.mxu0 0.0
      %1660 = vmatmul.mubr.f32.gmra.mrb[0].mxu0 %v1041
      %v1661 = vpop.f32.mrb[0].mxu0
      %v1662 = vadd.f32 0.0, %v1661
      %v1663 = vpop.f32.mrb[0].mxu0
      %1664 = vmatprep.mubr.f32.mxu0 0.0
      %1665 = vmatmul.mubr.f32.gmra.mrb[0].mxu0 %v1043
      %v1666 = vpop.f32.mrb[0].mxu0
      %v1667 = vadd.f32 0.0, %v1666
      %v1668 = vpop.f32.mrb[0].mxu0
      %1669 = vmatprep.mubr.f32.mxu0 0.0
      %1670 = vmatmul.mubr.f32.gmra.mrb[0].mxu0 %v1045
      %v1671 = vpop.f32.mrb[0].mxu0
      %v1672 = vadd.f32 0.0, %v1671
      %v1673 = vpop.f32.mrb[0].mxu0
      %1674 = vmatprep.mubr.f32.mxu0 0.0
      %1675 = vmatmul.mubr.f32.gmra.mrb[0].mxu0 %v1047
      %v1676 = vpop.f32.mrb[0].mxu0
      %v1677 = vadd.f32 0.0, %v1676
      %v1678 = vpop.f32.mrb[0].mxu0
      %1679 = vmatprep.mubr.f32.mxu0 0.0
      %1680 = vmatmul.mubr.f32.gmra.mrb[0].mxu0 %v1049
      %v1681 = vpop.f32.mrb[0].mxu0
      %v1682 = vadd.f32 0.0, %v1681
      %v1683 = vpop.f32.mrb[0].mxu0
      %1684 = vmatprep.mubr.f32.mxu0 0.0
      %1685 = vmatmul.mubr.f32.gmra.mrb[0].mxu0 %v1051
      %v1686 = vpop.f32.mrb[0].mxu0
      %v1687 = vadd.f32 0.0, %v1686
      %v1688 = vpop.f32.mrb[0].mxu0
      %1689 = vmatprep.mubr.f32.mxu0 0.0
      %1690 = vmatmul.mubr.f32.gmra.mrb[0].mxu0 %v1053
      %v1691 = vpop.f32.mrb[0].mxu0
      %v1692 = vadd.f32 0.0, %v1691
      %v1693 = vpop.f32.mrb[0].mxu0
      %1694 = vmatprep.mubr.f32.mxu0 0.0
      %1695 = vmatmul.mubr.f32.gmra.mrb[0].mxu0 %v1055
      %v1696 = vpop.f32.mrb[0].mxu0
      %v1697 = vadd.f32 0.0, %v1696
      %v1698 = vpop.f32.mrb[0].mxu0
      %1699 = vmatprep.mubr.f32.mxu0 0.0
      %1700 = vmatmul.mubr.f32.gmra.mrb[0].mxu0 %v1057
      %v1701 = vpop.f32.mrb[0].mxu0
      %v1702 = vadd.f32 0.0, %v1701
      %v1703 = vpop.f32.mrb[0].mxu0
      %1704 = vmatprep.mubr.f32.mxu0 0.0
      %1705 = vmatmul.mubr.f32.gmra.mrb[0].mxu0 %v1059
      %v1706 = vpop.f32.mrb[0].mxu0
      %v1707 = vadd.f32 0.0, %v1706
      %v1708 = vpop.f32.mrb[0].mxu0
      %1709 = vmatprep.mubr.f32.mxu0 0.0
      %1710 = vmatmul.mubr.f32.gmra.mrb[0].mxu0 %v1061
      %v1711 = vpop.f32.mrb[0].mxu0
      %v1712 = vadd.f32 0.0, %v1711
      %v1713 = vpop.f32.mrb[0].mxu0
      %1714 = vmatprep.mubr.f32.mxu0 0.0
      %1715 = vmatmul.mubr.f32.gmra.mrb[0].mxu0 %v1063
      %v1716 = vpop.f32.mrb[0].mxu0
      %v1717 = vadd.f32 0.0, %v1716
      %v1718 = vpop.f32.mrb[0].mxu0
      %1719 = vmatprep.mubr.f32.mxu0 0.0
      %1720 = vmatmul.mubr.f32.gmra.mrb[0].mxu0 %v1065
      %v1721 = vpop.f32.mrb[0].mxu0
      %v1722 = vadd.f32 0.0, %v1721
      %v1723 = vpop.f32.mrb[0].mxu0
      %1724 = vmatprep.mubr.f32.mxu0 0.0
      %1725 = vmatmul.mubr.f32.gmra.mrb[0].mxu0 %v1067
      %v1726 = vpop.f32.mrb[0].mxu0
      %v1727 = vadd.f32 0.0, %v1726
      %v1728 = vpop.f32.mrb[0].mxu0
      %1729 = vmatprep.mubr.f32.mxu0 0.0
      %1730 = vmatmul.mubr.f32.gmra.mrb[0].mxu0 %v1588
      %v1731 = vpop.f32.mrb[0].mxu0
      %v1732 = vadd.f32 0.0, %v1731
      %v1733 = vpop.f32.mrb[0].mxu0
      %1734 = vmatprep.mubr.f32.mxu0 0.0
      %1735 = vmatmul.mubr.f32.gmra.mrb[0].mxu0 %v1590
      %v1736 = vpop.f32.mrb[0].mxu0
      %v1737 = vadd.f32 0.0, %v1736
      %v1738 = vpop.f32.mrb[0].mxu0
      %1739 = vdwg.mxu0
      %v1740 = vadd.f32 %v1565, %v1662
      %v1741 = vadd.f32 %v1566, %v1667
      %v1742 = vadd.f32 %v1567, %v1672
      %v1743 = vadd.f32 %v1568, %v1677
      %v1744 = vadd.f32 %v1569, %v1682
      %v1745 = vadd.f32 %v1570, %v1687
      %v1746 = vadd.f32 %v1571, %v1692
      %v1747 = vadd.f32 %v1572, %v1697
      %v1748 = vadd.f32 %v1573, %v1702
      %v1749 = vadd.f32 %v1574, %v1707
      %v1750 = vadd.f32 %v1575, %v1712
      %v1751 = vadd.f32 %v1576, %v1717
      %v1752 = vadd.f32 %v1577, %v1722
      %v1753 = vadd.f32 %v1578, %v1727
      %v1754 = vadd.f32 %v1579, %v1732
      %v1755 = vadd.f32 %v1580, %v1737
      %s1756 = scalar_lea.vmem %s4, 24
      %v1757 = vld [vmem:[%s1756] sm:$0xf]
      %v1759 = vsel %vm496, %v562, 0
      %v1762 = vsel %vm496, %v563, 0
      %v1765 = vsel %vm665, %v1757, 0
      %1767 = vmatprep.subr.mxu0 0.0
      %1768 = vmatpush1.msra.mxu0 %v1765
      %1769 = vmatprep.subr.mxu0 0.0
      %1770 = vmatpush1.msra.mxu0 0.0
      %1771 = vmatprep.subr.mxu0 0.0
      %1772 = vmatpush1.msra.mxu0 0.0
      %1773 = vmatprep.subr.mxu0 0.0
      %1774 = vmatpush1.msra.mxu0 0.0
      %1775 = vmatprep.subr.mxu0 0.0
      %1776 = vmatpush1.msra.mxu0 0.0
      %1777 = vmatprep.subr.mxu0 0.0
      %1778 = vmatpush1.msra.mxu0 0.0
      %1779 = vmatprep.subr.mxu0 0.0
      %1780 = vmatpush1.msra.mxu0 0.0
      %1781 = vmatprep.subr.mxu0 0.0
      %1782 = vmatpush1.msra.mxu0 0.0
      %1783 = vmatprep.subr.mxu0 0.0
      %1784 = vmatpush1.msra.mxu0 0.0
      %1785 = vmatprep.subr.mxu0 0.0
      %1786 = vmatpush1.msra.mxu0 0.0
      %1787 = vmatprep.subr.mxu0 0.0
      %1788 = vmatpush1.msra.mxu0 0.0
      %1789 = vmatprep.subr.mxu0 0.0
      %1790 = vmatpush1.msra.mxu0 0.0
      %1791 = vmatprep.subr.mxu0 0.0
      %1792 = vmatpush1.msra.mxu0 0.0
      %1793 = vmatprep.subr.mxu0 0.0
      %1794 = vmatpush1.msra.mxu0 0.0
      %1795 = vmatprep.subr.mxu0 0.0
      %1796 = vmatpush1.msra.mxu0 0.0
      %1797 = vmatprep.subr.mxu0 0.0
      %1798 = vmatpush1.msra.mxu0 0.0
      %1799 = vmatprep.subr.mxu0 0.0
      %1800 = vmatpush1.msra.mxu0 0.0
      %1801 = vmatprep.subr.mxu0 0.0
      %1802 = vmatpush1.msra.mxu0 0.0
      %1803 = vmatprep.subr.mxu0 0.0
      %1804 = vmatpush1.msra.mxu0 0.0
      %1805 = vmatprep.subr.mxu0 0.0
      %1806 = vmatpush1.msra.mxu0 0.0
      %1807 = vmatprep.subr.mxu0 0.0
      %1808 = vmatpush1.msra.mxu0 0.0
      %1809 = vmatprep.subr.mxu0 0.0
      %1810 = vmatpush1.msra.mxu0 0.0
      %1811 = vmatprep.subr.mxu0 0.0
      %1812 = vmatpush1.msra.mxu0 0.0
      %1813 = vmatprep.subr.mxu0 0.0
      %1814 = vmatpush1.msra.mxu0 0.0
      %1815 = vmatprep.subr.mxu0 0.0
      %1816 = vmatpush1.msra.mxu0 0.0
      %1817 = vmatprep.subr.mxu0 0.0
      %1818 = vmatpush1.msra.mxu0 0.0
      %1819 = vmatprep.subr.mxu0 0.0
      %1820 = vmatpush1.msra.mxu0 0.0
      %1821 = vmatprep.subr.mxu0 0.0
      %1822 = vmatpush1.msra.mxu0 0.0
      %1823 = vmatprep.subr.mxu0 0.0
      %1824 = vmatpush1.msra.mxu0 0.0
      %1825 = vmatprep.subr.mxu0 0.0
      %1826 = vmatpush1.msra.mxu0 0.0
      %1827 = vmatprep.subr.mxu0 0.0
      %1828 = vmatpush1.msra.mxu0 0.0
      %1829 = vmatprep.subr.mxu0 0.0
      %1830 = vmatpush1.msra.mxu0 0.0
      %1831 = vmatprep.mubr.f32.mxu0 0.0
      %1832 = vmatmul.mubr.f32.gmra.mrb[0].mxu0 %v822
      %v1833 = vpop.f32.mrb[0].mxu0
      %v1834 = vadd.f32 0.0, %v1833
      %v1835 = vpop.f32.mrb[0].mxu0
      %1836 = vmatprep.mubr.f32.mxu0 0.0
      %1837 = vmatmul.mubr.f32.gmra.mrb[0].mxu0 %v824
      %v1838 = vpop.f32.mrb[0].mxu0
      %v1839 = vadd.f32 0.0, %v1838
      %v1840 = vpop.f32.mrb[0].mxu0
      %1841 = vmatprep.mubr.f32.mxu0 0.0
      %1842 = vmatmul.mubr.f32.gmra.mrb[0].mxu0 %v826
      %v1843 = vpop.f32.mrb[0].mxu0
      %v1844 = vadd.f32 0.0, %v1843
      %v1845 = vpop.f32.mrb[0].mxu0
      %1846 = vmatprep.mubr.f32.mxu0 0.0
      %1847 = vmatmul.mubr.f32.gmra.mrb[0].mxu0 %v828
      %v1848 = vpop.f32.mrb[0].mxu0
      %v1849 = vadd.f32 0.0, %v1848
      %v1850 = vpop.f32.mrb[0].mxu0
      %1851 = vmatprep.mubr.f32.mxu0 0.0
      %1852 = vmatmul.mubr.f32.gmra.mrb[0].mxu0 %v830
      %v1853 = vpop.f32.mrb[0].mxu0
      %v1854 = vadd.f32 0.0, %v1853
      %v1855 = vpop.f32.mrb[0].mxu0
      %1856 = vmatprep.mubr.f32.mxu0 0.0
      %1857 = vmatmul.mubr.f32.gmra.mrb[0].mxu0 %v832
      %v1858 = vpop.f32.mrb[0].mxu0
      %v1859 = vadd.f32 0.0, %v1858
      %v1860 = vpop.f32.mrb[0].mxu0
      %1861 = vmatprep.mubr.f32.mxu0 0.0
      %1862 = vmatmul.mubr.f32.gmra.mrb[0].mxu0 %v834
      %v1863 = vpop.f32.mrb[0].mxu0
      %v1864 = vadd.f32 0.0, %v1863
      %v1865 = vpop.f32.mrb[0].mxu0
      %1866 = vmatprep.mubr.f32.mxu0 0.0
      %1867 = vmatmul.mubr.f32.gmra.mrb[0].mxu0 %v836
      %v1868 = vpop.f32.mrb[0].mxu0
      %v1869 = vadd.f32 0.0, %v1868
      %v1870 = vpop.f32.mrb[0].mxu0
      %1871 = vmatprep.mubr.f32.mxu0 0.0
      %1872 = vmatmul.mubr.f32.gmra.mrb[0].mxu0 %v838
      %v1873 = vpop.f32.mrb[0].mxu0
      %v1874 = vadd.f32 0.0, %v1873
      %v1875 = vpop.f32.mrb[0].mxu0
      %1876 = vmatprep.mubr.f32.mxu0 0.0
      %1877 = vmatmul.mubr.f32.gmra.mrb[0].mxu0 %v840
      %v1878 = vpop.f32.mrb[0].mxu0
      %v1879 = vadd.f32 0.0, %v1878
      %v1880 = vpop.f32.mrb[0].mxu0
      %1881 = vmatprep.mubr.f32.mxu0 0.0
      %1882 = vmatmul.mubr.f32.gmra.mrb[0].mxu0 %v842
      %v1883 = vpop.f32.mrb[0].mxu0
      %v1884 = vadd.f32 0.0, %v1883
      %v1885 = vpop.f32.mrb[0].mxu0
      %1886 = vmatprep.mubr.f32.mxu0 0.0
      %1887 = vmatmul.mubr.f32.gmra.mrb[0].mxu0 %v844
      %v1888 = vpop.f32.mrb[0].mxu0
      %v1889 = vadd.f32 0.0, %v1888
      %v1890 = vpop.f32.mrb[0].mxu0
      %1891 = vmatprep.mubr.f32.mxu0 0.0
      %1892 = vmatmul.mubr.f32.gmra.mrb[0].mxu0 %v1236
      %v1893 = vpop.f32.mrb[0].mxu0
      %v1894 = vadd.f32 0.0, %v1893
      %v1895 = vpop.f32.mrb[0].mxu0
      %1896 = vmatprep.mubr.f32.mxu0 0.0
      %1897 = vmatmul.mubr.f32.gmra.mrb[0].mxu0 %v1239
      %v1898 = vpop.f32.mrb[0].mxu0
      %v1899 = vadd.f32 0.0, %v1898
      %v1900 = vpop.f32.mrb[0].mxu0
      %1901 = vmatprep.mubr.f32.mxu0 0.0
      %1902 = vmatmul.mubr.f32.gmra.mrb[0].mxu0 %v1759
      %v1903 = vpop.f32.mrb[0].mxu0
      %v1904 = vadd.f32 0.0, %v1903
      %v1905 = vpop.f32.mrb[0].mxu0
      %1906 = vmatprep.mubr.f32.mxu0 0.0
      %1907 = vmatmul.mubr.f32.gmra.mrb[0].mxu0 %v1762
      %v1908 = vpop.f32.mrb[0].mxu0
      %v1909 = vadd.f32 0.0, %v1908
      %v1910 = vpop.f32.mrb[0].mxu0
      %1911 = vdwg.mxu0
      %v1912 = vadd.f32 %v1740, %v1834
      %v1913 = vadd.f32 %v1741, %v1839
      %v1914 = vadd.f32 %v1742, %v1844
      %v1915 = vadd.f32 %v1743, %v1849
      %v1916 = vadd.f32 %v1744, %v1854
      %v1917 = vadd.f32 %v1745, %v1859
      %v1918 = vadd.f32 %v1746, %v1864
      %v1919 = vadd.f32 %v1747, %v1869
      %v1920 = vadd.f32 %v1748, %v1874
      %v1921 = vadd.f32 %v1749, %v1879
      %v1922 = vadd.f32 %v1750, %v1884
      %v1923 = vadd.f32 %v1751, %v1889
      %v1924 = vadd.f32 %v1752, %v1894
      %v1925 = vadd.f32 %v1753, %v1899
      %v1926 = vadd.f32 %v1754, %v1904
      %v1927 = vadd.f32 %v1755, %v1909
      %v1929 = vrot.slane %v562, 1
      %v1930 = vrot.slane %v563, 1
      %v1931 = vsel %vm590, %v1929, %v1930
      %v1932 = vrot.slane %v564, 1
      %v1933 = vsel %vm590, %v1930, %v1932
      %s1934 = scalar_lea.vmem %s4, 28
      %v1935 = vld [vmem:[%s1934] sm:$0xf]
      %v1936 = vsel %vm496, %v1931, 0
      %v1938 = vsel %vm496, %v1933, 0
      %v1941 = vsel %vm665, %v1935, 0
      %1943 = vmatprep.subr.mxu0 0.0
      %1944 = vmatpush1.msra.mxu0 %v1941
      %1945 = vmatprep.subr.mxu0 0.0
      %1946 = vmatpush1.msra.mxu0 0.0
      %1947 = vmatprep.subr.mxu0 0.0
      %1948 = vmatpush1.msra.mxu0 0.0
      %1949 = vmatprep.subr.mxu0 0.0
      %1950 = vmatpush1.msra.mxu0 0.0
      %1951 = vmatprep.subr.mxu0 0.0
      %1952 = vmatpush1.msra.mxu0 0.0
      %1953 = vmatprep.subr.mxu0 0.0
      %1954 = vmatpush1.msra.mxu0 0.0
      %1955 = vmatprep.subr.mxu0 0.0
      %1956 = vmatpush1.msra.mxu0 0.0
      %1957 = vmatprep.subr.mxu0 0.0
      %1958 = vmatpush1.msra.mxu0 0.0
      %1959 = vmatprep.subr.mxu0 0.0
      %1960 = vmatpush1.msra.mxu0 0.0
      %1961 = vmatprep.subr.mxu0 0.0
      %1962 = vmatpush1.msra.mxu0 0.0
      %1963 = vmatprep.subr.mxu0 0.0
      %1964 = vmatpush1.msra.mxu0 0.0
      %1965 = vmatprep.subr.mxu0 0.0
      %1966 = vmatpush1.msra.mxu0 0.0
      %1967 = vmatprep.subr.mxu0 0.0
      %1968 = vmatpush1.msra.mxu0 0.0
      %1969 = vmatprep.subr.mxu0 0.0
      %1970 = vmatpush1.msra.mxu0 0.0
      %1971 = vmatprep.subr.mxu0 0.0
      %1972 = vmatpush1.msra.mxu0 0.0
      %1973 = vmatprep.subr.mxu0 0.0
      %1974 = vmatpush1.msra.mxu0 0.0
      %1975 = vmatprep.subr.mxu0 0.0
      %1976 = vmatpush1.msra.mxu0 0.0
      %1977 = vmatprep.subr.mxu0 0.0
      %1978 = vmatpush1.msra.mxu0 0.0
      %1979 = vmatprep.subr.mxu0 0.0
      %1980 = vmatpush1.msra.mxu0 0.0
      %1981 = vmatprep.subr.mxu0 0.0
      %1982 = vmatpush1.msra.mxu0 0.0
      %1983 = vmatprep.subr.mxu0 0.0
      %1984 = vmatpush1.msra.mxu0 0.0
      %1985 = vmatprep.subr.mxu0 0.0
      %1986 = vmatpush1.msra.mxu0 0.0
      %1987 = vmatprep.subr.mxu0 0.0
      %1988 = vmatpush1.msra.mxu0 0.0
      %1989 = vmatprep.subr.mxu0 0.0
      %1990 = vmatpush1.msra.mxu0 0.0
      %1991 = vmatprep.subr.mxu0 0.0
      %1992 = vmatpush1.msra.mxu0 0.0
      %1993 = vmatprep.subr.mxu0 0.0
      %1994 = vmatpush1.msra.mxu0 0.0
      %1995 = vmatprep.subr.mxu0 0.0
      %1996 = vmatpush1.msra.mxu0 0.0
      %1997 = vmatprep.subr.mxu0 0.0
      %1998 = vmatpush1.msra.mxu0 0.0
      %1999 = vmatprep.subr.mxu0 0.0
      %2000 = vmatpush1.msra.mxu0 0.0
      %2001 = vmatprep.subr.mxu0 0.0
      %2002 = vmatpush1.msra.mxu0 0.0
      %2003 = vmatprep.subr.mxu0 0.0
      %2004 = vmatpush1.msra.mxu0 0.0
      %2005 = vmatprep.subr.mxu0 0.0
      %2006 = vmatpush1.msra.mxu0 0.0
      %2007 = vmatprep.mubr.f32.mxu0 0.0
      %2008 = vmatmul.mubr.f32.gmra.mrb[0].mxu0 %v641
      %v2009 = vpop.f32.mrb[0].mxu0
      %v2010 = vadd.f32 0.0, %v2009
      %v2011 = vpop.f32.mrb[0].mxu0
      %2012 = vmatprep.mubr.f32.mxu0 0.0
      %2013 = vmatmul.mubr.f32.gmra.mrb[0].mxu0 %v643
      %v2014 = vpop.f32.mrb[0].mxu0
      %v2015 = vadd.f32 0.0, %v2014
      %v2016 = vpop.f32.mrb[0].mxu0
      %2017 = vmatprep.mubr.f32.mxu0 0.0
      %2018 = vmatmul.mubr.f32.gmra.mrb[0].mxu0 %v645
      %v2019 = vpop.f32.mrb[0].mxu0
      %v2020 = vadd.f32 0.0, %v2019
      %v2021 = vpop.f32.mrb[0].mxu0
      %2022 = vmatprep.mubr.f32.mxu0 0.0
      %2023 = vmatmul.mubr.f32.gmra.mrb[0].mxu0 %v647
      %v2024 = vpop.f32.mrb[0].mxu0
      %v2025 = vadd.f32 0.0, %v2024
      %v2026 = vpop.f32.mrb[0].mxu0
      %2027 = vmatprep.mubr.f32.mxu0 0.0
      %2028 = vmatmul.mubr.f32.gmra.mrb[0].mxu0 %v649
      %v2029 = vpop.f32.mrb[0].mxu0
      %v2030 = vadd.f32 0.0, %v2029
      %v2031 = vpop.f32.mrb[0].mxu0
      %2032 = vmatprep.mubr.f32.mxu0 0.0
      %2033 = vmatmul.mubr.f32.gmra.mrb[0].mxu0 %v651
      %v2034 = vpop.f32.mrb[0].mxu0
      %v2035 = vadd.f32 0.0, %v2034
      %v2036 = vpop.f32.mrb[0].mxu0
      %2037 = vmatprep.mubr.f32.mxu0 0.0
      %2038 = vmatmul.mubr.f32.gmra.mrb[0].mxu0 %v653
      %v2039 = vpop.f32.mrb[0].mxu0
      %v2040 = vadd.f32 0.0, %v2039
      %v2041 = vpop.f32.mrb[0].mxu0
      %2042 = vmatprep.mubr.f32.mxu0 0.0
      %2043 = vmatmul.mubr.f32.gmra.mrb[0].mxu0 %v655
      %v2044 = vpop.f32.mrb[0].mxu0
      %v2045 = vadd.f32 0.0, %v2044
      %v2046 = vpop.f32.mrb[0].mxu0
      %2047 = vmatprep.mubr.f32.mxu0 0.0
      %2048 = vmatmul.mubr.f32.gmra.mrb[0].mxu0 %v657
      %v2049 = vpop.f32.mrb[0].mxu0
      %v2050 = vadd.f32 0.0, %v2049
      %v2051 = vpop.f32.mrb[0].mxu0
      %2052 = vmatprep.mubr.f32.mxu0 0.0
      %2053 = vmatmul.mubr.f32.gmra.mrb[0].mxu0 %v659
      %v2054 = vpop.f32.mrb[0].mxu0
      %v2055 = vadd.f32 0.0, %v2054
      %v2056 = vpop.f32.mrb[0].mxu0
      %2057 = vmatprep.mubr.f32.mxu0 0.0
      %2058 = vmatmul.mubr.f32.gmra.mrb[0].mxu0 %v661
      %v2059 = vpop.f32.mrb[0].mxu0
      %v2060 = vadd.f32 0.0, %v2059
      %v2061 = vpop.f32.mrb[0].mxu0
      %2062 = vmatprep.mubr.f32.mxu0 0.0
      %2063 = vmatmul.mubr.f32.gmra.mrb[0].mxu0 %v663
      %v2064 = vpop.f32.mrb[0].mxu0
      %v2065 = vadd.f32 0.0, %v2064
      %v2066 = vpop.f32.mrb[0].mxu0
      %2067 = vmatprep.mubr.f32.mxu0 0.0
      %2068 = vmatmul.mubr.f32.gmra.mrb[0].mxu0 %v1413
      %v2069 = vpop.f32.mrb[0].mxu0
      %v2070 = vadd.f32 0.0, %v2069
      %v2071 = vpop.f32.mrb[0].mxu0
      %2072 = vmatprep.mubr.f32.mxu0 0.0
      %2073 = vmatmul.mubr.f32.gmra.mrb[0].mxu0 %v1415
      %v2074 = vpop.f32.mrb[0].mxu0
      %v2075 = vadd.f32 0.0, %v2074
      %v2076 = vpop.f32.mrb[0].mxu0
      %2077 = vmatprep.mubr.f32.mxu0 0.0
      %2078 = vmatmul.mubr.f32.gmra.mrb[0].mxu0 %v1936
      %v2079 = vpop.f32.mrb[0].mxu0
      %v2080 = vadd.f32 0.0, %v2079
      %v2081 = vpop.f32.mrb[0].mxu0
      %2082 = vmatprep.mubr.f32.mxu0 0.0
      %2083 = vmatmul.mubr.f32.gmra.mrb[0].mxu0 %v1938
      %v2084 = vpop.f32.mrb[0].mxu0
      %v2085 = vadd.f32 0.0, %v2084
      %v2086 = vpop.f32.mrb[0].mxu0
      %2087 = vdwg.mxu0
      %v2088 = vadd.f32 %v1912, %v2010
      %v2089 = vadd.f32 %v1913, %v2015
      %v2090 = vadd.f32 %v1914, %v2020
      %v2091 = vadd.f32 %v1915, %v2025
      %v2092 = vadd.f32 %v1916, %v2030
      %v2093 = vadd.f32 %v1917, %v2035
      %v2094 = vadd.f32 %v1918, %v2040
      %v2095 = vadd.f32 %v1919, %v2045
      %v2096 = vadd.f32 %v1920, %v2050
      %v2097 = vadd.f32 %v1921, %v2055
      %v2098 = vadd.f32 %v1922, %v2060
      %v2099 = vadd.f32 %v1923, %v2065
      %v2100 = vadd.f32 %v1924, %v2070
      %v2101 = vadd.f32 %v1925, %v2075
      %v2102 = vadd.f32 %v1926, %v2080
      %v2103 = vadd.f32 %v1927, %v2085
      %v2104 = vrot.slane %v562, 2
      %v2105 = vrot.slane %v563, 2
      %v2106 = vsel %vm994, %v2104, %v2105
      %v2107 = vrot.slane %v564, 2
      %v2108 = vsel %vm994, %v2105, %v2107
      %s2109 = scalar_lea.vmem %s4, 32
      %v2110 = vld [vmem:[%s2109] sm:$0xf]
      %v2111 = vsel %vm496, %v2106, 0
      %v2113 = vsel %vm496, %v2108, 0
      %v2116 = vsel %vm665, %v2110, 0
      %2118 = vmatprep.subr.mxu0 0.0
      %2119 = vmatpush1.msra.mxu0 %v2116
      %2120 = vmatprep.subr.mxu0 0.0
      %2121 = vmatpush1.msra.mxu0 0.0
      %2122 = vmatprep.subr.mxu0 0.0
      %2123 = vmatpush1.msra.mxu0 0.0
      %2124 = vmatprep.subr.mxu0 0.0
      %2125 = vmatpush1.msra.mxu0 0.0
      %2126 = vmatprep.subr.mxu0 0.0
      %2127 = vmatpush1.msra.mxu0 0.0
      %2128 = vmatprep.subr.mxu0 0.0
      %2129 = vmatpush1.msra.mxu0 0.0
      %2130 = vmatprep.subr.mxu0 0.0
      %2131 = vmatpush1.msra.mxu0 0.0
      %2132 = vmatprep.subr.mxu0 0.0
      %2133 = vmatpush1.msra.mxu0 0.0
      %2134 = vmatprep.subr.mxu0 0.0
      %2135 = vmatpush1.msra.mxu0 0.0
      %2136 = vmatprep.subr.mxu0 0.0
      %2137 = vmatpush1.msra.mxu0 0.0
      %2138 = vmatprep.subr.mxu0 0.0
      %2139 = vmatpush1.msra.mxu0 0.0
      %2140 = vmatprep.subr.mxu0 0.0
      %2141 = vmatpush1.msra.mxu0 0.0
      %2142 = vmatprep.subr.mxu0 0.0
      %2143 = vmatpush1.msra.mxu0 0.0
      %2144 = vmatprep.subr.mxu0 0.0
      %2145 = vmatpush1.msra.mxu0 0.0
      %2146 = vmatprep.subr.mxu0 0.0
      %2147 = vmatpush1.msra.mxu0 0.0
      %2148 = vmatprep.subr.mxu0 0.0
      %2149 = vmatpush1.msra.mxu0 0.0
      %2150 = vmatprep.subr.mxu0 0.0
      %2151 = vmatpush1.msra.mxu0 0.0
      %2152 = vmatprep.subr.mxu0 0.0
      %2153 = vmatpush1.msra.mxu0 0.0
      %2154 = vmatprep.subr.mxu0 0.0
      %2155 = vmatpush1.msra.mxu0 0.0
      %2156 = vmatprep.subr.mxu0 0.0
      %2157 = vmatpush1.msra.mxu0 0.0
      %2158 = vmatprep.subr.mxu0 0.0
      %2159 = vmatpush1.msra.mxu0 0.0
      %2160 = vmatprep.subr.mxu0 0.0
      %2161 = vmatpush1.msra.mxu0 0.0
      %2162 = vmatprep.subr.mxu0 0.0
      %2163 = vmatpush1.msra.mxu0 0.0
      %2164 = vmatprep.subr.mxu0 0.0
      %2165 = vmatpush1.msra.mxu0 0.0
      %2166 = vmatprep.subr.mxu0 0.0
      %2167 = vmatpush1.msra.mxu0 0.0
      %2168 = vmatprep.subr.mxu0 0.0
      %2169 = vmatpush1.msra.mxu0 0.0
      %2170 = vmatprep.subr.mxu0 0.0
      %2171 = vmatpush1.msra.mxu0 0.0
      %2172 = vmatprep.subr.mxu0 0.0
      %2173 = vmatpush1.msra.mxu0 0.0
      %2174 = vmatprep.subr.mxu0 0.0
      %2175 = vmatpush1.msra.mxu0 0.0
      %2176 = vmatprep.subr.mxu0 0.0
      %2177 = vmatpush1.msra.mxu0 0.0
      %2178 = vmatprep.subr.mxu0 0.0
      %2179 = vmatpush1.msra.mxu0 0.0
      %2180 = vmatprep.subr.mxu0 0.0
      %2181 = vmatpush1.msra.mxu0 0.0
      %2182 = vmatprep.mubr.f32.mxu0 0.0
      %2183 = vmatmul.mubr.f32.gmra.mrb[0].mxu0 %v1045
      %v2184 = vpop.f32.mrb[0].mxu0
      %v2185 = vadd.f32 0.0, %v2184
      %v2186 = vpop.f32.mrb[0].mxu0
      %2187 = vmatprep.mubr.f32.mxu0 0.0
      %2188 = vmatmul.mubr.f32.gmra.mrb[0].mxu0 %v1047
      %v2189 = vpop.f32.mrb[0].mxu0
      %v2190 = vadd.f32 0.0, %v2189
      %v2191 = vpop.f32.mrb[0].mxu0
      %2192 = vmatprep.mubr.f32.mxu0 0.0
      %2193 = vmatmul.mubr.f32.gmra.mrb[0].mxu0 %v1049
      %v2194 = vpop.f32.mrb[0].mxu0
      %v2195 = vadd.f32 0.0, %v2194
      %v2196 = vpop.f32.mrb[0].mxu0
      %2197 = vmatprep.mubr.f32.mxu0 0.0
      %2198 = vmatmul.mubr.f32.gmra.mrb[0].mxu0 %v1051
      %v2199 = vpop.f32.mrb[0].mxu0
      %v2200 = vadd.f32 0.0, %v2199
      %v2201 = vpop.f32.mrb[0].mxu0
      %2202 = vmatprep.mubr.f32.mxu0 0.0
      %2203 = vmatmul.mubr.f32.gmra.mrb[0].mxu0 %v1053
      %v2204 = vpop.f32.mrb[0].mxu0
      %v2205 = vadd.f32 0.0, %v2204
      %v2206 = vpop.f32.mrb[0].mxu0
      %2207 = vmatprep.mubr.f32.mxu0 0.0
      %2208 = vmatmul.mubr.f32.gmra.mrb[0].mxu0 %v1055
      %v2209 = vpop.f32.mrb[0].mxu0
      %v2210 = vadd.f32 0.0, %v2209
      %v2211 = vpop.f32.mrb[0].mxu0
      %2212 = vmatprep.mubr.f32.mxu0 0.0
      %2213 = vmatmul.mubr.f32.gmra.mrb[0].mxu0 %v1057
      %v2214 = vpop.f32.mrb[0].mxu0
      %v2215 = vadd.f32 0.0, %v2214
      %v2216 = vpop.f32.mrb[0].mxu0
      %2217 = vmatprep.mubr.f32.mxu0 0.0
      %2218 = vmatmul.mubr.f32.gmra.mrb[0].mxu0 %v1059
      %v2219 = vpop.f32.mrb[0].mxu0
      %v2220 = vadd.f32 0.0, %v2219
      %v2221 = vpop.f32.mrb[0].mxu0
      %2222 = vmatprep.mubr.f32.mxu0 0.0
      %2223 = vmatmul.mubr.f32.gmra.mrb[0].mxu0 %v1061
      %v2224 = vpop.f32.mrb[0].mxu0
      %v2225 = vadd.f32 0.0, %v2224
      %v2226 = vpop.f32.mrb[0].mxu0
      %2227 = vmatprep.mubr.f32.mxu0 0.0
      %2228 = vmatmul.mubr.f32.gmra.mrb[0].mxu0 %v1063
      %v2229 = vpop.f32.mrb[0].mxu0
      %v2230 = vadd.f32 0.0, %v2229
      %v2231 = vpop.f32.mrb[0].mxu0
      %2232 = vmatprep.mubr.f32.mxu0 0.0
      %2233 = vmatmul.mubr.f32.gmra.mrb[0].mxu0 %v1065
      %v2234 = vpop.f32.mrb[0].mxu0
      %v2235 = vadd.f32 0.0, %v2234
      %v2236 = vpop.f32.mrb[0].mxu0
      %2237 = vmatprep.mubr.f32.mxu0 0.0
      %2238 = vmatmul.mubr.f32.gmra.mrb[0].mxu0 %v1067
      %v2239 = vpop.f32.mrb[0].mxu0
      %v2240 = vadd.f32 0.0, %v2239
      %v2241 = vpop.f32.mrb[0].mxu0
      %2242 = vmatprep.mubr.f32.mxu0 0.0
      %2243 = vmatmul.mubr.f32.gmra.mrb[0].mxu0 %v1588
      %v2244 = vpop.f32.mrb[0].mxu0
      %v2245 = vadd.f32 0.0, %v2244
      %v2246 = vpop.f32.mrb[0].mxu0
      %2247 = vmatprep.mubr.f32.mxu0 0.0
      %2248 = vmatmul.mubr.f32.gmra.mrb[0].mxu0 %v1590
      %v2249 = vpop.f32.mrb[0].mxu0
      %v2250 = vadd.f32 0.0, %v2249
      %v2251 = vpop.f32.mrb[0].mxu0
      %2252 = vmatprep.mubr.f32.mxu0 0.0
      %2253 = vmatmul.mubr.f32.gmra.mrb[0].mxu0 %v2111
      %v2254 = vpop.f32.mrb[0].mxu0
      %v2255 = vadd.f32 0.0, %v2254
      %v2256 = vpop.f32.mrb[0].mxu0
      %2257 = vmatprep.mubr.f32.mxu0 0.0
      %2258 = vmatmul.mubr.f32.gmra.mrb[0].mxu0 %v2113
      %v2259 = vpop.f32.mrb[0].mxu0
      %v2260 = vadd.f32 0.0, %v2259
      %v2261 = vpop.f32.mrb[0].mxu0
      %2262 = vdwg.mxu0
      %v2263 = vadd.f32 %v2088, %v2185
      %v2264 = vadd.f32 %v2089, %v2190
      %v2265 = vadd.f32 %v2090, %v2195
      %v2266 = vadd.f32 %v2091, %v2200
      %v2267 = vadd.f32 %v2092, %v2205
      %v2268 = vadd.f32 %v2093, %v2210
      %v2269 = vadd.f32 %v2094, %v2215
      %v2270 = vadd.f32 %v2095, %v2220
      %v2271 = vadd.f32 %v2096, %v2225
      %v2272 = vadd.f32 %v2097, %v2230
      %v2273 = vadd.f32 %v2098, %v2235
      %v2274 = vadd.f32 %v2099, %v2240
      %v2275 = vadd.f32 %v2100, %v2245
      %v2276 = vadd.f32 %v2101, %v2250
      %v2277 = vadd.f32 %v2102, %v2255
      %v2278 = vadd.f32 %v2103, %v2260
      %v2279 = vld [vmem:[%s5] sm:$0x1]
      %v2281 = vlaneseq
      %v2282 = vshrl.u32 %v2281, 7
      %v2283 = vsub.s32 0, %v2282
      %v2284 = vrot.slane %v2279, %v2283
      %v2286 = vadd.f32 %v2263, %v2284
      %v2287 = vadd.f32 %v2264, %v2284
      %v2288 = vadd.f32 %v2265, %v2284
      %v2289 = vadd.f32 %v2266, %v2284
      %v2290 = vadd.f32 %v2267, %v2284
      %v2291 = vadd.f32 %v2268, %v2284
      %v2292 = vadd.f32 %v2269, %v2284
      %v2293 = vadd.f32 %v2270, %v2284
      %v2294 = vadd.f32 %v2271, %v2284
      %v2295 = vadd.f32 %v2272, %v2284
      %v2296 = vadd.f32 %v2273, %v2284
      %v2297 = vadd.f32 %v2274, %v2284
      %v2298 = vadd.f32 %v2275, %v2284
      %v2299 = vadd.f32 %v2276, %v2284
      %v2300 = vadd.f32 %v2277, %v2284
      %v2301 = vadd.f32 %v2278, %v2284
      %v2302 = vld [vmem:[%s446] sm:$0xff]
      %v2303 = vld [vmem:[%s446 + $0x8] sm:$0xff]
      %v2304 = vld [vmem:[%s446 + $0x10] sm:$0xff]
      %v2305 = vld [vmem:[%s446 + $0x18] sm:$0xff]
      %v2306 = vld [vmem:[%s446 + $0x20] sm:$0xff]
      %v2307 = vld [vmem:[%s446 + $0x28] sm:$0xff]
      %v2308 = vld [vmem:[%s446 + $0x30] sm:$0xff]
      %v2309 = vld [vmem:[%s446 + $0x38] sm:$0xff]
      %v2310 = vld [vmem:[%s446 + $0x40] sm:$0xff]
      %v2311 = vld [vmem:[%s446 + $0x48] sm:$0xff]
      %v2312 = vld [vmem:[%s446 + $0x50] sm:$0xff]
      %v2313 = vld [vmem:[%s446 + $0x58] sm:$0xff]
      %v2314 = vld [vmem:[%s446 + $0x60] sm:$0xff]
      %v2315 = vld [vmem:[%s446 + $0x68] sm:$0xff]
      %v2316 = vld [vmem:[%s446 + $0x70] sm:$0xff]
      %v2317 = vld [vmem:[%s446 + $0x78] sm:$0xff]
      %v2318 = vadd.f32 %v2286, %v2302
      %v2319 = vadd.f32 %v2287, %v2303
      %v2320 = vadd.f32 %v2288, %v2304
      %v2321 = vadd.f32 %v2289, %v2305
      %v2322 = vadd.f32 %v2290, %v2306
      %v2323 = vadd.f32 %v2291, %v2307
      %v2324 = vadd.f32 %v2292, %v2308
      %v2325 = vadd.f32 %v2293, %v2309
      %v2326 = vadd.f32 %v2294, %v2310
      %v2327 = vadd.f32 %v2295, %v2311
      %v2328 = vadd.f32 %v2296, %v2312
      %v2329 = vadd.f32 %v2297, %v2313
      %v2330 = vadd.f32 %v2298, %v2314
      %v2331 = vadd.f32 %v2299, %v2315
      %v2332 = vadd.f32 %v2300, %v2316
      %v2333 = vadd.f32 %v2301, %v2317
      %2334 = vst.msk [vmem:[%s457] sm:$0xff] %vm496, %v2318
      %2335 = vst.msk [vmem:[%s457 + $0x8] sm:$0xff] %vm496, %v2319
      %2336 = vst.msk [vmem:[%s457 + $0x10] sm:$0xff] %vm496, %v2320
      %2337 = vst.msk [vmem:[%s457 + $0x18] sm:$0xff] %vm496, %v2321
      %2338 = vst.msk [vmem:[%s457 + $0x20] sm:$0xff] %vm496, %v2322
      %2339 = vst.msk [vmem:[%s457 + $0x28] sm:$0xff] %vm496, %v2323
      %2340 = vst.msk [vmem:[%s457 + $0x30] sm:$0xff] %vm496, %v2324
      %2341 = vst.msk [vmem:[%s457 + $0x38] sm:$0xff] %vm496, %v2325
      %2342 = vst.msk [vmem:[%s457 + $0x40] sm:$0xff] %vm496, %v2326
      %2343 = vst.msk [vmem:[%s457 + $0x48] sm:$0xff] %vm496, %v2327
      %2344 = vst.msk [vmem:[%s457 + $0x50] sm:$0xff] %vm496, %v2328
      %2345 = vst.msk [vmem:[%s457 + $0x58] sm:$0xff] %vm496, %v2329
      %2346 = vst.msk [vmem:[%s457 + $0x60] sm:$0xff] %vm496, %v2330
      %2347 = vst.msk [vmem:[%s457 + $0x68] sm:$0xff] %vm496, %v2331
      %2348 = vst.msk [vmem:[%s457 + $0x70] sm:$0xff] %vm496, %v2332
      %2349 = vst.msk [vmem:[%s457 + $0x78] sm:$0xff] %vm496, %v2333
      %s2350 = smul.u32 8, %s22
      %p2351 = scmp.lt.s32.totalorder %s21, 1
      %s2352 = scalar_select %p2351, %s21, 1
      %p2353 = scmp.lt.s32.totalorder %s2350, 15
      %s2354 = scalar_select %p2353, %s2350, 15
      %s2355 = smul.addr %s2354, 2
      %s2356 = smul.addr %s2352, 32
      %s2357 = sadd.s32 %s2355, %s2356
      %s2358 = smul.addr %s2357, 8
      %s2359 = scalar_lea.vmem %s6, %s2358
      // Predicated region
      $region45: #{residual_group_forward.9} parent=43 // pred_check
        %p2360 = pneg %p219
      $region46: #{residual_group_forward.9} parent=43 // pred_check_branch
        %2362 = sbr.rel (%p2360) target = $region48
      $region47: #{residual_group_forward.9} parent=43 // pred_region
        %s2363 = smul.u32 8, %s22
      $region48: #{residual_group_forward.9} parent=43 // pred_fallthru
        _
    $region44: #{residual_group_forward.9} parent=5 // pred_fallthru
      _
    %p2364 = scmp.le.s32.totalorder 2, %s12
    // Predicated region
    $region49: #{residual_group_forward.9} parent=5 // pred_check
      %p2365 = pneg %p2364
    $region50: #{residual_group_forward.9} parent=5 // pred_check_branch
      %2367 = sbr.rel (%p2365) target = $region52
    $region51: #{residual_group_forward.9} parent=5 // pred_region
      %s2368 = ssub.s32 %s12, 2
      // Predicated region
      $region53: #{residual_group_forward.9} parent=51 // pred_check
        %p2369 = pneg %p225
      $region54: #{residual_group_forward.9} parent=51 // pred_check_branch
        %2371 = sbr.rel (%p2369) target = $region56
      $region55: #{residual_group_forward.9} parent=51 // pred_region
        %s2372 = smul.u32 8, %s24
        %p2373 = scmp.lt.s32.totalorder %s23, 1
        %s2374 = scalar_select %p2373, %s23, 1
        %p2375 = scmp.lt.s32.totalorder %s2372, 15
        %s2376 = scalar_select %p2375, %s2372, 15
        %s2377 = smul.addr %s2376, 2
        %s2378 = smul.addr %s2374, 32
        %s2379 = sadd.s32 %s2377, %s2378
        %s2380 = smul.addr %s2379, 8
        %s2381 = scalar_lea.vmem %s6, %s2380
      $region56: #{residual_group_forward.9} parent=51 // pred_fallthru
        _
    $region52: #{residual_group_forward.9} parent=5 // pred_fallthru
      _
  $region6: #{residual_group_forward.9} parent=0 // loop_footer
    %s16 = sadd.s32 1, %s12
  $region7: #{residual_group_forward.9} parent=0 // loop_footer_branch
    %11 = sbr.rel target = $region3
  $region8: #{residual_group_forward.9} parent=0 // loop_exit
    _

// kernel: residual_group_forward.5
$region0: #{residual_group_forward.5}
  #allocation0 [shape = 'u32[]', space=smem, size = 0x4, offset = 0x4, fixed_abs, tag = 'smem constant byte address 0x4 - core index']
  #allocation1 [shape = 'u32[144,128]{1,0:T(1,128)}', space=vmem, size = 0x12000, scoped, tag = 'internal scratch']
  #allocation2 [shape = 'f32[12,18,4]{2,1,0:T(8,128)}', space=vmem, size = 0x24000, scoped, tag = 'scratch operand']
  #allocation3 [shape = 'f32[10,18,4]{2,1,0:T(8,128)}', space=vmem, size = 0x1e000, scoped, tag = 'scratch operand']
  %s0 = inlined_call_operand.vmem [shape: f32[2,16,16,4], index: 0, kind: input, shape index: {}, may-alias: {0,1,2}]
  %s1 = inlined_call_operand.vmem [shape: f32[2,16,16,4], index: 1, kind: input, shape index: {}, may-alias: {0,1,2}]
  %s2 = inlined_call_operand.vmem [shape: f32[2,16,16,4], index: 2, kind: input, shape index: {}, may-alias: {0,1,2}]
  %s3 = inlined_call_operand.vmem [shape: f32[3,3,4,4], index: 3, kind: input, shape index: {}]
  %s4 = inlined_call_operand.vmem [shape: f32[1,4], index: 4, kind: input, shape index: {}]
  %s5 = inlined_call_operand.vmem [shape: f32[3,3,4,4], index: 5, kind: input, shape index: {}]
  %s6 = inlined_call_operand.vmem [shape: f32[1,4], index: 6, kind: input, shape index: {}]
  %s7 = inlined_call_operand.vmem [shape: f32[2,16,16,4], index: 7, kind: output, shape index: {0}]
  %s8 = inlined_call_operand.vmem [shape: f32[2,1,4], index: 8, kind: output, shape index: {1}]
  %9 = xla_tuple %s7, %s8
  %s10 = sld [smem:[#allocation0]]
  $region77: #{residual_group_forward.5} parent=0
    _
  %s12 = ssub.s32 1, %s10
  %s13 = scalar_select 0, %s12, %s10
  loop: start=0, step=1, limit=6
  $region2: #{residual_group_forward.5} parent=0 // loop_pre_header
    _
  $region3: #{residual_group_forward.5} parent=0 // loop_header
    %s15 = sphi 0, %s19
    %p16 = scmp.ge.s32.totalorder %s15, 6
    %s22 = sphi 0, %s34
    %s23 = sphi 0, %s30
    %s24 = sphi 0, %s22
    %s25 = sphi 0, %s23
    %s26 = sphi 0, %s24
    %s27 = sphi 0, %s25
    %s39 = sphi 0, %s41
    %s42 = sphi 0, %s39
    %s43 = sphi 0, %s42
    %s59 = sphi 0, %s43
    %s75 = sphi 0, %s77
    %s78 = sphi 0, %s75
    %s79 = sphi 0, %s78
    %s95 = sphi 0, %s79
    %s111 = sphi 0, %s113
    %s114 = sphi 0, %s111
    %s115 = sphi 0, %s114
    %s131 = sphi 0, %s115
    %s135 = sphi 0, %s135
    %s137 = sphi 0, %s135
    %s138 = sphi 0, %s137
    %s152 = sphi 0, %s138
    %s156 = sphi 0, %s156
    %s158 = sphi 0, %s156
    %s159 = sphi 0, %s158
    %s173 = sphi 0, %s159
    %s177 = sphi 0, %s177
    %s179 = sphi 0, %s177
    %s180 = sphi 0, %s179
    %s194 = sphi 0, %s180
    %s198 = sphi 0, %s198
    %s200 = sphi 0, %s198
    %s201 = sphi 0, %s200
    %s215 = sphi 0, %s201
    %s223 = sphi 0, %s225
    %s226 = sphi 0, %s223
    %s227 = sphi 0, %s226
    %s243 = sphi 0, %s227
    %s249 = sphi 0, %s251
    %s252 = sphi 0, %s249
    %s253 = sphi 0, %s252
    %s269 = sphi 0, %s253
  $region4: #{residual_group_forward.5} parent=0 // loop_header_branch
    %18 = sbr.rel (%p16) target = $region8
  $region5: #{residual_group_forward.5} parent=0 // loop_body
    %s20 = ssub.s32 %s15, 1
    %s21 = ssub.s32 %s15, 2
    %s28 = sadd.s32 1, %s23
    %p29 = scmp.ge.s32.totalorder %s28, 2
    %s30 = scalar_select %p29, 0, %s28
    %s31 = sadd.s32 1, %s22
    %s32 = scalar_select %p29, %s31, %s22
    %p33 = scmp.ge.s32.totalorder %s32, 2
    %s34 = scalar_select %p33, 0, %s32
    %s35 = ssub.s32 %s22, %s34
    %s36 = ssub.s32 %s23, %s30
    %s37 = sor.u32 %s35, %s36
    %p38 = scmp.eq.s32.totalorder %s37, 0
    %s40 = sadd.s32 %s39, 1
    %s41 = scalar_select %p38, %s39, %s40
    %p44 = pneg %p38
    %p45 = scmp.eq.s32.totalorder %s15, 3
    %p46 = por %p44, %p45
    %p47 = scmp.ne.s32.totalorder %s39, %s42
    %p48 = scmp.eq.s32.totalorder %s15, 0
    %p49 = por %p47, %p48
    %p50 = scmp.ne.s32.totalorder %s39, %s42
    %p51 = scmp.eq.s32.totalorder %s20, 3
    %p52 = por %p50, %p51
    %p53 = scmp.ne.s32.totalorder %s42, %s43
    %p54 = scmp.eq.s32.totalorder %s20, 0
    %p55 = por %p53, %p54
    %p56 = scmp.ne.s32.totalorder %s42, %s43
    %p57 = scmp.eq.s32.totalorder %s21, 3
    %p58 = por %p56, %p57
    %p60 = scmp.ne.s32.totalorder %s43, %s59
    %p61 = scmp.eq.s32.totalorder %s21, 0
    %p62 = por %p60, %p61
    %s63 = smul.u32 %s23, 4
    %s64 = ssub.s32 %s63, 1
    %p65 = scmp.gt.s32.totalorder %s64, 0
    %s66 = scalar_select %p65, %s64, 0
    %s67 = smul.u32 %s30, 4
    %s68 = ssub.s32 %s67, 1
    %p69 = scmp.gt.s32.totalorder %s68, 0
    %s70 = scalar_select %p69, %s68, 0
    %s71 = ssub.s32 %s22, %s34
    %s72 = ssub.s32 %s66, %s70
    %s73 = sor.u32 %s71, %s72
    %p74 = scmp.eq.s32.totalorder %s73, 0
    %s76 = sadd.s32 %s75, 1
    %s77 = scalar_select %p74, %s75, %s76
    %p80 = pneg %p74
    %p81 = scmp.eq.s32.totalorder %s15, 3
    %p82 = por %p80, %p81
    %p83 = scmp.ne.s32.totalorder %s75, %s78
    %p84 = scmp.eq.s32.totalorder %s15, 0
    %p85 = por %p83, %p84
    %p86 = scmp.ne.s32.totalorder %s75, %s78
    %p87 = scmp.eq.s32.totalorder %s20, 3
    %p88 = por %p86, %p87
    %p89 = scmp.ne.s32.totalorder %s78, %s79
    %p90 = scmp.eq.s32.totalorder %s20, 0
    %p91 = por %p89, %p90
    %p92 = scmp.ne.s32.totalorder %s78, %s79
    %p93 = scmp.eq.s32.totalorder %s21, 3
    %p94 = por %p92, %p93
    %p96 = scmp.ne.s32.totalorder %s79, %s95
    %p97 = scmp.eq.s32.totalorder %s21, 0
    %p98 = por %p96, %p97
    %s99 = sadd.s32 %s23, 1
    %s100 = smul.u32 %s99, 4
    %p101 = scmp.lt.s32.totalorder %s100, 7
    %s102 = scalar_select %p101, %s100, 7
    %s103 = sadd.s32 %s30, 1
    %s104 = smul.u32 %s103, 4
    %p105 = scmp.lt.s32.totalorder %s104, 7
    %s106 = scalar_select %p105, %s104, 7
    %s107 = ssub.s32 %s22, %s34
    %s108 = ssub.s32 %s102, %s106
    %s109 = sor.u32 %s107, %s108
    %p110 = scmp.eq.s32.totalorder %s109, 0
    %s112 = sadd.s32 %s111, 1
    %s113 = scalar_select %p110, %s111, %s112
    %p116 = pneg %p110
    %p117 = scmp.eq.s32.totalorder %s15, 3
    %p118 = por %p116, %p117
    %p119 = scmp.ne.s32.totalorder %s111, %s114
    %p120 = scmp.eq.s32.totalorder %s15, 0
    %p121 = por %p119, %p120
    %p122 = scmp.ne.s32.totalorder %s111, %s114
    %p123 = scmp.eq.s32.totalorder %s20, 3
    %p124 = por %p122, %p123
    %p125 = scmp.ne.s32.totalorder %s114, %s115
    %p126 = scmp.eq.s32.totalorder %s20, 0
    %p127 = por %p125, %p126
    %p128 = scmp.ne.s32.totalorder %s114, %s115
    %p129 = scmp.eq.s32.totalorder %s21, 3
    %p130 = por %p128, %p129
    %p132 = scmp.ne.s32.totalorder %s115, %s131
    %p133 = scmp.eq.s32.totalorder %s21, 0
    %p134 = por %p132, %p133
    %s136 = sadd.s32 %s135, 1
    %p139 = scmp.eq.s32.totalorder %s15, 3
    %p140 = scmp.ne.s32.totalorder %s135, %s137
    %p141 = scmp.eq.s32.totalorder %s15, 0
    %p142 = por %p140, %p141
    %p143 = scmp.ne.s32.totalorder %s135, %s137
    %p144 = scmp.eq.s32.totalorder %s20, 3
    %p145 = por %p143, %p144
    %p146 = scmp.ne.s32.totalorder %s137, %s138
    %p147 = scmp.eq.s32.totalorder %s20, 0
    %p148 = por %p146, %p147
    %p149 = scmp.ne.s32.totalorder %s137, %s138
    %p150 = scmp.eq.s32.totalorder %s21, 3
    %p151 = por %p149, %p150
    %p153 = scmp.ne.s32.totalorder %s138, %s152
    %p154 = scmp.eq.s32.totalorder %s21, 0
    %p155 = por %p153, %p154
    %s157 = sadd.s32 %s156, 1
    %p160 = scmp.eq.s32.totalorder %s15, 3
    %p161 = scmp.ne.s32.totalorder %s156, %s158
    %p162 = scmp.eq.s32.totalorder %s15, 0
    %p163 = por %p161, %p162
    %p164 = scmp.ne.s32.totalorder %s156, %s158
    %p165 = scmp.eq.s32.totalorder %s20, 3
    %p166 = por %p164, %p165
    %p167 = scmp.ne.s32.totalorder %s158, %s159
    %p168 = scmp.eq.s32.totalorder %s20, 0
    %p169 = por %p167, %p168
    %p170 = scmp.ne.s32.totalorder %s158, %s159
    %p171 = scmp.eq.s32.totalorder %s21, 3
    %p172 = por %p170, %p171
    %p174 = scmp.ne.s32.totalorder %s159, %s173
    %p175 = scmp.eq.s32.totalorder %s21, 0
    %p176 = por %p174, %p175
    %s178 = sadd.s32 %s177, 1
    %p181 = scmp.eq.s32.totalorder %s15, 3
    %p182 = scmp.ne.s32.totalorder %s177, %s179
    %p183 = scmp.eq.s32.totalorder %s15, 0
    %p184 = por %p182, %p183
    %p185 = scmp.ne.s32.totalorder %s177, %s179
    %p186 = scmp.eq.s32.totalorder %s20, 3
    %p187 = por %p185, %p186
    %p188 = scmp.ne.s32.totalorder %s179, %s180
    %p189 = scmp.eq.s32.totalorder %s20, 0
    %p190 = por %p188, %p189
    %p191 = scmp.ne.s32.totalorder %s179, %s180
    %p192 = scmp.eq.s32.totalorder %s21, 3
    %p193 = por %p191, %p192
    %p195 = scmp.ne.s32.totalorder %s180, %s194
    %p196 = scmp.eq.s32.totalorder %s21, 0
    %p197 = por %p195, %p196
    %s199 = sadd.s32 %s198, 1
    %p202 = scmp.eq.s32.totalorder %s15, 3
    %p203 = scmp.ne.s32.totalorder %s198, %s200
    %p204 = scmp.eq.s32.totalorder %s15, 0
    %p205 = por %p203, %p204
    %p206 = scmp.ne.s32.totalorder %s198, %s200
    %p207 = scmp.eq.s32.totalorder %s20, 3
    %p208 = por %p206, %p207
    %p209 = scmp.ne.s32.totalorder %s200, %s201
    %p210 = scmp.eq.s32.totalorder %s20, 0
    %p211 = por %p209, %p210
    %p212 = scmp.ne.s32.totalorder %s200, %s201
    %p213 = scmp.eq.s32.totalorder %s21, 3
    %p214 = por %p212, %p213
    %p216 = scmp.ne.s32.totalorder %s201, %s215
    %p217 = scmp.eq.s32.totalorder %s21, 0
    %p218 = por %p216, %p217
    %s219 = ssub.s32 %s22, %s34
    %s220 = ssub.s32 %s23, %s30
    %s221 = sor.u32 %s219, %s220
    %p222 = scmp.eq.s32.totalorder %s221, 0
    %s224 = sadd.s32 %s223, 1
    %s225 = scalar_select %p222, %s223, %s224
    %p228 = pneg %p222
    %p229 = scmp.eq.s32.totalorder %s15, 3
    %p230 = por %p228, %p229
    %p231 = scmp.ne.s32.totalorder %s223, %s226
    %p232 = scmp.eq.s32.totalorder %s15, 0
    %p233 = por %p231, %p232
    %p234 = scmp.ne.s32.totalorder %s223, %s226
    %p235 = scmp.eq.s32.totalorder %s20, 3
    %p236 = por %p234, %p235
    %p237 = scmp.ne.s32.totalorder %s226, %s227
    %p238 = scmp.eq.s32.totalorder %s20, 0
    %p239 = por %p237, %p238
    %p240 = scmp.ne.s32.totalorder %s226, %s227
    %p241 = scmp.eq.s32.totalorder %s21, 3
    %p242 = por %p240, %p241
    %p244 = scmp.ne.s32.totalorder %s227, %s243
    %p245 = scmp.eq.s32.totalorder %s21, 0
    %p246 = por %p244, %p245
    %s247 = ssub.s32 %s22, %s34
    %p248 = scmp.eq.s32.totalorder %s247, 0
    %s250 = sadd.s32 %s249, 1
    %s251 = scalar_select %p248, %s249, %s250
    %p254 = pneg %p248
    %p255 = scmp.eq.s32.totalorder %s15, 3
    %p256 = por %p254, %p255
    %p257 = scmp.ne.s32.totalorder %s249, %s252
    %p258 = scmp.eq.s32.totalorder %s15, 0
    %p259 = por %p257, %p258
    %p260 = scmp.ne.s32.totalorder %s249, %s252
    %p261 = scmp.eq.s32.totalorder %s20, 3
    %p262 = por %p260, %p261
    %p263 = scmp.ne.s32.totalorder %s252, %s253
    %p264 = scmp.eq.s32.totalorder %s20, 0
    %p265 = por %p263, %p264
    %p266 = scmp.ne.s32.totalorder %s252, %s253
    %p267 = scmp.eq.s32.totalorder %s21, 3
    %p268 = por %p266, %p267
    %p270 = scmp.ne.s32.totalorder %s253, %s269
    %p271 = scmp.eq.s32.totalorder %s21, 0
    %p272 = por %p270, %p271
    %p273 = scmp.le.s32.totalorder 1, %s15
    %p274 = scmp.lt.s32.totalorder %s15, 5
    %p275 = pnand %p273, %p274
    %p276 = pneg %p275
    // Predicated region
    $region9: #{residual_group_forward.5} parent=5 // pred_check
      _
    $region10: #{residual_group_forward.5} parent=5 // pred_check_branch
      %278 = sbr.rel (%p275) target = $region12
    $region11: #{residual_group_forward.5} parent=5 // pred_region
      %s279 = ssub.s32 %s15, 1
      // Predicated region
      $region13: #{residual_group_forward.5} parent=11 // pred_check
        %p280 = pneg %p148
      $region14: #{residual_group_forward.5} parent=11 // pred_check_branch
        %282 = sbr.rel (%p280) target = $region16
      $region15: #{residual_group_forward.5} parent=11 // pred_region
        _
      $region16: #{residual_group_forward.5} parent=11 // pred_fallthru
        _
      // Predicated region
      $region17: #{residual_group_forward.5} parent=11 // pred_check
        %p283 = pneg %p169
      $region18: #{residual_group_forward.5} parent=11 // pred_check_branch
        %285 = sbr.rel (%p283) target = $region20
      $region19: #{residual_group_forward.5} parent=11 // pred_region
        _
      $region20: #{residual_group_forward.5} parent=11 // pred_fallthru
        _
      // Predicated region
      $region21: #{residual_group_forward.5} parent=11 // pred_check
        %p286 = pneg %p190
      $region22: #{residual_group_forward.5} parent=11 // pred_check_branch
        %288 = sbr.rel (%p286) target = $region24
      $region23: #{residual_group_forward.5} parent=11 // pred_region
        _
      $region24: #{residual_group_forward.5} parent=11 // pred_fallthru
        _
      // Predicated region
      $region25: #{residual_group_forward.5} parent=11 // pred_check
        %p289 = pneg %p211
      $region26: #{residual_group_forward.5} parent=11 // pred_check_branch
        %291 = sbr.rel (%p289) target = $region28
      $region27: #{residual_group_forward.5} parent=11 // pred_region
        _
      $region28: #{residual_group_forward.5} parent=11 // pred_fallthru
        _
    $region12: #{residual_group_forward.5} parent=5 // pred_fallthru
      _
    %p292 = scmp.lt.s32.totalorder %s15, 4
    // Predicated region
    $region29: #{residual_group_forward.5} parent=5 // pred_check
      %p293 = pneg %p292
    $region30: #{residual_group_forward.5} parent=5 // pred_check_branch
      %295 = sbr.rel (%p293) target = $region32
    $region31: #{residual_group_forward.5} parent=5 // pred_region
      // Predicated region
      $region33: #{residual_group_forward.5} parent=31 // pred_check
        %p296 = pneg %p49
      $region34: #{residual_group_forward.5} parent=31 // pred_check_branch
        %298 = sbr.rel (%p296) target = $region36
      $region35: #{residual_group_forward.5} parent=31 // pred_region
        %s299 = smul.u32 8, %s23
        %p300 = scmp.lt.s32.totalorder %s22, 1
        %s301 = scalar_select %p300, %s22, 1
        %p302 = scmp.lt.s32.totalorder %s299, 15
        %s303 = scalar_select %p302, %s299, 15
        %s304 = smul.addr %s303, 2
        %s305 = smul.addr %s301, 32
        %s306 = sadd.s32 %s304, %s305
        %s307 = smul.addr %s306, 8
        %s308 = scalar_lea.vmem %s0, %s307
        %s309 = smul.u32 8, %s23
      $region36: #{residual_group_forward.5} parent=31 // pred_fallthru
        _
      // Predicated region
      $region37: #{residual_group_forward.5} parent=31 // pred_check
        %p310 = pneg %p85
      $region38: #{residual_group_forward.5} parent=31 // pred_check_branch
        %312 = sbr.rel (%p310) target = $region40
      $region39: #{residual_group_forward.5} parent=31 // pred_region
        %s313 = smul.u32 %s23, 4
        %s314 = ssub.s32 %s313, 1
        %p315 = scmp.gt.s32.totalorder %s314, 0
        %s316 = scalar_select %p315, %s314, 0
        %s317 = smul.u32 2, %s316
        %p318 = scmp.lt.s32.totalorder %s22, 1
        %s319 = scalar_select %p318, %s22, 1
        %p320 = scmp.lt.s32.totalorder %s317, 15
        %s321 = scalar_select %p320, %s317, 15
        %s322 = smul.addr %s321, 2
        %s323 = smul.addr %s319, 32
        %s324 = sadd.s32 %s322, %s323
        %s325 = smul.addr %s324, 8
        %s326 = scalar_lea.vmem %s1, %s325
        %s327 = smul.u32 %s23, 4
        %s328 = ssub.s32 %s327, 1
        %p329 = scmp.gt.s32.totalorder %s328, 0
        %s330 = scalar_select %p329, %s328, 0
        %s331 = smul.u32 2, %s330
      $region40: #{residual_group_forward.5} parent=31 // pred_fallthru
        _
      // Predicated region
      $region41: #{residual_group_forward.5} parent=31 // pred_check
        %p332 = pneg %p121
      $region42: #{residual_group_forward.5} parent=31 // pred_check_branch
        %334 = sbr.rel (%p332) target = $region44
      $region43: #{residual_group_forward.5} parent=31 // pred_region
        %s335 = sadd.s32 %s23, 1
        %s336 = smul.u32 %s335, 4
        %p337 = scmp.lt.s32.totalorder %s336, 7
        %s338 = scalar_select %p337, %s336, 7
        %s339 = smul.u32 2, %s338
        %p340 = scmp.lt.s32.totalorder %s22, 1
        %s341 = scalar_select %p340, %s22, 1
        %p342 = scmp.lt.s32.totalorder %s339, 15
        %s343 = scalar_select %p342, %s339, 15
        %s344 = smul.addr %s343, 2
        %s345 = smul.addr %s341, 32
        %s346 = sadd.s32 %s344, %s345
        %s347 = smul.addr %s346, 8
        %s348 = scalar_lea.vmem %s2, %s347
        %s349 = sadd.s32 %s23, 1
        %s350 = smul.u32 %s349, 4
        %p351 = scmp.lt.s32.totalorder %s350, 7
        %s352 = scalar_select %p351, %s350, 7
        %s353 = smul.u32 2, %s352
      $region44: #{residual_group_forward.5} parent=31 // pred_fallthru
        _
    $region32: #{residual_group_forward.5} parent=5 // pred_fallthru
      _
    %p354 = scmp.le.s32.totalorder 1, %s15
    %p355 = scmp.lt.s32.totalorder %s15, 5
    %p356 = pnand %p354, %p355
    %p357 = pneg %p356
    // Predicated region
    $region45: #{residual_group_forward.5} parent=5 // pred_check
      _
    $region46: #{residual_group_forward.5} parent=5 // pred_check_branch
      %359 = sbr.rel (%p356) target = $region48
    $region47: #{residual_group_forward.5} parent=5 // pred_region
      %s360 = ssub.s32 %s15, 1
      %s361 = smul.u32 8, %s25
      %p362 = scmp.lt.s32.totalorder %s24, 1
      %s363 = scalar_select %p362, %s24, 1
      %p364 = scmp.lt.s32.totalorder %s361, 15
      %s365 = scalar_select %p364, %s361, 15
      %s366 = smul.addr %s365, 2
      %s367 = smul.addr %s363, 32
      %s368 = sadd.s32 %s366, %s367
      %s369 = smul.addr %s368, 8
      %s370 = scalar_lea.vmem %s0, %s369
      %p371 = pneg %p55
      %p372 = pneg %p52
      %s373 = smul.u32 %s25, 4
      %s374 = ssub.s32 %s373, 1
      %p375 = scmp.gt.s32.totalorder %s374, 0
      %s376 = scalar_select %p375, %s374, 0
      %s377 = smul.u32 2, %s376
      %p378 = scmp.lt.s32.totalorder %s24, 1
      %s379 = scalar_select %p378, %s24, 1
      %p380 = scmp.lt.s32.totalorder %s377, 15
      %s381 = scalar_select %p380, %s377, 15
      %s382 = smul.addr %s381, 2
      %s383 = smul.addr %s379, 32
      %s384 = sadd.s32 %s382, %s383
      %s385 = smul.addr %s384, 8
      %s386 = scalar_lea.vmem %s1, %s385
      %p387 = pneg %p91
      %p388 = pneg %p88
      %s389 = sadd.s32 %s25, 1
      %s390 = smul.u32 %s389, 4
      %p391 = scmp.lt.s32.totalorder %s390, 7
      %s392 = scalar_select %p391, %s390, 7
      %s393 = smul.u32 2, %s392
      %p394 = scmp.lt.s32.totalorder %s24, 1
      %s395 = scalar_select %p394, %s24, 1
      %p396 = scmp.lt.s32.totalorder %s393, 15
      %s397 = scalar_select %p396, %s393, 15
      %s398 = smul.addr %s397, 2
      %s399 = smul.addr %s395, 32
      %s400 = sadd.s32 %s398, %s399
      %s401 = smul.addr %s400, 8
      %s402 = scalar_lea.vmem %s2, %s401
      %p403 = pneg %p127
      %p404 = pneg %p124
      %p405 = pneg %p148
      %p406 = pneg %p145
      %p407 = pneg %p169
      %p408 = pneg %p166
      %p409 = pneg %p190
      %p410 = pneg %p187
      %p411 = pneg %p211
      %p412 = pneg %p208
      %p413 = pneg %p239
      %p414 = pneg %p236
      %s415 = smul.u32 8, %s25
      %p416 = scmp.lt.s32.totalorder %s24, 1
      %s417 = scalar_select %p416, %s24, 1
      %p418 = scmp.lt.s32.totalorder %s415, 15
      %s419 = scalar_select %p418, %s415, 15
      %s420 = smul.addr %s419, 2
      %s421 = smul.addr %s417, 32
      %s422 = sadd.s32 %s420, %s421
      %s423 = smul.addr %s422, 8
      %s424 = scalar_lea.vmem %s7, %s423
      %p425 = pneg %p265
      %p426 = pneg %p262
      %p427 = scmp.lt.s32.totalorder %s24, 1
      %s428 = scalar_select %p427, %s24, 1
      %s429 = scalar_lea.vmem %s8, %s428
      %s430 = smul.u32 8, %s25
      %p431 = scmp.lt.s32.totalorder %s24, 1
      %s432 = scalar_select %p431, %s24, 1
      %p433 = scmp.lt.s32.totalorder %s430, 15
      %s434 = scalar_select %p433, %s430, 15
      %s435 = smul.addr %s434, 2
      %s436 = smul.addr %s432, 32
      %s437 = sadd.s32 %s435, %s436
      %s438 = smul.addr %s437, 8
      %s439 = scalar_lea.vmem %s0, %s438
      %s440 = smul.u32 8, %s25
      %s441 = smul.u32 %s25, 4
      %s442 = ssub.s32 %s441, 1
      %p443 = scmp.gt.s32.totalorder %s442, 0
      %s444 = scalar_select %p443, %s442, 0
      %s445 = smul.u32 2, %s444
      %p446 = scmp.lt.s32.totalorder %s24, 1
      %s447 = scalar_select %p446, %s24, 1
      %p448 = scmp.lt.s32.totalorder %s445, 15
      %s449 = scalar_select %p448, %s445, 15
      %s450 = smul.addr %s449, 2
      %s451 = smul.addr %s447, 32
      %s452 = sadd.s32 %s450, %s451
      %s453 = smul.addr %s452, 8
      %s454 = scalar_lea.vmem %s1, %s453
      %s455 = smul.u32 %s25, 4
      %s456 = ssub.s32 %s455, 1
      %p457 = scmp.gt.s32.totalorder %s456, 0
      %s458 = scalar_select %p457, %s456, 0
      %s459 = smul.u32 2, %s458
      %s460 = sadd.s32 %s25, 1
      %s461 = smul.u32 %s460, 4
      %p462 = scmp.lt.s32.totalorder %s461, 7
      %s463 = scalar_select %p462, %s461, 7
      %s464 = smul.u32 2, %s463
      %p465 = scmp.lt.s32.totalorder %s24, 1
      %s466 = scalar_select %p465, %s24, 1
      %p467 = scmp.lt.s32.totalorder %s464, 15
      %s468 = scalar_select %p467, %s464, 15
      %s469 = smul.addr %s468, 2
      %s470 = smul.addr %s466, 32
      %s471 = sadd.s32 %s469, %s470
      %s472 = smul.addr %s471, 8
      %s473 = scalar_lea.vmem %s2, %s472
      %s474 = sadd.s32 %s25, 1
      %s475 = smul.u32 %s474, 4
      %p476 = scmp.lt.s32.totalorder %s475, 7
      %s477 = scalar_select %p476, %s475, 7
      %s478 = smul.u32 2, %s477
      %s479 = smul.u32 8, %s25
      %p480 = scmp.lt.s32.totalorder %s24, 1
      %s481 = scalar_select %p480, %s24, 1
      %p482 = scmp.lt.s32.totalorder %s479, 15
      %s483 = scalar_select %p482, %s479, 15
      %s484 = smul.addr %s483, 2
      %s485 = smul.addr %s481, 32
      %s486 = sadd.s32 %s484, %s485
      %s487 = smul.addr %s486, 8
      %s488 = scalar_lea.vmem %s7, %s487
      %s489 = smul.u32 8, %s25
      %p490 = scmp.lt.s32.totalorder %s24, 1
      %s491 = scalar_select %p490, %s24, 1
      %s492 = scalar_lea.vmem %s8, %s491
      %vm493 = vcmask 24576
      %494 = vst.msk [vmem:[#allocation2] sm:$0x1] %vm493, 0.0
      %495 = vst.msk [vmem:[#allocation2 + $0x18] sm:$0x1] %vm493, 0.0
      %496 = vst.msk [vmem:[#allocation2 + $0x30] sm:$0x1] %vm493, 0.0
      %497 = vst.msk [vmem:[#allocation2 + $0x48] sm:$0x1] %vm493, 0.0
      %498 = vst.msk [vmem:[#allocation2 + $0x60] sm:$0x1] %vm493, 0.0
      %499 = vst.msk [vmem:[#allocation2 + $0x78] sm:$0x1] %vm493, 0.0
      %500 = vst.msk [vmem:[#allocation2 + $0x90] sm:$0x1] %vm493, 0.0
      %501 = vst.msk [vmem:[#allocation2 + $0xa8] sm:$0x1] %vm493, 0.0
      %502 = vst.msk [vmem:[#allocation2 + $0xc0] sm:$0x1] %vm493, 0.0
      %503 = vst.msk [vmem:[#allocation2 + $0xd8] sm:$0x1] %vm493, 0.0
      %504 = vst.msk [vmem:[#allocation2 + $0xf0] sm:$0x1] %vm493, 0.0
      %505 = vst.msk [vmem:[#allocation2 + $0x108] sm:$0x1] %vm493, 0.0
      %506 = vst.msk [vmem:[#allocation2 + $0x11] sm:$0x1] %vm493, 0.0
      %507 = vst.msk [vmem:[#allocation2 + $0x29] sm:$0x1] %vm493, 0.0
      %508 = vst.msk [vmem:[#allocation2 + $0x41] sm:$0x1] %vm493, 0.0
      %509 = vst.msk [vmem:[#allocation2 + $0x59] sm:$0x1] %vm493, 0.0
      %510 = vst.msk [vmem:[#allocation2 + $0x71] sm:$0x1] %vm493, 0.0
      %511 = vst.msk [vmem:[#allocation2 + $0x89] sm:$0x1] %vm493, 0.0
      %512 = vst.msk [vmem:[#allocation2 + $0xa1] sm:$0x1] %vm493, 0.0
      %513 = vst.msk [vmem:[#allocation2 + $0xb9] sm:$0x1] %vm493, 0.0
      %514 = vst.msk [vmem:[#allocation2 + $0xd1] sm:$0x1] %vm493, 0.0
      %515 = vst.msk [vmem:[#allocation2 + $0xe9] sm:$0x1] %vm493, 0.0
      %516 = vst.msk [vmem:[#allocation2 + $0x101] sm:$0x1] %vm493, 0.0
      %517 = vst.msk [vmem:[#allocation2 + $0x119] sm:$0x1] %vm493, 0.0
      %v518 = vld [vmem:[%s454] sm:$0xff]
      %v519 = vld [vmem:[%s454 + $0x8] sm:$0xff]
      %v520 = vld [vmem:[%s454 + $0x10] sm:$0xff]
      %v521 = vld [vmem:[%s454 + $0x18] sm:$0xff]
      %p522 = scmp.gt.s32.totalorder %s25, 0
      %s523 = scalar_select %p522, 1, 0
      %s524 = scvt.s32.f32 %s523
      %v525 = vstv %s524
      %v526 = vmul.f32 %v518, %v525
      %v527 = vmul.f32 %v519, %v525
      %v528 = vmul.f32 %v520, %v525
      %v529 = vmul.f32 %v521, %v525
      %v530 = vld [vmem:[%s473] sm:$0xff]
      %v531 = vld [vmem:[%s473 + $0x8] sm:$0xff]
      %v532 = vld [vmem:[%s473 + $0x10] sm:$0xff]
      %v533 = vld [vmem:[%s473 + $0x18] sm:$0xff]
      %p534 = scmp.lt.s32.totalorder %s25, 1
      %s535 = scalar_select %p534, 1, 0
      %s536 = scvt.s32.f32 %s535
      %v537 = vstv %s536
      %v538 = vmul.f32 %v530, %v537
      %v539 = vmul.f32 %v531, %v537
      %v540 = vmul.f32 %v532, %v537
      %v541 = vmul.f32 %v533, %v537
      %vm542 = vcmask 31744
      %543 = vst.msk [vmem:[#allocation2 + $0x1] sm:$0xff] %vm542, %v526
      %544 = vst.msk [vmem:[#allocation2 + $0x9] sm:$0xff] %vm542, %v527
      %545 = vst.msk [vmem:[#allocation2 + $0x19] sm:$0xff] %vm542, %v528
      %546 = vst.msk [vmem:[#allocation2 + $0x21] sm:$0xff] %vm542, %v529
      %v547 = vld [vmem:[%s439] sm:$0xff]
      %v548 = vld [vmem:[%s439 + $0x8] sm:$0xff]
      %v549 = vld [vmem:[%s439 + $0x10] sm:$0xff]
      %v550 = vld [vmem:[%s439 + $0x18] sm:$0xff]
      %v551 = vld [vmem:[%s439 + $0x20] sm:$0xff]
      %v552 = vld [vmem:[%s439 + $0x28] sm:$0xff]
      %v553 = vld [vmem:[%s439 + $0x30] sm:$0xff]
      %v554 = vld [vmem:[%s439 + $0x38] sm:$0xff]
      %v555 = vld [vmem:[%s439 + $0x40] sm:$0xff]
      %v556 = vld [vmem:[%s439 + $0x48] sm:$0xff]
      %v557 = vld [vmem:[%s439 + $0x50] sm:$0xff]
      %v558 = vld [vmem:[%s439 + $0x58] sm:$0xff]
      %v559 = vld [vmem:[%s439 + $0x60] sm:$0xff]
      %v560 = vld [vmem:[%s439 + $0x68] sm:$0xff]
      %v561 = vld [vmem:[%s439 + $0x70] sm:$0xff]
      %v562 = vld [vmem:[%s439 + $0x78] sm:$0xff]
      %s563 = scalar_lea.vmem [#allocation2], 48
      %564 = vst.msk [vmem:[%s563 + $0x1] sm:$0xff] %vm542, %v547
      %565 = vst.msk [vmem:[%s563 + $0x9] sm:$0xff] %vm542, %v548
      %566 = vst.msk [vmem:[%s563 + $0x19] sm:$0xff] %vm542, %v549
      %567 = vst.msk [vmem:[%s563 + $0x21] sm:$0xff] %vm542, %v550
      %568 = vst.msk [vmem:[%s563 + $0x31] sm:$0xff] %vm542, %v551
      %569 = vst.msk [vmem:[%s563 + $0x39] sm:$0xff] %vm542, %v552
      %570 = vst.msk [vmem:[%s563 + $0x49] sm:$0xff] %vm542, %v553
      %571 = vst.msk [vmem:[%s563 + $0x51] sm:$0xff] %vm542, %v554
      %572 = vst.msk [vmem:[%s563 + $0x61] sm:$0xff] %vm542, %v555
      %573 = vst.msk [vmem:[%s563 + $0x69] sm:$0xff] %vm542, %v556
      %574 = vst.msk [vmem:[%s563 + $0x79] sm:$0xff] %vm542, %v557
      %575 = vst.msk [vmem:[%s563 + $0x81] sm:$0xff] %vm542, %v558
      %576 = vst.msk [vmem:[%s563 + $0x91] sm:$0xff] %vm542, %v559
      %577 = vst.msk [vmem:[%s563 + $0x99] sm:$0xff] %vm542, %v560
      %578 = vst.msk [vmem:[%s563 + $0xa9] sm:$0xff] %vm542, %v561
      %579 = vst.msk [vmem:[%s563 + $0xb1] sm:$0xff] %vm542, %v562
      %s580 = scalar_lea.vmem [#allocation2], 240
      %581 = vst.msk [vmem:[%s580 + $0x1] sm:$0xff] %vm542, %v538
      %582 = vst.msk [vmem:[%s580 + $0x9] sm:$0xff] %vm542, %v539
      %583 = vst.msk [vmem:[%s580 + $0x19] sm:$0xff] %vm542, %v540
      %584 = vst.msk [vmem:[%s580 + $0x21] sm:$0xff] %vm542, %v541
      %v585 = vld [vmem:[#allocation2] sm:$0xff]
      %v586 = vld [vmem:[#allocation2 + $0x8] sm:$0xff]
      %v587 = vld [vmem:[#allocation2 + $0x10] sm:$0x3]
      %v588 = vld [vmem:[#allocation2 + $0x18] sm:$0xff]
      %v589 = vld [vmem:[#allocation2 + $0x20] sm:$0xff]
      %v590 = vld [vmem:[#allocation2 + $0x28] sm:$0x3]
      %v591 = vld [vmem:[#allocation2 + $0x30] sm:$0xff]
      %v592 = vld [vmem:[#allocation2 + $0x38] sm:$0xff]
      %v593 = vld [vmem:[#allocation2 + $0x40] sm:$0x3]
      %v594 = vld [vmem:[#allocation2 + $0x48] sm:$0xff]
      %v595 = vld [vmem:[#allocation2 + $0x50] sm:$0xff]
      %v596 = vld [vmem:[#allocation2 + $0x58] sm:$0x3]
      %v597 = vld [vmem:[#allocation2 + $0x60] sm:$0xff]
      %v598 = vld [vmem:[#allocation2 + $0x68] sm:$0xff]
      %v599 = vld [vmem:[#allocation2 + $0x70] sm:$0x3]
      %v600 = vld [vmem:[#allocation2 + $0x78] sm:$0xff]
      %v601 = vld [vmem:[#allocation2 + $0x80] sm:$0xff]
      %v602 = vld [vmem:[#allocation2 + $0x88] sm:$0x3]
      %v603 = vld [vmem:[#allocation2 + $0x90] sm:$0xff]
      %v604 = vld [vmem:[#allocation2 + $0x98] sm:$0xff]
      %v605 = vld [vmem:[#allocation2 + $0xa0] sm:$0x3]
      %v606 = vld [vmem:[#allocation2 + $0xa8] sm:$0xff]
      %v607 = vld [vmem:[#allocation2 + $0xb0] sm:$0xff]
      %v608 = vld [vmem:[#allocation2 + $0xb8] sm:$0x3]
      %v609 = vld [vmem:[#allocation2 + $0xc0] sm:$0xff]
      %v610 = vld [vmem:[#allocation2 + $0xc8] sm:$0xff]
      %v611 = vld [vmem:[#allocation2 + $0xd0] sm:$0x3]
      %v612 = vld [vmem:[#allocation2 + $0xd8] sm:$0xff]
      %v613 = vld [vmem:[#allocation2 + $0xe0] sm:$0xff]
      %v614 = vld [vmem:[#allocation2 + $0xe8] sm:$0x3]
      %v615 = vld [vmem:[#allocation2 + $0xf0] sm:$0xff]
      %v616 = vld [vmem:[#allocation2 + $0xf8] sm:$0xff]
      %v617 = vld [vmem:[#allocation2 + $0x100] sm:$0x3]
      %v618 = vld [vmem:[#allocation2 + $0x108] sm:$0xff]
      %v619 = vld [vmem:[#allocation2 + $0x110] sm:$0xff]
      %v620 = vld [vmem:[#allocation2 + $0x118] sm:$0x3]
      %v621 = vld [vmem:[%s3] sm:$0xf]
      %vm652 = vcmask 1046528
      %v653 = vrot.slane %v585, 1
      %v654 = vrot.slane %v586, 1
      %v655 = vsel %vm652, %v653, %v654
      %v656 = vrot.slane %v587, 1
      %v657 = vsel %vm652, %v654, %v656
      %v658 = vrot.slane %v588, 1
      %v659 = vrot.slane %v589, 1
      %v660 = vsel %vm652, %v658, %v659
      %v661 = vrot.slane %v590, 1
      %v662 = vsel %vm652, %v659, %v661
      %v663 = vrot.slane %v591, 1
      %v664 = vrot.slane %v592, 1
      %v665 = vsel %vm652, %v663, %v664
      %v666 = vrot.slane %v593, 1
      %v667 = vsel %vm652, %v664, %v666
      %v668 = vrot.slane %v594, 1
      %v669 = vrot.slane %v595, 1
      %v670 = vsel %vm652, %v668, %v669
      %v671 = vrot.slane %v596, 1
      %v672 = vsel %vm652, %v669, %v671
      %v673 = vrot.slane %v597, 1
      %v674 = vrot.slane %v598, 1
      %v675 = vsel %vm652, %v673, %v674
      %v676 = vrot.slane %v599, 1
      %v677 = vsel %vm652, %v674, %v676
      %v678 = vrot.slane %v600, 1
      %v679 = vrot.slane %v601, 1
      %v680 = vsel %vm652, %v678, %v679
      %v681 = vrot.slane %v602, 1
      %v682 = vsel %vm652, %v679, %v681
      %v683 = vrot.slane %v603, 1
      %v684 = vrot.slane %v604, 1
      %v685 = vsel %vm652, %v683, %v684
      %v686 = vrot.slane %v605, 1
      %v687 = vsel %vm652, %v684, %v686
      %v688 = vrot.slane %v606, 1
      %v689 = vrot.slane %v607, 1
      %v690 = vsel %vm652, %v688, %v689
      %v691 = vrot.slane %v608, 1
      %v692 = vsel %vm652, %v689, %v691
      %v693 = vrot.slane %v609, 1
      %v694 = vrot.slane %v610, 1
      %v695 = vsel %vm652, %v693, %v694
      %v696 = vrot.slane %v611, 1
      %v697 = vsel %vm652, %v694, %v696
      %v698 = vrot.slane %v612, 1
      %v699 = vrot.slane %v613, 1
      %v700 = vsel %vm652, %v698, %v699
      %v701 = vrot.slane %v614, 1
      %v702 = vsel %vm652, %v699, %v701
      %s703 = scalar_lea.vmem %s3, 4
      %v704 = vld [vmem:[%s703] sm:$0xf]
      %v705 = vsel %vm542, %v655, 0
      %v707 = vsel %vm542, %v657, 0
      %v709 = vsel %vm542, %v660, 0
      %v711 = vsel %vm542, %v662, 0
      %v713 = vsel %vm542, %v665, 0
      %v715 = vsel %vm542, %v667, 0
      %v717 = vsel %vm542, %v670, 0
      %v719 = vsel %vm542, %v672, 0
      %v721 = vsel %vm542, %v675, 0
      %v723 = vsel %vm542, %v677, 0
      %v725 = vsel %vm542, %v680, 0
      %v727 = vsel %vm542, %v682, 0
      %v729 = vsel %vm542, %v685, 0
      %v731 = vsel %vm542, %v687, 0
      %v733 = vsel %vm542, %v690, 0
      %v735 = vsel %vm542, %v692, 0
      %v737 = vsel %vm542, %v695, 0
      %v739 = vsel %vm542, %v697, 0
      %v741 = vsel %vm542, %v700, 0
      %v743 = vsel %vm542, %v702, 0
      %vm745 = vcmask 1043456
      %v747 = vsel %vm745, %v704, 0
      %749 = vmatprep.subr.mxu0 0.0
      %750 = vmatpush1.msra.mxu0 %v747
      %751 = vmatprep.subr.mxu0 0.0
      %752 = vmatpush1.msra.mxu0 0.0
      %753 = vmatprep.subr.mxu0 0.0
      %754 = vmatpush1.msra.mxu0 0.0
      %755 = vmatprep.subr.mxu0 0.0
      %756 = vmatpush1.msra.mxu0 0.0
      %757 = vmatprep.subr.mxu0 0.0
      %758 = vmatpush1.msra.mxu0 0.0
      %759 = vmatprep.subr.mxu0 0.0
      %760 = vmatpush1.msra.mxu0 0.0
      %761 = vmatprep.subr.mxu0 0.0
      %762 = vmatpush1.msra.mxu0 0.0
      %763 = vmatprep.subr.mxu0 0.0
      %764 = vmatpush1.msra.mxu0 0.0
      %765 = vmatprep.subr.mxu0 0.0
      %766 = vmatpush1.msra.mxu0 0.0
      %767 = vmatprep.subr.mxu0 0.0
      %768 = vmatpush1.msra.mxu0 0.0
      %769 = vmatprep.subr.mxu0 0.0
      %770 = vmatpush1.msra.mxu0 0.0
      %771 = vmatprep.subr.mxu0 0.0
      %772 = vmatpush1.msra.mxu0 0.0
      %773 = vmatprep.subr.mxu0 0.0
      %774 = vmatpush1.msra.mxu0 0.0
      %775 = vmatprep.subr.mxu0 0.0
      %776 = vmatpush1.msra.mxu0 0.0
      %777 = vmatprep.subr.mxu0 0.0
      %778 = vmatpush1.msra.mxu0 0.0
      %779 = vmatprep.subr.mxu0 0.0
      %780 = vmatpush1.msra.mxu0 0.0
      %781 = vmatprep.subr.mxu0 0.0
      %782 = vmatpush1.msra.mxu0 0.0
      %783 = vmatprep.subr.mxu0 0.0
      %784 = vmatpush1.msra.mxu0 0.0
      %785 = vmatprep.subr.mxu0 0.0
      %786 = vmatpush1.msra.mxu0 0.0
      %787 = vmatprep.subr.mxu0 0.0
      %788 = vmatpush1.msra.mxu0 0.0
      %789 = vmatprep.subr.mxu0 0.0
      %790 = vmatpush1.msra.mxu0 0.0
      %791 = vmatprep.subr.mxu0 0.0
      %792 = vmatpush1.msra.mxu0 0.0
      %793 = vmatprep.subr.mxu0 0.0
      %794 = vmatpush1.msra.mxu0 0.0
      %795 = vmatprep.subr.mxu0 0.0
      %796 = vmatpush1.msra.mxu0 0.0
      %797 = vmatprep.subr.mxu0 0.0
      %798 = vmatpush1.msra.mxu0 0.0
      %799 = vmatprep.subr.mxu0 0.0
      %800 = vmatpush1.msra.mxu0 0.0
      %801 = vmatprep.subr.mxu0 0.0
      %802 = vmatpush1.msra.mxu0 0.0
      %803 = vmatprep.subr.mxu0 0.0
      %804 = vmatpush1.msra.mxu0 0.0
      %805 = vmatprep.subr.mxu0 0.0
      %806 = vmatpush1.msra.mxu0 0.0
      %807 = vmatprep.subr.mxu0 0.0
      %808 = vmatpush1.msra.mxu0 0.0
      %809 = vmatprep.subr.mxu0 0.0
      %810 = vmatpush1.msra.mxu0 0.0
      %811 = vmatprep.subr.mxu0 0.0
      %812 = vmatpush1.msra.mxu0 0.0
      %813 = vmatprep.mubr.f32.mxu0 0.0
      %814 = vmatmul.mubr.f32.gmra.mrb[0].mxu0 %v705
      %v815 = vpop.f32.mrb[0].mxu0
      %v816 = vadd.f32 0.0, %v815
      %v817 = vpop.f32.mrb[0].mxu0
      %818 = vmatprep.mubr.f32.mxu0 0.0
      %819 = vmatmul.mubr.f32.gmra.mrb[0].mxu0 %v707
      %v820 = vpop.f32.mrb[0].mxu0
      %v821 = vadd.f32 0.0, %v820
      %v822 = vpop.f32.mrb[0].mxu0
      %823 = vmatprep.mubr.f32.mxu0 0.0
      %824 = vmatmul.mubr.f32.gmra.mrb[0].mxu0 %v709
      %v825 = vpop.f32.mrb[0].mxu0
      %v826 = vadd.f32 0.0, %v825
      %v827 = vpop.f32.mrb[0].mxu0
      %828 = vmatprep.mubr.f32.mxu0 0.0
      %829 = vmatmul.mubr.f32.gmra.mrb[0].mxu0 %v711
      %v830 = vpop.f32.mrb[0].mxu0
      %v831 = vadd.f32 0.0, %v830
      %v832 = vpop.f32.mrb[0].mxu0
      %833 = vmatprep.mubr.f32.mxu0 0.0
      %834 = vmatmul.mubr.f32.gmra.mrb[0].mxu0 %v713
      %v835 = vpop.f32.mrb[0].mxu0
      %v836 = vadd.f32 0.0, %v835
      %v837 = vpop.f32.mrb[0].mxu0
      %838 = vmatprep.mubr.f32.mxu0 0.0
      %839 = vmatmul.mubr.f32.gmra.mrb[0].mxu0 %v715
      %v840 = vpop.f32.mrb[0].mxu0
      %v841 = vadd.f32 0.0, %v840
      %v842 = vpop.f32.mrb[0].mxu0
      %843 = vmatprep.mubr.f32.mxu0 0.0
      %844 = vmatmul.mubr.f32.gmra.mrb[0].mxu0 %v717
      %v845 = vpop.f32.mrb[0].mxu0
      %v846 = vadd.f32 0.0, %v845
      %v847 = vpop.f32.mrb[0].mxu0
      %848 = vmatprep.mubr.f32.mxu0 0.0
      %849 = vmatmul.mubr.f32.gmra.mrb[0].mxu0 %v719
      %v850 = vpop.f32.mrb[0].mxu0
      %v851 = vadd.f32 0.0, %v850
      %v852 = vpop.f32.mrb[0].mxu0
      %853 = vmatprep.mubr.f32.mxu0 0.0
      %854 = vmatmul.mubr.f32.gmra.mrb[0].mxu0 %v721
      %v855 = vpop.f32.mrb[0].mxu0
      %v856 = vadd.f32 0.0, %v855
      %v857 = vpop.f32.mrb[0].mxu0
      %858 = vmatprep.mubr.f32.mxu0 0.0
      %859 = vmatmul.mubr.f32.gmra.mrb[0].mxu0 %v723
      %v860 = vpop.f32.mrb[0].mxu0
      %v861 = vadd.f32 0.0, %v860
      %v862 = vpop.f32.mrb[0].mxu0
      %863 = vmatprep.mubr.f32.mxu0 0.0
      %864 = vmatmul.mubr.f32.gmra.mrb[0].mxu0 %v725
      %v865 = vpop.f32.mrb[0].mxu0
      %v866 = vadd.f32 0.0, %v865
      %v867 = vpop.f32.mrb[0].mxu0
      %868 = vmatprep.mubr.f32.mxu0 0.0
      %869 = vmatmul.mubr.f32.gmra.mrb[0].mxu0 %v727
      %v870 = vpop.f32.mrb[0].mxu0
      %v871 = vadd.f32 0.0, %v870
      %v872 = vpop.f32.mrb[0].mxu0
      %873 = vmatprep.mubr.f32.mxu0 0.0
      %874 = vmatmul.mubr.f32.gmra.mrb[0].mxu0 %v729
      %v875 = vpop.f32.mrb[0].mxu0
      %v876 = vadd.f32 0.0, %v875
      %v877 = vpop.f32.mrb[0].mxu0
      %878 = vmatprep.mubr.f32.mxu0 0.0
      %879 = vmatmul.mubr.f32.gmra.mrb[0].mxu0 %v731
      %v880 = vpop.f32.mrb[0].mxu0
      %v881 = vadd.f32 0.0, %v880
      %v882 = vpop.f32.mrb[0].mxu0
      %883 = vmatprep.mubr.f32.mxu0 0.0
      %884 = vmatmul.mubr.f32.gmra.mrb[0].mxu0 %v733
      %v885 = vpop.f32.mrb[0].mxu0
      %v886 = vadd.f32 0.0, %v885
      %v887 = vpop.f32.mrb[0].mxu0
      %888 = vmatprep.mubr.f32.mxu0 0.0
      %889 = vmatmul.mubr.f32.gmra.mrb[0].mxu0 %v735
      %v890 = vpop.f32.mrb[0].mxu0
      %v891 = vadd.f32 0.0, %v890
      %v892 = vpop.f32.mrb[0].mxu0
      %893 = vmatprep.mubr.f32.mxu0 0.0
      %894 = vmatmul.mubr.f32.gmra.mrb[0].mxu0 %v737
      %v895 = vpop.f32.mrb[0].mxu0
      %v896 = vadd.f32 0.0, %v895
      %v897 = vpop.f32.mrb[0].mxu0
      %898 = vmatprep.mubr.f32.mxu0 0.0
      %899 = vmatmul.mubr.f32.gmra.mrb[0].mxu0 %v739
      %v900 = vpop.f32.mrb[0].mxu0
      %v901 = vadd.f32 0.0, %v900
      %v902 = vpop.f32.mrb[0].mxu0
      %903 = vmatprep.mubr.f32.mxu0 0.0
      %904 = vmatmul.mubr.f32.gmra.mrb[0].mxu0 %v741
      %v905 = vpop.f32.mrb[0].mxu0
      %v906 = vadd.f32 0.0, %v905
      %v907 = vpop.f32.mrb[0].mxu0
      %908 = vmatprep.mubr.f32.mxu0 0.0
      %909 = vmatmul.mubr.f32.gmra.mrb[0].mxu0 %v743
      %v910 = vpop.f32.mrb[0].mxu0
      %v911 = vadd.f32 0.0, %v910
      %v912 = vpop.f32.mrb[0].mxu0
      %913 = vdwg.mxu0
      %v914 = vsel %vm542, %v585, 0
      %v916 = vsel %vm542, %v586, 0
      %v918 = vsel %vm542, %v588, 0
      %v920 = vsel %vm542, %v589, 0
      %v922 = vsel %vm542, %v591, 0
      %v924 = vsel %vm542, %v592, 0
      %v926 = vsel %vm542, %v594, 0
      %v928 = vsel %vm542, %v595, 0
      %v930 = vsel %vm542, %v597, 0
      %v932 = vsel %vm542, %v598, 0
      %v934 = vsel %vm542, %v600, 0
      %v936 = vsel %vm542, %v601, 0
      %v938 = vsel %vm542, %v603, 0
      %v940 = vsel %vm542, %v604, 0
      %v942 = vsel %vm542, %v606, 0
      %v944 = vsel %vm542, %v607, 0
      %v946 = vsel %vm542, %v609, 0
      %v948 = vsel %vm542, %v610, 0
      %v950 = vsel %vm542, %v612, 0
      %v952 = vsel %vm542, %v613, 0
      %v955 = vsel %vm745, %v621, 0
      %957 = vmatprep.subr.mxu0 0.0
      %958 = vmatpush1.msra.mxu0 %v955
      %959 = vmatprep.subr.mxu0 0.0
      %960 = vmatpush1.msra.mxu0 0.0
      %961 = vmatprep.subr.mxu0 0.0
      %962 = vmatpush1.msra.mxu0 0.0
      %963 = vmatprep.subr.mxu0 0.0
      %964 = vmatpush1.msra.mxu0 0.0
      %965 = vmatprep.subr.mxu0 0.0
      %966 = vmatpush1.msra.mxu0 0.0
      %967 = vmatprep.subr.mxu0 0.0
      %968 = vmatpush1.msra.mxu0 0.0
      %969 = vmatprep.subr.mxu0 0.0
      %970 = vmatpush1.msra.mxu0 0.0
      %971 = vmatprep.subr.mxu0 0.0
      %972 = vmatpush1.msra.mxu0 0.0
      %973 = vmatprep.subr.mxu0 0.0
      %974 = vmatpush1.msra.mxu0 0.0
      %975 = vmatprep.subr.mxu0 0.0
      %976 = vmatpush1.msra.mxu0 0.0
      %977 = vmatprep.subr.mxu0 0.0
      %978 = vmatpush1.msra.mxu0 0.0
      %979 = vmatprep.subr.mxu0 0.0
      %980 = vmatpush1.msra.mxu0 0.0
      %981 = vmatprep.subr.mxu0 0.0
      %982 = vmatpush1.msra.mxu0 0.0
      %983 = vmatprep.subr.mxu0 0.0
      %984 = vmatpush1.msra.mxu0 0.0
      %985 = vmatprep.subr.mxu0 0.0
      %986 = vmatpush1.msra.mxu0 0.0
      %987 = vmatprep.subr.mxu0 0.0
      %988 = vmatpush1.msra.mxu0 0.0
      %989 = vmatprep.subr.mxu0 0.0
      %990 = vmatpush1.msra.mxu0 0.0
      %991 = vmatprep.subr.mxu0 0.0
      %992 = vmatpush1.msra.mxu0 0.0
      %993 = vmatprep.subr.mxu0 0.0
      %994 = vmatpush1.msra.mxu0 0.0
      %995 = vmatprep.subr.mxu0 0.0
      %996 = vmatpush1.msra.mxu0 0.0
      %997 = vmatprep.subr.mxu0 0.0
      %998 = vmatpush1.msra.mxu0 0.0
      %999 = vmatprep.subr.mxu0 0.0
      %1000 = vmatpush1.msra.mxu0 0.0
      %1001 = vmatprep.subr.mxu0 0.0
      %1002 = vmatpush1.msra.mxu0 0.0
      %1003 = vmatprep.subr.mxu0 0.0
      %1004 = vmatpush1.msra.mxu0 0.0
      %1005 = vmatprep.subr.mxu0 0.0
      %1006 = vmatpush1.msra.mxu0 0.0
      %1007 = vmatprep.subr.mxu0 0.0
      %1008 = vmatpush1.msra.mxu0 0.0
      %1009 = vmatprep.subr.mxu0 0.0
      %1010 = vmatpush1.msra.mxu0 0.0
      %1011 = vmatprep.subr.mxu0 0.0
      %1012 = vmatpush1.msra.mxu0 0.0
      %1013 = vmatprep.subr.mxu0 0.0
      %1014 = vmatpush1.msra.mxu0 0.0
      %1015 = vmatprep.subr.mxu0 0.0
      %1016 = vmatpush1.msra.mxu0 0.0
      %1017 = vmatprep.subr.mxu0 0.0
      %1018 = vmatpush1.msra.mxu0 0.0
      %1019 = vmatprep.subr.mxu0 0.0
      %1020 = vmatpush1.msra.mxu0 0.0
      %1021 = vmatprep.mubr.f32.mxu0 0.0
      %1022 = vmatmul.mubr.f32.gmra.mrb[0].mxu0 %v914
      %v1023 = vpop.f32.mrb[0].mxu0
      %v1024 = vadd.f32 %v816, %v1023
      %v1025 = vpop.f32.mrb[0].mxu0
      %1026 = vmatprep.mubr.f32.mxu0 0.0
      %1027 = vmatmul.mubr.f32.gmra.mrb[0].mxu0 %v916
      %v1028 = vpop.f32.mrb[0].mxu0
      %v1029 = vadd.f32 %v821, %v1028
      %v1030 = vpop.f32.mrb[0].mxu0
      %1031 = vmatprep.mubr.f32.mxu0 0.0
      %1032 = vmatmul.mubr.f32.gmra.mrb[0].mxu0 %v918
      %v1033 = vpop.f32.mrb[0].mxu0
      %v1034 = vadd.f32 %v826, %v1033
      %v1035 = vpop.f32.mrb[0].mxu0
      %1036 = vmatprep.mubr.f32.mxu0 0.0
      %1037 = vmatmul.mubr.f32.gmra.mrb[0].mxu0 %v920
      %v1038 = vpop.f32.mrb[0].mxu0
      %v1039 = vadd.f32 %v831, %v1038
      %v1040 = vpop.f32.mrb[0].mxu0
      %1041 = vmatprep.mubr.f32.mxu0 0.0
      %1042 = vmatmul.mubr.f32.gmra.mrb[0].mxu0 %v922
      %v1043 = vpop.f32.mrb[0].mxu0
      %v1044 = vadd.f32 %v836, %v1043
      %v1045 = vpop.f32.mrb[0].mxu0
      %1046 = vmatprep.mubr.f32.mxu0 0.0
      %1047 = vmatmul.mubr.f32.gmra.mrb[0].mxu0 %v924
      %v1048 = vpop.f32.mrb[0].mxu0
      %v1049 = vadd.f32 %v841, %v1048
      %v1050 = vpop.f32.mrb[0].mxu0
      %1051 = vmatprep.mubr.f32.mxu0 0.0
      %1052 = vmatmul.mubr.f32.gmra.mrb[0].mxu0 %v926
      %v1053 = vpop.f32.mrb[0].mxu0
      %v1054 = vadd.f32 %v846, %v1053
      %v1055 = vpop.f32.mrb[0].mxu0
      %1056 = vmatprep.mubr.f32.mxu0 0.0
      %1057 = vmatmul.mubr.f32.gmra.mrb[0].mxu0 %v928
      %v1058 = vpop.f32.mrb[0].mxu0
      %v1059 = vadd.f32 %v851, %v1058
      %v1060 = vpop.f32.mrb[0].mxu0
      %1061 = vmatprep.mubr.f32.mxu0 0.0
      %1062 = vmatmul.mubr.f32.gmra.mrb[0].mxu0 %v930
      %v1063 = vpop.f32.mrb[0].mxu0
      %v1064 = vadd.f32 %v856, %v1063
      %v1065 = vpop.f32.mrb[0].mxu0
      %1066 = vmatprep.mubr.f32.mxu0 0.0
      %1067 = vmatmul.mubr.f32.gmra.mrb[0].mxu0 %v932
      %v1068 = vpop.f32.mrb[0].mxu0
      %v1069 = vadd.f32 %v861, %v1068
      %v1070 = vpop.f32.mrb[0].mxu0
      %1071 = vmatprep.mubr.f32.mxu0 0.0
      %1072 = vmatmul.mubr.f32.gmra.mrb[0].mxu0 %v934
      %v1073 = vpop.f32.mrb[0].mxu0
      %v1074 = vadd.f32 %v866, %v1073
      %v1075 = vpop.f32.mrb[0].mxu0
      %1076 = vmatprep.mubr.f32.mxu0 0.0
      %1077 = vmatmul.mubr.f32.gmra.mrb[0].mxu0 %v936
      %v1078 = vpop.f32.mrb[0].mxu0
      %v1079 = vadd.f32 %v871, %v1078
      %v1080 = vpop.f32.mrb[0].mxu0
      %1081 = vmatprep.mubr.f32.mxu0 0.0
      %1082 = vmatmul.mubr.f32.gmra.mrb[0].mxu0 %v938
      %v1083 = vpop.f32.mrb[0].mxu0
      %v1084 = vadd.f32 %v876, %v1083
      %v1085 = vpop.f32.mrb[0].mxu0
      %1086 = vmatprep.mubr.f32.mxu0 0.0
      %1087 = vmatmul.mubr.f32.gmra.mrb[0].mxu0 %v940
      %v1088 = vpop.f32.mrb[0].mxu0
      %v1089 = vadd.f32 %v881, %v1088
      %v1090 = vpop.f32.mrb[0].mxu0
      %1091 = vmatprep.mubr.f32.mxu0 0.0
      %1092 = vmatmul.mubr.f32.gmra.mrb[0].mxu0 %v942
      %v1093 = vpop.f32.mrb[0].mxu0
      %v1094 = vadd.f32 %v886, %v1093
      %v1095 = vpop.f32.mrb[0].mxu0
      %1096 = vmatprep.mubr.f32.mxu0 0.0
      %1097 = vmatmul.mubr.f32.gmra.mrb[0].mxu0 %v944
      %v1098 = vpop.f32.mrb[0].mxu0
      %v1099 = vadd.f32 %v891, %v1098
      %v1100 = vpop.f32.mrb[0].mxu0
      %1101 = vmatprep.mubr.f32.mxu0 0.0
      %1102 = vmatmul.mubr.f32.gmra.mrb[0].mxu0 %v946
      %v1103 = vpop.f32.mrb[0].mxu0
      %v1104 = vadd.f32 %v896, %v1103
      %v1105 = vpop.f32.mrb[0].mxu0
      %1106 = vmatprep.mubr.f32.mxu0 0.0
      %1107 = vmatmul.mubr.f32.gmra.mrb[0].mxu0 %v948
      %v1108 = vpop.f32.mrb[0].mxu0
      %v1109 = vadd.f32 %v901, %v1108
      %v1110 = vpop.f32.mrb[0].mxu0
      %1111 = vmatprep.mubr.f32.mxu0 0.0
      %1112 = vmatmul.mubr.f32.gmra.mrb[0].mxu0 %v950
      %v1113 = vpop.f32.mrb[0].mxu0
      %v1114 = vadd.f32 %v906, %v1113
      %v1115 = vpop.f32.mrb[0].mxu0
      %1116 = vmatprep.mubr.f32.mxu0 0.0
      %1117 = vmatmul.mubr.f32.gmra.mrb[0].mxu0 %v952
      %v1118 = vpop.f32.mrb[0].mxu0
      %v1119 = vadd.f32 %v911, %v1118
      %v1120 = vpop.f32.mrb[0].mxu0
      %1121 = vdwg.mxu0
      %vm1122 = vcmask 1045504
      %v1123 = vrot.slane %v585, 2
      %v1124 = vrot.slane %v586, 2
      %v1125 = vsel %vm1122, %v1123, %v1124
      %v1126 = vrot.slane %v587, 2
      %v1127 = vsel %vm1122, %v1124, %v1126
      %v1128 = vrot.slane %v588, 2
      %v1129 = vrot.slane %v589, 2
      %v1130 = vsel %vm1122, %v1128, %v1129
      %v1131 = vrot.slane %v590, 2
      %v1132 = vsel %vm1122, %v1129, %v1131
      %v1133 = vrot.slane %v591, 2
      %v1134 = vrot.slane %v592, 2
      %v1135 = vsel %vm1122, %v1133, %v1134
      %v1136 = vrot.slane %v593, 2
      %v1137 = vsel %vm1122, %v1134, %v1136
      %v1138 = vrot.slane %v594, 2
      %v1139 = vrot.slane %v595, 2
      %v1140 = vsel %vm1122, %v1138, %v1139
      %v1141 = vrot.slane %v596, 2
      %v1142 = vsel %vm1122, %v1139, %v1141
      %v1143 = vrot.slane %v597, 2
      %v1144 = vrot.slane %v598, 2
      %v1145 = vsel %vm1122, %v1143, %v1144
      %v1146 = vrot.slane %v599, 2
      %v1147 = vsel %vm1122, %v1144, %v1146
      %v1148 = vrot.slane %v600, 2
      %v1149 = vrot.slane %v601, 2
      %v1150 = vsel %vm1122, %v1148, %v1149
      %v1151 = vrot.slane %v602, 2
      %v1152 = vsel %vm1122, %v1149, %v1151
      %v1153 = vrot.slane %v603, 2
      %v1154 = vrot.slane %v604, 2
      %v1155 = vsel %vm1122, %v1153, %v1154
      %v1156 = vrot.slane %v605, 2
      %v1157 = vsel %vm1122, %v1154, %v1156
      %v1158 = vrot.slane %v606, 2
      %v1159 = vrot.slane %v607, 2
      %v1160 = vsel %vm1122, %v1158, %v1159
      %v1161 = vrot.slane %v608, 2
      %v1162 = vsel %vm1122, %v1159, %v1161
      %v1163 = vrot.slane %v609, 2
      %v1164 = vrot.slane %v610, 2
      %v1165 = vsel %vm1122, %v1163, %v1164
      %v1166 = vrot.slane %v611, 2
      %v1167 = vsel %vm1122, %v1164, %v1166
      %v1168 = vrot.slane %v612, 2
      %v1169 = vrot.slane %v613, 2
      %v1170 = vsel %vm1122, %v1168, %v1169
      %v1171 = vrot.slane %v614, 2
      %v1172 = vsel %vm1122, %v1169, %v1171
      %s1173 = scalar_lea.vmem %s3, 8
      %v1174 = vld [vmem:[%s1173] sm:$0xf]
      %v1175 = vsel %vm542, %v1125, 0
      %v1177 = vsel %vm542, %v1127, 0
      %v1179 = vsel %vm542, %v1130, 0
      %v1181 = vsel %vm542, %v1132, 0
      %v1183 = vsel %vm542, %v1135, 0
      %v1185 = vsel %vm542, %v1137, 0
      %v1187 = vsel %vm542, %v1140, 0
      %v1189 = vsel %vm542, %v1142, 0
      %v1191 = vsel %vm542, %v1145, 0
      %v1193 = vsel %vm542, %v1147, 0
      %v1195 = vsel %vm542, %v1150, 0
      %v1197 = vsel %vm542, %v1152, 0
      %v1199 = vsel %vm542, %v1155, 0
      %v1201 = vsel %vm542, %v1157, 0
      %v1203 = vsel %vm542, %v1160, 0
      %v1205 = vsel %vm542, %v1162, 0
      %v1207 = vsel %vm542, %v1165, 0
      %v1209 = vsel %vm542, %v1167, 0
      %v1211 = vsel %vm542, %v1170, 0
      %v1213 = vsel %vm542, %v1172, 0
      %v1216 = vsel %vm745, %v1174, 0
      %1218 = vmatprep.subr.mxu0 0.0
      %1219 = vmatpush1.msra.mxu0 %v1216
      %1220 = vmatprep.subr.mxu0 0.0
      %1221 = vmatpush1.msra.mxu0 0.0
      %1222 = vmatprep.subr.mxu0 0.0
      %1223 = vmatpush1.msra.mxu0 0.0
      %1224 = vmatprep.subr.mxu0 0.0
      %1225 = vmatpush1.msra.mxu0 0.0
      %1226 = vmatprep.subr.mxu0 0.0
      %1227 = vmatpush1.msra.mxu0 0.0
      %1228 = vmatprep.subr.mxu0 0.0
      %1229 = vmatpush1.msra.mxu0 0.0
      %1230 = vmatprep.subr.mxu0 0.0
      %1231 = vmatpush1.msra.mxu0 0.0
      %1232 = vmatprep.subr.mxu0 0.0
      %1233 = vmatpush1.msra.mxu0 0.0
      %1234 = vmatprep.subr.mxu0 0.0
      %1235 = vmatpush1.msra.mxu0 0.0
      %1236 = vmatprep.subr.mxu0 0.0
      %1237 = vmatpush1.msra.mxu0 0.0
      %1238 = vmatprep.subr.mxu0 0.0
      %1239 = vmatpush1.msra.mxu0 0.0
      %1240 = vmatprep.subr.mxu0 0.0
      %1241 = vmatpush1.msra.mxu0 0.0
      %1242 = vmatprep.subr.mxu0 0.0
      %1243 = vmatpush1.msra.mxu0 0.0
      %1244 = vmatprep.subr.mxu0 0.0
      %1245 = vmatpush1.msra.mxu0 0.0
      %1246 = vmatprep.subr.mxu0 0.0
      %1247 = vmatpush1.msra.mxu0 0.0
      %1248 = vmatprep.subr.mxu0 0.0
      %1249 = vmatpush1.msra.mxu0 0.0
      %1250 = vmatprep.subr.mxu0 0.0
      %1251 = vmatpush1.msra.mxu0 0.0
      %1252 = vmatprep.subr.mxu0 0.0
      %1253 = vmatpush1.msra.mxu0 0.0
      %1254 = vmatprep.subr.mxu0 0.0
      %1255 = vmatpush1.msra.mxu0 0.0
      %1256 = vmatprep.subr.mxu0 0.0
      %1257 = vmatpush1.msra.mxu0 0.0
      %1258 = vmatprep.subr.mxu0 0.0
      %1259 = vmatpush1.msra.mxu0 0.0
      %1260 = vmatprep.subr.mxu0 0.0
      %1261 = vmatpush1.msra.mxu0 0.0
      %1262 = vmatprep.subr.mxu0 0.0
      %1263 = vmatpush1.msra.mxu0 0.0
      %1264 = vmatprep.subr.mxu0 0.0
      %1265 = vmatpush1.msra.mxu0 0.0
      %1266 = vmatprep.subr.mxu0 0.0
      %1267 = vmatpush1.msra.mxu0 0.0
      %1268 = vmatprep.subr.mxu0 0.0
      %1269 = vmatpush1.msra.mxu0 0.0
      %1270 = vmatprep.subr.mxu0 0.0
      %1271 = vmatpush1.msra.mxu0 0.0
      %1272 = vmatprep.subr.mxu0 0.0
      %1273 = vmatpush1.msra.mxu0 0.0
      %1274 = vmatprep.subr.mxu0 0.0
      %1275 = vmatpush1.msra.mxu0 0.0
      %1276 = vmatprep.subr.mxu0 0.0
      %1277 = vmatpush1.msra.mxu0 0.0
      %1278 = vmatprep.subr.mxu0 0.0
      %1279 = vmatpush1.msra.mxu0 0.0
      %1280 = vmatprep.subr.mxu0 0.0
      %1281 = vmatpush1.msra.mxu0 0.0
      %1282 = vmatprep.mubr.f32.mxu0 0.0
      %1283 = vmatmul.mubr.f32.gmra.mrb[0].mxu0 %v1175
      %v1284 = vpop.f32.mrb[0].mxu0
      %v1285 = vadd.f32 0.0, %v1284
      %v1286 = vpop.f32.mrb[0].mxu0
      %1287 = vmatprep.mubr.f32.mxu0 0.0
      %1288 = vmatmul.mubr.f32.gmra.mrb[0].mxu0 %v1177
      %v1289 = vpop.f32.mrb[0].mxu0
      %v1290 = vadd.f32 0.0, %v1289
      %v1291 = vpop.f32.mrb[0].mxu0
      %1292 = vmatprep.mubr.f32.mxu0 0.0
      %1293 = vmatmul.mubr.f32.gmra.mrb[0].mxu0 %v1179
      %v1294 = vpop.f32.mrb[0].mxu0
      %v1295 = vadd.f32 0.0, %v1294
      %v1296 = vpop.f32.mrb[0].mxu0
      %1297 = vmatprep.mubr.f32.mxu0 0.0
      %1298 = vmatmul.mubr.f32.gmra.mrb[0].mxu0 %v1181
      %v1299 = vpop.f32.mrb[0].mxu0
      %v1300 = vadd.f32 0.0, %v1299
      %v1301 = vpop.f32.mrb[0].mxu0
      %1302 = vmatprep.mubr.f32.mxu0 0.0
      %1303 = vmatmul.mubr.f32.gmra.mrb[0].mxu0 %v1183
      %v1304 = vpop.f32.mrb[0].mxu0
      %v1305 = vadd.f32 0.0, %v1304
      %v1306 = vpop.f32.mrb[0].mxu0
      %1307 = vmatprep.mubr.f32.mxu0 0.0
      %1308 = vmatmul.mubr.f32.gmra.mrb[0].mxu0 %v1185
      %v1309 = vpop.f32.mrb[0].mxu0
      %v1310 = vadd.f32 0.0, %v1309
      %v1311 = vpop.f32.mrb[0].mxu0
      %1312 = vmatprep.mubr.f32.mxu0 0.0
      %1313 = vmatmul.mubr.f32.gmra.mrb[0].mxu0 %v1187
      %v1314 = vpop.f32.mrb[0].mxu0
      %v1315 = vadd.f32 0.0, %v1314
      %v1316 = vpop.f32.mrb[0].mxu0
      %1317 = vmatprep.mubr.f32.mxu0 0.0
      %1318 = vmatmul.mubr.f32.gmra.mrb[0].mxu0 %v1189
      %v1319 = vpop.f32.mrb[0].mxu0
      %v1320 = vadd.f32 0.0, %v1319
      %v1321 = vpop.f32.mrb[0].mxu0
      %1322 = vmatprep.mubr.f32.mxu0 0.0
      %1323 = vmatmul.mubr.f32.gmra.mrb[0].mxu0 %v1191
      %v1324 = vpop.f32.mrb[0].mxu0
      %v1325 = vadd.f32 0.0, %v1324
      %v1326 = vpop.f32.mrb[0].mxu0
      %1327 = vmatprep.mubr.f32.mxu0 0.0
      %1328 = vmatmul.mubr.f32.gmra.mrb[0].mxu0 %v1193
      %v1329 = vpop.f32.mrb[0].mxu0
      %v1330 = vadd.f32 0.0, %v1329
      %v1331 = vpop.f32.mrb[0].mxu0
      %1332 = vmatprep.mubr.f32.mxu0 0.0
      %1333 = vmatmul.mubr.f32.gmra.mrb[0].mxu0 %v1195
      %v1334 = vpop.f32.mrb[0].mxu0
      %v1335 = vadd.f32 0.0, %v1334
      %v1336 = vpop.f32.mrb[0].mxu0
      %1337 = vmatprep.mubr.f32.mxu0 0.0
      %1338 = vmatmul.mubr.f32.gmra.mrb[0].mxu0 %v1197
      %v1339 = vpop.f32.mrb[0].mxu0
      %v1340 = vadd.f32 0.0, %v1339
      %v1341 = vpop.f32.mrb[0].mxu0
      %1342 = vmatprep.mubr.f32.mxu0 0.0
      %1343 = vmatmul.mubr.f32.gmra.mrb[0].mxu0 %v1199
      %v1344 = vpop.f32.mrb[0].mxu0
      %v1345 = vadd.f32 0.0, %v1344
      %v1346 = vpop.f32.mrb[0].mxu0
      %1347 = vmatprep.mubr.f32.mxu0 0.0
      %1348 = vmatmul.mubr.f32.gmra.mrb[0].mxu0 %v1201
      %v1349 = vpop.f32.mrb[0].mxu0
      %v1350 = vadd.f32 0.0, %v1349
      %v1351 = vpop.f32.mrb[0].mxu0
      %1352 = vmatprep.mubr.f32.mxu0 0.0
      %1353 = vmatmul.mubr.f32.gmra.mrb[0].mxu0 %v1203
      %v1354 = vpop.f32.mrb[0].mxu0
      %v1355 = vadd.f32 0.0, %v1354
      %v1356 = vpop.f32.mrb[0].mxu0
      %1357 = vmatprep.mubr.f32.mxu0 0.0
      %1358 = vmatmul.mubr.f32.gmra.mrb[0].mxu0 %v1205
      %v1359 = vpop.f32.mrb[0].mxu0
      %v1360 = vadd.f32 0.0, %v1359
      %v1361 = vpop.f32.mrb[0].mxu0
      %1362 = vmatprep.mubr.f32.mxu0 0.0
      %1363 = vmatmul.mubr.f32.gmra.mrb[0].mxu0 %v1207
      %v1364 = vpop.f32.mrb[0].mxu0
      %v1365 = vadd.f32 0.0, %v1364
      %v1366 = vpop.f32.mrb[0].mxu0
      %1367 = vmatprep.mubr.f32.mxu0 0.0
      %1368 = vmatmul.mubr.f32.gmra.mrb[0].mxu0 %v1209
      %v1369 = vpop.f32.mrb[0].mxu0
      %v1370 = vadd.f32 0.0, %v1369
      %v1371 = vpop.f32.mrb[0].mxu0
      %1372 = vmatprep.mubr.f32.mxu0 0.0
      %1373 = vmatmul.mubr.f32.gmra.mrb[0].mxu0 %v1211
      %v1374 = vpop.f32.mrb[0].mxu0
      %v1375 = vadd.f32 0.0, %v1374
      %v1376 = vpop.f32.mrb[0].mxu0
      %1377 = vmatprep.mubr.f32.mxu0 0.0
      %1378 = vmatmul.mubr.f32.gmra.mrb[0].mxu0 %v1213
      %v1379 = vpop.f32.mrb[0].mxu0
      %v1380 = vadd.f32 0.0, %v1379
      %v1381 = vpop.f32.mrb[0].mxu0
      %1382 = vdwg.mxu0
      %v1383 = vadd.f32 %v1024, %v1285
      %v1384 = vadd.f32 %v1029, %v1290
      %v1385 = vadd.f32 %v1034, %v1295
      %v1386 = vadd.f32 %v1039, %v1300
      %v1387 = vadd.f32 %v1044, %v1305
      %v1388 = vadd.f32 %v1049, %v1310
      %v1389 = vadd.f32 %v1054, %v1315
      %v1390 = vadd.f32 %v1059, %v1320
      %v1391 = vadd.f32 %v1064, %v1325
      %v1392 = vadd.f32 %v1069, %v1330
      %v1393 = vadd.f32 %v1074, %v1335
      %v1394 = vadd.f32 %v1079, %v1340
      %v1395 = vadd.f32 %v1084, %v1345
      %v1396 = vadd.f32 %v1089, %v1350
      %v1397 = vadd.f32 %v1094, %v1355
      %v1398 = vadd.f32 %v1099, %v1360
      %v1399 = vadd.f32 %v1104, %v1365
      %v1400 = vadd.f32 %v1109, %v1370
      %v1401 = vadd.f32 %v1114, %v1375
      %v1402 = vadd.f32 %v1119, %v1380
      %s1403 = scalar_lea.vmem %s3, 12
      %v1404 = vld [vmem:[%s1403] sm:$0xf]
      %v1406 = vsel %vm542, %v615, 0
      %v1409 = vsel %vm542, %v616, 0
      %v1412 = vsel %vm745, %v1404, 0
      %1414 = vmatprep.subr.mxu0 0.0
      %1415 = vmatpush1.msra.mxu0 %v1412
      %1416 = vmatprep.subr.mxu0 0.0
      %1417 = vmatpush1.msra.mxu0 0.0
      %1418 = vmatprep.subr.mxu0 0.0
      %1419 = vmatpush1.msra.mxu0 0.0
      %1420 = vmatprep.subr.mxu0 0.0
      %1421 = vmatpush1.msra.mxu0 0.0
      %1422 = vmatprep.subr.mxu0 0.0
      %1423 = vmatpush1.msra.mxu0 0.0
      %1424 = vmatprep.subr.mxu0 0.0
      %1425 = vmatpush1.msra.mxu0 0.0
      %1426 = vmatprep.subr.mxu0 0.0
      %1427 = vmatpush1.msra.mxu0 0.0
      %1428 = vmatprep.subr.mxu0 0.0
      %1429 = vmatpush1.msra.mxu0 0.0
      %1430 = vmatprep.subr.mxu0 0.0
      %1431 = vmatpush1.msra.mxu0 0.0
      %1432 = vmatprep.subr.mxu0 0.0
      %1433 = vmatpush1.msra.mxu0 0.0
      %1434 = vmatprep.subr.mxu0 0.0
      %1435 = vmatpush1.msra.mxu0 0.0
      %1436 = vmatprep.subr.mxu0 0.0
      %1437 = vmatpush1.msra.mxu0 0.0
      %1438 = vmatprep.subr.mxu0 0.0
      %1439 = vmatpush1.msra.mxu0 0.0
      %1440 = vmatprep.subr.mxu0 0.0
      %1441 = vmatpush1.msra.mxu0 0.0
      %1442 = vmatprep.subr.mxu0 0.0
      %1443 = vmatpush1.msra.mxu0 0.0
      %1444 = vmatprep.subr.mxu0 0.0
      %1445 = vmatpush1.msra.mxu0 0.0
      %1446 = vmatprep.subr.mxu0 0.0
      %1447 = vmatpush1.msra.mxu0 0.0
      %1448 = vmatprep.subr.mxu0 0.0
      %1449 = vmatpush1.msra.mxu0 0.0
      %1450 = vmatprep.subr.mxu0 0.0
      %1451 = vmatpush1.msra.mxu0 0.0
      %1452 = vmatprep.subr.mxu0 0.0
      %1453 = vmatpush1.msra.mxu0 0.0
      %1454 = vmatprep.subr.mxu0 0.0
      %1455 = vmatpush1.msra.mxu0 0.0
      %1456 = vmatprep.subr.mxu0 0.0
      %1457 = vmatpush1.msra.mxu0 0.0
      %1458 = vmatprep.subr.mxu0 0.0
      %1459 = vmatpush1.msra.mxu0 0.0
      %1460 = vmatprep.subr.mxu0 0.0
      %1461 = vmatpush1.msra.mxu0 0.0
      %1462 = vmatprep.subr.mxu0 0.0
      %1463 = vmatpush1.msra.mxu0 0.0
      %1464 = vmatprep.subr.mxu0 0.0
      %1465 = vmatpush1.msra.mxu0 0.0
      %1466 = vmatprep.subr.mxu0 0.0
      %1467 = vmatpush1.msra.mxu0 0.0
      %1468 = vmatprep.subr.mxu0 0.0
      %1469 = vmatpush1.msra.mxu0 0.0
      %1470 = vmatprep.subr.mxu0 0.0
      %1471 = vmatpush1.msra.mxu0 0.0
      %1472 = vmatprep.subr.mxu0 0.0
      %1473 = vmatpush1.msra.mxu0 0.0
      %1474 = vmatprep.subr.mxu0 0.0
      %1475 = vmatpush1.msra.mxu0 0.0
      %1476 = vmatprep.subr.mxu0 0.0
      %1477 = vmatpush1.msra.mxu0 0.0
      %1478 = vmatprep.mubr.f32.mxu0 0.0
      %1479 = vmatmul.mubr.f32.gmra.mrb[0].mxu0 %v918
      %v1480 = vpop.f32.mrb[0].mxu0
      %v1481 = vadd.f32 0.0, %v1480
      %v1482 = vpop.f32.mrb[0].mxu0
      %1483 = vmatprep.mubr.f32.mxu0 0.0
      %1484 = vmatmul.mubr.f32.gmra.mrb[0].mxu0 %v920
      %v1485 = vpop.f32.mrb[0].mxu0
      %v1486 = vadd.f32 0.0, %v1485
      %v1487 = vpop.f32.mrb[0].mxu0
      %1488 = vmatprep.mubr.f32.mxu0 0.0
      %1489 = vmatmul.mubr.f32.gmra.mrb[0].mxu0 %v922
      %v1490 = vpop.f32.mrb[0].mxu0
      %v1491 = vadd.f32 0.0, %v1490
      %v1492 = vpop.f32.mrb[0].mxu0
      %1493 = vmatprep.mubr.f32.mxu0 0.0
      %1494 = vmatmul.mubr.f32.gmra.mrb[0].mxu0 %v924
      %v1495 = vpop.f32.mrb[0].mxu0
      %v1496 = vadd.f32 0.0, %v1495
      %v1497 = vpop.f32.mrb[0].mxu0
      %1498 = vmatprep.mubr.f32.mxu0 0.0
      %1499 = vmatmul.mubr.f32.gmra.mrb[0].mxu0 %v926
      %v1500 = vpop.f32.mrb[0].mxu0
      %v1501 = vadd.f32 0.0, %v1500
      %v1502 = vpop.f32.mrb[0].mxu0
      %1503 = vmatprep.mubr.f32.mxu0 0.0
      %1504 = vmatmul.mubr.f32.gmra.mrb[0].mxu0 %v928
      %v1505 = vpop.f32.mrb[0].mxu0
      %v1506 = vadd.f32 0.0, %v1505
      %v1507 = vpop.f32.mrb[0].mxu0
      %1508 = vmatprep.mubr.f32.mxu0 0.0
      %1509 = vmatmul.mubr.f32.gmra.mrb[0].mxu0 %v930
      %v1510 = vpop.f32.mrb[0].mxu0
      %v1511 = vadd.f32 0.0, %v1510
      %v1512 = vpop.f32.mrb[0].mxu0
      %1513 = vmatprep.mubr.f32.mxu0 0.0
      %1514 = vmatmul.mubr.f32.gmra.mrb[0].mxu0 %v932
      %v1515 = vpop.f32.mrb[0].mxu0
      %v1516 = vadd.f32 0.0, %v1515
      %v1517 = vpop.f32.mrb[0].mxu0
      %1518 = vmatprep.mubr.f32.mxu0 0.0
      %1519 = vmatmul.mubr.f32.gmra.mrb[0].mxu0 %v934
      %v1520 = vpop.f32.mrb[0].mxu0
      %v1521 = vadd.f32 0.0, %v1520
      %v1522 = vpop.f32.mrb[0].mxu0
      %1523 = vmatprep.mubr.f32.mxu0 0.0
      %1524 = vmatmul.mubr.f32.gmra.mrb[0].mxu0 %v936
      %v1525 = vpop.f32.mrb[0].mxu0
      %v1526 = vadd.f32 0.0, %v1525
      %v1527 = vpop.f32.mrb[0].mxu0
      %1528 = vmatprep.mubr.f32.mxu0 0.0
      %1529 = vmatmul.mubr.f32.gmra.mrb[0].mxu0 %v938
      %v1530 = vpop.f32.mrb[0].mxu0
      %v1531 = vadd.f32 0.0, %v1530
      %v1532 = vpop.f32.mrb[0].mxu0
      %1533 = vmatprep.mubr.f32.mxu0 0.0
      %1534 = vmatmul.mubr.f32.gmra.mrb[0].mxu0 %v940
      %v1535 = vpop.f32.mrb[0].mxu0
      %v1536 = vadd.f32 0.0, %v1535
      %v1537 = vpop.f32.mrb[0].mxu0
      %1538 = vmatprep.mubr.f32.mxu0 0.0
      %1539 = vmatmul.mubr.f32.gmra.mrb[0].mxu0 %v942
      %v1540 = vpop.f32.mrb[0].mxu0
      %v1541 = vadd.f32 0.0, %v1540
      %v1542 = vpop.f32.mrb[0].mxu0
      %1543 = vmatprep.mubr.f32.mxu0 0.0
      %1544 = vmatmul.mubr.f32.gmra.mrb[0].mxu0 %v944
      %v1545 = vpop.f32.mrb[0].mxu0
      %v1546 = vadd.f32 0.0, %v1545
      %v1547 = vpop.f32.mrb[0].mxu0
      %1548 = vmatprep.mubr.f32.mxu0 0.0
      %1549 = vmatmul.mubr.f32.gmra.mrb[0].mxu0 %v946
      %v1550 = vpop.f32.mrb[0].mxu0
      %v1551 = vadd.f32 0.0, %v1550
      %v1552 = vpop.f32.mrb[0].mxu0
      %1553 = vmatprep.mubr.f32.mxu0 0.0
      %1554 = vmatmul.mubr.f32.gmra.mrb[0].mxu0 %v948
      %v1555 = vpop.f32.mrb[0].mxu0
      %v1556 = vadd.f32 0.0, %v1555
      %v1557 = vpop.f32.mrb[0].mxu0
      %1558 = vmatprep.mubr.f32.mxu0 0.0
      %1559 = vmatmul.mubr.f32.gmra.mrb[0].mxu0 %v950
      %v1560 = vpop.f32.mrb[0].mxu0
      %v1561 = vadd.f32 0.0, %v1560
      %v1562 = vpop.f32.mrb[0].mxu0
      %1563 = vmatprep.mubr.f32.mxu0 0.0
      %1564 = vmatmul.mubr.f32.gmra.mrb[0].mxu0 %v952
      %v1565 = vpop.f32.mrb[0].mxu0
      %v1566 = vadd.f32 0.0, %v1565
      %v1567 = vpop.f32.mrb[0].mxu0
      %1568 = vmatprep.mubr.f32.mxu0 0.0
      %1569 = vmatmul.mubr.f32.gmra.mrb[0].mxu0 %v1406
      %v1570 = vpop.f32.mrb[0].mxu0
      %v1571 = vadd.f32 0.0, %v1570
      %v1572 = vpop.f32.mrb[0].mxu0
      %1573 = vmatprep.mubr.f32.mxu0 0.0
      %1574 = vmatmul.mubr.f32.gmra.mrb[0].mxu0 %v1409
      %v1575 = vpop.f32.mrb[0].mxu0
      %v1576 = vadd.f32 0.0, %v1575
      %v1577 = vpop.f32.mrb[0].mxu0
      %1578 = vdwg.mxu0
      %v1579 = vadd.f32 %v1383, %v1481
      %v1580 = vadd.f32 %v1384, %v1486
      %v1581 = vadd.f32 %v1385, %v1491
      %v1582 = vadd.f32 %v1386, %v1496
      %v1583 = vadd.f32 %v1387, %v1501
      %v1584 = vadd.f32 %v1388, %v1506
      %v1585 = vadd.f32 %v1389, %v1511
      %v1586 = vadd.f32 %v1390, %v1516
      %v1587 = vadd.f32 %v1391, %v1521
      %v1588 = vadd.f32 %v1392, %v1526
      %v1589 = vadd.f32 %v1393, %v1531
      %v1590 = vadd.f32 %v1394, %v1536
      %v1591 = vadd.f32 %v1395, %v1541
      %v1592 = vadd.f32 %v1396, %v1546
      %v1593 = vadd.f32 %v1397, %v1551
      %v1594 = vadd.f32 %v1398, %v1556
      %v1595 = vadd.f32 %v1399, %v1561
      %v1596 = vadd.f32 %v1400, %v1566
      %v1597 = vadd.f32 %v1401, %v1571
      %v1598 = vadd.f32 %v1402, %v1576
      %v1600 = vrot.slane %v615, 1
      %v1601 = vrot.slane %v616, 1
      %v1602 = vsel %vm652, %v1600, %v1601
      %v1603 = vrot.slane %v617, 1
      %v1604 = vsel %vm652, %v1601, %v1603
      %s1605 = scalar_lea.vmem %s3, 16
      %v1606 = vld [vmem:[%s1605] sm:$0xf]
      %v1607 = vsel %vm542, %v1602, 0
      %v1609 = vsel %vm542, %v1604, 0
      %v1612 = vsel %vm745, %v1606, 0
      %1614 = vmatprep.subr.mxu0 0.0
      %1615 = vmatpush1.msra.mxu0 %v1612
      %1616 = vmatprep.subr.mxu0 0.0
      %1617 = vmatpush1.msra.mxu0 0.0
      %1618 = vmatprep.subr.mxu0 0.0
      %1619 = vmatpush1.msra.mxu0 0.0
      %1620 = vmatprep.subr.mxu0 0.0
      %1621 = vmatpush1.msra.mxu0 0.0
      %1622 = vmatprep.subr.mxu0 0.0
      %1623 = vmatpush1.msra.mxu0 0.0
      %1624 = vmatprep.subr.mxu0 0.0
      %1625 = vmatpush1.msra.mxu0 0.0
      %1626 = vmatprep.subr.mxu0 0.0
      %1627 = vmatpush1.msra.mxu0 0.0
      %1628 = vmatprep.subr.mxu0 0.0
      %1629 = vmatpush1.msra.mxu0 0.0
      %1630 = vmatprep.subr.mxu0 0.0
      %1631 = vmatpush1.msra.mxu0 0.0
      %1632 = vmatprep.subr.mxu0 0.0
      %1633 = vmatpush1.msra.mxu0 0.0
      %1634 = vmatprep.subr.mxu0 0.0
      %1635 = vmatpush1.msra.mxu0 0.0
      %1636 = vmatprep.subr.mxu0 0.0
      %1637 = vmatpush1.msra.mxu0 0.0
      %1638 = vmatprep.subr.mxu0 0.0
      %1639 = vmatpush1.msra.mxu0 0.0
      %1640 = vmatprep.subr.mxu0 0.0
      %1641 = vmatpush1.msra.mxu0 0.0
      %1642 = vmatprep.subr.mxu0 0.0
      %1643 = vmatpush1.msra.mxu0 0.0
      %1644 = vmatprep.subr.mxu0 0.0
      %1645 = vmatpush1.msra.mxu0 0.0
      %1646 = vmatprep.subr.mxu0 0.0
      %1647 = vmatpush1.msra.mxu0 0.0
      %1648 = vmatprep.subr.mxu0 0.0
      %1649 = vmatpush1.msra.mxu0 0.0
      %1650 = vmatprep.subr.mxu0 0.0
      %1651 = vmatpush1.msra.mxu0 0.0
      %1652 = vmatprep.subr.mxu0 0.0
      %1653 = vmatpush1.msra.mxu0 0.0
      %1654 = vmatprep.subr.mxu0 0.0
      %1655 = vmatpush1.msra.mxu0 0.0
      %1656 = vmatprep.subr.mxu0 0.0
      %1657 = vmatpush1.msra.mxu0 0.0
      %1658 = vmatprep.subr.mxu0 0.0
      %1659 = vmatpush1.msra.mxu0 0.0
      %1660 = vmatprep.subr.mxu0 0.0
      %1661 = vmatpush1.msra.mxu0 0.0
      %1662 = vmatprep.subr.mxu0 0.0
      %1663 = vmatpush1.msra.mxu0 0.0
      %1664 = vmatprep.subr.mxu0 0.0
      %1665 = vmatpush1.msra.mxu0 0.0
      %1666 = vmatprep.subr.mxu0 0.0
      %1667 = vmatpush1.msra.mxu0 0.0
      %1668 = vmatprep.subr.mxu0 0.0
      %1669 = vmatpush1.msra.mxu0 0.0
      %1670 = vmatprep.subr.mxu0 0.0
      %1671 = vmatpush1.msra.mxu0 0.0
      %1672 = vmatprep.subr.mxu0 0.0
      %1673 = vmatpush1.msra.mxu0 0.0
      %1674 = vmatprep.subr.mxu0 0.0
      %1675 = vmatpush1.msra.mxu0 0.0
      %1676 = vmatprep.subr.mxu0 0.0
      %1677 = vmatpush1.msra.mxu0 0.0
      %1678 = vmatprep.mubr.f32.mxu0 0.0
      %1679 = vmatmul.mubr.f32.gmra.mrb[0].mxu0 %v709
      %v1680 = vpop.f32.mrb[0].mxu0
      %v1681 = vadd.f32 0.0, %v1680
      %v1682 = vpop.f32.mrb[0].mxu0
      %1683 = vmatprep.mubr.f32.mxu0 0.0
      %1684 = vmatmul.mubr.f32.gmra.mrb[0].mxu0 %v711
      %v1685 = vpop.f32.mrb[0].mxu0
      %v1686 = vadd.f32 0.0, %v1685
      %v1687 = vpop.f32.mrb[0].mxu0
      %1688 = vmatprep.mubr.f32.mxu0 0.0
      %1689 = vmatmul.mubr.f32.gmra.mrb[0].mxu0 %v713
      %v1690 = vpop.f32.mrb[0].mxu0
      %v1691 = vadd.f32 0.0, %v1690
      %v1692 = vpop.f32.mrb[0].mxu0
      %1693 = vmatprep.mubr.f32.mxu0 0.0
      %1694 = vmatmul.mubr.f32.gmra.mrb[0].mxu0 %v715
      %v1695 = vpop.f32.mrb[0].mxu0
      %v1696 = vadd.f32 0.0, %v1695
      %v1697 = vpop.f32.mrb[0].mxu0
      %1698 = vmatprep.mubr.f32.mxu0 0.0
      %1699 = vmatmul.mubr.f32.gmra.mrb[0].mxu0 %v717
      %v1700 = vpop.f32.mrb[0].mxu0
      %v1701 = vadd.f32 0.0, %v1700
      %v1702 = vpop.f32.mrb[0].mxu0
      %1703 = vmatprep.mubr.f32.mxu0 0.0
      %1704 = vmatmul.mubr.f32.gmra.mrb[0].mxu0 %v719
      %v1705 = vpop.f32.mrb[0].mxu0
      %v1706 = vadd.f32 0.0, %v1705
      %v1707 = vpop.f32.mrb[0].mxu0
      %1708 = vmatprep.mubr.f32.mxu0 0.0
      %1709 = vmatmul.mubr.f32.gmra.mrb[0].mxu0 %v721
      %v1710 = vpop.f32.mrb[0].mxu0
      %v1711 = vadd.f32 0.0, %v1710
      %v1712 = vpop.f32.mrb[0].mxu0
      %1713 = vmatprep.mubr.f32.mxu0 0.0
      %1714 = vmatmul.mubr.f32.gmra.mrb[0].mxu0 %v723
      %v1715 = vpop.f32.mrb[0].mxu0
      %v1716 = vadd.f32 0.0, %v1715
      %v1717 = vpop.f32.mrb[0].mxu0
      %1718 = vmatprep.mubr.f32.mxu0 0.0
      %1719 = vmatmul.mubr.f32.gmra.mrb[0].mxu0 %v725
      %v1720 = vpop.f32.mrb[0].mxu0
      %v1721 = vadd.f32 0.0, %v1720
      %v1722 = vpop.f32.mrb[0].mxu0
      %1723 = vmatprep.mubr.f32.mxu0 0.0
      %1724 = vmatmul.mubr.f32.gmra.mrb[0].mxu0 %v727
      %v1725 = vpop.f32.mrb[0].mxu0
      %v1726 = vadd.f32 0.0, %v1725
      %v1727 = vpop.f32.mrb[0].mxu0
      %1728 = vmatprep.mubr.f32.mxu0 0.0
      %1729 = vmatmul.mubr.f32.gmra.mrb[0].mxu0 %v729
      %v1730 = vpop.f32.mrb[0].mxu0
      %v1731 = vadd.f32 0.0, %v1730
      %v1732 = vpop.f32.mrb[0].mxu0
      %1733 = vmatprep.mubr.f32.mxu0 0.0
      %1734 = vmatmul.mubr.f32.gmra.mrb[0].mxu0 %v731
      %v1735 = vpop.f32.mrb[0].mxu0
      %v1736 = vadd.f32 0.0, %v1735
      %v1737 = vpop.f32.mrb[0].mxu0
      %1738 = vmatprep.mubr.f32.mxu0 0.0
      %1739 = vmatmul.mubr.f32.gmra.mrb[0].mxu0 %v733
      %v1740 = vpop.f32.mrb[0].mxu0
      %v1741 = vadd.f32 0.0, %v1740
      %v1742 = vpop.f32.mrb[0].mxu0
      %1743 = vmatprep.mubr.f32.mxu0 0.0
      %1744 = vmatmul.mubr.f32.gmra.mrb[0].mxu0 %v735
      %v1745 = vpop.f32.mrb[0].mxu0
      %v1746 = vadd.f32 0.0, %v1745
      %v1747 = vpop.f32.mrb[0].mxu0
      %1748 = vmatprep.mubr.f32.mxu0 0.0
      %1749 = vmatmul.mubr.f32.gmra.mrb[0].mxu0 %v737
      %v1750 = vpop.f32.mrb[0].mxu0
      %v1751 = vadd.f32 0.0, %v1750
      %v1752 = vpop.f32.mrb[0].mxu0
      %1753 = vmatprep.mubr.f32.mxu0 0.0
      %1754 = vmatmul.mubr.f32.gmra.mrb[0].mxu0 %v739
      %v1755 = vpop.f32.mrb[0].mxu0
      %v1756 = vadd.f32 0.0, %v1755
      %v1757 = vpop.f32.mrb[0].mxu0
      %1758 = vmatprep.mubr.f32.mxu0 0.0
      %1759 = vmatmul.mubr.f32.gmra.mrb[0].mxu0 %v741
      %v1760 = vpop.f32.mrb[0].mxu0
      %v1761 = vadd.f32 0.0, %v1760
      %v1762 = vpop.f32.mrb[0].mxu0
      %1763 = vmatprep.mubr.f32.mxu0 0.0
      %1764 = vmatmul.mubr.f32.gmra.mrb[0].mxu0 %v743
      %v1765 = vpop.f32.mrb[0].mxu0
      %v1766 = vadd.f32 0.0, %v1765
      %v1767 = vpop.f32.mrb[0].mxu0
      %1768 = vmatprep.mubr.f32.mxu0 0.0
      %1769 = vmatmul.mubr.f32.gmra.mrb[0].mxu0 %v1607
      %v1770 = vpop.f32.mrb[0].mxu0
      %v1771 = vadd.f32 0.0, %v1770
      %v1772 = vpop.f32.mrb[0].mxu0
      %1773 = vmatprep.mubr.f32.mxu0 0.0
      %1774 = vmatmul.mubr.f32.gmra.mrb[0].mxu0 %v1609
      %v1775 = vpop.f32.mrb[0].mxu0
      %v1776 = vadd.f32 0.0, %v1775
      %v1777 = vpop.f32.mrb[0].mxu0
      %1778 = vdwg.mxu0
      %v1779 = vadd.f32 %v1579, %v1681
      %v1780 = vadd.f32 %v1580, %v1686
      %v1781 = vadd.f32 %v1581, %v1691
      %v1782 = vadd.f32 %v1582, %v1696
      %v1783 = vadd.f32 %v1583, %v1701
      %v1784 = vadd.f32 %v1584, %v1706
      %v1785 = vadd.f32 %v1585, %v1711
      %v1786 = vadd.f32 %v1586, %v1716
      %v1787 = vadd.f32 %v1587, %v1721
      %v1788 = vadd.f32 %v1588, %v1726
      %v1789 = vadd.f32 %v1589, %v1731
      %v1790 = vadd.f32 %v1590, %v1736
      %v1791 = vadd.f32 %v1591, %v1741
      %v1792 = vadd.f32 %v1592, %v1746
      %v1793 = vadd.f32 %v1593, %v1751
      %v1794 = vadd.f32 %v1594, %v1756
      %v1795 = vadd.f32 %v1595, %v1761
      %v1796 = vadd.f32 %v1596, %v1766
      %v1797 = vadd.f32 %v1597, %v1771
      %v1798 = vadd.f32 %v1598, %v1776
      %v1799 = vrot.slane %v615, 2
      %v1800 = vrot.slane %v616, 2
      %v1801 = vsel %vm1122, %v1799, %v1800
      %v1802 = vrot.slane %v617, 2
      %v1803 = vsel %vm1122, %v1800, %v1802
      %s1804 = scalar_lea.vmem %s3, 20
      %v1805 = vld [vmem:[%s1804] sm:$0xf]
      %v1806 = vsel %vm542, %v1801, 0
      %v1808 = vsel %vm542, %v1803, 0
      %v1811 = vsel %vm745, %v1805, 0
      %1813 = vmatprep.subr.mxu0 0.0
      %1814 = vmatpush1.msra.mxu0 %v1811
      %1815 = vmatprep.subr.mxu0 0.0
      %1816 = vmatpush1.msra.mxu0 0.0
      %1817 = vmatprep.subr.mxu0 0.0
      %1818 = vmatpush1.msra.mxu0 0.0
      %1819 = vmatprep.subr.mxu0 0.0
      %1820 = vmatpush1.msra.mxu0 0.0
      %1821 = vmatprep.subr.mxu0 0.0
      %1822 = vmatpush1.msra.mxu0 0.0
      %1823 = vmatprep.subr.mxu0 0.0
      %1824 = vmatpush1.msra.mxu0 0.0
      %1825 = vmatprep.subr.mxu0 0.0
      %1826 = vmatpush1.msra.mxu0 0.0
      %1827 = vmatprep.subr.mxu0 0.0
      %1828 = vmatpush1.msra.mxu0 0.0
      %1829 = vmatprep.subr.mxu0 0.0
      %1830 = vmatpush1.msra.mxu0 0.0
      %1831 = vmatprep.subr.mxu0 0.0
      %1832 = vmatpush1.msra.mxu0 0.0
      %1833 = vmatprep.subr.mxu0 0.0
      %1834 = vmatpush1.msra.mxu0 0.0
      %1835 = vmatprep.subr.mxu0 0.0
      %1836 = vmatpush1.msra.mxu0 0.0
      %1837 = vmatprep.subr.mxu0 0.0
      %1838 = vmatpush1.msra.mxu0 0.0
      %1839 = vmatprep.subr.mxu0 0.0
      %1840 = vmatpush1.msra.mxu0 0.0
      %1841 = vmatprep.subr.mxu0 0.0
      %1842 = vmatpush1.msra.mxu0 0.0
      %1843 = vmatprep.subr.mxu0 0.0
      %1844 = vmatpush1.msra.mxu0 0.0
      %1845 = vmatprep.subr.mxu0 0.0
      %1846 = vmatpush1.msra.mxu0 0.0
      %1847 = vmatprep.subr.mxu0 0.0
      %1848 = vmatpush1.msra.mxu0 0.0
      %1849 = vmatprep.subr.mxu0 0.0
      %1850 = vmatpush1.msra.mxu0 0.0
      %1851 = vmatprep.subr.mxu0 0.0
      %1852 = vmatpush1.msra.mxu0 0.0
      %1853 = vmatprep.subr.mxu0 0.0
      %1854 = vmatpush1.msra.mxu0 0.0
      %1855 = vmatprep.subr.mxu0 0.0
      %1856 = vmatpush1.msra.mxu0 0.0
      %1857 = vmatprep.subr.mxu0 0.0
      %1858 = vmatpush1.msra.mxu0 0.0
      %1859 = vmatprep.subr.mxu0 0.0
      %1860 = vmatpush1.msra.mxu0 0.0
      %1861 = vmatprep.subr.mxu0 0.0
      %1862 = vmatpush1.msra.mxu0 0.0
      %1863 = vmatprep.subr.mxu0 0.0
      %1864 = vmatpush1.msra.mxu0 0.0
      %1865 = vmatprep.subr.mxu0 0.0
      %1866 = vmatpush1.msra.mxu0 0.0
      %1867 = vmatprep.subr.mxu0 0.0
      %1868 = vmatpush1.msra.mxu0 0.0
      %1869 = vmatprep.subr.mxu0 0.0
      %1870 = vmatpush1.msra.mxu0 0.0
      %1871 = vmatprep.subr.mxu0 0.0
      %1872 = vmatpush1.msra.mxu0 0.0
      %1873 = vmatprep.subr.mxu0 0.0
      %1874 = vmatpush1.msra.mxu0 0.0
      %1875 = vmatprep.subr.mxu0 0.0
      %1876 = vmatpush1.msra.mxu0 0.0
      %1877 = vmatprep.mubr.f32.mxu0 0.0
      %1878 = vmatmul.mubr.f32.gmra.mrb[0].mxu0 %v1179
      %v1879 = vpop.f32.mrb[0].mxu0
      %v1880 = vadd.f32 0.0, %v1879
      %v1881 = vpop.f32.mrb[0].mxu0
      %1882 = vmatprep.mubr.f32.mxu0 0.0
      %1883 = vmatmul.mubr.f32.gmra.mrb[0].mxu0 %v1181
      %v1884 = vpop.f32.mrb[0].mxu0
      %v1885 = vadd.f32 0.0, %v1884
      %v1886 = vpop.f32.mrb[0].mxu0
      %1887 = vmatprep.mubr.f32.mxu0 0.0
      %1888 = vmatmul.mubr.f32.gmra.mrb[0].mxu0 %v1183
      %v1889 = vpop.f32.mrb[0].mxu0
      %v1890 = vadd.f32 0.0, %v1889
      %v1891 = vpop.f32.mrb[0].mxu0
      %1892 = vmatprep.mubr.f32.mxu0 0.0
      %1893 = vmatmul.mubr.f32.gmra.mrb[0].mxu0 %v1185
      %v1894 = vpop.f32.mrb[0].mxu0
      %v1895 = vadd.f32 0.0, %v1894
      %v1896 = vpop.f32.mrb[0].mxu0
      %1897 = vmatprep.mubr.f32.mxu0 0.0
      %1898 = vmatmul.mubr.f32.gmra.mrb[0].mxu0 %v1187
      %v1899 = vpop.f32.mrb[0].mxu0
      %v1900 = vadd.f32 0.0, %v1899
      %v1901 = vpop.f32.mrb[0].mxu0
      %1902 = vmatprep.mubr.f32.mxu0 0.0
      %1903 = vmatmul.mubr.f32.gmra.mrb[0].mxu0 %v1189
      %v1904 = vpop.f32.mrb[0].mxu0
      %v1905 = vadd.f32 0.0, %v1904
      %v1906 = vpop.f32.mrb[0].mxu0
      %1907 = vmatprep.mubr.f32.mxu0 0.0
      %1908 = vmatmul.mubr.f32.gmra.mrb[0].mxu0 %v1191
      %v1909 = vpop.f32.mrb[0].mxu0
      %v1910 = vadd.f32 0.0, %v1909
      %v1911 = vpop.f32.mrb[0].mxu0
      %1912 = vmatprep.mubr.f32.mxu0 0.0
      %1913 = vmatmul.mubr.f32.gmra.mrb[0].mxu0 %v1193
      %v1914 = vpop.f32.mrb[0].mxu0
      %v1915 = vadd.f32 0.0, %v1914
      %v1916 = vpop.f32.mrb[0].mxu0
      %1917 = vmatprep.mubr.f32.mxu0 0.0
      %1918 = vmatmul.mubr.f32.gmra.mrb[0].mxu0 %v1195
      %v1919 = vpop.f32.mrb[0].mxu0
      %v1920 = vadd.f32 0.0, %v1919
      %v1921 = vpop.f32.mrb[0].mxu0
      %1922 = vmatprep.mubr.f32.mxu0 0.0
      %1923 = vmatmul.mubr.f32.gmra.mrb[0].mxu0 %v1197
      %v1924 = vpop.f32.mrb[0].mxu0
      %v1925 = vadd.f32 0.0, %v1924
      %v1926 = vpop.f32.mrb[0].mxu0
      %1927 = vmatprep.mubr.f32.mxu0 0.0
      %1928 = vmatmul.mubr.f32.gmra.mrb[0].mxu0 %v1199
      %v1929 = vpop.f32.mrb[0].mxu0
      %v1930 = vadd.f32 0.0, %v1929
      %v1931 = vpop.f32.mrb[0].mxu0
      %1932 = vmatprep.mubr.f32.mxu0 0.0
      %1933 = vmatmul.mubr.f32.gmra.mrb[0].mxu0 %v1201
      %v1934 = vpop.f32.mrb[0].mxu0
      %v1935 = vadd.f32 0.0, %v1934
      %v1936 = vpop.f32.mrb[0].mxu0
      %1937 = vmatprep.mubr.f32.mxu0 0.0
      %1938 = vmatmul.mubr.f32.gmra.mrb[0].mxu0 %v1203
      %v1939 = vpop.f32.mrb[0].mxu0
      %v1940 = vadd.f32 0.0, %v1939
      %v1941 = vpop.f32.mrb[0].mxu0
      %1942 = vmatprep.mubr.f32.mxu0 0.0
      %1943 = vmatmul.mubr.f32.gmra.mrb[0].mxu0 %v1205
      %v1944 = vpop.f32.mrb[0].mxu0
      %v1945 = vadd.f32 0.0, %v1944
      %v1946 = vpop.f32.mrb[0].mxu0
      %1947 = vmatprep.mubr.f32.mxu0 0.0
      %1948 = vmatmul.mubr.f32.gmra.mrb[0].mxu0 %v1207
      %v1949 = vpop.f32.mrb[0].mxu0
      %v1950 = vadd.f32 0.0, %v1949
      %v1951 = vpop.f32.mrb[0].mxu0
      %1952 = vmatprep.mubr.f32.mxu0 0.0
      %1953 = vmatmul.mubr.f32.gmra.mrb[0].mxu0 %v1209
      %v1954 = vpop.f32.mrb[0].mxu0
      %v1955 = vadd.f32 0.0, %v1954
      %v1956 = vpop.f32.mrb[0].mxu0
      %1957 = vmatprep.mubr.f32.mxu0 0.0
      %1958 = vmatmul.mubr.f32.gmra.mrb[0].mxu0 %v1211
      %v1959 = vpop.f32.mrb[0].mxu0
      %v1960 = vadd.f32 0.0, %v1959
      %v1961 = vpop.f32.mrb[0].mxu0
      %1962 = vmatprep.mubr.f32.mxu0 0.0
      %1963 = vmatmul.mubr.f32.gmra.mrb[0].mxu0 %v1213
      %v1964 = vpop.f32.mrb[0].mxu0
      %v1965 = vadd.f32 0.0, %v1964
      %v1966 = vpop.f32.mrb[0].mxu0
      %1967 = vmatprep.mubr.f32.mxu0 0.0
      %1968 = vmatmul.mubr.f32.gmra.mrb[0].mxu0 %v1806
      %v1969 = vpop.f32.mrb[0].mxu0
      %v1970 = vadd.f32 0.0, %v1969
      %v1971 = vpop.f32.mrb[0].mxu0
      %1972 = vmatprep.mubr.f32.mxu0 0.0
      %1973 = vmatmul.mubr.f32.gmra.mrb[0].mxu0 %v1808
      %v1974 = vpop.f32.mrb[0].mxu0
      %v1975 = vadd.f32 0.0, %v1974
      %v1976 = vpop.f32.mrb[0].mxu0
      %1977 = vdwg.mxu0
      %v1978 = vadd.f32 %v1779, %v1880
      %v1979 = vadd.f32 %v1780, %v1885
      %v1980 = vadd.f32 %v1781, %v1890
      %v1981 = vadd.f32 %v1782, %v1895
      %v1982 = vadd.f32 %v1783, %v1900
      %v1983 = vadd.f32 %v1784, %v1905
      %v1984 = vadd.f32 %v1785, %v1910
      %v1985 = vadd.f32 %v1786, %v1915
      %v1986 = vadd.f32 %v1787, %v1920
      %v1987 = vadd.f32 %v1788, %v1925
      %v1988 = vadd.f32 %v1789, %v1930
      %v1989 = vadd.f32 %v1790, %v1935
      %v1990 = vadd.f32 %v1791, %v1940
      %v1991 = vadd.f32 %v1792, %v1945
      %v1992 = vadd.f32 %v1793, %v1950
      %v1993 = vadd.f32 %v1794, %v1955
      %v1994 = vadd.f32 %v1795, %v1960
      %v1995 = vadd.f32 %v1796, %v1965
      %v1996 = vadd.f32 %v1797, %v1970
      %v1997 = vadd.f32 %v1798, %v1975
      %s1998 = scalar_lea.vmem %s3, 24
      %v1999 = vld [vmem:[%s1998] sm:$0xf]
      %v2001 = vsel %vm542, %v618, 0
      %v2004 = vsel %vm542, %v619, 0
      %v2007 = vsel %vm745, %v1999, 0
      %2009 = vmatprep.subr.mxu0 0.0
      %2010 = vmatpush1.msra.mxu0 %v2007
      %2011 = vmatprep.subr.mxu0 0.0
      %2012 = vmatpush1.msra.mxu0 0.0
      %2013 = vmatprep.subr.mxu0 0.0
      %2014 = vmatpush1.msra.mxu0 0.0
      %2015 = vmatprep.subr.mxu0 0.0
      %2016 = vmatpush1.msra.mxu0 0.0
      %2017 = vmatprep.subr.mxu0 0.0
      %2018 = vmatpush1.msra.mxu0 0.0
      %2019 = vmatprep.subr.mxu0 0.0
      %2020 = vmatpush1.msra.mxu0 0.0
      %2021 = vmatprep.subr.mxu0 0.0
      %2022 = vmatpush1.msra.mxu0 0.0
      %2023 = vmatprep.subr.mxu0 0.0
      %2024 = vmatpush1.msra.mxu0 0.0
      %2025 = vmatprep.subr.mxu0 0.0
      %2026 = vmatpush1.msra.mxu0 0.0
      %2027 = vmatprep.subr.mxu0 0.0
      %2028 = vmatpush1.msra.mxu0 0.0
      %2029 = vmatprep.subr.mxu0 0.0
      %2030 = vmatpush1.msra.mxu0 0.0
      %2031 = vmatprep.subr.mxu0 0.0
      %2032 = vmatpush1.msra.mxu0 0.0
      %2033 = vmatprep.subr.mxu0 0.0
      %2034 = vmatpush1.msra.mxu0 0.0
      %2035 = vmatprep.subr.mxu0 0.0
      %2036 = vmatpush1.msra.mxu0 0.0
      %2037 = vmatprep.subr.mxu0 0.0
      %2038 = vmatpush1.msra.mxu0 0.0
      %2039 = vmatprep.subr.mxu0 0.0
      %2040 = vmatpush1.msra.mxu0 0.0
      %2041 = vmatprep.subr.mxu0 0.0
      %2042 = vmatpush1.msra.mxu0 0.0
      %2043 = vmatprep.subr.mxu0 0.0
      %2044 = vmatpush1.msra.mxu0 0.0
      %2045 = vmatprep.subr.mxu0 0.0
      %2046 = vmatpush1.msra.mxu0 0.0
      %2047 = vmatprep.subr.mxu0 0.0
      %2048 = vmatpush1.msra.mxu0 0.0
      %2049 = vmatprep.subr.mxu0 0.0
      %2050 = vmatpush1.msra.mxu0 0.0
      %2051 = vmatprep.subr.mxu0 0.0
      %2052 = vmatpush1.msra.mxu0 0.0
      %2053 = vmatprep.subr.mxu0 0.0
      %2054 = vmatpush1.msra.mxu0 0.0
      %2055 = vmatprep.subr.mxu0 0.0
      %2056 = vmatpush1.msra.mxu0 0.0
      %2057 = vmatprep.subr.mxu0 0.0
      %2058 = vmatpush1.msra.mxu0 0.0
      %2059 = vmatprep.subr.mxu0 0.0
      %2060 = vmatpush1.msra.mxu0 0.0
      %2061 = vmatprep.subr.mxu0 0.0
      %2062 = vmatpush1.msra.mxu0 0.0
      %2063 = vmatprep.subr.mxu0 0.0
      %2064 = vmatpush1.msra.mxu0 0.0
      %2065 = vmatprep.subr.mxu0 0.0
      %2066 = vmatpush1.msra.mxu0 0.0
      %2067 = vmatprep.subr.mxu0 0.0
      %2068 = vmatpush1.msra.mxu0 0.0
      %2069 = vmatprep.subr.mxu0 0.0
      %2070 = vmatpush1.msra.mxu0 0.0
      %2071 = vmatprep.subr.mxu0 0.0
      %2072 = vmatpush1.msra.mxu0 0.0
      %2073 = vmatprep.mubr.f32.mxu0 0.0
      %2074 = vmatmul.mubr.f32.gmra.mrb[0].mxu0 %v922
      %v2075 = vpop.f32.mrb[0].mxu0
      %v2076 = vadd.f32 0.0, %v2075
      %v2077 = vpop.f32.mrb[0].mxu0
      %2078 = vmatprep.mubr.f32.mxu0 0.0
      %2079 = vmatmul.mubr.f32.gmra.mrb[0].mxu0 %v924
      %v2080 = vpop.f32.mrb[0].mxu0
      %v2081 = vadd.f32 0.0, %v2080
      %v2082 = vpop.f32.mrb[0].mxu0
      %2083 = vmatprep.mubr.f32.mxu0 0.0
      %2084 = vmatmul.mubr.f32.gmra.mrb[0].mxu0 %v926
      %v2085 = vpop.f32.mrb[0].mxu0
      %v2086 = vadd.f32 0.0, %v2085
      %v2087 = vpop.f32.mrb[0].mxu0
      %2088 = vmatprep.mubr.f32.mxu0 0.0
      %2089 = vmatmul.mubr.f32.gmra.mrb[0].mxu0 %v928
      %v2090 = vpop.f32.mrb[0].mxu0
      %v2091 = vadd.f32 0.0, %v2090
      %v2092 = vpop.f32.mrb[0].mxu0
      %2093 = vmatprep.mubr.f32.mxu0 0.0
      %2094 = vmatmul.mubr.f32.gmra.mrb[0].mxu0 %v930
      %v2095 = vpop.f32.mrb[0].mxu0
      %v2096 = vadd.f32 0.0, %v2095
      %v2097 = vpop.f32.mrb[0].mxu0
      %2098 = vmatprep.mubr.f32.mxu0 0.0
      %2099 = vmatmul.mubr.f32.gmra.mrb[0].mxu0 %v932
      %v2100 = vpop.f32.mrb[0].mxu0
      %v2101 = vadd.f32 0.0, %v2100
      %v2102 = vpop.f32.mrb[0].mxu0
      %2103 = vmatprep.mubr.f32.mxu0 0.0
      %2104 = vmatmul.mubr.f32.gmra.mrb[0].mxu0 %v934
      %v2105 = vpop.f32.mrb[0].mxu0
      %v2106 = vadd.f32 0.0, %v2105
      %v2107 = vpop.f32.mrb[0].mxu0
      %2108 = vmatprep.mubr.f32.mxu0 0.0
      %2109 = vmatmul.mubr.f32.gmra.mrb[0].mxu0 %v936
      %v2110 = vpop.f32.mrb[0].mxu0
      %v2111 = vadd.f32 0.0, %v2110
      %v2112 = vpop.f32.mrb[0].mxu0
      %2113 = vmatprep.mubr.f32.mxu0 0.0
      %2114 = vmatmul.mubr.f32.gmra.mrb[0].mxu0 %v938
      %v2115 = vpop.f32.mrb[0].mxu0
      %v2116 = vadd.f32 0.0, %v2115
      %v2117 = vpop.f32.mrb[0].mxu0
      %2118 = vmatprep.mubr.f32.mxu0 0.0
      %2119 = vmatmul.mubr.f32.gmra.mrb[0].mxu0 %v940
      %v2120 = vpop.f32.mrb[0].mxu0
      %v2121 = vadd.f32 0.0, %v2120
      %v2122 = vpop.f32.mrb[0].mxu0
      %2123 = vmatprep.mubr.f32.mxu0 0.0
      %2124 = vmatmul.mubr.f32.gmra.mrb[0].mxu0 %v942
      %v2125 = vpop.f32.mrb[0].mxu0
      %v2126 = vadd.f32 0.0, %v2125
      %v2127 = vpop.f32.mrb[0].mxu0
      %2128 = vmatprep.mubr.f32.mxu0 0.0
      %2129 = vmatmul.mubr.f32.gmra.mrb[0].mxu0 %v944
      %v2130 = vpop.f32.mrb[0].mxu0
      %v2131 = vadd.f32 0.0, %v2130
      %v2132 = vpop.f32.mrb[0].mxu0
      %2133 = vmatprep.mubr.f32.mxu0 0.0
      %2134 = vmatmul.mubr.f32.gmra.mrb[0].mxu0 %v946
      %v2135 = vpop.f32.mrb[0].mxu0
      %v2136 = vadd.f32 0.0, %v2135
      %v2137 = vpop.f32.mrb[0].mxu0
      %2138 = vmatprep.mubr.f32.mxu0 0.0
      %2139 = vmatmul.mubr.f32.gmra.mrb[0].mxu0 %v948
      %v2140 = vpop.f32.mrb[0].mxu0
      %v2141 = vadd.f32 0.0, %v2140
      %v2142 = vpop.f32.mrb[0].mxu0
      %2143 = vmatprep.mubr.f32.mxu0 0.0
      %2144 = vmatmul.mubr.f32.gmra.mrb[0].mxu0 %v950
      %v2145 = vpop.f32.mrb[0].mxu0
      %v2146 = vadd.f32 0.0, %v2145
      %v2147 = vpop.f32.mrb[0].mxu0
      %2148 = vmatprep.mubr.f32.mxu0 0.0
      %2149 = vmatmul.mubr.f32.gmra.mrb[0].mxu0 %v952
      %v2150 = vpop.f32.mrb[0].mxu0
      %v2151 = vadd.f32 0.0, %v2150
      %v2152 = vpop.f32.mrb[0].mxu0
      %2153 = vmatprep.mubr.f32.mxu0 0.0
      %2154 = vmatmul.mubr.f32.gmra.mrb[0].mxu0 %v1406
      %v2155 = vpop.f32.mrb[0].mxu0
      %v2156 = vadd.f32 0.0, %v2155
      %v2157 = vpop.f32.mrb[0].mxu0
      %2158 = vmatprep.mubr.f32.mxu0 0.0
      %2159 = vmatmul.mubr.f32.gmra.mrb[0].mxu0 %v1409
      %v2160 = vpop.f32.mrb[0].mxu0
      %v2161 = vadd.f32 0.0, %v2160
      %v2162 = vpop.f32.mrb[0].mxu0
      %2163 = vmatprep.mubr.f32.mxu0 0.0
      %2164 = vmatmul.mubr.f32.gmra.mrb[0].mxu0 %v2001
      %v2165 = vpop.f32.mrb[0].mxu0
      %v2166 = vadd.f32 0.0, %v2165
      %v2167 = vpop.f32.mrb[0].mxu0
      %2168 = vmatprep.mubr.f32.mxu0 0.0
      %2169 = vmatmul.mubr.f32.gmra.mrb[0].mxu0 %v2004
      %v2170 = vpop.f32.mrb[0].mxu0
      %v2171 = vadd.f32 0.0, %v2170
      %v2172 = vpop.f32.mrb[0].mxu0
      %2173 = vdwg.mxu0
      %v2174 = vadd.f32 %v1978, %v2076
      %v2175 = vadd.f32 %v1979, %v2081
      %v2176 = vadd.f32 %v1980, %v2086
      %v2177 = vadd.f32 %v1981, %v2091
      %v2178 = vadd.f32 %v1982, %v2096
      %v2179 = vadd.f32 %v1983, %v2101
      %v2180 = vadd.f32 %v1984, %v2106
      %v2181 = vadd.f32 %v1985, %v2111
      %v2182 = vadd.f32 %v1986, %v2116
      %v2183 = vadd.f32 %v1987, %v2121
      %v2184 = vadd.f32 %v1988, %v2126
      %v2185 = vadd.f32 %v1989, %v2131
      %v2186 = vadd.f32 %v1990, %v2136
      %v2187 = vadd.f32 %v1991, %v2141
      %v2188 = vadd.f32 %v1992, %v2146
      %v2189 = vadd.f32 %v1993, %v2151
      %v2190 = vadd.f32 %v1994, %v2156
      %v2191 = vadd.f32 %v1995, %v2161
      %v2192 = vadd.f32 %v1996, %v2166
      %v2193 = vadd.f32 %v1997, %v2171
      %v2195 = vrot.slane %v618, 1
      %v2196 = vrot.slane %v619, 1
      %v2197 = vsel %vm652, %v2195, %v2196
      %v2198 = vrot.slane %v620, 1
      %v2199 = vsel %vm652, %v2196, %v2198
      %s2200 = scalar_lea.vmem %s3, 28
      %v2201 = vld [vmem:[%s2200] sm:$0xf]
      %v2202 = vsel %vm542, %v2197, 0
      %v2204 = vsel %vm542, %v2199, 0
      %v2207 = vsel %vm745, %v2201, 0
      %2209 = vmatprep.subr.mxu0 0.0
      %2210 = vmatpush1.msra.mxu0 %v2207
      %2211 = vmatprep.subr.mxu0 0.0
      %2212 = vmatpush1.msra.mxu0 0.0
      %2213 = vmatprep.subr.mxu0 0.0
      %2214 = vmatpush1.msra.mxu0 0.0
      %2215 = vmatprep.subr.mxu0 0.0
      %2216 = vmatpush1.msra.mxu0 0.0
      %2217 = vmatprep.subr.mxu0 0.0
      %2218 = vmatpush1.msra.mxu0 0.0
      %2219 = vmatprep.subr.mxu0 0.0
      %2220 = vmatpush1.msra.mxu0 0.0
      %2221 = vmatprep.subr.mxu0 0.0
      %2222 = vmatpush1.msra.mxu0 0.0
      %2223 = vmatprep.subr.mxu0 0.0
      %2224 = vmatpush1.msra.mxu0 0.0
      %2225 = vmatprep.subr.mxu0 0.0
      %2226 = vmatpush1.msra.mxu0 0.0
      %2227 = vmatprep.subr.mxu0 0.0
      %2228 = vmatpush1.msra.mxu0 0.0
      %2229 = vmatprep.subr.mxu0 0.0
      %2230 = vmatpush1.msra.mxu0 0.0
      %2231 = vmatprep.subr.mxu0 0.0
      %2232 = vmatpush1.msra.mxu0 0.0
      %2233 = vmatprep.subr.mxu0 0.0
      %2234 = vmatpush1.msra.mxu0 0.0
      %2235 = vmatprep.subr.mxu0 0.0
      %2236 = vmatpush1.msra.mxu0 0.0
      %2237 = vmatprep.subr.mxu0 0.0
      %2238 = vmatpush1.msra.mxu0 0.0
      %2239 = vmatprep.subr.mxu0 0.0
      %2240 = vmatpush1.msra.mxu0 0.0
      %2241 = vmatprep.subr.mxu0 0.0
      %2242 = vmatpush1.msra.mxu0 0.0
      %2243 = vmatprep.subr.mxu0 0.0
      %2244 = vmatpush1.msra.mxu0 0.0
      %2245 = vmatprep.subr.mxu0 0.0
      %2246 = vmatpush1.msra.mxu0 0.0
      %2247 = vmatprep.subr.mxu0 0.0
      %2248 = vmatpush1.msra.mxu0 0.0
      %2249 = vmatprep.subr.mxu0 0.0
      %2250 = vmatpush1.msra.mxu0 0.0
      %2251 = vmatprep.subr.mxu0 0.0
      %2252 = vmatpush1.msra.mxu0 0.0
      %2253 = vmatprep.subr.mxu0 0.0
      %2254 = vmatpush1.msra.mxu0 0.0
      %2255 = vmatprep.subr.mxu0 0.0
      %2256 = vmatpush1.msra.mxu0 0.0
      %2257 = vmatprep.subr.mxu0 0.0
      %2258 = vmatpush1.msra.mxu0 0.0
      %2259 = vmatprep.subr.mxu0 0.0
      %2260 = vmatpush1.msra.mxu0 0.0
      %2261 = vmatprep.subr.mxu0 0.0
      %2262 = vmatpush1.msra.mxu0 0.0
      %2263 = vmatprep.subr.mxu0 0.0
      %2264 = vmatpush1.msra.mxu0 0.0
      %2265 = vmatprep.subr.mxu0 0.0
      %2266 = vmatpush1.msra.mxu0 0.0
      %2267 = vmatprep.subr.mxu0 0.0
      %2268 = vmatpush1.msra.mxu0 0.0
      %2269 = vmatprep.subr.mxu0 0.0
      %2270 = vmatpush1.msra.mxu0 0.0
      %2271 = vmatprep.subr.mxu0 0.0
      %2272 = vmatpush1.msra.mxu0 0.0
      %2273 = vmatprep.mubr.f32.mxu0 0.0
      %2274 = vmatmul.mubr.f32.gmra.mrb[0].mxu0 %v713
      %v2275 = vpop.f32.mrb[0].mxu0
      %v2276 = vadd.f32 0.0, %v2275
      %v2277 = vpop.f32.mrb[0].mxu0
      %2278 = vmatprep.mubr.f32.mxu0 0.0
      %2279 = vmatmul.mubr.f32.gmra.mrb[0].mxu0 %v715
      %v2280 = vpop.f32.mrb[0].mxu0
      %v2281 = vadd.f32 0.0, %v2280
      %v2282 = vpop.f32.mrb[0].mxu0
      %2283 = vmatprep.mubr.f32.mxu0 0.0
      %2284 = vmatmul.mubr.f32.gmra.mrb[0].mxu0 %v717
      %v2285 = vpop.f32.mrb[0].mxu0
      %v2286 = vadd.f32 0.0, %v2285
      %v2287 = vpop.f32.mrb[0].mxu0
      %2288 = vmatprep.mubr.f32.mxu0 0.0
      %2289 = vmatmul.mubr.f32.gmra.mrb[0].mxu0 %v719
      %v2290 = vpop.f32.mrb[0].mxu0
      %v2291 = vadd.f32 0.0, %v2290
      %v2292 = vpop.f32.mrb[0].mxu0
      %2293 = vmatprep.mubr.f32.mxu0 0.0
      %2294 = vmatmul.mubr.f32.gmra.mrb[0].mxu0 %v721
      %v2295 = vpop.f32.mrb[0].mxu0
      %v2296 = vadd.f32 0.0, %v2295
      %v2297 = vpop.f32.mrb[0].mxu0
      %2298 = vmatprep.mubr.f32.mxu0 0.0
      %2299 = vmatmul.mubr.f32.gmra.mrb[0].mxu0 %v723
      %v2300 = vpop.f32.mrb[0].mxu0
      %v2301 = vadd.f32 0.0, %v2300
      %v2302 = vpop.f32.mrb[0].mxu0
      %2303 = vmatprep.mubr.f32.mxu0 0.0
      %2304 = vmatmul.mubr.f32.gmra.mrb[0].mxu0 %v725
      %v2305 = vpop.f32.mrb[0].mxu0
      %v2306 = vadd.f32 0.0, %v2305
      %v2307 = vpop.f32.mrb[0].mxu0
      %2308 = vmatprep.mubr.f32.mxu0 0.0
      %2309 = vmatmul.mubr.f32.gmra.mrb[0].mxu0 %v727
      %v2310 = vpop.f32.mrb[0].mxu0
      %v2311 = vadd.f32 0.0, %v2310
      %v2312 = vpop.f32.mrb[0].mxu0
      %2313 = vmatprep.mubr.f32.mxu0 0.0
      %2314 = vmatmul.mubr.f32.gmra.mrb[0].mxu0 %v729
      %v2315 = vpop.f32.mrb[0].mxu0
      %v2316 = vadd.f32 0.0, %v2315
      %v2317 = vpop.f32.mrb[0].mxu0
      %2318 = vmatprep.mubr.f32.mxu0 0.0
      %2319 = vmatmul.mubr.f32.gmra.mrb[0].mxu0 %v731
      %v2320 = vpop.f32.mrb[0].mxu0
      %v2321 = vadd.f32 0.0, %v2320
      %v2322 = vpop.f32.mrb[0].mxu0
      %2323 = vmatprep.mubr.f32.mxu0 0.0
      %2324 = vmatmul.mubr.f32.gmra.mrb[0].mxu0 %v733
      %v2325 = vpop.f32.mrb[0].mxu0
      %v2326 = vadd.f32 0.0, %v2325
      %v2327 = vpop.f32.mrb[0].mxu0
      %2328 = vmatprep.mubr.f32.mxu0 0.0
      %2329 = vmatmul.mubr.f32.gmra.mrb[0].mxu0 %v735
      %v2330 = vpop.f32.mrb[0].mxu0
      %v2331 = vadd.f32 0.0, %v2330
      %v2332 = vpop.f32.mrb[0].mxu0
      %2333 = vmatprep.mubr.f32.mxu0 0.0
      %2334 = vmatmul.mubr.f32.gmra.mrb[0].mxu0 %v737
      %v2335 = vpop.f32.mrb[0].mxu0
      %v2336 = vadd.f32 0.0, %v2335
      %v2337 = vpop.f32.mrb[0].mxu0
      %2338 = vmatprep.mubr.f32.mxu0 0.0
      %2339 = vmatmul.mubr.f32.gmra.mrb[0].mxu0 %v739
      %v2340 = vpop.f32.mrb[0].mxu0
      %v2341 = vadd.f32 0.0, %v2340
      %v2342 = vpop.f32.mrb[0].mxu0
      %2343 = vmatprep.mubr.f32.mxu0 0.0
      %2344 = vmatmul.mubr.f32.gmra.mrb[0].mxu0 %v741
      %v2345 = vpop.f32.mrb[0].mxu0
      %v2346 = vadd.f32 0.0, %v2345
      %v2347 = vpop.f32.mrb[0].mxu0
      %2348 = vmatprep.mubr.f32.mxu0 0.0
      %2349 = vmatmul.mubr.f32.gmra.mrb[0].mxu0 %v743
      %v2350 = vpop.f32.mrb[0].mxu0
      %v2351 = vadd.f32 0.0, %v2350
      %v2352 = vpop.f32.mrb[0].mxu0
      %2353 = vmatprep.mubr.f32.mxu0 0.0
      %2354 = vmatmul.mubr.f32.gmra.mrb[0].mxu0 %v1607
      %v2355 = vpop.f32.mrb[0].mxu0
      %v2356 = vadd.f32 0.0, %v2355
      %v2357 = vpop.f32.mrb[0].mxu0
      %2358 = vmatprep.mubr.f32.mxu0 0.0
      %2359 = vmatmul.mubr.f32.gmra.mrb[0].mxu0 %v1609
      %v2360 = vpop.f32.mrb[0].mxu0
      %v2361 = vadd.f32 0.0, %v2360
      %v2362 = vpop.f32.mrb[0].mxu0
      %2363 = vmatprep.mubr.f32.mxu0 0.0
      %2364 = vmatmul.mubr.f32.gmra.mrb[0].mxu0 %v2202
      %v2365 = vpop.f32.mrb[0].mxu0
      %v2366 = vadd.f32 0.0, %v2365
      %v2367 = vpop.f32.mrb[0].mxu0
      %2368 = vmatprep.mubr.f32.mxu0 0.0
      %2369 = vmatmul.mubr.f32.gmra.mrb[0].mxu0 %v2204
      %v2370 = vpop.f32.mrb[0].mxu0
      %v2371 = vadd.f32 0.0, %v2370
      %v2372 = vpop.f32.mrb[0].mxu0
      %2373 = vdwg.mxu0
      %v2374 = vadd.f32 %v2174, %v2276
      %v2375 = vadd.f32 %v2175, %v2281
      %v2376 = vadd.f32 %v2176, %v2286
      %v2377 = vadd.f32 %v2177, %v2291
      %v2378 = vadd.f32 %v2178, %v2296
      %v2379 = vadd.f32 %v2179, %v2301
      %v2380 = vadd.f32 %v2180, %v2306
      %v2381 = vadd.f32 %v2181, %v2311
      %v2382 = vadd.f32 %v2182, %v2316
      %v2383 = vadd.f32 %v2183, %v2321
      %v2384 = vadd.f32 %v2184, %v2326
      %v2385 = vadd.f32 %v2185, %v2331
      %v2386 = vadd.f32 %v2186, %v2336
      %v2387 = vadd.f32 %v2187, %v2341
      %v2388 = vadd.f32 %v2188, %v2346
      %v2389 = vadd.f32 %v2189, %v2351
      %v2390 = vadd.f32 %v2190, %v2356
      %v2391 = vadd.f32 %v2191, %v2361
      %v2392 = vadd.f32 %v2192, %v2366
      %v2393 = vadd.f32 %v2193, %v2371
      %v2394 = vrot.slane %v618, 2
      %v2395 = vrot.slane %v619, 2
      %v2396 = vsel %vm1122, %v2394, %v2395
      %v2397 = vrot.slane %v620, 2
      %v2398 = vsel %vm1122, %v2395, %v2397
      %s2399 = scalar_lea.vmem %s3, 32
      %v2400 = vld [vmem:[%s2399] sm:$0xf]
      %v2401 = vsel %vm542, %v2396, 0
      %v2403 = vsel %vm542, %v2398, 0
      %v2406 = vsel %vm745, %v2400, 0
      %2408 = vmatprep.subr.mxu0 0.0
      %2409 = vmatpush1.msra.mxu0 %v2406
      %2410 = vmatprep.subr.mxu0 0.0
      %2411 = vmatpush1.msra.mxu0 0.0
      %2412 = vmatprep.subr.mxu0 0.0
      %2413 = vmatpush1.msra.mxu0 0.0
      %2414 = vmatprep.subr.mxu0 0.0
      %2415 = vmatpush1.msra.mxu0 0.0
      %2416 = vmatprep.subr.mxu0 0.0
      %2417 = vmatpush1.msra.mxu0 0.0
      %2418 = vmatprep.subr.mxu0 0.0
      %2419 = vmatpush1.msra.mxu0 0.0
      %2420 = vmatprep.subr.mxu0 0.0
      %2421 = vmatpush1.msra.mxu0 0.0
      %2422 = vmatprep.subr.mxu0 0.0
      %2423 = vmatpush1.msra.mxu0 0.0
      %2424 = vmatprep.subr.mxu0 0.0
      %2425 = vmatpush1.msra.mxu0 0.0
      %2426 = vmatprep.subr.mxu0 0.0
      %2427 = vmatpush1.msra.mxu0 0.0
      %2428 = vmatprep.subr.mxu0 0.0
      %2429 = vmatpush1.msra.mxu0 0.0
      %2430 = vmatprep.subr.mxu0 0.0
      %2431 = vmatpush1.msra.mxu0 0.0
      %2432 = vmatprep.subr.mxu0 0.0
      %2433 = vmatpush1.msra.mxu0 0.0
      %2434 = vmatprep.subr.mxu0 0.0
      %2435 = vmatpush1.msra.mxu0 0.0
      %2436 = vmatprep.subr.mxu0 0.0
      %2437 = vmatpush1.msra.mxu0 0.0
      %2438 = vmatprep.subr.mxu0 0.0
      %2439 = vmatpush1.msra.mxu0 0.0
      %2440 = vmatprep.subr.mxu0 0.0
      %2441 = vmatpush1.msra.mxu0 0.0
      %2442 = vmatprep.subr.mxu0 0.0
      %2443 = vmatpush1.msra.mxu0 0.0
      %2444 = vmatprep.subr.mxu0 0.0
      %2445 = vmatpush1.msra.mxu0 0.0
      %2446 = vmatprep.subr.mxu0 0.0
      %2447 = vmatpush1.msra.mxu0 0.0
      %2448 = vmatprep.subr.mxu0 0.0
      %2449 = vmatpush1.msra.mxu0 0.0
      %2450 = vmatprep.subr.mxu0 0.0
      %2451 = vmatpush1.msra.mxu0 0.0
      %2452 = vmatprep.subr.mxu0 0.0
      %2453 = vmatpush1.msra.mxu0 0.0
      %2454 = vmatprep.subr.mxu0 0.0
      %2455 = vmatpush1.msra.mxu0 0.0
      %2456 = vmatprep.subr.mxu0 0.0
      %2457 = vmatpush1.msra.mxu0 0.0
      %2458 = vmatprep.subr.mxu0 0.0
      %2459 = vmatpush1.msra.mxu0 0.0
      %2460 = vmatprep.subr.mxu0 0.0
      %2461 = vmatpush1.msra.mxu0 0.0
      %2462 = vmatprep.subr.mxu0 0.0
      %2463 = vmatpush1.msra.mxu0 0.0
      %2464 = vmatprep.subr.mxu0 0.0
      %2465 = vmatpush1.msra.mxu0 0.0
      %2466 = vmatprep.subr.mxu0 0.0
      %2467 = vmatpush1.msra.mxu0 0.0
      %2468 = vmatprep.subr.mxu0 0.0
      %2469 = vmatpush1.msra.mxu0 0.0
      %2470 = vmatprep.subr.mxu0 0.0
      %2471 = vmatpush1.msra.mxu0 0.0
      %2472 = vmatprep.mubr.f32.mxu0 0.0
      %2473 = vmatmul.mubr.f32.gmra.mrb[0].mxu0 %v1183
      %v2474 = vpop.f32.mrb[0].mxu0
      %v2475 = vadd.f32 0.0, %v2474
      %v2476 = vpop.f32.mrb[0].mxu0
      %2477 = vmatprep.mubr.f32.mxu0 0.0
      %2478 = vmatmul.mubr.f32.gmra.mrb[0].mxu0 %v1185
      %v2479 = vpop.f32.mrb[0].mxu0
      %v2480 = vadd.f32 0.0, %v2479
      %v2481 = vpop.f32.mrb[0].mxu0
      %2482 = vmatprep.mubr.f32.mxu0 0.0
      %2483 = vmatmul.mubr.f32.gmra.mrb[0].mxu0 %v1187
      %v2484 = vpop.f32.mrb[0].mxu0
      %v2485 = vadd.f32 0.0, %v2484
      %v2486 = vpop.f32.mrb[0].mxu0
      %2487 = vmatprep.mubr.f32.mxu0 0.0
      %2488 = vmatmul.mubr.f32.gmra.mrb[0].mxu0 %v1189
      %v2489 = vpop.f32.mrb[0].mxu0
      %v2490 = vadd.f32 0.0, %v2489
      %v2491 = vpop.f32.mrb[0].mxu0
      %2492 = vmatprep.mubr.f32.mxu0 0.0
      %2493 = vmatmul.mubr.f32.gmra.mrb[0].mxu0 %v1191
      %v2494 = vpop.f32.mrb[0].mxu0
      %v2495 = vadd.f32 0.0, %v2494
      %v2496 = vpop.f32.mrb[0].mxu0
      %2497 = vmatprep.mubr.f32.mxu0 0.0
      %2498 = vmatmul.mubr.f32.gmra.mrb[0].mxu0 %v1193
      %v2499 = vpop.f32.mrb[0].mxu0
      %v2500 = vadd.f32 0.0, %v2499
      %v2501 = vpop.f32.mrb[0].mxu0
      %2502 = vmatprep.mubr.f32.mxu0 0.0
      %2503 = vmatmul.mubr.f32.gmra.mrb[0].mxu0 %v1195
      %v2504 = vpop.f32.mrb[0].mxu0
      %v2505 = vadd.f32 0.0, %v2504
      %v2506 = vpop.f32.mrb[0].mxu0
      %2507 = vmatprep.mubr.f32.mxu0 0.0
      %2508 = vmatmul.mubr.f32.gmra.mrb[0].mxu0 %v1197
      %v2509 = vpop.f32.mrb[0].mxu0
      %v2510 = vadd.f32 0.0, %v2509
      %v2511 = vpop.f32.mrb[0].mxu0
      %2512 = vmatprep.mubr.f32.mxu0 0.0
      %2513 = vmatmul.mubr.f32.gmra.mrb[0].mxu0 %v1199
      %v2514 = vpop.f32.mrb[0].mxu0
      %v2515 = vadd.f32 0.0, %v2514
      %v2516 = vpop.f32.mrb[0].mxu0
      %2517 = vmatprep.mubr.f32.mxu0 0.0
      %2518 = vmatmul.mubr.f32.gmra.mrb[0].mxu0 %v1201
      %v2519 = vpop.f32.mrb[0].mxu0
      %v2520 = vadd.f32 0.0, %v2519
      %v2521 = vpop.f32.mrb[0].mxu0
      %2522 = vmatprep.mubr.f32.mxu0 0.0
      %2523 = vmatmul.mubr.f32.gmra.mrb[0].mxu0 %v1203
      %v2524 = vpop.f32.mrb[0].mxu0
      %v2525 = vadd.f32 0.0, %v2524
      %v2526 = vpop.f32.mrb[0].mxu0
      %2527 = vmatprep.mubr.f32.mxu0 0.0
      %2528 = vmatmul.mubr.f32.gmra.mrb[0].mxu0 %v1205
      %v2529 = vpop.f32.mrb[0].mxu0
      %v2530 = vadd.f32 0.0, %v2529
      %v2531 = vpop.f32.mrb[0].mxu0
      %2532 = vmatprep.mubr.f32.mxu0 0.0
      %2533 = vmatmul.mubr.f32.gmra.mrb[0].mxu0 %v1207
      %v2534 = vpop.f32.mrb[0].mxu0
      %v2535 = vadd.f32 0.0, %v2534
      %v2536 = vpop.f32.mrb[0].mxu0
      %2537 = vmatprep.mubr.f32.mxu0 0.0
      %2538 = vmatmul.mubr.f32.gmra.mrb[0].mxu0 %v1209
      %v2539 = vpop.f32.mrb[0].mxu0
      %v2540 = vadd.f32 0.0, %v2539
      %v2541 = vpop.f32.mrb[0].mxu0
      %2542 = vmatprep.mubr.f32.mxu0 0.0
      %2543 = vmatmul.mubr.f32.gmra.mrb[0].mxu0 %v1211
      %v2544 = vpop.f32.mrb[0].mxu0
      %v2545 = vadd.f32 0.0, %v2544
      %v2546 = vpop.f32.mrb[0].mxu0
      %2547 = vmatprep.mubr.f32.mxu0 0.0
      %2548 = vmatmul.mubr.f32.gmra.mrb[0].mxu0 %v1213
      %v2549 = vpop.f32.mrb[0].mxu0
      %v2550 = vadd.f32 0.0, %v2549
      %v2551 = vpop.f32.mrb[0].mxu0
      %2552 = vmatprep.mubr.f32.mxu0 0.0
      %2553 = vmatmul.mubr.f32.gmra.mrb[0].mxu0 %v1806
      %v2554 = vpop.f32.mrb[0].mxu0
      %v2555 = vadd.f32 0.0, %v2554
      %v2556 = vpop.f32.mrb[0].mxu0
      %2557 = vmatprep.mubr.f32.mxu0 0.0
      %2558 = vmatmul.mubr.f32.gmra.mrb[0].mxu0 %v1808
      %v2559 = vpop.f32.mrb[0].mxu0
      %v2560 = vadd.f32 0.0, %v2559
      %v2561 = vpop.f32.mrb[0].mxu0
      %2562 = vmatprep.mubr.f32.mxu0 0.0
      %2563 = vmatmul.mubr.f32.gmra.mrb[0].mxu0 %v2401
      %v2564 = vpop.f32.mrb[0].mxu0
      %v2565 = vadd.f32 0.0, %v2564
      %v2566 = vpop.f32.mrb[0].mxu0
      %2567 = vmatprep.mubr.f32.mxu0 0.0
      %2568 = vmatmul.mubr.f32.gmra.mrb[0].mxu0 %v2403
      %v2569 = vpop.f32.mrb[0].mxu0
      %v2570 = vadd.f32 0.0, %v2569
      %v2571 = vpop.f32.mrb[0].mxu0
      %2572 = vdwg.mxu0
      %v2573 = vadd.f32 %v2374, %v2475
      %v2574 = vadd.f32 %v2375, %v2480
      %v2575 = vadd.f32 %v2376, %v2485
      %v2576 = vadd.f32 %v2377, %v2490
      %v2577 = vadd.f32 %v2378, %v2495
      %v2578 = vadd.f32 %v2379, %v2500
      %v2579 = vadd.f32 %v2380, %v2505
      %v2580 = vadd.f32 %v2381, %v2510
      %v2581 = vadd.f32 %v2382, %v2515
      %v2582 = vadd.f32 %v2383, %v2520
      %v2583 = vadd.f32 %v2384, %v2525
      %v2584 = vadd.f32 %v2385, %v2530
      %v2585 = vadd.f32 %v2386, %v2535
      %v2586 = vadd.f32 %v2387, %v2540
      %v2587 = vadd.f32 %v2388, %v2545
      %v2588 = vadd.f32 %v2389, %v2550
      %v2589 = vadd.f32 %v2390, %v2555
      %v2590 = vadd.f32 %v2391, %v2560
      %v2591 = vadd.f32 %v2392, %v2565
      %v2592 = vadd.f32 %v2393, %v2570
      %v2593 = vld [vmem:[%s4] sm:$0x1]
      %v2595 = vlaneseq
      %v2596 = vshrl.u32 %v2595, 7
      %v2597 = vsub.s32 0, %v2596
      %v2598 = vrot.slane %v2593, %v2597
      %v2600 = vadd.f32 %v2573, %v2598
      %v2601 = vadd.f32 %v2574, %v2598
      %v2602 = vadd.f32 %v2575, %v2598
      %v2603 = vadd.f32 %v2576, %v2598
      %v2604 = vadd.f32 %v2577, %v2598
      %v2605 = vadd.f32 %v2578, %v2598
      %v2606 = vadd.f32 %v2579, %v2598
      %v2607 = vadd.f32 %v2580, %v2598
      %v2608 = vadd.f32 %v2581, %v2598
      %v2609 = vadd.f32 %v2582, %v2598
      %v2610 = vadd.f32 %v2583, %v2598
      %v2611 = vadd.f32 %v2584, %v2598
      %v2612 = vadd.f32 %v2585, %v2598
      %v2613 = vadd.f32 %v2586, %v2598
      %v2614 = vadd.f32 %v2587, %v2598
      %v2615 = vadd.f32 %v2588, %v2598
      %v2616 = vadd.f32 %v2589, %v2598
      %v2617 = vadd.f32 %v2590, %v2598
      %v2618 = vadd.f32 %v2591, %v2598
      %v2619 = vadd.f32 %v2592, %v2598
      %v2620 = vmax.f32 %v2600, 0.0
      %v2621 = vmax.f32 %v2601, 0.0
      %v2622 = vmax.f32 %v2602, 0.0
      %v2623 = vmax.f32 %v2603, 0.0
      %v2624 = vmax.f32 %v2604, 0.0
      %v2625 = vmax.f32 %v2605, 0.0
      %v2626 = vmax.f32 %v2606, 0.0
      %v2627 = vmax.f32 %v2607, 0.0
      %v2628 = vmax.f32 %v2608, 0.0
      %v2629 = vmax.f32 %v2609, 0.0
      %v2630 = vmax.f32 %v2610, 0.0
      %v2631 = vmax.f32 %v2611, 0.0
      %v2632 = vmax.f32 %v2612, 0.0
      %v2633 = vmax.f32 %v2613, 0.0
      %v2634 = vmax.f32 %v2614, 0.0
      %v2635 = vmax.f32 %v2615, 0.0
      %v2636 = vmax.f32 %v2616, 0.0
      %v2637 = vmax.f32 %v2617, 0.0
      %v2638 = vmax.f32 %v2618, 0.0
      %v2639 = vmax.f32 %v2619, 0.0
      %s2640 = smul.u32 %s25, 8
      %s2641 = ssub.s32 %s2640, 1
      %v2642 = vstv %s2641
      %v2643 = vadd.s32 %v2642, 1
      %v2644 = vadd.s32 %v2642, 2
      %v2645 = vadd.s32 %v2642, 3
      %v2646 = vadd.s32 %v2642, 4
      %v2647 = vadd.s32 %v2642, 5
      %v2648 = vadd.s32 %v2642, 6
      %v2649 = vadd.s32 %v2642, 7
      %v2650 = vadd.s32 %v2642, 8
      %v2651 = vadd.s32 %v2642, 9
      %vm2652 = vcmp.ge.s32.totalorder %v2642, 0
      %vm2653 = vcmp.ge.s32.totalorder %v2643, 0
      %vm2654 = vcmp.ge.s32.totalorder %v2644, 0
      %vm2655 = vcmp.ge.s32.totalorder %v2645, 0
      %vm2656 = vcmp.ge.s32.totalorder %v2646, 0
      %vm2657 = vcmp.ge.s32.totalorder %v2647, 0
      %vm2658 = vcmp.ge.s32.totalorder %v2648, 0
      %vm2659 = vcmp.ge.s32.totalorder %v2649, 0
      %vm2660 = vcmp.ge.s32.totalorder %v2650, 0
      %vm2661 = vcmp.ge.s32.totalorder %v2651, 0
      %vm2662 = vcmp.lt.s32.totalorder %v2642, 16
      %vm2663 = vcmp.lt.s32.totalorder %v2643, 16
      %vm2664 = vcmp.lt.s32.totalorder %v2644, 16
      %vm2665 = vcmp.lt.s32.totalorder %v2645, 16
      %vm2666 = vcmp.lt.s32.totalorder %v2646, 16
      %vm2667 = vcmp.lt.s32.totalorder %v2647, 16
      %vm2668 = vcmp.lt.s32.totalorder %v2648, 16
      %vm2669 = vcmp.lt.s32.totalorder %v2649, 16
      %vm2670 = vcmp.lt.s32.totalorder %v2650, 16
      %vm2671 = vcmp.lt.s32.totalorder %v2651, 16
      %vm2672 = vmand %vm2652, %vm2662
      %vm2673 = vmand %vm2653, %vm2663
      %vm2674 = vmand %vm2654, %vm2664
      %vm2675 = vmand %vm2655, %vm2665
      %vm2676 = vmand %vm2656, %vm2666
      %vm2677 = vmand %vm2657, %vm2667
      %vm2678 = vmand %vm2658, %vm2668
      %vm2679 = vmand %vm2659, %vm2669
      %vm2680 = vmand %vm2660, %vm2670
      %vm2681 = vmand %vm2661, %vm2671
      %v2682 = vsel %vm2672, 1, 0
      %v2683 = vsel %vm2673, 1, 0
      %v2684 = vsel %vm2674, 1, 0
      %v2685 = vsel %vm2675, 1, 0
      %v2686 = vsel %vm2676, 1, 0
      %v2687 = vsel %vm2677, 1, 0
      %v2688 = vsel %vm2678, 1, 0
      %v2689 = vsel %vm2679, 1, 0
      %v2690 = vsel %vm2680, 1, 0
      %v2691 = vsel %vm2681, 1, 0
      %v2692 = vcvt.s32.f32 %v2682
      %v2693 = vcvt.s32.f32 %v2683
      %v2694 = vcvt.s32.f32 %v2684
      %v2695 = vcvt.s32.f32 %v2685
      %v2696 = vcvt.s32.f32 %v2686
      %v2697 = vcvt.s32.f32 %v2687
      %v2698 = vcvt.s32.f32 %v2688
      %v2699 = vcvt.s32.f32 %v2689
      %v2700 = vcvt.s32.f32 %v2690
      %v2701 = vcvt.s32.f32 %v2691
      %v2702 = vmul.f32 %v2620, %v2692
      %v2703 = vmul.f32 %v2621, %v2692
      %v2704 = vmul.f32 %v2622, %v2693
      %v2705 = vmul.f32 %v2623, %v2693
      %v2706 = vmul.f32 %v2624, %v2694
      %v2707 = vmul.f32 %v2625, %v2694
      %v2708 = vmul.f32 %v2626, %v2695
      %v2709 = vmul.f32 %v2627, %v2695
      %v2710 = vmul.f32 %v2628, %v2696
      %v2711 = vmul.f32 %v2629, %v2696
      %v2712 = vmul.f32 %v2630, %v2697
      %v2713 = vmul.f32 %v2631, %v2697
      %v2714 = vmul.f32 %v2632, %v2698
      %v2715 = vmul.f32 %v2633, %v2698
      %v2716 = vmul.f32 %v2634, %v2699
      %v2717 = vmul.f32 %v2635, %v2699
      %v2718 = vmul.f32 %v2636, %v2700
      %v2719 = vmul.f32 %v2637, %v2700
      %v2720 = vmul.f32 %v2638, %v2701
      %v2721 = vmul.f32 %v2639, %v2701
      %2722 = vst.msk [vmem:[#allocation3] sm:$0x1] %vm493, 0.0
      %2723 = vst.msk [vmem:[#allocation3 + $0x18] sm:$0x1] %vm493, 0.0
      %2724 = vst.msk [vmem:[#allocation3 + $0x30] sm:$0x1] %vm493, 0.0
      %2725 = vst.msk [vmem:[#allocation3 + $0x48] sm:$0x1] %vm493, 0.0
      %2726 = vst.msk [vmem:[#allocation3 + $0x60] sm:$0x1] %vm493, 0.0
      %2727 = vst.msk [vmem:[#allocation3 + $0x78] sm:$0x1] %vm493, 0.0
      %2728 = vst.msk [vmem:[#allocation3 + $0x90] sm:$0x1] %vm493, 0.0
      %2729 = vst.msk [vmem:[#allocation3 + $0xa8] sm:$0x1] %vm493, 0.0
      %2730 = vst.msk [vmem:[#allocation3 + $0xc0] sm:$0x1] %vm493, 0.0
      %2731 = vst.msk [vmem:[#allocation3 + $0xd8] sm:$0x1] %vm493, 0.0
      %2732 = vst.msk [vmem:[#allocation3 + $0x11] sm:$0x1] %vm493, 0.0
      %2733 = vst.msk [vmem:[#allocation3 + $0x29] sm:$0x1] %vm493, 0.0
      %2734 = vst.msk [vmem:[#allocation3 + $0x41] sm:$0x1] %vm493, 0.0
      %2735 = vst.msk [vmem:[#allocation3 + $0x59] sm:$0x1] %vm493, 0.0
      %2736 = vst.msk [vmem:[#allocation3 + $0x71] sm:$0x1] %vm493, 0.0
      %2737 = vst.msk [vmem:[#allocation3 + $0x89] sm:$0x1] %vm493, 0.0
      %2738 = vst.msk [vmem:[#allocation3 + $0xa1] sm:$0x1] %vm493, 0.0
      %2739 = vst.msk [vmem:[#allocation3 + $0xb9] sm:$0x1] %vm493, 0.0
      %2740 = vst.msk [vmem:[#allocation3 + $0xd1] sm:$0x1] %vm493, 0.0
      %2741 = vst.msk [vmem:[#allocation3 + $0xe9] sm:$0x1] %vm493, 0.0
      %2742 = vst.msk [vmem:[#allocation3 + $0x1] sm:$0xff] %vm542, %v2702
      %2743 = vst.msk [vmem:[#allocation3 + $0x9] sm:$0xff] %vm542, %v2703
      %2744 = vst.msk [vmem:[#allocation3 + $0x19] sm:$0xff] %vm542, %v2704
      %2745 = vst.msk [vmem:[#allocation3 + $0x21] sm:$0xff] %vm542, %v2705
      %2746 = vst.msk [vmem:[#allocation3 + $0x31] sm:$0xff] %vm542, %v2706
      %2747 = vst.msk [vmem:[#allocation3 + $0x39] sm:$0xff] %vm542, %v2707
      %2748 = vst.msk [vmem:[#allocation3 + $0x49] sm:$0xff] %vm542, %v2708
      %2749 = vst.msk [vmem:[#allocation3 + $0x51] sm:$0xff] %vm542, %v2709
      %2750 = vst.msk [vmem:[#allocation3 + $0x61] sm:$0xff] %vm542, %v2710
      %2751 = vst.msk [vmem:[#allocation3 + $0x69] sm:$0xff] %vm542, %v2711
      %2752 = vst.msk [vmem:[#allocation3 + $0x79] sm:$0xff] %vm542, %v2712
      %2753 = vst.msk [vmem:[#allocation3 + $0x81] sm:$0xff] %vm542, %v2713
      %2754 = vst.msk [vmem:[#allocation3 + $0x91] sm:$0xff] %vm542, %v2714
      %2755 = vst.msk [vmem:[#allocation3 + $0x99] sm:$0xff] %vm542, %v2715
      %2756 = vst.msk [vmem:[#allocation3 + $0xa9] sm:$0xff] %vm542, %v2716
      %2757 = vst.msk [vmem:[#allocation3 + $0xb1] sm:$0xff] %vm542, %v2717
      %2758 = vst.msk [vmem:[#allocation3 + $0xc1] sm:$0xff] %vm542, %v2718
      %2759 = vst.msk [vmem:[#allocation3 + $0xc9] sm:$0xff] %vm542, %v2719
      %2760 = vst.msk [vmem:[#allocation3 + $0xd9] sm:$0xff] %vm542, %v2720
      %2761 = vst.msk [vmem:[#allocation3 + $0xe1] sm:$0xff] %vm542, %v2721
      %v2762 = vld [vmem:[#allocation3] sm:$0xff]
      %v2763 = vld [vmem:[#allocation3 + $0x8] sm:$0xff]
      %v2764 = vld [vmem:[#allocation3 + $0x10] sm:$0x3]
      %v2765 = vld [vmem:[#allocation3 + $0x18] sm:$0xff]
      %v2766 = vld [vmem:[#allocation3 + $0x20] sm:$0xff]
      %v2767 = vld [vmem:[#allocation3 + $0x28] sm:$0x3]
      %v2768 = vld [vmem:[#allocation3 + $0x30] sm:$0xff]
      %v2769 = vld [vmem:[#allocation3 + $0x38] sm:$0xff]
      %v2770 = vld [vmem:[#allocation3 + $0x40] sm:$0x3]
      %v2771 = vld [vmem:[#allocation3 + $0x48] sm:$0xff]
      %v2772 = vld [vmem:[#allocation3 + $0x50] sm:$0xff]
      %v2773 = vld [vmem:[#allocation3 + $0x58] sm:$0x3]
      %v2774 = vld [vmem:[#allocation3 + $0x60] sm:$0xff]
      %v2775 = vld [vmem:[#allocation3 + $0x68] sm:$0xff]
      %v2776 = vld [vmem:[#allocation3 + $0x70] sm:$0x3]
      %v2777 = vld [vmem:[#allocation3 + $0x78] sm:$0xff]
      %v2778 = vld [vmem:[#allocation3 + $0x80] sm:$0xff]
      %v2779 = vld [vmem:[#allocation3 + $0x88] sm:$0x3]
      %v2780 = vld [vmem:[#allocation3 + $0x90] sm:$0xff]
      %v2781 = vld [vmem:[#allocation3 + $0x98] sm:$0xff]
      %v2782 = vld [vmem:[#allocation3 + $0xa0] sm:$0x3]
      %v2783 = vld [vmem:[#allocation3 + $0xa8] sm:$0xff]
      %v2784 = vld [vmem:[#allocation3 + $0xb0] sm:$0xff]
      %v2785 = vld [vmem:[#allocation3 + $0xb8] sm:$0x3]
      %v2786 = vld [vmem:[#allocation3 + $0xc0] sm:$0xff]
      %v2787 = vld [vmem:[#allocation3 + $0xc8] sm:$0xff]
      %v2788 = vld [vmem:[#allocation3 + $0xd0] sm:$0x3]
      %v2789 = vld [vmem:[#allocation3 + $0xd8] sm:$0xff]
      %v2790 = vld [vmem:[#allocation3 + $0xe0] sm:$0xff]
      %v2791 = vld [vmem:[#allocation3 + $0xe8] sm:$0x3]
      %v2792 = vld [vmem:[%s5] sm:$0xf]
      %v2817 = vrot.slane %v2762, 1
      %v2818 = vrot.slane %v2763, 1
      %v2819 = vsel %vm652, %v2817, %v2818
      %v2820 = vrot.slane %v2764, 1
      %v2821 = vsel %vm652, %v2818, %v2820
      %v2822 = vrot.slane %v2765, 1
      %v2823 = vrot.slane %v2766, 1
      %v2824 = vsel %vm652, %v2822, %v2823
      %v2825 = vrot.slane %v2767, 1
      %v2826 = vsel %vm652, %v2823, %v2825
      %v2827 = vrot.slane %v2768, 1
      %v2828 = vrot.slane %v2769, 1
      %v2829 = vsel %vm652, %v2827, %v2828
      %v2830 = vrot.slane %v2770, 1
      %v2831 = vsel %vm652, %v2828, %v2830
      %v2832 = vrot.slane %v2771, 1
      %v2833 = vrot.slane %v2772, 1
      %v2834 = vsel %vm652, %v2832, %v2833
      %v2835 = vrot.slane %v2773, 1
      %v2836 = vsel %vm652, %v2833, %v2835
      %v2837 = vrot.slane %v2774, 1
      %v2838 = vrot.slane %v2775, 1
      %v2839 = vsel %vm652, %v2837, %v2838
      %v2840 = vrot.slane %v2776, 1
      %v2841 = vsel %vm652, %v2838, %v2840
      %v2842 = vrot.slane %v2777, 1
      %v2843 = vrot.slane %v2778, 1
      %v2844 = vsel %vm652, %v2842, %v2843
      %v2845 = vrot.slane %v2779, 1
      %v2846 = vsel %vm652, %v2843, %v2845
      %v2847 = vrot.slane %v2780, 1
      %v2848 = vrot.slane %v2781, 1
      %v2849 = vsel %vm652, %v2847, %v2848
      %v2850 = vrot.slane %v2782, 1
      %v2851 = vsel %vm652, %v2848, %v2850
      %v2852 = vrot.slane %v2783, 1
      %v2853 = vrot.slane %v2784, 1
      %v2854 = vsel %vm652, %v2852, %v2853
      %v2855 = vrot.slane %v2785, 1
      %v2856 = vsel %vm652, %v2853, %v2855
      %s2857 = scalar_lea.vmem %s5, 4
      %v2858 = vld [vmem:[%s2857] sm:$0xf]
      %v2859 = vsel %vm542, %v2819, 0
      %v2861 = vsel %vm542, %v2821, 0
      %v2863 = vsel %vm542, %v2824, 0
      %v2865 = vsel %vm542, %v2826, 0
      %v2867 = vsel %vm542, %v2829, 0
      %v2869 = vsel %vm542, %v2831, 0
      %v2871 = vsel %vm542, %v2834, 0
      %v2873 = vsel %vm542, %v2836, 0
      %v2875 = vsel %vm542, %v2839, 0
      %v2877 = vsel %vm542, %v2841, 0
      %v2879 = vsel %vm542, %v2844, 0
      %v2881 = vsel %vm542, %v2846, 0
      %v2883 = vsel %vm542, %v2849, 0
      %v2885 = vsel %vm542, %v2851, 0
      %v2887 = vsel %vm542, %v2854, 0
      %v2889 = vsel %vm542, %v2856, 0
      %v2892 = vsel %vm745, %v2858, 0
      %2894 = vmatprep.subr.mxu0 0.0
      %2895 = vmatpush1.msra.mxu0 %v2892
      %2896 = vmatprep.subr.mxu0 0.0
      %2897 = vmatpush1.msra.mxu0 0.0
      %2898 = vmatprep.subr.mxu0 0.0
      %2899 = vmatpush1.msra.mxu0 0.0
      %2900 = vmatprep.subr.mxu0 0.0
      %2901 = vmatpush1.msra.mxu0 0.0
      %2902 = vmatprep.subr.mxu0 0.0
      %2903 = vmatpush1.msra.mxu0 0.0
      %2904 = vmatprep.subr.mxu0 0.0
      %2905 = vmatpush1.msra.mxu0 0.0
      %2906 = vmatprep.subr.mxu0 0.0
      %2907 = vmatpush1.msra.mxu0 0.0
      %2908 = vmatprep.subr.mxu0 0.0
      %2909 = vmatpush1.msra.mxu0 0.0
      %2910 = vmatprep.subr.mxu0 0.0
      %2911 = vmatpush1.msra.mxu0 0.0
      %2912 = vmatprep.subr.mxu0 0.0
      %2913 = vmatpush1.msra.mxu0 0.0
      %2914 = vmatprep.subr.mxu0 0.0
      %2915 = vmatpush1.msra.mxu0 0.0
      %2916 = vmatprep.subr.mxu0 0.0
      %2917 = vmatpush1.msra.mxu0 0.0
      %2918 = vmatprep.subr.mxu0 0.0
      %2919 = vmatpush1.msra.mxu0 0.0
      %2920 = vmatprep.subr.mxu0 0.0
      %2921 = vmatpush1.msra.mxu0 0.0
      %2922 = vmatprep.subr.mxu0 0.0
      %2923 = vmatpush1.msra.mxu0 0.0
      %2924 = vmatprep.subr.mxu0 0.0
      %2925 = vmatpush1.msra.mxu0 0.0
      %2926 = vmatprep.subr.mxu0 0.0
      %2927 = vmatpush1.msra.mxu0 0.0
      %2928 = vmatprep.subr.mxu0 0.0
      %2929 = vmatpush1.msra.mxu0 0.0
      %2930 = vmatprep.subr.mxu0 0.0
      %2931 = vmatpush1.msra.mxu0 0.0
      %2932 = vmatprep.subr.mxu0 0.0
      %2933 = vmatpush1.msra.mxu0 0.0
      %2934 = vmatprep.subr.mxu0 0.0
      %2935 = vmatpush1.msra.mxu0 0.0
      %2936 = vmatprep.subr.mxu0 0.0
      %2937 = vmatpush1.msra.mxu0 0.0
      %2938 = vmatprep.subr.mxu0 0.0
      %2939 = vmatpush1.msra.mxu0 0.0
      %2940 = vmatprep.subr.mxu0 0.0
      %2941 = vmatpush1.msra.mxu0 0.0
      %2942 = vmatprep.subr.mxu0 0.0
      %2943 = vmatpush1.msra.mxu0 0.0
      %2944 = vmatprep.subr.mxu0 0.0
      %2945 = vmatpush1.msra.mxu0 0.0
      %2946 = vmatprep.subr.mxu0 0.0
      %2947 = vmatpush1.msra.mxu0 0.0
      %2948 = vmatprep.subr.mxu0 0.0
      %2949 = vmatpush1.msra.mxu0 0.0
      %2950 = vmatprep.subr.mxu0 0.0
      %2951 = vmatpush1.msra.mxu0 0.0
      %2952 = vmatprep.subr.mxu0 0.0
      %2953 = vmatpush1.msra.mxu0 0.0
      %2954 = vmatprep.subr.mxu0 0.0
      %2955 = vmatpush1.msra.mxu0 0.0
      %2956 = vmatprep.subr.mxu0 0.0
      %2957 = vmatpush1.msra.mxu0 0.0
      %2958 = vmatprep.mubr.f32.mxu0 0.0
      %2959 = vmatmul.mubr.f32.gmra.mrb[0].mxu0 %v2859
      %v2960 = vpop.f32.mrb[0].mxu0
      %v2961 = vadd.f32 0.0, %v2960
      %v2962 = vpop.f32.mrb[0].mxu0
      %2963 = vmatprep.mubr.f32.mxu0 0.0
      %2964 = vmatmul.mubr.f32.gmra.mrb[0].mxu0 %v2861
      %v2965 = vpop.f32.mrb[0].mxu0
      %v2966 = vadd.f32 0.0, %v2965
      %v2967 = vpop.f32.mrb[0].mxu0
      %2968 = vmatprep.mubr.f32.mxu0 0.0
      %2969 = vmatmul.mubr.f32.gmra.mrb[0].mxu0 %v2863
      %v2970 = vpop.f32.mrb[0].mxu0
      %v2971 = vadd.f32 0.0, %v2970
      %v2972 = vpop.f32.mrb[0].mxu0
      %2973 = vmatprep.mubr.f32.mxu0 0.0
      %2974 = vmatmul.mubr.f32.gmra.mrb[0].mxu0 %v2865
      %v2975 = vpop.f32.mrb[0].mxu0
      %v2976 = vadd.f32 0.0, %v2975
      %v2977 = vpop.f32.mrb[0].mxu0
      %2978 = vmatprep.mubr.f32.mxu0 0.0
      %2979 = vmatmul.mubr.f32.gmra.mrb[0].mxu0 %v2867
      %v2980 = vpop.f32.mrb[0].mxu0
      %v2981 = vadd.f32 0.0, %v2980
      %v2982 = vpop.f32.mrb[0].mxu0
      %2983 = vmatprep.mubr.f32.mxu0 0.0
      %2984 = vmatmul.mubr.f32.gmra.mrb[0].mxu0 %v2869
      %v2985 = vpop.f32.mrb[0].mxu0
      %v2986 = vadd.f32 0.0, %v2985
      %v2987 = vpop.f32.mrb[0].mxu0
      %2988 = vmatprep.mubr.f32.mxu0 0.0
      %2989 = vmatmul.mubr.f32.gmra.mrb[0].mxu0 %v2871
      %v2990 = vpop.f32.mrb[0].mxu0
      %v2991 = vadd.f32 0.0, %v2990
      %v2992 = vpop.f32.mrb[0].mxu0
      %2993 = vmatprep.mubr.f32.mxu0 0.0
      %2994 = vmatmul.mubr.f32.gmra.mrb[0].mxu0 %v2873
      %v2995 = vpop.f32.mrb[0].mxu0
      %v2996 = vadd.f32 0.0, %v2995
      %v2997 = vpop.f32.mrb[0].mxu0
      %2998 = vmatprep.mubr.f32.mxu0 0.0
      %2999 = vmatmul.mubr.f32.gmra.mrb[0].mxu0 %v2875
      %v3000 = vpop.f32.mrb[0].mxu0
      %v3001 = vadd.f32 0.0, %v3000
      %v3002 = vpop.f32.mrb[0].mxu0
      %3003 = vmatprep.mubr.f32.mxu0 0.0
      %3004 = vmatmul.mubr.f32.gmra.mrb[0].mxu0 %v2877
      %v3005 = vpop.f32.mrb[0].mxu0
      %v3006 = vadd.f32 0.0, %v3005
      %v3007 = vpop.f32.mrb[0].mxu0
      %3008 = vmatprep.mubr.f32.mxu0 0.0
      %3009 = vmatmul.mubr.f32.gmra.mrb[0].mxu0 %v2879
      %v3010 = vpop.f32.mrb[0].mxu0
      %v3011 = vadd.f32 0.0, %v3010
      %v3012 = vpop.f32.mrb[0].mxu0
      %3013 = vmatprep.mubr.f32.mxu0 0.0
      %3014 = vmatmul.mubr.f32.gmra.mrb[0].mxu0 %v2881
      %v3015 = vpop.f32.mrb[0].mxu0
      %v3016 = vadd.f32 0.0, %v3015
      %v3017 = vpop.f32.mrb[0].mxu0
      %3018 = vmatprep.mubr.f32.mxu0 0.0
      %3019 = vmatmul.mubr.f32.gmra.mrb[0].mxu0 %v2883
      %v3020 = vpop.f32.mrb[0].mxu0
      %v3021 = vadd.f32 0.0, %v3020
      %v3022 = vpop.f32.mrb[0].mxu0
      %3023 = vmatprep.mubr.f32.mxu0 0.0
      %3024 = vmatmul.mubr.f32.gmra.mrb[0].mxu0 %v2885
      %v3025 = vpop.f32.mrb[0].mxu0
      %v3026 = vadd.f32 0.0, %v3025
      %v3027 = vpop.f32.mrb[0].mxu0
      %3028 = vmatprep.mubr.f32.mxu0 0.0
      %3029 = vmatmul.mubr.f32.gmra.mrb[0].mxu0 %v2887
      %v3030 = vpop.f32.mrb[0].mxu0
      %v3031 = vadd.f32 0.0, %v3030
      %v3032 = vpop.f32.mrb[0].mxu0
      %3033 = vmatprep.mubr.f32.mxu0 0.0
      %3034 = vmatmul.mubr.f32.gmra.mrb[0].mxu0 %v2889
      %v3035 = vpop.f32.mrb[0].mxu0
      %v3036 = vadd.f32 0.0, %v3035
      %v3037 = vpop.f32.mrb[0].mxu0
      %3038 = vdwg.mxu0
      %v3039 = vsel %vm542, %v2762, 0
      %v3041 = vsel %vm542, %v2763, 0
      %v3043 = vsel %vm542, %v2765, 0
      %v3045 = vsel %vm542, %v2766, 0
      %v3047 = vsel %vm542, %v2768, 0
      %v3049 = vsel %vm542, %v2769, 0
      %v3051 = vsel %vm542, %v2771, 0
      %v3053 = vsel %vm542, %v2772, 0
      %v3055 = vsel %vm542, %v2774, 0
      %v3057 = vsel %vm542, %v2775, 0
      %v3059 = vsel %vm542, %v2777, 0
      %v3061 = vsel %vm542, %v2778, 0
      %v3063 = vsel %vm542, %v2780, 0
      %v3065 = vsel %vm542, %v2781, 0
      %v3067 = vsel %vm542, %v2783, 0
      %v3069 = vsel %vm542, %v2784, 0
      %v3072 = vsel %vm745, %v2792, 0
      %3074 = vmatprep.subr.mxu0 0.0
      %3075 = vmatpush1.msra.mxu0 %v3072
      %3076 = vmatprep.subr.mxu0 0.0
      %3077 = vmatpush1.msra.mxu0 0.0
      %3078 = vmatprep.subr.mxu0 0.0
      %3079 = vmatpush1.msra.mxu0 0.0
      %3080 = vmatprep.subr.mxu0 0.0
      %3081 = vmatpush1.msra.mxu0 0.0
      %3082 = vmatprep.subr.mxu0 0.0
      %3083 = vmatpush1.msra.mxu0 0.0
      %3084 = vmatprep.subr.mxu0 0.0
      %3085 = vmatpush1.msra.mxu0 0.0
      %3086 = vmatprep.subr.mxu0 0.0
      %3087 = vmatpush1.msra.mxu0 0.0
      %3088 = vmatprep.subr.mxu0 0.0
      %3089 = vmatpush1.msra.mxu0 0.0
      %3090 = vmatprep.subr.mxu0 0.0
      %3091 = vmatpush1.msra.mxu0 0.0
      %3092 = vmatprep.subr.mxu0 0.0
      %3093 = vmatpush1.msra.mxu0 0.0
      %3094 = vmatprep.subr.mxu0 0.0
      %3095 = vmatpush1.msra.mxu0 0.0
      %3096 = vmatprep.subr.mxu0 0.0
      %3097 = vmatpush1.msra.mxu0 0.0
      %3098 = vmatprep.subr.mxu0 0.0
      %3099 = vmatpush1.msra.mxu0 0.0
      %3100 = vmatprep.subr.mxu0 0.0
      %3101 = vmatpush1.msra.mxu0 0.0
      %3102 = vmatprep.subr.mxu0 0.0
      %3103 = vmatpush1.msra.mxu0 0.0
      %3104 = vmatprep.subr.mxu0 0.0
      %3105 = vmatpush1.msra.mxu0 0.0
      %3106 = vmatprep.subr.mxu0 0.0
      %3107 = vmatpush1.msra.mxu0 0.0
      %3108 = vmatprep.subr.mxu0 0.0
      %3109 = vmatpush1.msra.mxu0 0.0
      %3110 = vmatprep.subr.mxu0 0.0
      %3111 = vmatpush1.msra.mxu0 0.0
      %3112 = vmatprep.subr.mxu0 0.0
      %3113 = vmatpush1.msra.mxu0 0.0
      %3114 = vmatprep.subr.mxu0 0.0
      %3115 = vmatpush1.msra.mxu0 0.0
      %3116 = vmatprep.subr.mxu0 0.0
      %3117 = vmatpush1.msra.mxu0 0.0
      %3118 = vmatprep.subr.mxu0 0.0
      %3119 = vmatpush1.msra.mxu0 0.0
      %3120 = vmatprep.subr.mxu0 0.0
      %3121 = vmatpush1.msra.mxu0 0.0
      %3122 = vmatprep.subr.mxu0 0.0
      %3123 = vmatpush1.msra.mxu0 0.0
      %3124 = vmatprep.subr.mxu0 0.0
      %3125 = vmatpush1.msra.mxu0 0.0
      %3126 = vmatprep.subr.mxu0 0.0
      %3127 = vmatpush1.msra.mxu0 0.0
      %3128 = vmatprep.subr.mxu0 0.0
      %3129 = vmatpush1.msra.mxu0 0.0
      %3130 = vmatprep.subr.mxu0 0.0
      %3131 = vmatpush1.msra.mxu0 0.0
      %3132 = vmatprep.subr.mxu0 0.0
      %3133 = vmatpush1.msra.mxu0 0.0
      %3134 = vmatprep.subr.mxu0 0.0
      %3135 = vmatpush1.msra.mxu0 0.0
      %3136 = vmatprep.subr.mxu0 0.0
      %3137 = vmatpush1.msra.mxu0 0.0
      %3138 = vmatprep.mubr.f32.mxu0 0.0
      %3139 = vmatmul.mubr.f32.gmra.mrb[0].mxu0 %v3039
      %v3140 = vpop.f32.mrb[0].mxu0
      %v3141 = vadd.f32 %v2961, %v3140
      %v3142 = vpop.f32.mrb[0].mxu0
      %3143 = vmatprep.mubr.f32.mxu0 0.0
      %3144 = vmatmul.mubr.f32.gmra.mrb[0].mxu0 %v3041
      %v3145 = vpop.f32.mrb[0].mxu0
      %v3146 = vadd.f32 %v2966, %v3145
      %v3147 = vpop.f32.mrb[0].mxu0
      %3148 = vmatprep.mubr.f32.mxu0 0.0
      %3149 = vmatmul.mubr.f32.gmra.mrb[0].mxu0 %v3043
      %v3150 = vpop.f32.mrb[0].mxu0
      %v3151 = vadd.f32 %v2971, %v3150
      %v3152 = vpop.f32.mrb[0].mxu0
      %3153 = vmatprep.mubr.f32.mxu0 0.0
      %3154 = vmatmul.mubr.f32.gmra.mrb[0].mxu0 %v3045
      %v3155 = vpop.f32.mrb[0].mxu0
      %v3156 = vadd.f32 %v2976, %v3155
      %v3157 = vpop.f32.mrb[0].mxu0
      %3158 = vmatprep.mubr.f32.mxu0 0.0
      %3159 = vmatmul.mubr.f32.gmra.mrb[0].mxu0 %v3047
      %v3160 = vpop.f32.mrb[0].mxu0
      %v3161 = vadd.f32 %v2981, %v3160
      %v3162 = vpop.f32.mrb[0].mxu0
      %3163 = vmatprep.mubr.f32.mxu0 0.0
      %3164 = vmatmul.mubr.f32.gmra.mrb[0].mxu0 %v3049
      %v3165 = vpop.f32.mrb[0].mxu0
      %v3166 = vadd.f32 %v2986, %v3165
      %v3167 = vpop.f32.mrb[0].mxu0
      %3168 = vmatprep.mubr.f32.mxu0 0.0
      %3169 = vmatmul.mubr.f32.gmra.mrb[0].mxu0 %v3051
      %v3170 = vpop.f32.mrb[0].mxu0
      %v3171 = vadd.f32 %v2991, %v3170
      %v3172 = vpop.f32.mrb[0].mxu0
      %3173 = vmatprep.mubr.f32.mxu0 0.0
      %3174 = vmatmul.mubr.f32.gmra.mrb[0].mxu0 %v3053
      %v3175 = vpop.f32.mrb[0].mxu0
      %v3176 = vadd.f32 %v2996, %v3175
      %v3177 = vpop.f32.mrb[0].mxu0
      %3178 = vmatprep.mubr.f32.mxu0 0.0
      %3179 = vmatmul.mubr.f32.gmra.mrb[0].mxu0 %v3055
      %v3180 = vpop.f32.mrb[0].mxu0
      %v3181 = vadd.f32 %v3001, %v3180
      %v3182 = vpop.f32.mrb[0].mxu0
      %3183 = vmatprep.mubr.f32.mxu0 0.0
      %3184 = vmatmul.mubr.f32.gmra.mrb[0].mxu0 %v3057
      %v3185 = vpop.f32.mrb[0].mxu0
      %v3186 = vadd.f32 %v3006, %v3185
      %v3187 = vpop.f32.mrb[0].mxu0
      %3188 = vmatprep.mubr.f32.mxu0 0.0
      %3189 = vmatmul.mubr.f32.gmra.mrb[0].mxu0 %v3059
      %v3190 = vpop.f32.mrb[0].mxu0
      %v3191 = vadd.f32 %v3011, %v3190
      %v3192 = vpop.f32.mrb[0].mxu0
      %3193 = vmatprep.mubr.f32.mxu0 0.0
      %3194 = vmatmul.mubr.f32.gmra.mrb[0].mxu0 %v3061
      %v3195 = vpop.f32.mrb[0].mxu0
      %v3196 = vadd.f32 %v3016, %v3195
      %v3197 = vpop.f32.mrb[0].mxu0
      %3198 = vmatprep.mubr.f32.mxu0 0.0
      %3199 = vmatmul.mubr.f32.gmra.mrb[0].mxu0 %v3063
      %v3200 = vpop.f32.mrb[0].mxu0
      %v3201 = vadd.f32 %v3021, %v3200
      %v3202 = vpop.f32.mrb[0].mxu0
      %3203 = vmatprep.mubr.f32.mxu0 0.0
      %3204 = vmatmul.mubr.f32.gmra.mrb[0].mxu0 %v3065
      %v3205 = vpop.f32.mrb[0].mxu0
      %v3206 = vadd.f32 %v3026, %v3205
      %v3207 = vpop.f32.mrb[0].mxu0
      %3208 = vmatprep.mubr.f32.mxu0 0.0
      %3209 = vmatmul.mubr.f32.gmra.mrb[0].mxu0 %v3067
      %v3210 = vpop.f32.mrb[0].mxu0
      %v3211 = vadd.f32 %v3031, %v3210
      %v3212 = vpop.f32.mrb[0].mxu0
      %3213 = vmatprep.mubr.f32.mxu0 0.0
      %3214 = vmatmul.mubr.f32.gmra.mrb[0].mxu0 %v3069
      %v3215 = vpop.f32.mrb[0].mxu0
      %v3216 = vadd.f32 %v3036, %v3215
      %v3217 = vpop.f32.mrb[0].mxu0
      %3218 = vdwg.mxu0
      %v3219 = vrot.slane %v2762, 2
      %v3220 = vrot.slane %v2763, 2
      %v3221 = vsel %vm1122, %v3219, %v3220
      %v3222 = vrot.slane %v2764, 2
      %v3223 = vsel %vm1122, %v3220, %v3222
      %v3224 = vrot.slane %v2765, 2
      %v3225 = vrot.slane %v2766, 2
      %v3226 = vsel %vm1122, %v3224, %v3225
      %v3227 = vrot.slane %v2767, 2
      %v3228 = vsel %vm1122, %v3225, %v3227
      %v3229 = vrot.slane %v2768, 2
      %v3230 = vrot.slane %v2769, 2
      %v3231 = vsel %vm1122, %v3229, %v3230
      %v3232 = vrot.slane %v2770, 2
      %v3233 = vsel %vm1122, %v3230, %v3232
      %v3234 = vrot.slane %v2771, 2
      %v3235 = vrot.slane %v2772, 2
      %v3236 = vsel %vm1122, %v3234, %v3235
      %v3237 = vrot.slane %v2773, 2
      %v3238 = vsel %vm1122, %v3235, %v3237
      %v3239 = vrot.slane %v2774, 2
      %v3240 = vrot.slane %v2775, 2
      %v3241 = vsel %vm1122, %v3239, %v3240
      %v3242 = vrot.slane %v2776, 2
      %v3243 = vsel %vm1122, %v3240, %v3242
      %v3244 = vrot.slane %v2777, 2
      %v3245 = vrot.slane %v2778, 2
      %v3246 = vsel %vm1122, %v3244, %v3245
      %v3247 = vrot.slane %v2779, 2
      %v3248 = vsel %vm1122, %v3245, %v3247
      %v3249 = vrot.slane %v2780, 2
      %v3250 = vrot.slane %v2781, 2
      %v3251 = vsel %vm1122, %v3249, %v3250
      %v3252 = vrot.slane %v2782, 2
      %v3253 = vsel %vm1122, %v3250, %v3252
      %v3254 = vrot.slane %v2783, 2
      %v3255 = vrot.slane %v2784, 2
      %v3256 = vsel %vm1122, %v3254, %v3255
      %v3257 = vrot.slane %v2785, 2
      %v3258 = vsel %vm1122, %v3255, %v3257
      %s3259 = scalar_lea.vmem %s5, 8
      %v3260 = vld [vmem:[%s3259] sm:$0xf]
      %v3261 = vsel %vm542, %v3221, 0
      %v3263 = vsel %vm542, %v3223, 0
      %v3265 = vsel %vm542, %v3226, 0
      %v3267 = vsel %vm542, %v3228, 0
      %v3269 = vsel %vm542, %v3231, 0
      %v3271 = vsel %vm542, %v3233, 0
      %v3273 = vsel %vm542, %v3236, 0
      %v3275 = vsel %vm542, %v3238, 0
      %v3277 = vsel %vm542, %v3241, 0
      %v3279 = vsel %vm542, %v3243, 0
      %v3281 = vsel %vm542, %v3246, 0
      %v3283 = vsel %vm542, %v3248, 0
      %v3285 = vsel %vm542, %v3251, 0
      %v3287 = vsel %vm542, %v3253, 0
      %v3289 = vsel %vm542, %v3256, 0
      %v3291 = vsel %vm542, %v3258, 0
      %v3294 = vsel %vm745, %v3260, 0
      %3296 = vmatprep.subr.mxu0 0.0
      %3297 = vmatpush1.msra.mxu0 %v3294
      %3298 = vmatprep.subr.mxu0 0.0
      %3299 = vmatpush1.msra.mxu0 0.0
      %3300 = vmatprep.subr.mxu0 0.0
      %3301 = vmatpush1.msra.mxu0 0.0
      %3302 = vmatprep.subr.mxu0 0.0
      %3303 = vmatpush1.msra.mxu0 0.0
      %3304 = vmatprep.subr.mxu0 0.0
      %3305 = vmatpush1.msra.mxu0 0.0
      %3306 = vmatprep.subr.mxu0 0.0
      %3307 = vmatpush1.msra.mxu0 0.0
      %3308 = vmatprep.subr.mxu0 0.0
      %3309 = vmatpush1.msra.mxu0 0.0
      %3310 = vmatprep.subr.mxu0 0.0
      %3311 = vmatpush1.msra.mxu0 0.0
      %3312 = vmatprep.subr.mxu0 0.0
      %3313 = vmatpush1.msra.mxu0 0.0
      %3314 = vmatprep.subr.mxu0 0.0
      %3315 = vmatpush1.msra.mxu0 0.0
      %3316 = vmatprep.subr.mxu0 0.0
      %3317 = vmatpush1.msra.mxu0 0.0
      %3318 = vmatprep.subr.mxu0 0.0
      %3319 = vmatpush1.msra.mxu0 0.0
      %3320 = vmatprep.subr.mxu0 0.0
      %3321 = vmatpush1.msra.mxu0 0.0
      %3322 = vmatprep.subr.mxu0 0.0
      %3323 = vmatpush1.msra.mxu0 0.0
      %3324 = vmatprep.subr.mxu0 0.0
      %3325 = vmatpush1.msra.mxu0 0.0
      %3326 = vmatprep.subr.mxu0 0.0
      %3327 = vmatpush1.msra.mxu0 0.0
      %3328 = vmatprep.subr.mxu0 0.0
      %3329 = vmatpush1.msra.mxu0 0.0
      %3330 = vmatprep.subr.mxu0 0.0
      %3331 = vmatpush1.msra.mxu0 0.0
      %3332 = vmatprep.subr.mxu0 0.0
      %3333 = vmatpush1.msra.mxu0 0.0
      %3334 = vmatprep.subr.mxu0 0.0
      %3335 = vmatpush1.msra.mxu0 0.0
      %3336 = vmatprep.subr.mxu0 0.0
      %3337 = vmatpush1.msra.mxu0 0.0
      %3338 = vmatprep.subr.mxu0 0.0
      %3339 = vmatpush1.msra.mxu0 0.0
      %3340 = vmatprep.subr.mxu0 0.0
      %3341 = vmatpush1.msra.mxu0 0.0
      %3342 = vmatprep.subr.mxu0 0.0
      %3343 = vmatpush1.msra.mxu0 0.0
      %3344 = vmatprep.subr.mxu0 0.0
      %3345 = vmatpush1.msra.mxu0 0.0
      %3346 = vmatprep.subr.mxu0 0.0
      %3347 = vmatpush1.msra.mxu0 0.0
      %3348 = vmatprep.subr.mxu0 0.0
      %3349 = vmatpush1.msra.mxu0 0.0
      %3350 = vmatprep.subr.mxu0 0.0
      %3351 = vmatpush1.msra.mxu0 0.0
      %3352 = vmatprep.subr.mxu0 0.0
      %3353 = vmatpush1.msra.mxu0 0.0
      %3354 = vmatprep.subr.mxu0 0.0
      %3355 = vmatpush1.msra.mxu0 0.0
      %3356 = vmatprep.subr.mxu0 0.0
      %3357 = vmatpush1.msra.mxu0 0.0
      %3358 = vmatprep.subr.mxu0 0.0
      %3359 = vmatpush1.msra.mxu0 0.0
      %3360 = vmatprep.mubr.f32.mxu0 0.0
      %3361 = vmatmul.mubr.f32.gmra.mrb[0].mxu0 %v3261
      %v3362 = vpop.f32.mrb[0].mxu0
      %v3363 = vadd.f32 0.0, %v3362
      %v3364 = vpop.f32.mrb[0].mxu0
      %3365 = vmatprep.mubr.f32.mxu0 0.0
      %3366 = vmatmul.mubr.f32.gmra.mrb[0].mxu0 %v3263
      %v3367 = vpop.f32.mrb[0].mxu0
      %v3368 = vadd.f32 0.0, %v3367
      %v3369 = vpop.f32.mrb[0].mxu0
      %3370 = vmatprep.mubr.f32.mxu0 0.0
      %3371 = vmatmul.mubr.f32.gmra.mrb[0].mxu0 %v3265
      %v3372 = vpop.f32.mrb[0].mxu0
      %v3373 = vadd.f32 0.0, %v3372
      %v3374 = vpop.f32.mrb[0].mxu0
      %3375 = vmatprep.mubr.f32.mxu0 0.0
      %3376 = vmatmul.mubr.f32.gmra.mrb[0].mxu0 %v3267
      %v3377 = vpop.f32.mrb[0].mxu0
      %v3378 = vadd.f32 0.0, %v3377
      %v3379 = vpop.f32.mrb[0].mxu0
      %3380 = vmatprep.mubr.f32.mxu0 0.0
      %3381 = vmatmul.mubr.f32.gmra.mrb[0].mxu0 %v3269
      %v3382 = vpop.f32.mrb[0].mxu0
      %v3383 = vadd.f32 0.0, %v3382
      %v3384 = vpop.f32.mrb[0].mxu0
      %3385 = vmatprep.mubr.f32.mxu0 0.0
      %3386 = vmatmul.mubr.f32.gmra.mrb[0].mxu0 %v3271
      %v3387 = vpop.f32.mrb[0].mxu0
      %v3388 = vadd.f32 0.0, %v3387
      %v3389 = vpop.f32.mrb[0].mxu0
      %3390 = vmatprep.mubr.f32.mxu0 0.0
      %3391 = vmatmul.mubr.f32.gmra.mrb[0].mxu0 %v3273
      %v3392 = vpop.f32.mrb[0].mxu0
      %v3393 = vadd.f32 0.0, %v3392
      %v3394 = vpop.f32.mrb[0].mxu0
      %3395 = vmatprep.mubr.f32.mxu0 0.0
      %3396 = vmatmul.mubr.f32.gmra.mrb[0].mxu0 %v3275
      %v3397 = vpop.f32.mrb[0].mxu0
      %v3398 = vadd.f32 0.0, %v3397
      %v3399 = vpop.f32.mrb[0].mxu0
      %3400 = vmatprep.mubr.f32.mxu0 0.0
      %3401 = vmatmul.mubr.f32.gmra.mrb[0].mxu0 %v3277
      %v3402 = vpop.f32.mrb[0].mxu0
      %v3403 = vadd.f32 0.0, %v3402
      %v3404 = vpop.f32.mrb[0].mxu0
      %3405 = vmatprep.mubr.f32.mxu0 0.0
      %3406 = vmatmul.mubr.f32.gmra.mrb[0].mxu0 %v3279
      %v3407 = vpop.f32.mrb[0].mxu0
      %v3408 = vadd.f32 0.0, %v3407
      %v3409 = vpop.f32.mrb[0].mxu0
      %3410 = vmatprep.mubr.f32.mxu0 0.0
      %3411 = vmatmul.mubr.f32.gmra.mrb[0].mxu0 %v3281
      %v3412 = vpop.f32.mrb[0].mxu0
      %v3413 = vadd.f32 0.0, %v3412
      %v3414 = vpop.f32.mrb[0].mxu0
      %3415 = vmatprep.mubr.f32.mxu0 0.0
      %3416 = vmatmul.mubr.f32.gmra.mrb[0].mxu0 %v3283
      %v3417 = vpop.f32.mrb[0].mxu0
      %v3418 = vadd.f32 0.0, %v3417
      %v3419 = vpop.f32.mrb[0].mxu0
      %3420 = vmatprep.mubr.f32.mxu0 0.0
      %3421 = vmatmul.mubr.f32.gmra.mrb[0].mxu0 %v3285
      %v3422 = vpop.f32.mrb[0].mxu0
      %v3423 = vadd.f32 0.0, %v3422
      %v3424 = vpop.f32.mrb[0].mxu0
      %3425 = vmatprep.mubr.f32.mxu0 0.0
      %3426 = vmatmul.mubr.f32.gmra.mrb[0].mxu0 %v3287
      %v3427 = vpop.f32.mrb[0].mxu0
      %v3428 = vadd.f32 0.0, %v3427
      %v3429 = vpop.f32.mrb[0].mxu0
      %3430 = vmatprep.mubr.f32.mxu0 0.0
      %3431 = vmatmul.mubr.f32.gmra.mrb[0].mxu0 %v3289
      %v3432 = vpop.f32.mrb[0].mxu0
      %v3433 = vadd.f32 0.0, %v3432
      %v3434 = vpop.f32.mrb[0].mxu0
      %3435 = vmatprep.mubr.f32.mxu0 0.0
      %3436 = vmatmul.mubr.f32.gmra.mrb[0].mxu0 %v3291
      %v3437 = vpop.f32.mrb[0].mxu0
      %v3438 = vadd.f32 0.0, %v3437
      %v3439 = vpop.f32.mrb[0].mxu0
      %3440 = vdwg.mxu0
      %v3441 = vadd.f32 %v3141, %v3363
      %v3442 = vadd.f32 %v3146, %v3368
      %v3443 = vadd.f32 %v3151, %v3373
      %v3444 = vadd.f32 %v3156, %v3378
      %v3445 = vadd.f32 %v3161, %v3383
      %v3446 = vadd.f32 %v3166, %v3388
      %v3447 = vadd.f32 %v3171, %v3393
      %v3448 = vadd.f32 %v3176, %v3398
      %v3449 = vadd.f32 %v3181, %v3403
      %v3450 = vadd.f32 %v3186, %v3408
      %v3451 = vadd.f32 %v3191, %v3413
      %v3452 = vadd.f32 %v3196, %v3418
      %v3453 = vadd.f32 %v3201, %v3423
      %v3454 = vadd.f32 %v3206, %v3428
      %v3455 = vadd.f32 %v3211, %v3433
      %v3456 = vadd.f32 %v3216, %v3438
      %s3457 = scalar_lea.vmem %s5, 12
      %v3458 = vld [vmem:[%s3457] sm:$0xf]
      %v3460 = vsel %vm542, %v2786, 0
      %v3463 = vsel %vm542, %v2787, 0
      %v3466 = vsel %vm745, %v3458, 0
      %3468 = vmatprep.subr.mxu0 0.0
      %3469 = vmatpush1.msra.mxu0 %v3466
      %3470 = vmatprep.subr.mxu0 0.0
      %3471 = vmatpush1.msra.mxu0 0.0
      %3472 = vmatprep.subr.mxu0 0.0
      %3473 = vmatpush1.msra.mxu0 0.0
      %3474 = vmatprep.subr.mxu0 0.0
      %3475 = vmatpush1.msra.mxu0 0.0
      %3476 = vmatprep.subr.mxu0 0.0
      %3477 = vmatpush1.msra.mxu0 0.0
      %3478 = vmatprep.subr.mxu0 0.0
      %3479 = vmatpush1.msra.mxu0 0.0
      %3480 = vmatprep.subr.mxu0 0.0
      %3481 = vmatpush1.msra.mxu0 0.0
      %3482 = vmatprep.subr.mxu0 0.0
      %3483 = vmatpush1.msra.mxu0 0.0
      %3484 = vmatprep.subr.mxu0 0.0
      %3485 = vmatpush1.msra.mxu0 0.0
      %3486 = vmatprep.subr.mxu0 0.0
      %3487 = vmatpush1.msra.mxu0 0.0
      %3488 = vmatprep.subr.mxu0 0.0
      %3489 = vmatpush1.msra.mxu0 0.0
      %3490 = vmatprep.subr.mxu0 0.0
      %3491 = vmatpush1.msra.mxu0 0.0
      %3492 = vmatprep.subr.mxu0 0.0
      %3493 = vmatpush1.msra.mxu0 0.0
      %3494 = vmatprep.subr.mxu0 0.0
      %3495 = vmatpush1.msra.mxu0 0.0
      %3496 = vmatprep.subr.mxu0 0.0
      %3497 = vmatpush1.msra.mxu0 0.0
      %3498 = vmatprep.subr.mxu0 0.0
      %3499 = vmatpush1.msra.mxu0 0.0
      %3500 = vmatprep.subr.mxu0 0.0
      %3501 = vmatpush1.msra.mxu0 0.0
      %3502 = vmatprep.subr.mxu0 0.0
      %3503 = vmatpush1.msra.mxu0 0.0
      %3504 = vmatprep.subr.mxu0 0.0
      %3505 = vmatpush1.msra.mxu0 0.0
      %3506 = vmatprep.subr.mxu0 0.0
      %3507 = vmatpush1.msra.mxu0 0.0
      %3508 = vmatprep.subr.mxu0 0.0
      %3509 = vmatpush1.msra.mxu0 0.0
      %3510 = vmatprep.subr.mxu0 0.0
      %3511 = vmatpush1.msra.mxu0 0.0
      %3512 = vmatprep.subr.mxu0 0.0
      %3513 = vmatpush1.msra.mxu0 0.0
      %3514 = vmatprep.subr.mxu0 0.0
      %3515 = vmatpush1.msra.mxu0 0.0
      %3516 = vmatprep.subr.mxu0 0.0
      %3517 = vmatpush1.msra.mxu0 0.0
      %3518 = vmatprep.subr.mxu0 0.0
      %3519 = vmatpush1.msra.mxu0 0.0
      %3520 = vmatprep.subr.mxu0 0.0
      %3521 = vmatpush1.msra.mxu0 0.0
      %3522 = vmatprep.subr.mxu0 0.0
      %3523 = vmatpush1.msra.mxu0 0.0
      %3524 = vmatprep.subr.mxu0 0.0
      %3525 = vmatpush1.msra.mxu0 0.0
      %3526 = vmatprep.subr.mxu0 0.0
      %3527 = vmatpush1.msra.mxu0 0.0
      %3528 = vmatprep.subr.mxu0 0.0
      %3529 = vmatpush1.msra.mxu0 0.0
      %3530 = vmatprep.subr.mxu0 0.0
      %3531 = vmatpush1.msra.mxu0 0.0
      %3532 = vmatprep.mubr.f32.mxu0 0.0
      %3533 = vmatmul.mubr.f32.gmra.mrb[0].mxu0 %v3043
      %v3534 = vpop.f32.mrb[0].mxu0
      %v3535 = vadd.f32 0.0, %v3534
      %v3536 = vpop.f32.mrb[0].mxu0
      %3537 = vmatprep.mubr.f32.mxu0 0.0
      %3538 = vmatmul.mubr.f32.gmra.mrb[0].mxu0 %v3045
      %v3539 = vpop.f32.mrb[0].mxu0
      %v3540 = vadd.f32 0.0, %v3539
      %v3541 = vpop.f32.mrb[0].mxu0
      %3542 = vmatprep.mubr.f32.mxu0 0.0
      %3543 = vmatmul.mubr.f32.gmra.mrb[0].mxu0 %v3047
      %v3544 = vpop.f32.mrb[0].mxu0
      %v3545 = vadd.f32 0.0, %v3544
      %v3546 = vpop.f32.mrb[0].mxu0
      %3547 = vmatprep.mubr.f32.mxu0 0.0
      %3548 = vmatmul.mubr.f32.gmra.mrb[0].mxu0 %v3049
      %v3549 = vpop.f32.mrb[0].mxu0
      %v3550 = vadd.f32 0.0, %v3549
      %v3551 = vpop.f32.mrb[0].mxu0
      %3552 = vmatprep.mubr.f32.mxu0 0.0
      %3553 = vmatmul.mubr.f32.gmra.mrb[0].mxu0 %v3051
      %v3554 = vpop.f32.mrb[0].mxu0
      %v3555 = vadd.f32 0.0, %v3554
      %v3556 = vpop.f32.mrb[0].mxu0
      %3557 = vmatprep.mubr.f32.mxu0 0.0
      %3558 = vmatmul.mubr.f32.gmra.mrb[0].mxu0 %v3053
      %v3559 = vpop.f32.mrb[0].mxu0
      %v3560 = vadd.f32 0.0, %v3559
      %v3561 = vpop.f32.mrb[0].mxu0
      %3562 = vmatprep.mubr.f32.mxu0 0.0
      %3563 = vmatmul.mubr.f32.gmra.mrb[0].mxu0 %v3055
      %v3564 = vpop.f32.mrb[0].mxu0
      %v3565 = vadd.f32 0.0, %v3564
      %v3566 = vpop.f32.mrb[0].mxu0
      %3567 = vmatprep.mubr.f32.mxu0 0.0
      %3568 = vmatmul.mubr.f32.gmra.mrb[0].mxu0 %v3057
      %v3569 = vpop.f32.mrb[0].mxu0
      %v3570 = vadd.f32 0.0, %v3569
      %v3571 = vpop.f32.mrb[0].mxu0
      %3572 = vmatprep.mubr.f32.mxu0 0.0
      %3573 = vmatmul.mubr.f32.gmra.mrb[0].mxu0 %v3059
      %v3574 = vpop.f32.mrb[0].mxu0
      %v3575 = vadd.f32 0.0, %v3574
      %v3576 = vpop.f32.mrb[0].mxu0
      %3577 = vmatprep.mubr.f32.mxu0 0.0
      %3578 = vmatmul.mubr.f32.gmra.mrb[0].mxu0 %v3061
      %v3579 = vpop.f32.mrb[0].mxu0
      %v3580 = vadd.f32 0.0, %v3579
      %v3581 = vpop.f32.mrb[0].mxu0
      %3582 = vmatprep.mubr.f32.mxu0 0.0
      %3583 = vmatmul.mubr.f32.gmra.mrb[0].mxu0 %v3063
      %v3584 = vpop.f32.mrb[0].mxu0
      %v3585 = vadd.f32 0.0, %v3584
      %v3586 = vpop.f32.mrb[0].mxu0
      %3587 = vmatprep.mubr.f32.mxu0 0.0
      %3588 = vmatmul.mubr.f32.gmra.mrb[0].mxu0 %v3065
      %v3589 = vpop.f32.mrb[0].mxu0
      %v3590 = vadd.f32 0.0, %v3589
      %v3591 = vpop.f32.mrb[0].mxu0
      %3592 = vmatprep.mubr.f32.mxu0 0.0
      %3593 = vmatmul.mubr.f32.gmra.mrb[0].mxu0 %v3067
      %v3594 = vpop.f32.mrb[0].mxu0
      %v3595 = vadd.f32 0.0, %v3594
      %v3596 = vpop.f32.mrb[0].mxu0
      %3597 = vmatprep.mubr.f32.mxu0 0.0
      %3598 = vmatmul.mubr.f32.gmra.mrb[0].mxu0 %v3069
      %v3599 = vpop.f32.mrb[0].mxu0
      %v3600 = vadd.f32 0.0, %v3599
      %v3601 = vpop.f32.mrb[0].mxu0
      %3602 = vmatprep.mubr.f32.mxu0 0.0
      %3603 = vmatmul.mubr.f32.gmra.mrb[0].mxu0 %v3460
      %v3604 = vpop.f32.mrb[0].mxu0
      %v3605 = vadd.f32 0.0, %v3604
      %v3606 = vpop.f32.mrb[0].mxu0
      %3607 = vmatprep.mubr.f32.mxu0 0.0
      %3608 = vmatmul.mubr.f32.gmra.mrb[0].mxu0 %v3463
      %v3609 = vpop.f32.mrb[0].mxu0
      %v3610 = vadd.f32 0.0, %v3609
      %v3611 = vpop.f32.mrb[0].mxu0
      %3612 = vdwg.mxu0
      %v3613 = vadd.f32 %v3441, %v3535
      %v3614 = vadd.f32 %v3442, %v3540
      %v3615 = vadd.f32 %v3443, %v3545
      %v3616 = vadd.f32 %v3444, %v3550
      %v3617 = vadd.f32 %v3445, %v3555
      %v3618 = vadd.f32 %v3446, %v3560
      %v3619 = vadd.f32 %v3447, %v3565
      %v3620 = vadd.f32 %v3448, %v3570
      %v3621 = vadd.f32 %v3449, %v3575
      %v3622 = vadd.f32 %v3450, %v3580
      %v3623 = vadd.f32 %v3451, %v3585
      %v3624 = vadd.f32 %v3452, %v3590
      %v3625 = vadd.f32 %v3453, %v3595
      %v3626 = vadd.f32 %v3454, %v3600
      %v3627 = vadd.f32 %v3455, %v3605
      %v3628 = vadd.f32 %v3456, %v3610
      %v3630 = vrot.slane %v2786, 1
      %v3631 = vrot.slane %v2787, 1
      %v3632 = vsel %vm652, %v3630, %v3631
      %v3633 = vrot.slane %v2788, 1
      %v3634 = vsel %vm652, %v3631, %v3633
      %s3635 = scalar_lea.vmem %s5, 16
      %v3636 = vld [vmem:[%s3635] sm:$0xf]
      %v3637 = vsel %vm542, %v3632, 0
      %v3639 = vsel %vm542, %v3634, 0
      %v3642 = vsel %vm745, %v3636, 0
      %3644 = vmatprep.subr.mxu0 0.0
      %3645 = vmatpush1.msra.mxu0 %v3642
      %3646 = vmatprep.subr.mxu0 0.0
      %3647 = vmatpush1.msra.mxu0 0.0
      %3648 = vmatprep.subr.mxu0 0.0
      %3649 = vmatpush1.msra.mxu0 0.0
      %3650 = vmatprep.subr.mxu0 0.0
      %3651 = vmatpush1.msra.mxu0 0.0
      %3652 = vmatprep.subr.mxu0 0.0
      %3653 = vmatpush1.msra.mxu0 0.0
      %3654 = vmatprep.subr.mxu0 0.0
      %3655 = vmatpush1.msra.mxu0 0.0
      %3656 = vmatprep.subr.mxu0 0.0
      %3657 = vmatpush1.msra.mxu0 0.0
      %3658 = vmatprep.subr.mxu0 0.0
      %3659 = vmatpush1.msra.mxu0 0.0
      %3660 = vmatprep.subr.mxu0 0.0
      %3661 = vmatpush1.msra.mxu0 0.0
      %3662 = vmatprep.subr.mxu0 0.0
      %3663 = vmatpush1.msra.mxu0 0.0
      %3664 = vmatprep.subr.mxu0 0.0
      %3665 = vmatpush1.msra.mxu0 0.0
      %3666 = vmatprep.subr.mxu0 0.0
      %3667 = vmatpush1.msra.mxu0 0.0
      %3668 = vmatprep.subr.mxu0 0.0
      %3669 = vmatpush1.msra.mxu0 0.0
      %3670 = vmatprep.subr.mxu0 0.0
      %3671 = vmatpush1.msra.mxu0 0.0
      %3672 = vmatprep.subr.mxu0 0.0
      %3673 = vmatpush1.msra.mxu0 0.0
      %3674 = vmatprep.subr.mxu0 0.0
      %3675 = vmatpush1.msra.mxu0 0.0
      %3676 = vmatprep.subr.mxu0 0.0
      %3677 = vmatpush1.msra.mxu0 0.0
      %3678 = vmatprep.subr.mxu0 0.0
      %3679 = vmatpush1.msra.mxu0 0.0
      %3680 = vmatprep.subr.mxu0 0.0
      %3681 = vmatpush1.msra.mxu0 0.0
      %3682 = vmatprep.subr.mxu0 0.0
      %3683 = vmatpush1.msra.mxu0 0.0
      %3684 = vmatprep.subr.mxu0 0.0
      %3685 = vmatpush1.msra.mxu0 0.0
      %3686 = vmatprep.subr.mxu0 0.0
      %3687 = vmatpush1.msra.mxu0 0.0
      %3688 = vmatprep.subr.mxu0 0.0
      %3689 = vmatpush1.msra.mxu0 0.0
      %3690 = vmatprep.subr.mxu0 0.0
      %3691 = vmatpush1.msra.mxu0 0.0
      %3692 = vmatprep.subr.mxu0 0.0
      %3693 = vmatpush1.msra.mxu0 0.0
      %3694 = vmatprep.subr.mxu0 0.0
      %3695 = vmatpush1.msra.mxu0 0.0
      %3696 = vmatprep.subr.mxu0 0.0
      %3697 = vmatpush1.msra.mxu0 0.0
      %3698 = vmatprep.subr.mxu0 0.0
      %3699 = vmatpush1.msra.mxu0 0.0
      %3700 = vmatprep.subr.mxu0 0.0
      %3701 = vmatpush1.msra.mxu0 0.0
      %3702 = vmatprep.subr.mxu0 0.0
      %3703 = vmatpush1.msra.mxu0 0.0
      %3704 = vmatprep.subr.mxu0 0.0
      %3705 = vmatpush1.msra.mxu0 0.0
      %3706 = vmatprep.subr.mxu0 0.0
      %3707 = vmatpush1.msra.mxu0 0.0
      %3708 = vmatprep.mubr.f32.mxu0 0.0
      %3709 = vmatmul.mubr.f32.gmra.mrb[0].mxu0 %v2863
      %v3710 = vpop.f32.mrb[0].mxu0
      %v3711 = vadd.f32 0.0, %v3710
      %v3712 = vpop.f32.mrb[0].mxu0
      %3713 = vmatprep.mubr.f32.mxu0 0.0
      %3714 = vmatmul.mubr.f32.gmra.mrb[0].mxu0 %v2865
      %v3715 = vpop.f32.mrb[0].mxu0
      %v3716 = vadd.f32 0.0, %v3715
      %v3717 = vpop.f32.mrb[0].mxu0
      %3718 = vmatprep.mubr.f32.mxu0 0.0
      %3719 = vmatmul.mubr.f32.gmra.mrb[0].mxu0 %v2867
      %v3720 = vpop.f32.mrb[0].mxu0
      %v3721 = vadd.f32 0.0, %v3720
      %v3722 = vpop.f32.mrb[0].mxu0
      %3723 = vmatprep.mubr.f32.mxu0 0.0
      %3724 = vmatmul.mubr.f32.gmra.mrb[0].mxu0 %v2869
      %v3725 = vpop.f32.mrb[0].mxu0
      %v3726 = vadd.f32 0.0, %v3725
      %v3727 = vpop.f32.mrb[0].mxu0
      %3728 = vmatprep.mubr.f32.mxu0 0.0
      %3729 = vmatmul.mubr.f32.gmra.mrb[0].mxu0 %v2871
      %v3730 = vpop.f32.mrb[0].mxu0
      %v3731 = vadd.f32 0.0, %v3730
      %v3732 = vpop.f32.mrb[0].mxu0
      %3733 = vmatprep.mubr.f32.mxu0 0.0
      %3734 = vmatmul.mubr.f32.gmra.mrb[0].mxu0 %v2873
      %v3735 = vpop.f32.mrb[0].mxu0
      %v3736 = vadd.f32 0.0, %v3735
      %v3737 = vpop.f32.mrb[0].mxu0
      %3738 = vmatprep.mubr.f32.mxu0 0.0
      %3739 = vmatmul.mubr.f32.gmra.mrb[0].mxu0 %v2875
      %v3740 = vpop.f32.mrb[0].mxu0
      %v3741 = vadd.f32 0.0, %v3740
      %v3742 = vpop.f32.mrb[0].mxu0
      %3743 = vmatprep.mubr.f32.mxu0 0.0
      %3744 = vmatmul.mubr.f32.gmra.mrb[0].mxu0 %v2877
      %v3745 = vpop.f32.mrb[0].mxu0
      %v3746 = vadd.f32 0.0, %v3745
      %v3747 = vpop.f32.mrb[0].mxu0
      %3748 = vmatprep.mubr.f32.mxu0 0.0
      %3749 = vmatmul.mubr.f32.gmra.mrb[0].mxu0 %v2879
      %v3750 = vpop.f32.mrb[0].mxu0
      %v3751 = vadd.f32 0.0, %v3750
      %v3752 = vpop.f32.mrb[0].mxu0
      %3753 = vmatprep.mubr.f32.mxu0 0.0
      %3754 = vmatmul.mubr.f32.gmra.mrb[0].mxu0 %v2881
      %v3755 = vpop.f32.mrb[0].mxu0
      %v3756 = vadd.f32 0.0, %v3755
      %v3757 = vpop.f32.mrb[0].mxu0
      %3758 = vmatprep.mubr.f32.mxu0 0.0
      %3759 = vmatmul.mubr.f32.gmra.mrb[0].mxu0 %v2883
      %v3760 = vpop.f32.mrb[0].mxu0
      %v3761 = vadd.f32 0.0, %v3760
      %v3762 = vpop.f32.mrb[0].mxu0
      %3763 = vmatprep.mubr.f32.mxu0 0.0
      %3764 = vmatmul.mubr.f32.gmra.mrb[0].mxu0 %v2885
      %v3765 = vpop.f32.mrb[0].mxu0
      %v3766 = vadd.f32 0.0, %v3765
      %v3767 = vpop.f32.mrb[0].mxu0
      %3768 = vmatprep.mubr.f32.mxu0 0.0
      %3769 = vmatmul.mubr.f32.gmra.mrb[0].mxu0 %v2887
      %v3770 = vpop.f32.mrb[0].mxu0
      %v3771 = vadd.f32 0.0, %v3770
      %v3772 = vpop.f32.mrb[0].mxu0
      %3773 = vmatprep.mubr.f32.mxu0 0.0
      %3774 = vmatmul.mubr.f32.gmra.mrb[0].mxu0 %v2889
      %v3775 = vpop.f32.mrb[0].mxu0
      %v3776 = vadd.f32 0.0, %v3775
      %v3777 = vpop.f32.mrb[0].mxu0
      %3778 = vmatprep.mubr.f32.mxu0 0.0
      %3779 = vmatmul.mubr.f32.gmra.mrb[0].mxu0 %v3637
      %v3780 = vpop.f32.mrb[0].mxu0
      %v3781 = vadd.f32 0.0, %v3780
      %v3782 = vpop.f32.mrb[0].mxu0
      %3783 = vmatprep.mubr.f32.mxu0 0.0
      %3784 = vmatmul.mubr.f32.gmra.mrb[0].mxu0 %v3639
      %v3785 = vpop.f32.mrb[0].mxu0
      %v3786 = vadd.f32 0.0, %v3785
      %v3787 = vpop.f32.mrb[0].mxu0
      %3788 = vdwg.mxu0
      %v3789 = vadd.f32 %v3613, %v3711
      %v3790 = vadd.f32 %v3614, %v3716
      %v3791 = vadd.f32 %v3615, %v3721
      %v3792 = vadd.f32 %v3616, %v3726
      %v3793 = vadd.f32 %v3617, %v3731
      %v3794 = vadd.f32 %v3618, %v3736
      %v3795 = vadd.f32 %v3619, %v3741
      %v3796 = vadd.f32 %v3620, %v3746
      %v3797 = vadd.f32 %v3621, %v3751
      %v3798 = vadd.f32 %v3622, %v3756
      %v3799 = vadd.f32 %v3623, %v3761
      %v3800 = vadd.f32 %v3624, %v3766
      %v3801 = vadd.f32 %v3625, %v3771
      %v3802 = vadd.f32 %v3626, %v3776
      %v3803 = vadd.f32 %v3627, %v3781
      %v3804 = vadd.f32 %v3628, %v3786
      %v3805 = vrot.slane %v2786, 2
      %v3806 = vrot.slane %v2787, 2
      %v3807 = vsel %vm1122, %v3805, %v3806
      %v3808 = vrot.slane %v2788, 2
      %v3809 = vsel %vm1122, %v3806, %v3808
      %s3810 = scalar_lea.vmem %s5, 20
      %v3811 = vld [vmem:[%s3810] sm:$0xf]
      %v3812 = vsel %vm542, %v3807, 0
      %v3814 = vsel %vm542, %v3809, 0
      %v3817 = vsel %vm745, %v3811, 0
      %3819 = vmatprep.subr.mxu0 0.0
      %3820 = vmatpush1.msra.mxu0 %v3817
      %3821 = vmatprep.subr.mxu0 0.0
      %3822 = vmatpush1.msra.mxu0 0.0
      %3823 = vmatprep.subr.mxu0 0.0
      %3824 = vmatpush1.msra.mxu0 0.0
      %3825 = vmatprep.subr.mxu0 0.0
      %3826 = vmatpush1.msra.mxu0 0.0
      %3827 = vmatprep.subr.mxu0 0.0
      %3828 = vmatpush1.msra.mxu0 0.0
      %3829 = vmatprep.subr.mxu0 0.0
      %3830 = vmatpush1.msra.mxu0 0.0
      %3831 = vmatprep.subr.mxu0 0.0
      %3832 = vmatpush1.msra.mxu0 0.0
      %3833 = vmatprep.subr.mxu0 0.0
      %3834 = vmatpush1.msra.mxu0 0.0
      %3835 = vmatprep.subr.mxu0 0.0
      %3836 = vmatpush1.msra.mxu0 0.0
      %3837 = vmatprep.subr.mxu0 0.0
      %3838 = vmatpush1.msra.mxu0 0.0
      %3839 = vmatprep.subr.mxu0 0.0
      %3840 = vmatpush1.msra.mxu0 0.0
      %3841 = vmatprep.subr.mxu0 0.0
      %3842 = vmatpush1.msra.mxu0 0.0
      %3843 = vmatprep.subr.mxu0 0.0
      %3844 = vmatpush1.msra.mxu0 0.0
      %3845 = vmatprep.subr.mxu0 0.0
      %3846 = vmatpush1.msra.mxu0 0.0
      %3847 = vmatprep.subr.mxu0 0.0
      %3848 = vmatpush1.msra.mxu0 0.0
      %3849 = vmatprep.subr.mxu0 0.0
      %3850 = vmatpush1.msra.mxu0 0.0
      %3851 = vmatprep.subr.mxu0 0.0
      %3852 = vmatpush1.msra.mxu0 0.0
      %3853 = vmatprep.subr.mxu0 0.0
      %3854 = vmatpush1.msra.mxu0 0.0
      %3855 = vmatprep.subr.mxu0 0.0
      %3856 = vmatpush1.msra.mxu0 0.0
      %3857 = vmatprep.subr.mxu0 0.0
      %3858 = vmatpush1.msra.mxu0 0.0
      %3859 = vmatprep.subr.mxu0 0.0
      %3860 = vmatpush1.msra.mxu0 0.0
      %3861 = vmatprep.subr.mxu0 0.0
      %3862 = vmatpush1.msra.mxu0 0.0
      %3863 = vmatprep.subr.mxu0 0.0
      %3864 = vmatpush1.msra.mxu0 0.0
      %3865 = vmatprep.subr.mxu0 0.0
      %3866 = vmatpush1.msra.mxu0 0.0
      %3867 = vmatprep.subr.mxu0 0.0
      %3868 = vmatpush1.msra.mxu0 0.0
      %3869 = vmatprep.subr.mxu0 0.0
      %3870 = vmatpush1.msra.mxu0 0.0
      %3871 = vmatprep.subr.mxu0 0.0
      %3872 = vmatpush1.msra.mxu0 0.0
      %3873 = vmatprep.subr.mxu0 0.0
      %3874 = vmatpush1.msra.mxu0 0.0
      %3875 = vmatprep.subr.mxu0 0.0
      %3876 = vmatpush1.msra.mxu0 0.0
      %3877 = vmatprep.subr.mxu0 0.0
      %3878 = vmatpush1.msra.mxu0 0.0
      %3879 = vmatprep.subr.mxu0 0.0
      %3880 = vmatpush1.msra.mxu0 0.0
      %3881 = vmatprep.subr.mxu0 0.0
      %3882 = vmatpush1.msra.mxu0 0.0
      %3883 = vmatprep.mubr.f32.mxu0 0.0
      %3884 = vmatmul.mubr.f32.gmra.mrb[0].mxu0 %v3265
      %v3885 = vpop.f32.mrb[0].mxu0
      %v3886 = vadd.f32 0.0, %v3885
      %v3887 = vpop.f32.mrb[0].mxu0
      %3888 = vmatprep.mubr.f32.mxu0 0.0
      %3889 = vmatmul.mubr.f32.gmra.mrb[0].mxu0 %v3267
      %v3890 = vpop.f32.mrb[0].mxu0
      %v3891 = vadd.f32 0.0, %v3890
      %v3892 = vpop.f32.mrb[0].mxu0
      %3893 = vmatprep.mubr.f32.mxu0 0.0
      %3894 = vmatmul.mubr.f32.gmra.mrb[0].mxu0 %v3269
      %v3895 = vpop.f32.mrb[0].mxu0
      %v3896 = vadd.f32 0.0, %v3895
      %v3897 = vpop.f32.mrb[0].mxu0
      %3898 = vmatprep.mubr.f32.mxu0 0.0
      %3899 = vmatmul.mubr.f32.gmra.mrb[0].mxu0 %v3271
      %v3900 = vpop.f32.mrb[0].mxu0
      %v3901 = vadd.f32 0.0, %v3900
      %v3902 = vpop.f32.mrb[0].mxu0
      %3903 = vmatprep.mubr.f32.mxu0 0.0
      %3904 = vmatmul.mubr.f32.gmra.mrb[0].mxu0 %v3273
      %v3905 = vpop.f32.mrb[0].mxu0
      %v3906 = vadd.f32 0.0, %v3905
      %v3907 = vpop.f32.mrb[0].mxu0
      %3908 = vmatprep.mubr.f32.mxu0 0.0
      %3909 = vmatmul.mubr.f32.gmra.mrb[0].mxu0 %v3275
      %v3910 = vpop.f32.mrb[0].mxu0
      %v3911 = vadd.f32 0.0, %v3910
      %v3912 = vpop.f32.mrb[0].mxu0
      %3913 = vmatprep.mubr.f32.mxu0 0.0
      %3914 = vmatmul.mubr.f32.gmra.mrb[0].mxu0 %v3277
      %v3915 = vpop.f32.mrb[0].mxu0
      %v3916 = vadd.f32 0.0, %v3915
      %v3917 = vpop.f32.mrb[0].mxu0
      %3918 = vmatprep.mubr.f32.mxu0 0.0
      %3919 = vmatmul.mubr.f32.gmra.mrb[0].mxu0 %v3279
      %v3920 = vpop.f32.mrb[0].mxu0
      %v3921 = vadd.f32 0.0, %v3920
      %v3922 = vpop.f32.mrb[0].mxu0
      %3923 = vmatprep.mubr.f32.mxu0 0.0
      %3924 = vmatmul.mubr.f32.gmra.mrb[0].mxu0 %v3281
      %v3925 = vpop.f32.mrb[0].mxu0
      %v3926 = vadd.f32 0.0, %v3925
      %v3927 = vpop.f32.mrb[0].mxu0
      %3928 = vmatprep.mubr.f32.mxu0 0.0
      %3929 = vmatmul.mubr.f32.gmra.mrb[0].mxu0 %v3283
      %v3930 = vpop.f32.mrb[0].mxu0
      %v3931 = vadd.f32 0.0, %v3930
      %v3932 = vpop.f32.mrb[0].mxu0
      %3933 = vmatprep.mubr.f32.mxu0 0.0
      %3934 = vmatmul.mubr.f32.gmra.mrb[0].mxu0 %v3285
      %v3935 = vpop.f32.mrb[0].mxu0
      %v3936 = vadd.f32 0.0, %v3935
      %v3937 = vpop.f32.mrb[0].mxu0
      %3938 = vmatprep.mubr.f32.mxu0 0.0
      %3939 = vmatmul.mubr.f32.gmra.mrb[0].mxu0 %v3287
      %v3940 = vpop.f32.mrb[0].mxu0
      %v3941 = vadd.f32 0.0, %v3940
      %v3942 = vpop.f32.mrb[0].mxu0
      %3943 = vmatprep.mubr.f32.mxu0 0.0
      %3944 = vmatmul.mubr.f32.gmra.mrb[0].mxu0 %v3289
      %v3945 = vpop.f32.mrb[0].mxu0
      %v3946 = vadd.f32 0.0, %v3945
      %v3947 = vpop.f32.mrb[0].mxu0
      %3948 = vmatprep.mubr.f32.mxu0 0.0
      %3949 = vmatmul.mubr.f32.gmra.mrb[0].mxu0 %v3291
      %v3950 = vpop.f32.mrb[0].mxu0
      %v3951 = vadd.f32 0.0, %v3950
      %v3952 = vpop.f32.mrb[0].mxu0
      %3953 = vmatprep.mubr.f32.mxu0 0.0
      %3954 = vmatmul.mubr.f32.gmra.mrb[0].mxu0 %v3812
      %v3955 = vpop.f32.mrb[0].mxu0
      %v3956 = vadd.f32 0.0, %v3955
      %v3957 = vpop.f32.mrb[0].mxu0
      %3958 = vmatprep.mubr.f32.mxu0 0.0
      %3959 = vmatmul.mubr.f32.gmra.mrb[0].mxu0 %v3814
      %v3960 = vpop.f32.mrb[0].mxu0
      %v3961 = vadd.f32 0.0, %v3960
      %v3962 = vpop.f32.mrb[0].mxu0
      %3963 = vdwg.mxu0
      %v3964 = vadd.f32 %v3789, %v3886
      %v3965 = vadd.f32 %v3790, %v3891
      %v3966 = vadd.f32 %v3791, %v3896
      %v3967 = vadd.f32 %v3792, %v3901
      %v3968 = vadd.f32 %v3793, %v3906
      %v3969 = vadd.f32 %v3794, %v3911
      %v3970 = vadd.f32 %v3795, %v3916
      %v3971 = vadd.f32 %v3796, %v3921
      %v3972 = vadd.f32 %v3797, %v3926
      %v3973 = vadd.f32 %v3798, %v3931
      %v3974 = vadd.f32 %v3799, %v3936
      %v3975 = vadd.f32 %v3800, %v3941
      %v3976 = vadd.f32 %v3801, %v3946
      %v3977 = vadd.f32 %v3802, %v3951
      %v3978 = vadd.f32 %v3803, %v3956
      %v3979 = vadd.f32 %v3804, %v3961
      %s3980 = scalar_lea.vmem %s5, 24
      %v3981 = vld [vmem:[%s3980] sm:$0xf]
      %v3983 = vsel %vm542, %v2789, 0
      %v3986 = vsel %vm542, %v2790, 0
      %v3989 = vsel %vm745, %v3981, 0
      %3991 = vmatprep.subr.mxu0 0.0
      %3992 = vmatpush1.msra.mxu0 %v3989
      %3993 = vmatprep.subr.mxu0 0.0
      %3994 = vmatpush1.msra.mxu0 0.0
      %3995 = vmatprep.subr.mxu0 0.0
      %3996 = vmatpush1.msra.mxu0 0.0
      %3997 = vmatprep.subr.mxu0 0.0
      %3998 = vmatpush1.msra.mxu0 0.0
      %3999 = vmatprep.subr.mxu0 0.0
      %4000 = vmatpush1.msra.mxu0 0.0
      %4001 = vmatprep.subr.mxu0 0.0
      %4002 = vmatpush1.msra.mxu0 0.0
      %4003 = vmatprep.subr.mxu0 0.0
      %4004 = vmatpush1.msra.mxu0 0.0
      %4005 = vmatprep.subr.mxu0 0.0
      %4006 = vmatpush1.msra.mxu0 0.0
      %4007 = vmatprep.subr.mxu0 0.0
      %4008 = vmatpush1.msra.mxu0 0.0
      %4009 = vmatprep.subr.mxu0 0.0
      %4010 = vmatpush1.msra.mxu0 0.0
      %4011 = vmatprep.subr.mxu0 0.0
      %4012 = vmatpush1.msra.mxu0 0.0
      %4013 = vmatprep.subr.mxu0 0.0
      %4014 = vmatpush1.msra.mxu0 0.0
      %4015 = vmatprep.subr.mxu0 0.0
      %4016 = vmatpush1.msra.mxu0 0.0
      %4017 = vmatprep.subr.mxu0 0.0
      %4018 = vmatpush1.msra.mxu0 0.0
      %4019 = vmatprep.subr.mxu0 0.0
      %4020 = vmatpush1.msra.mxu0 0.0
      %4021 = vmatprep.subr.mxu0 0.0
      %4022 = vmatpush1.msra.mxu0 0.0
      %4023 = vmatprep.subr.mxu0 0.0
      %4024 = vmatpush1.msra.mxu0 0.0
      %4025 = vmatprep.subr.mxu0 0.0
      %4026 = vmatpush1.msra.mxu0 0.0
      %4027 = vmatprep.subr.mxu0 0.0
      %4028 = vmatpush1.msra.mxu0 0.0
      %4029 = vmatprep.subr.mxu0 0.0
      %4030 = vmatpush1.msra.mxu0 0.0
      %4031 = vmatprep.subr.mxu0 0.0
      %4032 = vmatpush1.msra.mxu0 0.0
      %4033 = vmatprep.subr.mxu0 0.0
      %4034 = vmatpush1.msra.mxu0 0.0
      %4035 = vmatprep.subr.mxu0 0.0
      %4036 = vmatpush1.msra.mxu0 0.0
      %4037 = vmatprep.subr.mxu0 0.0
      %4038 = vmatpush1.msra.mxu0 0.0
      %4039 = vmatprep.subr.mxu0 0.0
      %4040 = vmatpush1.msra.mxu0 0.0
      %4041 = vmatprep.subr.mxu0 0.0
      %4042 = vmatpush1.msra.mxu0 0.0
      %4043 = vmatprep.subr.mxu0 0.0
      %4044 = vmatpush1.msra.mxu0 0.0
      %4045 = vmatprep.subr.mxu0 0.0
      %4046 = vmatpush1.msra.mxu0 0.0
      %4047 = vmatprep.subr.mxu0 0.0
      %4048 = vmatpush1.msra.mxu0 0.0
      %4049 = vmatprep.subr.mxu0 0.0
      %4050 = vmatpush1.msra.mxu0 0.0
      %4051 = vmatprep.subr.mxu0 0.0
      %4052 = vmatpush1.msra.mxu0 0.0
      %4053 = vmatprep.subr.mxu0 0.0
      %4054 = vmatpush1.msra.mxu0 0.0
      %4055 = vmatprep.mubr.f32.mxu0 0.0
      %4056 = vmatmul.mubr.f32.gmra.mrb[0].mxu0 %v3047
      %v4057 = vpop.f32.mrb[0].mxu0
      %v4058 = vadd.f32 0.0, %v4057
      %v4059 = vpop.f32.mrb[0].mxu0
      %4060 = vmatprep.mubr.f32.mxu0 0.0
      %4061 = vmatmul.mubr.f32.gmra.mrb[0].mxu0 %v3049
      %v4062 = vpop.f32.mrb[0].mxu0
      %v4063 = vadd.f32 0.0, %v4062
      %v4064 = vpop.f32.mrb[0].mxu0
      %4065 = vmatprep.mubr.f32.mxu0 0.0
      %4066 = vmatmul.mubr.f32.gmra.mrb[0].mxu0 %v3051
      %v4067 = vpop.f32.mrb[0].mxu0
      %v4068 = vadd.f32 0.0, %v4067
      %v4069 = vpop.f32.mrb[0].mxu0
      %4070 = vmatprep.mubr.f32.mxu0 0.0
      %4071 = vmatmul.mubr.f32.gmra.mrb[0].mxu0 %v3053
      %v4072 = vpop.f32.mrb[0].mxu0
      %v4073 = vadd.f32 0.0, %v4072
      %v4074 = vpop.f32.mrb[0].mxu0
      %4075 = vmatprep.mubr.f32.mxu0 0.0
      %4076 = vmatmul.mubr.f32.gmra.mrb[0].mxu0 %v3055
      %v4077 = vpop.f32.mrb[0].mxu0
      %v4078 = vadd.f32 0.0, %v4077
      %v4079 = vpop.f32.mrb[0].mxu0
      %4080 = vmatprep.mubr.f32.mxu0 0.0
      %4081 = vmatmul.mubr.f32.gmra.mrb[0].mxu0 %v3057
      %v4082 = vpop.f32.mrb[0].mxu0
      %v4083 = vadd.f32 0.0, %v4082
      %v4084 = vpop.f32.mrb[0].mxu0
      %4085 = vmatprep.mubr.f32.mxu0 0.0
      %4086 = vmatmul.mubr.f32.gmra.mrb[0].mxu0 %v3059
      %v4087 = vpop.f32.mrb[0].mxu0
      %v4088 = vadd.f32 0.0, %v4087
      %v4089 = vpop.f32.mrb[0].mxu0
      %4090 = vmatprep.mubr.f32.mxu0 0.0
      %4091 = vmatmul.mubr.f32.gmra.mrb[0].mxu0 %v3061
      %v4092 = vpop.f32.mrb[0].mxu0
      %v4093 = vadd.f32 0.0, %v4092
      %v4094 = vpop.f32.mrb[0].mxu0
      %4095 = vmatprep.mubr.f32.mxu0 0.0
      %4096 = vmatmul.mubr.f32.gmra.mrb[0].mxu0 %v3063
      %v4097 = vpop.f32.mrb[0].mxu0
      %v4098 = vadd.f32 0.0, %v4097
      %v4099 = vpop.f32.mrb[0].mxu0
      %4100 = vmatprep.mubr.f32.mxu0 0.0
      %4101 = vmatmul.mubr.f32.gmra.mrb[0].mxu0 %v3065
      %v4102 = vpop.f32.mrb[0].mxu0
      %v4103 = vadd.f32 0.0, %v4102
      %v4104 = vpop.f32.mrb[0].mxu0
      %4105 = vmatprep.mubr.f32.mxu0 0.0
      %4106 = vmatmul.mubr.f32.gmra.mrb[0].mxu0 %v3067
      %v4107 = vpop.f32.mrb[0].mxu0
      %v4108 = vadd.f32 0.0, %v4107
      %v4109 = vpop.f32.mrb[0].mxu0
      %4110 = vmatprep.mubr.f32.mxu0 0.0
      %4111 = vmatmul.mubr.f32.gmra.mrb[0].mxu0 %v3069
      %v4112 = vpop.f32.mrb[0].mxu0
      %v4113 = vadd.f32 0.0, %v4112
      %v4114 = vpop.f32.mrb[0].mxu0
      %4115 = vmatprep.mubr.f32.mxu0 0.0
      %4116 = vmatmul.mubr.f32.gmra.mrb[0].mxu0 %v3460
      %v4117 = vpop.f32.mrb[0].mxu0
      %v4118 = vadd.f32 0.0, %v4117
      %v4119 = vpop.f32.mrb[0].mxu0
      %4120 = vmatprep.mubr.f32.mxu0 0.0
      %4121 = vmatmul.mubr.f32.gmra.mrb[0].mxu0 %v3463
      %v4122 = vpop.f32.mrb[0].mxu0
      %v4123 = vadd.f32 0.0, %v4122
      %v4124 = vpop.f32.mrb[0].mxu0
      %4125 = vmatprep.mubr.f32.mxu0 0.0
      %4126 = vmatmul.mubr.f32.gmra.mrb[0].mxu0 %v3983
      %v4127 = vpop.f32.mrb[0].mxu0
      %v4128 = vadd.f32 0.0, %v4127
      %v4129 = vpop.f32.mrb[0].mxu0
      %4130 = vmatprep.mubr.f32.mxu0 0.0
      %4131 = vmatmul.mubr.f32.gmra.mrb[0].mxu0 %v3986
      %v4132 = vpop.f32.mrb[0].mxu0
      %v4133 = vadd.f32 0.0, %v4132
      %v4134 = vpop.f32.mrb[0].mxu0
      %4135 = vdwg.mxu0
      %v4136 = vadd.f32 %v3964, %v4058
      %v4137 = vadd.f32 %v3965, %v4063
      %v4138 = vadd.f32 %v3966, %v4068
      %v4139 = vadd.f32 %v3967, %v4073
      %v4140 = vadd.f32 %v3968, %v4078
      %v4141 = vadd.f32 %v3969, %v4083
      %v4142 = vadd.f32 %v3970, %v4088
      %v4143 = vadd.f32 %v3971, %v4093
      %v4144 = vadd.f32 %v3972, %v4098
      %v4145 = vadd.f32 %v3973, %v4103
      %v4146 = vadd.f32 %v3974, %v4108
      %v4147 = vadd.f32 %v3975, %v4113
      %v4148 = vadd.f32 %v3976, %v4118
      %v4149 = vadd.f32 %v3977, %v4123
      %v4150 = vadd.f32 %v3978, %v4128
      %v4151 = vadd.f32 %v3979, %v4133
      %v4153 = vrot.slane %v2789, 1
      %v4154 = vrot.slane %v2790, 1
      %v4155 = vsel %vm652, %v4153, %v4154
      %v4156 = vrot.slane %v2791, 1
      %v4157 = vsel %vm652, %v4154, %v4156
      %s4158 = scalar_lea.vmem %s5, 28
      %v4159 = vld [vmem:[%s4158] sm:$0xf]
      %v4160 = vsel %vm542, %v4155, 0
      %v4162 = vsel %vm542, %v4157, 0
      %v4165 = vsel %vm745, %v4159, 0
      %4167 = vmatprep.subr.mxu0 0.0
      %4168 = vmatpush1.msra.mxu0 %v4165
      %4169 = vmatprep.subr.mxu0 0.0
      %4170 = vmatpush1.msra.mxu0 0.0
      %4171 = vmatprep.subr.mxu0 0.0
      %4172 = vmatpush1.msra.mxu0 0.0
      %4173 = vmatprep.subr.mxu0 0.0
      %4174 = vmatpush1.msra.mxu0 0.0
      %4175 = vmatprep.subr.mxu0 0.0
      %4176 = vmatpush1.msra.mxu0 0.0
      %4177 = vmatprep.subr.mxu0 0.0
      %4178 = vmatpush1.msra.mxu0 0.0
      %4179 = vmatprep.subr.mxu0 0.0
      %4180 = vmatpush1.msra.mxu0 0.0
      %4181 = vmatprep.subr.mxu0 0.0
      %4182 = vmatpush1.msra.mxu0 0.0
      %4183 = vmatprep.subr.mxu0 0.0
      %4184 = vmatpush1.msra.mxu0 0.0
      %4185 = vmatprep.subr.mxu0 0.0
      %4186 = vmatpush1.msra.mxu0 0.0
      %4187 = vmatprep.subr.mxu0 0.0
      %4188 = vmatpush1.msra.mxu0 0.0
      %4189 = vmatprep.subr.mxu0 0.0
      %4190 = vmatpush1.msra.mxu0 0.0
      %4191 = vmatprep.subr.mxu0 0.0
      %4192 = vmatpush1.msra.mxu0 0.0
      %4193 = vmatprep.subr.mxu0 0.0
      %4194 = vmatpush1.msra.mxu0 0.0
      %4195 = vmatprep.subr.mxu0 0.0
      %4196 = vmatpush1.msra.mxu0 0.0
      %4197 = vmatprep.subr.mxu0 0.0
      %4198 = vmatpush1.msra.mxu0 0.0
      %4199 = vmatprep.subr.mxu0 0.0
      %4200 = vmatpush1.msra.mxu0 0.0
      %4201 = vmatprep.subr.mxu0 0.0
      %4202 = vmatpush1.msra.mxu0 0.0
      %4203 = vmatprep.subr.mxu0 0.0
      %4204 = vmatpush1.msra.mxu0 0.0
      %4205 = vmatprep.subr.mxu0 0.0
      %4206 = vmatpush1.msra.mxu0 0.0
      %4207 = vmatprep.subr.mxu0 0.0
      %4208 = vmatpush1.msra.mxu0 0.0
      %4209 = vmatprep.subr.mxu0 0.0
      %4210 = vmatpush1.msra.mxu0 0.0
      %4211 = vmatprep.subr.mxu0 0.0
      %4212 = vmatpush1.msra.mxu0 0.0
      %4213 = vmatprep.subr.mxu0 0.0
      %4214 = vmatpush1.msra.mxu0 0.0
      %4215 = vmatprep.subr.mxu0 0.0
      %4216 = vmatpush1.msra.mxu0 0.0
      %4217 = vmatprep.subr.mxu0 0.0
      %4218 = vmatpush1.msra.mxu0 0.0
      %4219 = vmatprep.subr.mxu0 0.0
      %4220 = vmatpush1.msra.mxu0 0.0
      %4221 = vmatprep.subr.mxu0 0.0
      %4222 = vmatpush1.msra.mxu0 0.0
      %4223 = vmatprep.subr.mxu0 0.0
      %4224 = vmatpush1.msra.mxu0 0.0
      %4225 = vmatprep.subr.mxu0 0.0
      %4226 = vmatpush1.msra.mxu0 0.0
      %4227 = vmatprep.subr.mxu0 0.0
      %4228 = vmatpush1.msra.mxu0 0.0
      %4229 = vmatprep.subr.mxu0 0.0
      %4230 = vmatpush1.msra.mxu0 0.0
      %4231 = vmatprep.mubr.f32.mxu0 0.0
      %4232 = vmatmul.mubr.f32.gmra.mrb[0].mxu0 %v2867
      %v4233 = vpop.f32.mrb[0].mxu0
      %v4234 = vadd.f32 0.0, %v4233
      %v4235 = vpop.f32.mrb[0].mxu0
      %4236 = vmatprep.mubr.f32.mxu0 0.0
      %4237 = vmatmul.mubr.f32.gmra.mrb[0].mxu0 %v2869
      %v4238 = vpop.f32.mrb[0].mxu0
      %v4239 = vadd.f32 0.0, %v4238
      %v4240 = vpop.f32.mrb[0].mxu0
      %4241 = vmatprep.mubr.f32.mxu0 0.0
      %4242 = vmatmul.mubr.f32.gmra.mrb[0].mxu0 %v2871
      %v4243 = vpop.f32.mrb[0].mxu0
      %v4244 = vadd.f32 0.0, %v4243
      %v4245 = vpop.f32.mrb[0].mxu0
      %4246 = vmatprep.mubr.f32.mxu0 0.0
      %4247 = vmatmul.mubr.f32.gmra.mrb[0].mxu0 %v2873
      %v4248 = vpop.f32.mrb[0].mxu0
      %v4249 = vadd.f32 0.0, %v4248
      %v4250 = vpop.f32.mrb[0].mxu0
      %4251 = vmatprep.mubr.f32.mxu0 0.0
      %4252 = vmatmul.mubr.f32.gmra.mrb[0].mxu0 %v2875
      %v4253 = vpop.f32.mrb[0].mxu0
      %v4254 = vadd.f32 0.0, %v4253
      %v4255 = vpop.f32.mrb[0].mxu0
      %4256 = vmatprep.mubr.f32.mxu0 0.0
      %4257 = vmatmul.mubr.f32.gmra.mrb[0].mxu0 %v2877
      %v4258 = vpop.f32.mrb[0].mxu0
      %v4259 = vadd.f32 0.0, %v4258
      %v4260 = vpop.f32.mrb[0].mxu0
      %4261 = vmatprep.mubr.f32.mxu0 0.0
      %4262 = vmatmul.mubr.f32.gmra.mrb[0].mxu0 %v2879
      %v4263 = vpop.f32.mrb[0].mxu0
      %v4264 = vadd.f32 0.0, %v4263
      %v4265 = vpop.f32.mrb[0].mxu0
      %4266 = vmatprep.mubr.f32.mxu0 0.0
      %4267 = vmatmul.mubr.f32.gmra.mrb[0].mxu0 %v2881
      %v4268 = vpop.f32.mrb[0].mxu0
      %v4269 = vadd.f32 0.0, %v4268
      %v4270 = vpop.f32.mrb[0].mxu0
      %4271 = vmatprep.mubr.f32.mxu0 0.0
      %4272 = vmatmul.mubr.f32.gmra.mrb[0].mxu0 %v2883
      %v4273 = vpop.f32.mrb[0].mxu0
      %v4274 = vadd.f32 0.0, %v4273
      %v4275 = vpop.f32.mrb[0].mxu0
      %4276 = vmatprep.mubr.f32.mxu0 0.0
      %4277 = vmatmul.mubr.f32.gmra.mrb[0].mxu0 %v2885
      %v4278 = vpop.f32.mrb[0].mxu0
      %v4279 = vadd.f32 0.0, %v4278
      %v4280 = vpop.f32.mrb[0].mxu0
      %4281 = vmatprep.mubr.f32.mxu0 0.0
      %4282 = vmatmul.mubr.f32.gmra.mrb[0].mxu0 %v2887
      %v4283 = vpop.f32.mrb[0].mxu0
      %v4284 = vadd.f32 0.0, %v4283
      %v4285 = vpop.f32.mrb[0].mxu0
      %4286 = vmatprep.mubr.f32.mxu0 0.0
      %4287 = vmatmul.mubr.f32.gmra.mrb[0].mxu0 %v2889
      %v4288 = vpop.f32.mrb[0].mxu0
      %v4289 = vadd.f32 0.0, %v4288
      %v4290 = vpop.f32.mrb[0].mxu0
      %4291 = vmatprep.mubr.f32.mxu0 0.0
      %4292 = vmatmul.mubr.f32.gmra.mrb[0].mxu0 %v3637
      %v4293 = vpop.f32.mrb[0].mxu0
      %v4294 = vadd.f32 0.0, %v4293
      %v4295 = vpop.f32.mrb[0].mxu0
      %4296 = vmatprep.mubr.f32.mxu0 0.0
      %4297 = vmatmul.mubr.f32.gmra.mrb[0].mxu0 %v3639
      %v4298 = vpop.f32.mrb[0].mxu0
      %v4299 = vadd.f32 0.0, %v4298
      %v4300 = vpop.f32.mrb[0].mxu0
      %4301 = vmatprep.mubr.f32.mxu0 0.0
      %4302 = vmatmul.mubr.f32.gmra.mrb[0].mxu0 %v4160
      %v4303 = vpop.f32.mrb[0].mxu0
      %v4304 = vadd.f32 0.0, %v4303
      %v4305 = vpop.f32.mrb[0].mxu0
      %4306 = vmatprep.mubr.f32.mxu0 0.0
      %4307 = vmatmul.mubr.f32.gmra.mrb[0].mxu0 %v4162
      %v4308 = vpop.f32.mrb[0].mxu0
      %v4309 = vadd.f32 0.0, %v4308
      %v4310 = vpop.f32.mrb[0].mxu0
      %4311 = vdwg.mxu0
      %v4312 = vadd.f32 %v4136, %v4234
      %v4313 = vadd.f32 %v4137, %v4239
      %v4314 = vadd.f32 %v4138, %v4244
      %v4315 = vadd.f32 %v4139, %v4249
      %v4316 = vadd.f32 %v4140, %v4254
      %v4317 = vadd.f32 %v4141, %v4259
      %v4318 = vadd.f32 %v4142, %v4264
      %v4319 = vadd.f32 %v4143, %v4269
      %v4320 = vadd.f32 %v4144, %v4274
      %v4321 = vadd.f32 %v4145, %v4279
      %v4322 = vadd.f32 %v4146, %v4284
      %v4323 = vadd.f32 %v4147, %v4289
      %v4324 = vadd.f32 %v4148, %v4294
      %v4325 = vadd.f32 %v4149, %v4299
      %v4326 = vadd.f32 %v4150, %v4304
      %v4327 = vadd.f32 %v4151, %v4309
      %v4328 = vrot.slane %v2789, 2
      %v4329 = vrot.slane %v2790, 2
      %v4330 = vsel %vm1122, %v4328, %v4329
      %v4331 = vrot.slane %v2791, 2
      %v4332 = vsel %vm1122, %v4329, %v4331
      %s4333 = scalar_lea.vmem %s5, 32
      %v4334 = vld [vmem:[%s4333] sm:$0xf]
      %v4335 = vsel %vm542, %v4330, 0
      %v4337 = vsel %vm542, %v4332, 0
      %v4340 = vsel %vm745, %v4334, 0
      %4342 = vmatprep.subr.mxu0 0.0
      %4343 = vmatpush1.msra.mxu0 %v4340
      %4344 = vmatprep.subr.mxu0 0.0
      %4345 = vmatpush1.msra.mxu0 0.0
      %4346 = vmatprep.subr.mxu0 0.0
      %4347 = vmatpush1.msra.mxu0 0.0
      %4348 = vmatprep.subr.mxu0 0.0
      %4349 = vmatpush1.msra.mxu0 0.0
      %4350 = vmatprep.subr.mxu0 0.0
      %4351 = vmatpush1.msra.mxu0 0.0
      %4352 = vmatprep.subr.mxu0 0.0
      %4353 = vmatpush1.msra.mxu0 0.0
      %4354 = vmatprep.subr.mxu0 0.0
      %4355 = vmatpush1.msra.mxu0 0.0
      %4356 = vmatprep.subr.mxu0 0.0
      %4357 = vmatpush1.msra.mxu0 0.0
      %4358 = vmatprep.subr.mxu0 0.0
      %4359 = vmatpush1.msra.mxu0 0.0
      %4360 = vmatprep.subr.mxu0 0.0
      %4361 = vmatpush1.msra.mxu0 0.0
      %4362 = vmatprep.subr.mxu0 0.0
      %4363 = vmatpush1.msra.mxu0 0.0
      %4364 = vmatprep.subr.mxu0 0.0
      %4365 = vmatpush1.msra.mxu0 0.0
      %4366 = vmatprep.subr.mxu0 0.0
      %4367 = vmatpush1.msra.mxu0 0.0
      %4368 = vmatprep.subr.mxu0 0.0
      %4369 = vmatpush1.msra.mxu0 0.0
      %4370 = vmatprep.subr.mxu0 0.0
      %4371 = vmatpush1.msra.mxu0 0.0
      %4372 = vmatprep.subr.mxu0 0.0
      %4373 = vmatpush1.msra.mxu0 0.0
      %4374 = vmatprep.subr.mxu0 0.0
      %4375 = vmatpush1.msra.mxu0 0.0
      %4376 = vmatprep.subr.mxu0 0.0
      %4377 = vmatpush1.msra.mxu0 0.0
      %4378 = vmatprep.subr.mxu0 0.0
      %4379 = vmatpush1.msra.mxu0 0.0
      %4380 = vmatprep.subr.mxu0 0.0
      %4381 = vmatpush1.msra.mxu0 0.0
      %4382 = vmatprep.subr.mxu0 0.0
      %4383 = vmatpush1.msra.mxu0 0.0
      %4384 = vmatprep.subr.mxu0 0.0
      %4385 = vmatpush1.msra.mxu0 0.0
      %4386 = vmatprep.subr.mxu0 0.0
      %4387 = vmatpush1.msra.mxu0 0.0
      %4388 = vmatprep.subr.mxu0 0.0
      %4389 = vmatpush1.msra.mxu0 0.0
      %4390 = vmatprep.subr.mxu0 0.0
      %4391 = vmatpush1.msra.mxu0 0.0
      %4392 = vmatprep.subr.mxu0 0.0
      %4393 = vmatpush1.msra.mxu0 0.0
      %4394 = vmatprep.subr.mxu0 0.0
      %4395 = vmatpush1.msra.mxu0 0.0
      %4396 = vmatprep.subr.mxu0 0.0
      %4397 = vmatpush1.msra.mxu0 0.0
      %4398 = vmatprep.subr.mxu0 0.0
      %4399 = vmatpush1.msra.mxu0 0.0
      %4400 = vmatprep.subr.mxu0 0.0
      %4401 = vmatpush1.msra.mxu0 0.0
      %4402 = vmatprep.subr.mxu0 0.0
      %4403 = vmatpush1.msra.mxu0 0.0
      %4404 = vmatprep.subr.mxu0 0.0
      %4405 = vmatpush1.msra.mxu0 0.0
      %4406 = vmatprep.mubr.f32.mxu0 0.0
      %4407 = vmatmul.mubr.f32.gmra.mrb[0].mxu0 %v3269
      %v4408 = vpop.f32.mrb[0].mxu0
      %v4409 = vadd.f32 0.0, %v4408
      %v4410 = vpop.f32.mrb[0].mxu0
      %4411 = vmatprep.mubr.f32.mxu0 0.0
      %4412 = vmatmul.mubr.f32.gmra.mrb[0].mxu0 %v3271
      %v4413 = vpop.f32.mrb[0].mxu0
      %v4414 = vadd.f32 0.0, %v4413
      %v4415 = vpop.f32.mrb[0].mxu0
      %4416 = vmatprep.mubr.f32.mxu0 0.0
      %4417 = vmatmul.mubr.f32.gmra.mrb[0].mxu0 %v3273
      %v4418 = vpop.f32.mrb[0].mxu0
      %v4419 = vadd.f32 0.0, %v4418
      %v4420 = vpop.f32.mrb[0].mxu0
      %4421 = vmatprep.mubr.f32.mxu0 0.0
      %4422 = vmatmul.mubr.f32.gmra.mrb[0].mxu0 %v3275
      %v4423 = vpop.f32.mrb[0].mxu0
      %v4424 = vadd.f32 0.0, %v4423
      %v4425 = vpop.f32.mrb[0].mxu0
      %4426 = vmatprep.mubr.f32.mxu0 0.0
      %4427 = vmatmul.mubr.f32.gmra.mrb[0].mxu0 %v3277
      %v4428 = vpop.f32.mrb[0].mxu0
      %v4429 = vadd.f32 0.0, %v4428
      %v4430 = vpop.f32.mrb[0].mxu0
      %4431 = vmatprep.mubr.f32.mxu0 0.0
      %4432 = vmatmul.mubr.f32.gmra.mrb[0].mxu0 %v3279
      %v4433 = vpop.f32.mrb[0].mxu0
      %v4434 = vadd.f32 0.0, %v4433
      %v4435 = vpop.f32.mrb[0].mxu0
      %4436 = vmatprep.mubr.f32.mxu0 0.0
      %4437 = vmatmul.mubr.f32.gmra.mrb[0].mxu0 %v3281
      %v4438 = vpop.f32.mrb[0].mxu0
      %v4439 = vadd.f32 0.0, %v4438
      %v4440 = vpop.f32.mrb[0].mxu0
      %4441 = vmatprep.mubr.f32.mxu0 0.0
      %4442 = vmatmul.mubr.f32.gmra.mrb[0].mxu0 %v3283
      %v4443 = vpop.f32.mrb[0].mxu0
      %v4444 = vadd.f32 0.0, %v4443
      %v4445 = vpop.f32.mrb[0].mxu0
      %4446 = vmatprep.mubr.f32.mxu0 0.0
      %4447 = vmatmul.mubr.f32.gmra.mrb[0].mxu0 %v3285
      %v4448 = vpop.f32.mrb[0].mxu0
      %v4449 = vadd.f32 0.0, %v4448
      %v4450 = vpop.f32.mrb[0].mxu0
      %4451 = vmatprep.mubr.f32.mxu0 0.0
      %4452 = vmatmul.mubr.f32.gmra.mrb[0].mxu0 %v3287
      %v4453 = vpop.f32.mrb[0].mxu0
      %v4454 = vadd.f32 0.0, %v4453
      %v4455 = vpop.f32.mrb[0].mxu0
      %4456 = vmatprep.mubr.f32.mxu0 0.0
      %4457 = vmatmul.mubr.f32.gmra.mrb[0].mxu0 %v3289
      %v4458 = vpop.f32.mrb[0].mxu0
      %v4459 = vadd.f32 0.0, %v4458
      %v4460 = vpop.f32.mrb[0].mxu0
      %4461 = vmatprep.mubr.f32.mxu0 0.0
      %4462 = vmatmul.mubr.f32.gmra.mrb[0].mxu0 %v3291
      %v4463 = vpop.f32.mrb[0].mxu0
      %v4464 = vadd.f32 0.0, %v4463
      %v4465 = vpop.f32.mrb[0].mxu0
      %4466 = vmatprep.mubr.f32.mxu0 0.0
      %4467 = vmatmul.mubr.f32.gmra.mrb[0].mxu0 %v3812
      %v4468 = vpop.f32.mrb[0].mxu0
      %v4469 = vadd.f32 0.0, %v4468
      %v4470 = vpop.f32.mrb[0].mxu0
      %4471 = vmatprep.mubr.f32.mxu0 0.0
      %4472 = vmatmul.mubr.f32.gmra.mrb[0].mxu0 %v3814
      %v4473 = vpop.f32.mrb[0].mxu0
      %v4474 = vadd.f32 0.0, %v4473
      %v4475 = vpop.f32.mrb[0].mxu0
      %4476 = vmatprep.mubr.f32.mxu0 0.0
      %4477 = vmatmul.mubr.f32.gmra.mrb[0].mxu0 %v4335
      %v4478 = vpop.f32.mrb[0].mxu0
      %v4479 = vadd.f32 0.0, %v4478
      %v4480 = vpop.f32.mrb[0].mxu0
      %4481 = vmatprep.mubr.f32.mxu0 0.0
      %4482 = vmatmul.mubr.f32.gmra.mrb[0].mxu0 %v4337
      %v4483 = vpop.f32.mrb[0].mxu0
      %v4484 = vadd.f32 0.0, %v4483
      %v4485 = vpop.f32.mrb[0].mxu0
      %4486 = vdwg.mxu0
      %v4487 = vadd.f32 %v4312, %v4409
      %v4488 = vadd.f32 %v4313, %v4414
      %v4489 = vadd.f32 %v4314, %v4419
      %v4490 = vadd.f32 %v4315, %v4424
      %v4491 = vadd.f32 %v4316, %v4429
      %v4492 = vadd.f32 %v4317, %v4434
      %v4493 = vadd.f32 %v4318, %v4439
      %v4494 = vadd.f32 %v4319, %v4444
      %v4495 = vadd.f32 %v4320, %v4449
      %v4496 = vadd.f32 %v4321, %v4454
      %v4497 = vadd.f32 %v4322, %v4459
      %v4498 = vadd.f32 %v4323, %v4464
      %v4499 = vadd.f32 %v4324, %v4469
      %v4500 = vadd.f32 %v4325, %v4474
      %v4501 = vadd.f32 %v4326, %v4479
      %v4502 = vadd.f32 %v4327, %v4484
      %v4503 = vld [vmem:[%s6] sm:$0x1]
      %v4505 = vlaneseq
      %v4506 = vshrl.u32 %v4505, 7
      %v4507 = vsub.s32 0, %v4506
      %v4508 = vrot.slane %v4503, %v4507
      %v4510 = vadd.f32 %v4487, %v4508
      %v4511 = vadd.f32 %v4488, %v4508
      %v4512 = vadd.f32 %v4489, %v4508
      %v4513 = vadd.f32 %v4490, %v4508
      %v4514 = vadd.f32 %v4491, %v4508
      %v4515 = vadd.f32 %v4492, %v4508
      %v4516 = vadd.f32 %v4493, %v4508
      %v4517 = vadd.f32 %v4494, %v4508
      %v4518 = vadd.f32 %v4495, %v4508
      %v4519 = vadd.f32 %v4496, %v4508
      %v4520 = vadd.f32 %v4497, %v4508
      %v4521 = vadd.f32 %v4498, %v4508
      %v4522 = vadd.f32 %v4499, %v4508
      %v4523 = vadd.f32 %v4500, %v4508
      %v4524 = vadd.f32 %v4501, %v4508
      %v4525 = vadd.f32 %v4502, %v4508
      %4526 = vst.msk [vmem:[%s488] sm:$0xff] %vm542, %v4510
      %4527 = vst.msk [vmem:[%s488 + $0x8] sm:$0xff] %vm542, %v4511
      %4528 = vst.msk [vmem:[%s488 + $0x10] sm:$0xff] %vm542, %v4512
      %4529 = vst.msk [vmem:[%s488 + $0x18] sm:$0xff] %vm542, %v4513
      %4530 = vst.msk [vmem:[%s488 + $0x20] sm:$0xff] %vm542, %v4514
      %4531 = vst.msk [vmem:[%s488 + $0x28] sm:$0xff] %vm542, %v4515
      %4532 = vst.msk [vmem:[%s488 + $0x30] sm:$0xff] %vm542, %v4516
      %4533 = vst.msk [vmem:[%s488 + $0x38] sm:$0xff] %vm542, %v4517
      %4534 = vst.msk [vmem:[%s488 + $0x40] sm:$0xff] %vm542, %v4518
      %4535 = vst.msk [vmem:[%s488 + $0x48] sm:$0xff] %vm542, %v4519
      %4536 = vst.msk [vmem:[%s488 + $0x50] sm:$0xff] %vm542, %v4520
      %4537 = vst.msk [vmem:[%s488 + $0x58] sm:$0xff] %vm542, %v4521
      %4538 = vst.msk [vmem:[%s488 + $0x60] sm:$0xff] %vm542, %v4522
      %4539 = vst.msk [vmem:[%s488 + $0x68] sm:$0xff] %vm542, %v4523
      %4540 = vst.msk [vmem:[%s488 + $0x70] sm:$0xff] %vm542, %v4524
      %4541 = vst.msk [vmem:[%s488 + $0x78] sm:$0xff] %vm542, %v4525
      %v4542 = vsel %vm542, %v4510, 0.0
      %v4543 = vsel %vm542, %v4511, 0.0
      %v4544 = vadd.f32 %v4542, %v4543
      %v4545 = vsel %vm542, %v4512, 0.0
      %v4546 = vadd.f32 %v4544, %v4545
      %v4547 = vsel %vm542, %v4513, 0.0
      %v4548 = vadd.f32 %v4546, %v4547
      %v4549 = vsel %vm542, %v4514, 0.0
      %v4550 = vadd.f32 %v4548, %v4549
      %v4551 = vsel %vm542, %v4515, 0.0
      %v4552 = vadd.f32 %v4550, %v4551
      %v4553 = vsel %vm542, %v4516, 0.0
      %v4554 = vadd.f32 %v4552, %v4553
      %v4555 = vsel %vm542, %v4517, 0.0
      %v4556 = vadd.f32 %v4554, %v4555
      %v4557 = vsel %vm542, %v4518, 0.0
      %v4558 = vadd.f32 %v4556, %v4557
      %v4559 = vsel %vm542, %v4519, 0.0
      %v4560 = vadd.f32 %v4558, %v4559
      %v4561 = vsel %vm542, %v4520, 0.0
      %v4562 = vadd.f32 %v4560, %v4561
      %v4563 = vsel %vm542, %v4521, 0.0
      %v4564 = vadd.f32 %v4562, %v4563
      %v4565 = vsel %vm542, %v4522, 0.0
      %v4566 = vadd.f32 %v4564, %v4565
      %v4567 = vsel %vm542, %v4523, 0.0
      %v4568 = vadd.f32 %v4566, %v4567
      %v4569 = vsel %vm542, %v4524, 0.0
      %v4570 = vadd.f32 %v4568, %v4569
      %v4571 = vsel %vm542, %v4525, 0.0
      %v4572 = vadd.f32 %v4570, %v4571
      %v4573 = vrot.slane %v4572, 4
      %v4574 = vadd.f32 %v4572, %v4573
      %v4575 = vrot.slane %v4574, 2
      %v4576 = vadd.f32 %v4574, %v4575
      %v4577 = vrot.slane %v4576, 1
      %v4578 = vadd.f32 %v4576, %v4577
      %p4579 = scmp.eq.s32.totalorder %s25, 0
      // Predicated region
      $region49: #{residual_group_forward.5} parent=47 // pred_check
        %p4580 = pneg %p4579
      $region50: #{residual_group_forward.5} parent=47 // pred_check_branch
        %4582 = sbr.rel (%p4580) target = $region52
      $region51: #{residual_group_forward.5} parent=47 // pred_region
        %4583 = vst.msk [vmem:[%s492] sm:$0x1] %vm493, %v4578
      $region52: #{residual_group_forward.5} parent=47 // pred_fallthru
        _
      // Predicated region
      $region53: #{residual_group_forward.5} parent=47 // pred_check
        %p4584 = pneg %p522
      $region54: #{residual_group_forward.5} parent=47 // pred_check_branch
        %4586 = sbr.rel (%p4584) target = $region56
      $region55: #{residual_group_forward.5} parent=47 // pred_region
        %v4587 = vld [vmem:[%s492] sm:$0x1]
        %v4588 = vadd.f32 %v4587, %v4578
        %4589 = vst.msk [vmem:[%s492] sm:$0x1] %vm493, %v4588
      $region56: #{residual_group_forward.5} parent=47 // pred_fallthru
        _
      %s4590 = smul.u32 8, %s25
      %p4591 = scmp.lt.s32.totalorder %s24, 1
      %s4592 = scalar_select %p4591, %s24, 1
      %p4593 = scmp.lt.s32.totalorder %s4590, 15
      %s4594 = scalar_select %p4593, %s4590, 15
      %s4595 = smul.addr %s4594, 2
      %s4596 = smul.addr %s4592, 32
      %s4597 = sadd.s32 %s4595, %s4596
      %s4598 = smul.addr %s4597, 8
      %s4599 = scalar_lea.vmem %s7, %s4598
      %p4600 = scmp.lt.s32.totalorder %s24, 1
      %s4601 = scalar_select %p4600, %s24, 1
      %s4602 = scalar_lea.vmem %s8, %s4601
      // Predicated region
      $region57: #{residual_group_forward.5} parent=47 // pred_check
        %p4603 = pneg %p236
      $region58: #{residual_group_forward.5} parent=47 // pred_check_branch
        %4605 = sbr.rel (%p4603) target = $region60
      $region59: #{residual_group_forward.5} parent=47 // pred_region
        %s4606 = smul.u32 8, %s25
      $region60: #{residual_group_forward.5} parent=47 // pred_fallthru
        _
      // Predicated region
      $region61: #{residual_group_forward.5} parent=47 // pred_check
        %p4607 = pneg %p262
      $region62: #{residual_group_forward.5} parent=47 // pred_check_branch
        %4609 = sbr.rel (%p4607) target = $region64
      $region63: #{residual_group_forward.5} parent=47 // pred_region
        _
      $region64: #{residual_group_forward.5} parent=47 // pred_fallthru
        _
    $region48: #{residual_group_forward.5} parent=5 // pred_fallthru
      _
    %p4610 = scmp.le.s32.totalorder 2, %s15
    // Predicated region
    $region65: #{residual_group_forward.5} parent=5 // pred_check
      %p4611 = pneg %p4610
    $region66: #{residual_group_forward.5} parent=5 // pred_check_branch
      %4613 = sbr.rel (%p4611) target = $region68
    $region67: #{residual_group_forward.5} parent=5 // pred_region
      %s4614 = ssub.s32 %s15, 2
      // Predicated region
      $region69: #{residual_group_forward.5} parent=67 // pred_check
        %p4615 = pneg %p242
      $region70: #{residual_group_forward.5} parent=67 // pred_check_branch
        %4617 = sbr.rel (%p4615) target = $region72
      $region71: #{residual_group_forward.5} parent=67 // pred_region
        %s4618 = smul.u32 8, %s27
        %p4619 = scmp.lt.s32.totalorder %s26, 1
        %s4620 = scalar_select %p4619, %s26, 1
        %p4621 = scmp.lt.s32.totalorder %s4618, 15
        %s4622 = scalar_select %p4621, %s4618, 15
        %s4623 = smul.addr %s4622, 2
        %s4624 = smul.addr %s4620, 32
        %s4625 = sadd.s32 %s4623, %s4624
        %s4626 = smul.addr %s4625, 8
        %s4627 = scalar_lea.vmem %s7, %s4626
      $region72: #{residual_group_forward.5} parent=67 // pred_fallthru
        _
      // Predicated region
      $region73: #{residual_group_forward.5} parent=67 // pred_check
        %p4628 = pneg %p268
      $region74: #{residual_group_forward.5} parent=67 // pred_check_branch
        %4630 = sbr.rel (%p4628) target = $region76
      $region75: #{residual_group_forward.5} parent=67 // pred_region
        %p4631 = scmp.lt.s32.totalorder %s26, 1
        %s4632 = scalar_select %p4631, %s26, 1
        %s4633 = scalar_lea.vmem %s8, %s4632
      $region76: #{residual_group_forward.5} parent=67 // pred_fallthru
        _
    $region68: #{residual_group_forward.5} parent=5 // pred_fallthru
      _
  $region6: #{residual_group_forward.5} parent=0 // loop_footer
    %s19 = sadd.s32 1, %s15
  $region7: #{residual_group_forward.5} parent=0 // loop_footer_branch
    %14 = sbr.rel target = $region3
  $region8: #{residual_group_forward.5} parent=0 // loop_exit
    _

</llo_original>
